<compile_context>
chip_gen: v7x
topology: tpu7x:2x2x1
jax: 0.10.0
libtpu: 0.0.40
codegen_flags: <defaults>
</compile_context>

<pallas_src>
import functools
import math

import jax
import jax.numpy as jnp
from jax.experimental import pallas as pl
from jax.experimental.pallas import tpu as pltpu


VMEM_SPEC = pl.BlockSpec(memory_space=pltpu.MemorySpace.VMEM)


# ----------------------------- in-kernel helpers -----------------------------

def _layernorm(x, g, b, eps):
    """f32 LayerNorm over the last (lane) axis; g/b are (1, H) rows.

    One-pass statistics: sum(x) and sum(x^2) are independent row reductions, so the
    two XLU reductions can overlap instead of serializing (mean -> centered var).
    """
    mean = jnp.mean(x, axis=-1, keepdims=True)
    meansq = jnp.mean(x * x, axis=-1, keepdims=True)
    var = meansq - mean * mean
    return (x - mean) * jax.lax.rsqrt(var + eps) * g + b


# ------------------------------- Pallas kernels -------------------------------

def _patch_embed_kernel(x_ref, w_ref, b_ref, o_ref):
    # x: (tile_m, K_pad) bf16 im2col patches, w: (K_pad, H) bf16, b: (1, H) f32
    o_ref[...] = (jnp.dot(x_ref[...], w_ref[...],
                          preferred_element_type=jnp.float32)
                  + b_ref[...]).astype(o_ref.dtype)


def _layers_kernel(x_ref,
                   ln1_g_ref, ln1_b_ref, wqkv_ref, bqkv_ref, wo_ref, bo_ref, ls1_ref,
                   ln2_g_ref, ln2_b_ref, w1_ref, b1_ref, w2_ref, b2_ref, ls2_ref,
                   o_ref, h_ref, *, heads, eps):
    """All DINOv2 transformer blocks fused into one pallas_call.

    grid = (batch, layer):
      * batch axis ("parallel"): one batch element per program -> tokens can never
        attend across batch elements, so no attention mask/bias is needed.
      * layer axis ("arbitrary"): the (S, H) activation stays resident in the h_ref
        VMEM scratch for the whole layer sweep; per-layer weights (leading layer dim)
        are the only per-layer HBM traffic and are hidden by the BlockSpec pipeline.
    """
    l = pl.program_id(1)

    @pl.when(l == 0)
    def _():
        h_ref[...] = x_ref[...]                     # load activations once per batch elem

    x = h_ref[...]                                  # (S, H) f32 resident activation
    H = x.shape[-1]
    dh = H // heads
    scale = 1.0 / math.sqrt(dh)

    # ---- attention branch (pre-norm) ----
    x1 = _layernorm(x, ln1_g_ref[...], ln1_b_ref[...], eps)

    # single lane-dense (S, H) @ (H, 3H) matmul for Q, K, V (bf16 in, f32 accumulate)
    qkv = jnp.dot(x1.astype(jnp.bfloat16), wqkv_ref[...],
                  preferred_element_type=jnp.float32) + bqkv_ref[...]

    ctxs = []
    for hd in range(heads):                         # static unroll over 6 heads
        lo, hi = hd * dh, (hd + 1) * dh
        qh = qkv[:, lo:hi].astype(jnp.bfloat16)
        kh = qkv[:, H + lo:H + hi].astype(jnp.bfloat16)
        vh = qkv[:, 2 * H + lo:2 * H + hi].astype(jnp.bfloat16)

        # scores: (S, dh) x (S, dh)^T on the MXU, f32 accumulation
        s = jax.lax.dot_general(qh, kh, (((1,), (1,)), ((), ())),
                                preferred_element_type=jnp.float32) * scale
        m = jnp.max(s, axis=-1, keepdims=True)
        e = jnp.exp(s - m)
        # EUP reciprocal keeps the VALU free; set approx=False for strict parity.
        p = e * pl.reciprocal(jnp.sum(e, axis=-1, keepdims=True), approx=True)
        ctxs.append(jnp.dot(p.astype(jnp.bfloat16), vh,
                            preferred_element_type=jnp.float32))      # (S, dh)

    # Concatenate per-head contexts along the lane axis and run ONE K=384 output
    # projection (replaces six underfilled K=64 matmuls + six f32 accumulator adds).
    ctx = jnp.concatenate(ctxs, axis=-1)            # (S, H) f32
    attn_out = jnp.dot(ctx.astype(jnp.bfloat16), wo_ref[...],
                       preferred_element_type=jnp.float32) + bo_ref[...]
    h1 = x + attn_out * ls1_ref[...]                # LayerScale residual (ls = 1.0)

    # ---- MLP branch (pre-norm) ----
    x2 = _layernorm(h1, ln2_g_ref[...], ln2_b_ref[...], eps)
    m1 = jnp.dot(x2.astype(jnp.bfloat16), w1_ref[...],
                 preferred_element_type=jnp.float32) + b1_ref[...]
    # TODO(synk): HF DINOv2 'gelu' is the exact erf GELU; tanh approximation used in-kernel.
    m1 = jax.nn.gelu(m1, approximate=True)
    m2 = jnp.dot(m1.astype(jnp.bfloat16), w2_ref[...],
                 preferred_element_type=jnp.float32) + b2_ref[...]
    h_new = h1 + m2 * ls2_ref[...]

    h_ref[...] = h_new                              # stays VMEM-resident across layers

    @pl.when(l == pl.num_programs(1) - 1)
    def _():
        o_ref[...] = h_new.astype(o_ref.dtype)      # single HBM writeback per batch elem


def _head_kernel(x_ref, g_ref, b_ref, w_ref, pb_ref, o_ref, *, eps):
    # final LayerNorm on the CLS features + Linear(384 -> 512), fused
    y = _layernorm(x_ref[...].astype(jnp.float32), g_ref[...], b_ref[...], eps)
    o_ref[...] = (jnp.dot(y.astype(jnp.bfloat16), w_ref[...],
                          preferred_element_type=jnp.float32)
                  + pb_ref[...]).astype(o_ref.dtype)


# ------------------------------ parameter init --------------------------------

def init_params(key, cfg):
    H, M, C, P, L = cfg["hidden"], cfg["mlp"], cfg["channels"], cfg["patch"], cfg["layers"]
    n_patches = (cfg["image"] // P) ** 2
    S = n_patches + 1
    K = C * P * P
    Kp = ((K + 127) // 128) * 128       # pad im2col K (588) up to 640 for aligned MXU feeds
    std = 0.02

    ks = jax.random.split(key, 10)

    def nrm(k, shape):
        return std * jax.random.normal(k, shape, jnp.float32)

    ones = lambda *s: jnp.ones(s, jnp.float32)
    zeros = lambda *s: jnp.zeros(s, jnp.float32)

    patch_w = jnp.zeros((Kp, H), jnp.float32).at[:K].set(nrm(ks[2], (K, H)))
    # Q/K/V packed into a single lane-dense (H, 3H) matrix, stacked over layers.
    wqkv = jnp.concatenate([nrm(ks[3], (L, H, H)),
                            nrm(ks[4], (L, H, H)),
                            nrm(ks[5], (L, H, H))], axis=2)

    return {
        "cls_token": nrm(ks[0], (1, H)),
        "pos_embed": nrm(ks[1], (1, S, H)),
        "patch_w": patch_w.astype(jnp.bfloat16),          # bf16 MXU weights, zero-padded K
        "patch_b": zeros(1, H),
        # --- per-layer params stacked along a leading layer axis (grid-indexed) ---
        "ln1_g": ones(L, 1, H), "ln1_b": zeros(L, 1, H),
        "wqkv": wqkv.astype(jnp.bfloat16), "bqkv": zeros(L, 1, 3 * H),
        "wo": nrm(ks[6], (L, H, H)).astype(jnp.bfloat16), "bo": zeros(L, 1, H),
        "ls1": ones(L, 1, H),                              # Dinov2 layerscale_value = 1.0
        "ln2_g": ones(L, 1, H), "ln2_b": zeros(L, 1, H),
        "w1": nrm(ks[7], (L, H, M)).astype(jnp.bfloat16), "b1": zeros(L, 1, M),
        "w2": nrm(ks[8], (L, M, H)).astype(jnp.bfloat16), "b2": zeros(L, 1, H),
        "ls2": ones(L, 1, H),
        # --- final LayerNorm + projection head ---
        "ln_g": ones(1, H), "ln_b": zeros(1, H),
        "proj_w": nrm(ks[9], (H, cfg["proj"])).astype(jnp.bfloat16),
        "proj_b": zeros(1, cfg["proj"]),
    }


# -------------------------------- forward pass ---------------------------------

def dino_embedder_forward(params, pixel_values, cfg):
    B, C, Hi, Wi = pixel_values.shape
    P, H, M, heads, eps = cfg["patch"], cfg["hidden"], cfg["mlp"], cfg["heads"], cfg["eps"]
    L = cfg["layers"]
    nH, nW = Hi // P, Wi // P
    n_patches = nH * nW
    S = n_patches + 1
    K = C * P * P
    Kp = params["patch_w"].shape[0]

    # Patch-embedding conv (kernel == stride == patch) == im2col + matmul.
    # im2col, zero-pad of K to a 128-multiple and bf16 cast happen once in the wrapper;
    # the matmul is a row-tiled Pallas kernel (memory-bound -> bf16 halves DMA bytes).
    x = pixel_values.reshape(B, C, nH, P, nW, P)
    x = x.transpose(0, 2, 4, 1, 3, 5).reshape(B * n_patches, K)
    x = jnp.pad(x, ((0, 0), (0, Kp - K))).astype(jnp.bfloat16)

    rows = B * n_patches
    tile_m = rows                                   # demo scale: one full-array tile
    for cand in (1024, 512, 256, 128):
        if rows % cand == 0:
            tile_m = cand
            break

    patch_emb = pl.pallas_call(
        _patch_embed_kernel,
        out_shape=jax.ShapeDtypeStruct((rows, H), jnp.float32),
        grid_spec=pltpu.PrefetchScalarGridSpec(
            num_scalar_prefetch=0,
            grid=(rows // tile_m,),
            in_specs=[pl.BlockSpec((tile_m, Kp), lambda i: (i, 0)),
                      pl.BlockSpec((Kp, H), lambda i: (0, 0)),
                      pl.BlockSpec((1, H), lambda i: (0, 0))],
            out_specs=pl.BlockSpec((tile_m, H), lambda i: (i, 0))),
        compiler_params=pltpu.CompilerParams(
            dimension_semantics=("parallel",)),
    )(x, params["patch_w"], params["patch_b"])

    # CLS token + learned position embedding (tiny one-time ops, kept in the wrapper).
    tokens = patch_emb.reshape(B, n_patches, H)
    cls = jnp.broadcast_to(params["cls_token"][None], (B, 1, H))
    h = jnp.concatenate([cls, tokens], axis=1) + params["pos_embed"]      # (B, S, H) f32

    # ---- all transformer blocks in ONE pallas_call: grid = (batch, layer) ----
    def _layer_spec(*dims):                         # per-layer stacked params, l-indexed
        zs = (0,) * len(dims)
        return pl.BlockSpec((None,) + dims, lambda b, l, zs=zs: (l,) + zs)

    def _batch_spec(*dims):                         # activations, b-indexed
        zs = (0,) * len(dims)
        return pl.BlockSpec((None,) + dims, lambda b, l, zs=zs: (b,) + zs)

    flops = B * L * (2 * S * H * 3 * H + 4 * S * S * H + 2 * S * H * H + 4 * S * H * M)
    transcendentals = B * L * (heads * S * S + 2 * S * M)
    weight_bytes = 2 * (H * 3 * H + H * H + 2 * H * M) + 4 * (3 * H + 8 * H + M)
    bytes_accessed = B * L * weight_bytes + 2 * B * S * H * 4

    h = pl.pallas_call(
        functools.partial(_layers_kernel, heads=heads, eps=eps),
        out_shape=jax.ShapeDtypeStruct((B, S, H), jnp.float32),
        grid_spec=pltpu.PrefetchScalarGridSpec(
            num_scalar_prefetch=0,
            grid=(B, L),
            in_specs=[_batch_spec(S, H),
                      _layer_spec(1, H), _layer_spec(1, H),
                      _layer_spec(H, 3 * H), _layer_spec(1, 3 * H),
                      _layer_spec(H, H), _layer_spec(1, H), _layer_spec(1, H),
                      _layer_spec(1, H), _layer_spec(1, H),
                      _layer_spec(H, M), _layer_spec(1, M),
                      _layer_spec(M, H), _layer_spec(1, H), _layer_spec(1, H)],
            out_specs=_batch_spec(S, H),
            scratch_shapes=[pltpu.VMEM((S, H), jnp.float32)]),   # resident activation
        compiler_params=pltpu.CompilerParams(
            dimension_semantics=("parallel", "arbitrary"),
            vmem_limit_bytes=48 * 1024 * 1024),
        cost_estimate=pl.CostEstimate(flops=flops,
                                      transcendentals=transcendentals,
                                      bytes_accessed=bytes_accessed),
    )(h,
      params["ln1_g"], params["ln1_b"], params["wqkv"], params["bqkv"],
      params["wo"], params["bo"], params["ls1"],
      params["ln2_g"], params["ln2_b"], params["w1"], params["b1"],
      params["w2"], params["b2"], params["ls2"])

    # final LayerNorm + CLS-token slice + projection Linear(384, 512)
    cls_feat = h[:, 0]                                           # (B, 384)
    return pl.pallas_call(
        functools.partial(_head_kernel, eps=eps),
        out_shape=jax.ShapeDtypeStruct((B, cfg["proj"]), jnp.float32),
        in_specs=[VMEM_SPEC] * 5,
        out_specs=VMEM_SPEC,
    )(cls_feat, params["ln_g"], params["ln_b"], params["proj_w"], params["proj_b"])


# ------------------------------------ main --------------------------------------

if __name__ == "__main__":
    cfg = dict(
        hidden=384,      # dinov2-small hidden size (matches nn.Linear(384, 512))
        heads=6,
        mlp=1536,
        layers=2,        # real backbone has 12; shrunk for the demo
        patch=14,
        channels=3,
        image=28,        # 2x2 patches + CLS -> seq = 5
        proj=512,
        eps=1e-6,
    )

    key = jax.random.PRNGKey(0)
    k_params, k_x = jax.random.split(key)
    params = init_params(k_params, cfg)

    x = jax.random.normal(k_x, (2, cfg["channels"], cfg["image"], cfg["image"]),
                          jnp.float32)

    fwd = jax.jit(functools.partial(dino_embedder_forward, cfg=cfg))
    out = jax.block_until_ready(fwd(params, x))
    assert out.shape == (2, cfg["proj"]), out.shape
    assert out.dtype == jnp.float32
    print("KERNEL_OK")
</pallas_src>

<mosaic_0001>
module attributes {stable_mosaic.version = 11 : i64} {
  func.func @_patch_embed_kernel(%arg0: i32, %arg1: memref<8x640xbf16, #tpu.memory_space<vmem>>, %arg2: memref<640x384xbf16, #tpu.memory_space<vmem>>, %arg3: memref<1x384xf32, #tpu.memory_space<vmem>>, %arg4: memref<8x384xf32, #tpu.memory_space<vmem>>) attributes {dimension_semantics = [#tpu.dimension_semantics<parallel>], iteration_bounds = array<i64: 1>, scalar_prefetch = 0 : i64, scratch_operands = 0 : i64, tpu.core_type = #tpu.core_type<tc>, window_params = [{transform_indices = @transform_0, window_bounds = array<i64: 8, 640>}, {pipeline_mode = #tpu.pipeline_mode<synchronous>, transform_indices = @transform_1, window_bounds = array<i64: 640, 384>}, {pipeline_mode = #tpu.pipeline_mode<synchronous>, transform_indices = @transform_2, window_bounds = array<i64: 1, 384>}, {transform_indices = @transform_3, window_bounds = array<i64: 8, 384>}]} {
    %c0 = arith.constant 0 : index
    %c0_0 = arith.constant 0 : index
    %0 = vector.load %arg1[%c0, %c0_0] : memref<8x640xbf16, #tpu.memory_space<vmem>>, vector<8x640xbf16>
    %c0_1 = arith.constant 0 : index
    %c0_2 = arith.constant 0 : index
    %1 = vector.load %arg2[%c0_1, %c0_2] : memref<640x384xbf16, #tpu.memory_space<vmem>>, vector<640x384xbf16>
    %cst = arith.constant dense<0.000000e+00> : vector<8x384xf32>
    %2 = tpu.matmul %0, %1, %cst {dimension_numbers = #tpu.dot_dimension_numbers<[1], [0], [0], [1], [0, 0, 1, 1], [], []>} : vector<8x640xbf16>, vector<640x384xbf16>, vector<8x384xf32> -> vector<8x384xf32>
    %c0_3 = arith.constant 0 : index
    %c0_4 = arith.constant 0 : index
    %3 = vector.load %arg3[%c0_3, %c0_4] : memref<1x384xf32, #tpu.memory_space<vmem>>, vector<1x384xf32>
    %4 = vector.broadcast %3 : vector<1x384xf32> to vector<8x384xf32>
    %5 = arith.addf %2, %4 : vector<8x384xf32>
    %c0_5 = arith.constant 0 : index
    %c0_6 = arith.constant 0 : index
    %6 = vector.load %arg4[%c0_5, %c0_6] : memref<8x384xf32, #tpu.memory_space<vmem>>, vector<8x384xf32>
    tpu.vector_store %arg4[%c0_5, %c0_6], %5 {strides = array<i32>} : memref<8x384xf32, #tpu.memory_space<vmem>>, vector<8x384xf32>,
    return
  }
  func.func @transform_0(%arg0: i32) -> (i32, i32) {
    %c0_i32 = arith.constant 0 : i32
    %c0_i32_0 = arith.constant 0 : i32
    return %arg0, %c0_i32 : i32, i32
  }
  func.func @transform_1(%arg0: i32) -> (i32, i32) {
    %c0_i32 = arith.constant 0 : i32
    %c0_i32_0 = arith.constant 0 : i32
    %c0_i32_1 = arith.constant 0 : i32
    return %c0_i32, %c0_i32_0 : i32, i32
  }
  func.func @transform_2(%arg0: i32) -> (i32, i32) {
    %c0_i32 = arith.constant 0 : i32
    %c0_i32_0 = arith.constant 0 : i32
    %c0_i32_1 = arith.constant 0 : i32
    return %c0_i32, %c0_i32_0 : i32, i32
  }
  func.func @transform_3(%arg0: i32) -> (i32, i32) {
    %c0_i32 = arith.constant 0 : i32
    %c0_i32_0 = arith.constant 0 : i32
    return %arg0, %c0_i32 : i32, i32
  }
}

module attributes {stable_mosaic.version = 11 : i64} {
  func.func @_head_kernel(%arg0: memref<2x384xf32, #tpu.memory_space<vmem>>, %arg1: memref<1x384xf32, #tpu.memory_space<vmem>>, %arg2: memref<1x384xf32, #tpu.memory_space<vmem>>, %arg3: memref<384x512xbf16, #tpu.memory_space<vmem>>, %arg4: memref<1x512xf32, #tpu.memory_space<vmem>>, %arg5: memref<2x512xf32, #tpu.memory_space<vmem>>) attributes {dimension_semantics = [], scalar_prefetch = 0 : i64, scratch_operands = 0 : i64, tpu.core_type = #tpu.core_type<tc>} {
    %c0 = arith.constant 0 : index
    %c0_0 = arith.constant 0 : index
    %0 = vector.load %arg0[%c0, %c0_0] : memref<2x384xf32, #tpu.memory_space<vmem>>, vector<2x384xf32>
    %c0_1 = arith.constant 0 : index
    %c0_2 = arith.constant 0 : index
    %1 = vector.load %arg1[%c0_1, %c0_2] : memref<1x384xf32, #tpu.memory_space<vmem>>, vector<1x384xf32>
    %c0_3 = arith.constant 0 : index
    %c0_4 = arith.constant 0 : index
    %2 = vector.load %arg2[%c0_3, %c0_4] : memref<1x384xf32, #tpu.memory_space<vmem>>, vector<1x384xf32>
    %cst = arith.constant dense<0.000000e+00> : vector<2xf32>
    %3 = vector.multi_reduction <add>, %0, %cst [1] : vector<2x384xf32> to vector<2xf32>
    %4 = vector.shape_cast %3 : vector<2xf32> to vector<2x1xf32>
    %cst_5 = arith.constant 3.840000e+02 : f32
    %5 = vector.broadcast %cst_5 : f32 to vector<2x1xf32>
    %6 = arith.divf %4, %5 : vector<2x1xf32>
    %7 = arith.mulf %0, %0 : vector<2x384xf32>
    %cst_6 = arith.constant dense<0.000000e+00> : vector<2xf32>
    %8 = vector.multi_reduction <add>, %7, %cst_6 [1] : vector<2x384xf32> to vector<2xf32>
    %9 = vector.shape_cast %8 : vector<2xf32> to vector<2x1xf32>
    %cst_7 = arith.constant 3.840000e+02 : f32
    %10 = vector.broadcast %cst_7 : f32 to vector<2x1xf32>
    %11 = arith.divf %9, %10 : vector<2x1xf32>
    %12 = arith.mulf %6, %6 : vector<2x1xf32>
    %13 = arith.subf %11, %12 : vector<2x1xf32>
    %14 = vector.broadcast %6 : vector<2x1xf32> to vector<2x384xf32>
    %15 = arith.subf %0, %14 : vector<2x384xf32>
    %cst_8 = arith.constant 9.99999997E-7 : f32
    %16 = vector.broadcast %cst_8 : f32 to vector<2x1xf32>
    %17 = arith.addf %13, %16 : vector<2x1xf32>
    %18 = math.rsqrt %17 : vector<2x1xf32>
    %19 = vector.broadcast %18 : vector<2x1xf32> to vector<2x384xf32>
    %20 = arith.mulf %15, %19 : vector<2x384xf32>
    %21 = vector.broadcast %1 : vector<1x384xf32> to vector<2x384xf32>
    %22 = arith.mulf %20, %21 : vector<2x384xf32>
    %23 = vector.broadcast %2 : vector<1x384xf32> to vector<2x384xf32>
    %24 = arith.addf %22, %23 : vector<2x384xf32>
    %25 = arith.truncf %24 : vector<2x384xf32> to vector<2x384xbf16>
    %c0_9 = arith.constant 0 : index
    %c0_10 = arith.constant 0 : index
    %26 = vector.load %arg3[%c0_9, %c0_10] : memref<384x512xbf16, #tpu.memory_space<vmem>>, vector<384x512xbf16>
    %cst_11 = arith.constant dense<0.000000e+00> : vector<2x512xf32>
    %27 = tpu.matmul %25, %26, %cst_11 {dimension_numbers = #tpu.dot_dimension_numbers<[1], [0], [0], [1], [0, 0, 1, 1], [], []>} : vector<2x384xbf16>, vector<384x512xbf16>, vector<2x512xf32> -> vector<2x512xf32>
    %c0_12 = arith.constant 0 : index
    %c0_13 = arith.constant 0 : index
    %28 = vector.load %arg4[%c0_12, %c0_13] : memref<1x512xf32, #tpu.memory_space<vmem>>, vector<1x512xf32>
    %29 = vector.broadcast %28 : vector<1x512xf32> to vector<2x512xf32>
    %30 = arith.addf %27, %29 : vector<2x512xf32>
    %c0_14 = arith.constant 0 : index
    %c0_15 = arith.constant 0 : index
    %31 = vector.load %arg5[%c0_14, %c0_15] : memref<2x512xf32, #tpu.memory_space<vmem>>, vector<2x512xf32>
    tpu.vector_store %arg5[%c0_14, %c0_15], %30 {strides = array<i32>} : memref<2x512xf32, #tpu.memory_space<vmem>>, vector<2x512xf32>,
    return
  }
}

module attributes {stable_mosaic.version = 11 : i64} {
  func.func @_layers_kernel(%arg0: i32, %arg1: i32, %arg2: memref<1x5x384xf32, #tpu.memory_space<vmem>>, %arg3: memref<1x1x384xf32, #tpu.memory_space<vmem>>, %arg4: memref<1x1x384xf32, #tpu.memory_space<vmem>>, %arg5: memref<1x384x1152xbf16, #tpu.memory_space<vmem>>, %arg6: memref<1x1x1152xf32, #tpu.memory_space<vmem>>, %arg7: memref<1x384x384xbf16, #tpu.memory_space<vmem>>, %arg8: memref<1x1x384xf32, #tpu.memory_space<vmem>>, %arg9: memref<1x1x384xf32, #tpu.memory_space<vmem>>, %arg10: memref<1x1x384xf32, #tpu.memory_space<vmem>>, %arg11: memref<1x1x384xf32, #tpu.memory_space<vmem>>, %arg12: memref<1x384x1536xbf16, #tpu.memory_space<vmem>>, %arg13: memref<1x1x1536xf32, #tpu.memory_space<vmem>>, %arg14: memref<1x1536x384xbf16, #tpu.memory_space<vmem>>, %arg15: memref<1x1x384xf32, #tpu.memory_space<vmem>>, %arg16: memref<1x1x384xf32, #tpu.memory_space<vmem>>, %arg17: memref<1x5x384xf32, #tpu.memory_space<vmem>>, %arg18: memref<5x384xf32, #tpu.memory_space<vmem>>) attributes {dimension_semantics = [#tpu.dimension_semantics<parallel>, #tpu.dimension_semantics<arbitrary>], iteration_bounds = array<i64: 2, 2>, scalar_prefetch = 0 : i64, scratch_operands = 1 : i64, tpu.core_type = #tpu.core_type<tc>, window_params = [{transform_indices = @transform_0, window_bounds = array<i64: 1, 5, 384>}, {transform_indices = @transform_1, window_bounds = array<i64: 1, 1, 384>}, {transform_indices = @transform_2, window_bounds = array<i64: 1, 1, 384>}, {transform_indices = @transform_3, window_bounds = array<i64: 1, 384, 1152>}, {transform_indices = @transform_4, window_bounds = array<i64: 1, 1, 1152>}, {transform_indices = @transform_5, window_bounds = array<i64: 1, 384, 384>}, {transform_indices = @transform_6, window_bounds = array<i64: 1, 1, 384>}, {transform_indices = @transform_7, window_bounds = array<i64: 1, 1, 384>}, {transform_indices = @transform_8, window_bounds = array<i64: 1, 1, 384>}, {transform_indices = @transform_9, window_bounds = array<i64: 1, 1, 384>}, {transform_indices = @transform_10, window_bounds = array<i64: 1, 384, 1536>}, {transform_indices = @transform_11, window_bounds = array<i64: 1, 1, 1536>}, {transform_indices = @transform_12, window_bounds = array<i64: 1, 1536, 384>}, {transform_indices = @transform_13, window_bounds = array<i64: 1, 1, 384>}, {transform_indices = @transform_14, window_bounds = array<i64: 1, 1, 384>}, {transform_indices = @transform_15, window_bounds = array<i64: 1, 5, 384>}]} {
    %c0_i32 = arith.constant 0 : i32
    %0 = arith.cmpi eq, %arg1, %c0_i32 : i32
    %1 = arith.extui %0 : i1 to i32
    %c0_i32_0 = arith.constant 0 : i32
    %2 = arith.cmpi ne, %1, %c0_i32_0 : i32
    scf.if %2 {
      %c0_94 = arith.constant 0 : index
      %c0_95 = arith.constant 0 : index
      %c0_96 = arith.constant 0 : index
      %242 = vector.load %arg2[%c0_94, %c0_95, %c0_96] : memref<1x5x384xf32, #tpu.memory_space<vmem>>, vector<1x5x384xf32>
      %243 = vector.shape_cast %242 : vector<1x5x384xf32> to vector<5x384xf32>
      %c0_97 = arith.constant 0 : index
      %c0_98 = arith.constant 0 : index
      %244 = vector.load %arg18[%c0_97, %c0_98] : memref<5x384xf32, #tpu.memory_space<vmem>>, vector<5x384xf32>
      tpu.vector_store %arg18[%c0_97, %c0_98], %243 {strides = array<i32>} : memref<5x384xf32, #tpu.memory_space<vmem>>, vector<5x384xf32>,
    } else {
    }
    %c0 = arith.constant 0 : index
    %c0_1 = arith.constant 0 : index
    %3 = vector.load %arg18[%c0, %c0_1] : memref<5x384xf32, #tpu.memory_space<vmem>>, vector<5x384xf32>
    %c0_2 = arith.constant 0 : index
    %c0_3 = arith.constant 0 : index
    %c0_4 = arith.constant 0 : index
    %4 = vector.load %arg3[%c0_2, %c0_3, %c0_4] : memref<1x1x384xf32, #tpu.memory_space<vmem>>, vector<1x1x384xf32>
    %5 = vector.shape_cast %4 : vector<1x1x384xf32> to vector<1x384xf32>
    %c0_5 = arith.constant 0 : index
    %c0_6 = arith.constant 0 : index
    %c0_7 = arith.constant 0 : index
    %6 = vector.load %arg4[%c0_5, %c0_6, %c0_7] : memref<1x1x384xf32, #tpu.memory_space<vmem>>, vector<1x1x384xf32>
    %7 = vector.shape_cast %6 : vector<1x1x384xf32> to vector<1x384xf32>
    %cst = arith.constant dense<0.000000e+00> : vector<5xf32>
    %8 = vector.multi_reduction <add>, %3, %cst [1] : vector<5x384xf32> to vector<5xf32>
    %9 = vector.shape_cast %8 : vector<5xf32> to vector<5x1xf32>
    %cst_8 = arith.constant 3.840000e+02 : f32
    %10 = vector.broadcast %cst_8 : f32 to vector<5x1xf32>
    %11 = arith.divf %9, %10 : vector<5x1xf32>
    %12 = arith.mulf %3, %3 : vector<5x384xf32>
    %cst_9 = arith.constant dense<0.000000e+00> : vector<5xf32>
    %13 = vector.multi_reduction <add>, %12, %cst_9 [1] : vector<5x384xf32> to vector<5xf32>
    %14 = vector.shape_cast %13 : vector<5xf32> to vector<5x1xf32>
    %cst_10 = arith.constant 3.840000e+02 : f32
    %15 = vector.broadcast %cst_10 : f32 to vector<5x1xf32>
    %16 = arith.divf %14, %15 : vector<5x1xf32>
    %17 = arith.mulf %11, %11 : vector<5x1xf32>
    %18 = arith.subf %16, %17 : vector<5x1xf32>
    %19 = vector.broadcast %11 : vector<5x1xf32> to vector<5x384xf32>
    %20 = arith.subf %3, %19 : vector<5x384xf32>
    %cst_11 = arith.constant 9.99999997E-7 : f32
    %21 = vector.broadcast %cst_11 : f32 to vector<5x1xf32>
    %22 = arith.addf %18, %21 : vector<5x1xf32>
    %23 = math.rsqrt %22 : vector<5x1xf32>
    %24 = vector.broadcast %23 : vector<5x1xf32> to vector<5x384xf32>
    %25 = arith.mulf %20, %24 : vector<5x384xf32>
    %26 = vector.broadcast %5 : vector<1x384xf32> to vector<5x384xf32>
    %27 = arith.mulf %25, %26 : vector<5x384xf32>
    %28 = vector.broadcast %7 : vector<1x384xf32> to vector<5x384xf32>
    %29 = arith.addf %27, %28 : vector<5x384xf32>
    %30 = arith.truncf %29 : vector<5x384xf32> to vector<5x384xbf16>
    %c0_12 = arith.constant 0 : index
    %c0_13 = arith.constant 0 : index
    %c0_14 = arith.constant 0 : index
    %31 = vector.load %arg5[%c0_12, %c0_13, %c0_14] : memref<1x384x1152xbf16, #tpu.memory_space<vmem>>, vector<1x384x1152xbf16>
    %32 = vector.shape_cast %31 : vector<1x384x1152xbf16> to vector<384x1152xbf16>
    %cst_15 = arith.constant dense<0.000000e+00> : vector<5x1152xf32>
    %33 = tpu.matmul %30, %32, %cst_15 {dimension_numbers = #tpu.dot_dimension_numbers<[1], [0], [0], [1], [0, 0, 1, 1], [], []>} : vector<5x384xbf16>, vector<384x1152xbf16>, vector<5x1152xf32> -> vector<5x1152xf32>
    %c0_16 = arith.constant 0 : index
    %c0_17 = arith.constant 0 : index
    %c0_18 = arith.constant 0 : index
    %34 = vector.load %arg6[%c0_16, %c0_17, %c0_18] : memref<1x1x1152xf32, #tpu.memory_space<vmem>>, vector<1x1x1152xf32>
    %35 = vector.shape_cast %34 : vector<1x1x1152xf32> to vector<1x1152xf32>
    %36 = vector.broadcast %35 : vector<1x1152xf32> to vector<5x1152xf32>
    %37 = arith.addf %33, %36 : vector<5x1152xf32>
    %38 = vector.extract_strided_slice %37 {offsets = [0, 0], sizes = [5, 64], strides = [1, 1]} : vector<5x1152xf32> to vector<5x64xf32>
    %39 = arith.truncf %38 : vector<5x64xf32> to vector<5x64xbf16>
    %40 = vector.extract_strided_slice %37 {offsets = [0, 384], sizes = [5, 64], strides = [1, 1]} : vector<5x1152xf32> to vector<5x64xf32>
    %41 = arith.truncf %40 : vector<5x64xf32> to vector<5x64xbf16>
    %42 = vector.extract_strided_slice %37 {offsets = [0, 768], sizes = [5, 64], strides = [1, 1]} : vector<5x1152xf32> to vector<5x64xf32>
    %43 = arith.truncf %42 : vector<5x64xf32> to vector<5x64xbf16>
    %cst_19 = arith.constant dense<0.000000e+00> : vector<5x5xf32>
    %44 = tpu.matmul %39, %41, %cst_19 {dimension_numbers = #tpu.dot_dimension_numbers<[1], [1], [0], [0], [0, 0, 1, 0], [], []>} : vector<5x64xbf16>, vector<5x64xbf16>, vector<5x5xf32> -> vector<5x5xf32>
    %cst_20 = arith.constant 1.250000e-01 : f32
    %45 = vector.broadcast %cst_20 : f32 to vector<5x5xf32>
    %46 = arith.mulf %44, %45 : vector<5x5xf32>
    %cst_21 = arith.constant dense<0xFF800000> : vector<5xf32>
    %47 = vector.multi_reduction <maximumf>, %46, %cst_21 [1] : vector<5x5xf32> to vector<5xf32>
    %48 = vector.shape_cast %47 : vector<5xf32> to vector<5x1xf32>
    %49 = vector.broadcast %48 : vector<5x1xf32> to vector<5x5xf32>
    %50 = arith.subf %46, %49 : vector<5x5xf32>
    %51 = math.exp %50 : vector<5x5xf32>
    %cst_22 = arith.constant dense<0.000000e+00> : vector<5xf32>
    %52 = vector.multi_reduction <add>, %51, %cst_22 [1] : vector<5x5xf32> to vector<5xf32>
    %53 = vector.shape_cast %52 : vector<5xf32> to vector<5x1xf32>
    %54 = tpu.reciprocal %53 {approx = true} : vector<5x1xf32> -> vector<5x1xf32>
    %55 = vector.broadcast %54 : vector<5x1xf32> to vector<5x5xf32>
    %56 = arith.mulf %51, %55 : vector<5x5xf32>
    %57 = arith.truncf %56 : vector<5x5xf32> to vector<5x5xbf16>
    %cst_23 = arith.constant dense<0.000000e+00> : vector<5x64xf32>
    %58 = tpu.matmul %57, %43, %cst_23 {dimension_numbers = #tpu.dot_dimension_numbers<[1], [0], [0], [1], [0, 0, 1, 1], [], []>} : vector<5x5xbf16>, vector<5x64xbf16>, vector<5x64xf32> -> vector<5x64xf32>
    %59 = vector.extract_strided_slice %37 {offsets = [0, 64], sizes = [5, 64], strides = [1, 1]} : vector<5x1152xf32> to vector<5x64xf32>
    %60 = arith.truncf %59 : vector<5x64xf32> to vector<5x64xbf16>
    %61 = vector.extract_strided_slice %37 {offsets = [0, 448], sizes = [5, 64], strides = [1, 1]} : vector<5x1152xf32> to vector<5x64xf32>
    %62 = arith.truncf %61 : vector<5x64xf32> to vector<5x64xbf16>
    %63 = vector.extract_strided_slice %37 {offsets = [0, 832], sizes = [5, 64], strides = [1, 1]} : vector<5x1152xf32> to vector<5x64xf32>
    %64 = arith.truncf %63 : vector<5x64xf32> to vector<5x64xbf16>
    %cst_24 = arith.constant dense<0.000000e+00> : vector<5x5xf32>
    %65 = tpu.matmul %60, %62, %cst_24 {dimension_numbers = #tpu.dot_dimension_numbers<[1], [1], [0], [0], [0, 0, 1, 0], [], []>} : vector<5x64xbf16>, vector<5x64xbf16>, vector<5x5xf32> -> vector<5x5xf32>
    %cst_25 = arith.constant 1.250000e-01 : f32
    %66 = vector.broadcast %cst_25 : f32 to vector<5x5xf32>
    %67 = arith.mulf %65, %66 : vector<5x5xf32>
    %cst_26 = arith.constant dense<0xFF800000> : vector<5xf32>
    %68 = vector.multi_reduction <maximumf>, %67, %cst_26 [1] : vector<5x5xf32> to vector<5xf32>
    %69 = vector.shape_cast %68 : vector<5xf32> to vector<5x1xf32>
    %70 = vector.broadcast %69 : vector<5x1xf32> to vector<5x5xf32>
    %71 = arith.subf %67, %70 : vector<5x5xf32>
    %72 = math.exp %71 : vector<5x5xf32>
    %cst_27 = arith.constant dense<0.000000e+00> : vector<5xf32>
    %73 = vector.multi_reduction <add>, %72, %cst_27 [1] : vector<5x5xf32> to vector<5xf32>
    %74 = vector.shape_cast %73 : vector<5xf32> to vector<5x1xf32>
    %75 = tpu.reciprocal %74 {approx = true} : vector<5x1xf32> -> vector<5x1xf32>
    %76 = vector.broadcast %75 : vector<5x1xf32> to vector<5x5xf32>
    %77 = arith.mulf %72, %76 : vector<5x5xf32>
    %78 = arith.truncf %77 : vector<5x5xf32> to vector<5x5xbf16>
    %cst_28 = arith.constant dense<0.000000e+00> : vector<5x64xf32>
    %79 = tpu.matmul %78, %64, %cst_28 {dimension_numbers = #tpu.dot_dimension_numbers<[1], [0], [0], [1], [0, 0, 1, 1], [], []>} : vector<5x5xbf16>, vector<5x64xbf16>, vector<5x64xf32> -> vector<5x64xf32>
    %80 = vector.extract_strided_slice %37 {offsets = [0, 128], sizes = [5, 64], strides = [1, 1]} : vector<5x1152xf32> to vector<5x64xf32>
    %81 = arith.truncf %80 : vector<5x64xf32> to vector<5x64xbf16>
    %82 = vector.extract_strided_slice %37 {offsets = [0, 512], sizes = [5, 64], strides = [1, 1]} : vector<5x1152xf32> to vector<5x64xf32>
    %83 = arith.truncf %82 : vector<5x64xf32> to vector<5x64xbf16>
    %84 = vector.extract_strided_slice %37 {offsets = [0, 896], sizes = [5, 64], strides = [1, 1]} : vector<5x1152xf32> to vector<5x64xf32>
    %85 = arith.truncf %84 : vector<5x64xf32> to vector<5x64xbf16>
    %cst_29 = arith.constant dense<0.000000e+00> : vector<5x5xf32>
    %86 = tpu.matmul %81, %83, %cst_29 {dimension_numbers = #tpu.dot_dimension_numbers<[1], [1], [0], [0], [0, 0, 1, 0], [], []>} : vector<5x64xbf16>, vector<5x64xbf16>, vector<5x5xf32> -> vector<5x5xf32>
    %cst_30 = arith.constant 1.250000e-01 : f32
    %87 = vector.broadcast %cst_30 : f32 to vector<5x5xf32>
    %88 = arith.mulf %86, %87 : vector<5x5xf32>
    %cst_31 = arith.constant dense<0xFF800000> : vector<5xf32>
    %89 = vector.multi_reduction <maximumf>, %88, %cst_31 [1] : vector<5x5xf32> to vector<5xf32>
    %90 = vector.shape_cast %89 : vector<5xf32> to vector<5x1xf32>
    %91 = vector.broadcast %90 : vector<5x1xf32> to vector<5x5xf32>
    %92 = arith.subf %88, %91 : vector<5x5xf32>
    %93 = math.exp %92 : vector<5x5xf32>
    %cst_32 = arith.constant dense<0.000000e+00> : vector<5xf32>
    %94 = vector.multi_reduction <add>, %93, %cst_32 [1] : vector<5x5xf32> to vector<5xf32>
    %95 = vector.shape_cast %94 : vector<5xf32> to vector<5x1xf32>
    %96 = tpu.reciprocal %95 {approx = true} : vector<5x1xf32> -> vector<5x1xf32>
    %97 = vector.broadcast %96 : vector<5x1xf32> to vector<5x5xf32>
    %98 = arith.mulf %93, %97 : vector<5x5xf32>
    %99 = arith.truncf %98 : vector<5x5xf32> to vector<5x5xbf16>
    %cst_33 = arith.constant dense<0.000000e+00> : vector<5x64xf32>
    %100 = tpu.matmul %99, %85, %cst_33 {dimension_numbers = #tpu.dot_dimension_numbers<[1], [0], [0], [1], [0, 0, 1, 1], [], []>} : vector<5x5xbf16>, vector<5x64xbf16>, vector<5x64xf32> -> vector<5x64xf32>
    %101 = vector.extract_strided_slice %37 {offsets = [0, 192], sizes = [5, 64], strides = [1, 1]} : vector<5x1152xf32> to vector<5x64xf32>
    %102 = arith.truncf %101 : vector<5x64xf32> to vector<5x64xbf16>
    %103 = vector.extract_strided_slice %37 {offsets = [0, 576], sizes = [5, 64], strides = [1, 1]} : vector<5x1152xf32> to vector<5x64xf32>
    %104 = arith.truncf %103 : vector<5x64xf32> to vector<5x64xbf16>
    %105 = vector.extract_strided_slice %37 {offsets = [0, 960], sizes = [5, 64], strides = [1, 1]} : vector<5x1152xf32> to vector<5x64xf32>
    %106 = arith.truncf %105 : vector<5x64xf32> to vector<5x64xbf16>
    %cst_34 = arith.constant dense<0.000000e+00> : vector<5x5xf32>
    %107 = tpu.matmul %102, %104, %cst_34 {dimension_numbers = #tpu.dot_dimension_numbers<[1], [1], [0], [0], [0, 0, 1, 0], [], []>} : vector<5x64xbf16>, vector<5x64xbf16>, vector<5x5xf32> -> vector<5x5xf32>
    %cst_35 = arith.constant 1.250000e-01 : f32
    %108 = vector.broadcast %cst_35 : f32 to vector<5x5xf32>
    %109 = arith.mulf %107, %108 : vector<5x5xf32>
    %cst_36 = arith.constant dense<0xFF800000> : vector<5xf32>
    %110 = vector.multi_reduction <maximumf>, %109, %cst_36 [1] : vector<5x5xf32> to vector<5xf32>
    %111 = vector.shape_cast %110 : vector<5xf32> to vector<5x1xf32>
    %112 = vector.broadcast %111 : vector<5x1xf32> to vector<5x5xf32>
    %113 = arith.subf %109, %112 : vector<5x5xf32>
    %114 = math.exp %113 : vector<5x5xf32>
    %cst_37 = arith.constant dense<0.000000e+00> : vector<5xf32>
    %115 = vector.multi_reduction <add>, %114, %cst_37 [1] : vector<5x5xf32> to vector<5xf32>
    %116 = vector.shape_cast %115 : vector<5xf32> to vector<5x1xf32>
    %117 = tpu.reciprocal %116 {approx = true} : vector<5x1xf32> -> vector<5x1xf32>
    %118 = vector.broadcast %117 : vector<5x1xf32> to vector<5x5xf32>
    %119 = arith.mulf %114, %118 : vector<5x5xf32>
    %120 = arith.truncf %119 : vector<5x5xf32> to vector<5x5xbf16>
    %cst_38 = arith.constant dense<0.000000e+00> : vector<5x64xf32>
    %121 = tpu.matmul %120, %106, %cst_38 {dimension_numbers = #tpu.dot_dimension_numbers<[1], [0], [0], [1], [0, 0, 1, 1], [], []>} : vector<5x5xbf16>, vector<5x64xbf16>, vector<5x64xf32> -> vector<5x64xf32>
    %122 = vector.extract_strided_slice %37 {offsets = [0, 256], sizes = [5, 64], strides = [1, 1]} : vector<5x1152xf32> to vector<5x64xf32>
    %123 = arith.truncf %122 : vector<5x64xf32> to vector<5x64xbf16>
    %124 = vector.extract_strided_slice %37 {offsets = [0, 640], sizes = [5, 64], strides = [1, 1]} : vector<5x1152xf32> to vector<5x64xf32>
    %125 = arith.truncf %124 : vector<5x64xf32> to vector<5x64xbf16>
    %126 = vector.extract_strided_slice %37 {offsets = [0, 1024], sizes = [5, 64], strides = [1, 1]} : vector<5x1152xf32> to vector<5x64xf32>
    %127 = arith.truncf %126 : vector<5x64xf32> to vector<5x64xbf16>
    %cst_39 = arith.constant dense<0.000000e+00> : vector<5x5xf32>
    %128 = tpu.matmul %123, %125, %cst_39 {dimension_numbers = #tpu.dot_dimension_numbers<[1], [1], [0], [0], [0, 0, 1, 0], [], []>} : vector<5x64xbf16>, vector<5x64xbf16>, vector<5x5xf32> -> vector<5x5xf32>
    %cst_40 = arith.constant 1.250000e-01 : f32
    %129 = vector.broadcast %cst_40 : f32 to vector<5x5xf32>
    %130 = arith.mulf %128, %129 : vector<5x5xf32>
    %cst_41 = arith.constant dense<0xFF800000> : vector<5xf32>
    %131 = vector.multi_reduction <maximumf>, %130, %cst_41 [1] : vector<5x5xf32> to vector<5xf32>
    %132 = vector.shape_cast %131 : vector<5xf32> to vector<5x1xf32>
    %133 = vector.broadcast %132 : vector<5x1xf32> to vector<5x5xf32>
    %134 = arith.subf %130, %133 : vector<5x5xf32>
    %135 = math.exp %134 : vector<5x5xf32>
    %cst_42 = arith.constant dense<0.000000e+00> : vector<5xf32>
    %136 = vector.multi_reduction <add>, %135, %cst_42 [1] : vector<5x5xf32> to vector<5xf32>
    %137 = vector.shape_cast %136 : vector<5xf32> to vector<5x1xf32>
    %138 = tpu.reciprocal %137 {approx = true} : vector<5x1xf32> -> vector<5x1xf32>
    %139 = vector.broadcast %138 : vector<5x1xf32> to vector<5x5xf32>
    %140 = arith.mulf %135, %139 : vector<5x5xf32>
    %141 = arith.truncf %140 : vector<5x5xf32> to vector<5x5xbf16>
    %cst_43 = arith.constant dense<0.000000e+00> : vector<5x64xf32>
    %142 = tpu.matmul %141, %127, %cst_43 {dimension_numbers = #tpu.dot_dimension_numbers<[1], [0], [0], [1], [0, 0, 1, 1], [], []>} : vector<5x5xbf16>, vector<5x64xbf16>, vector<5x64xf32> -> vector<5x64xf32>
    %143 = vector.extract_strided_slice %37 {offsets = [0, 320], sizes = [5, 64], strides = [1, 1]} : vector<5x1152xf32> to vector<5x64xf32>
    %144 = arith.truncf %143 : vector<5x64xf32> to vector<5x64xbf16>
    %145 = vector.extract_strided_slice %37 {offsets = [0, 704], sizes = [5, 64], strides = [1, 1]} : vector<5x1152xf32> to vector<5x64xf32>
    %146 = arith.truncf %145 : vector<5x64xf32> to vector<5x64xbf16>
    %147 = vector.extract_strided_slice %37 {offsets = [0, 1088], sizes = [5, 64], strides = [1, 1]} : vector<5x1152xf32> to vector<5x64xf32>
    %148 = arith.truncf %147 : vector<5x64xf32> to vector<5x64xbf16>
    %cst_44 = arith.constant dense<0.000000e+00> : vector<5x5xf32>
    %149 = tpu.matmul %144, %146, %cst_44 {dimension_numbers = #tpu.dot_dimension_numbers<[1], [1], [0], [0], [0, 0, 1, 0], [], []>} : vector<5x64xbf16>, vector<5x64xbf16>, vector<5x5xf32> -> vector<5x5xf32>
    %cst_45 = arith.constant 1.250000e-01 : f32
    %150 = vector.broadcast %cst_45 : f32 to vector<5x5xf32>
    %151 = arith.mulf %149, %150 : vector<5x5xf32>
    %cst_46 = arith.constant dense<0xFF800000> : vector<5xf32>
    %152 = vector.multi_reduction <maximumf>, %151, %cst_46 [1] : vector<5x5xf32> to vector<5xf32>
    %153 = vector.shape_cast %152 : vector<5xf32> to vector<5x1xf32>
    %154 = vector.broadcast %153 : vector<5x1xf32> to vector<5x5xf32>
    %155 = arith.subf %151, %154 : vector<5x5xf32>
    %156 = math.exp %155 : vector<5x5xf32>
    %cst_47 = arith.constant dense<0.000000e+00> : vector<5xf32>
    %157 = vector.multi_reduction <add>, %156, %cst_47 [1] : vector<5x5xf32> to vector<5xf32>
    %158 = vector.shape_cast %157 : vector<5xf32> to vector<5x1xf32>
    %159 = tpu.reciprocal %158 {approx = true} : vector<5x1xf32> -> vector<5x1xf32>
    %160 = vector.broadcast %159 : vector<5x1xf32> to vector<5x5xf32>
    %161 = arith.mulf %156, %160 : vector<5x5xf32>
    %162 = arith.truncf %161 : vector<5x5xf32> to vector<5x5xbf16>
    %cst_48 = arith.constant dense<0.000000e+00> : vector<5x64xf32>
    %163 = tpu.matmul %162, %148, %cst_48 {dimension_numbers = #tpu.dot_dimension_numbers<[1], [0], [0], [1], [0, 0, 1, 1], [], []>} : vector<5x5xbf16>, vector<5x64xbf16>, vector<5x64xf32> -> vector<5x64xf32>
    %164 = tpu.concatenate %58, %79, %100, %121, %142, %163 in 1 : vector<5x64xf32>, vector<5x64xf32>, vector<5x64xf32>, vector<5x64xf32>, vector<5x64xf32>, vector<5x64xf32> -> vector<5x384xf32>
    %165 = arith.truncf %164 : vector<5x384xf32> to vector<5x384xbf16>
    %c0_49 = arith.constant 0 : index
    %c0_50 = arith.constant 0 : index
    %c0_51 = arith.constant 0 : index
    %166 = vector.load %arg7[%c0_49, %c0_50, %c0_51] : memref<1x384x384xbf16, #tpu.memory_space<vmem>>, vector<1x384x384xbf16>
    %167 = vector.shape_cast %166 : vector<1x384x384xbf16> to vector<384x384xbf16>
    %cst_52 = arith.constant dense<0.000000e+00> : vector<5x384xf32>
    %168 = tpu.matmul %165, %167, %cst_52 {dimension_numbers = #tpu.dot_dimension_numbers<[1], [0], [0], [1], [0, 0, 1, 1], [], []>} : vector<5x384xbf16>, vector<384x384xbf16>, vector<5x384xf32> -> vector<5x384xf32>
    %c0_53 = arith.constant 0 : index
    %c0_54 = arith.constant 0 : index
    %c0_55 = arith.constant 0 : index
    %169 = vector.load %arg8[%c0_53, %c0_54, %c0_55] : memref<1x1x384xf32, #tpu.memory_space<vmem>>, vector<1x1x384xf32>
    %170 = vector.shape_cast %169 : vector<1x1x384xf32> to vector<1x384xf32>
    %171 = vector.broadcast %170 : vector<1x384xf32> to vector<5x384xf32>
    %172 = arith.addf %168, %171 : vector<5x384xf32>
    %c0_56 = arith.constant 0 : index
    %c0_57 = arith.constant 0 : index
    %c0_58 = arith.constant 0 : index
    %173 = vector.load %arg9[%c0_56, %c0_57, %c0_58] : memref<1x1x384xf32, #tpu.memory_space<vmem>>, vector<1x1x384xf32>
    %174 = vector.shape_cast %173 : vector<1x1x384xf32> to vector<1x384xf32>
    %175 = vector.broadcast %174 : vector<1x384xf32> to vector<5x384xf32>
    %176 = arith.mulf %172, %175 : vector<5x384xf32>
    %177 = arith.addf %3, %176 : vector<5x384xf32>
    %c0_59 = arith.constant 0 : index
    %c0_60 = arith.constant 0 : index
    %c0_61 = arith.constant 0 : index
    %178 = vector.load %arg10[%c0_59, %c0_60, %c0_61] : memref<1x1x384xf32, #tpu.memory_space<vmem>>, vector<1x1x384xf32>
    %179 = vector.shape_cast %178 : vector<1x1x384xf32> to vector<1x384xf32>
    %c0_62 = arith.constant 0 : index
    %c0_63 = arith.constant 0 : index
    %c0_64 = arith.constant 0 : index
    %180 = vector.load %arg11[%c0_62, %c0_63, %c0_64] : memref<1x1x384xf32, #tpu.memory_space<vmem>>, vector<1x1x384xf32>
    %181 = vector.shape_cast %180 : vector<1x1x384xf32> to vector<1x384xf32>
    %cst_65 = arith.constant dense<0.000000e+00> : vector<5xf32>
    %182 = vector.multi_reduction <add>, %177, %cst_65 [1] : vector<5x384xf32> to vector<5xf32>
    %183 = vector.shape_cast %182 : vector<5xf32> to vector<5x1xf32>
    %cst_66 = arith.constant 3.840000e+02 : f32
    %184 = vector.broadcast %cst_66 : f32 to vector<5x1xf32>
    %185 = arith.divf %183, %184 : vector<5x1xf32>
    %186 = arith.mulf %177, %177 : vector<5x384xf32>
    %cst_67 = arith.constant dense<0.000000e+00> : vector<5xf32>
    %187 = vector.multi_reduction <add>, %186, %cst_67 [1] : vector<5x384xf32> to vector<5xf32>
    %188 = vector.shape_cast %187 : vector<5xf32> to vector<5x1xf32>
    %cst_68 = arith.constant 3.840000e+02 : f32
    %189 = vector.broadcast %cst_68 : f32 to vector<5x1xf32>
    %190 = arith.divf %188, %189 : vector<5x1xf32>
    %191 = arith.mulf %185, %185 : vector<5x1xf32>
    %192 = arith.subf %190, %191 : vector<5x1xf32>
    %193 = vector.broadcast %185 : vector<5x1xf32> to vector<5x384xf32>
    %194 = arith.subf %177, %193 : vector<5x384xf32>
    %cst_69 = arith.constant 9.99999997E-7 : f32
    %195 = vector.broadcast %cst_69 : f32 to vector<5x1xf32>
    %196 = arith.addf %192, %195 : vector<5x1xf32>
    %197 = math.rsqrt %196 : vector<5x1xf32>
    %198 = vector.broadcast %197 : vector<5x1xf32> to vector<5x384xf32>
    %199 = arith.mulf %194, %198 : vector<5x384xf32>
    %200 = vector.broadcast %179 : vector<1x384xf32> to vector<5x384xf32>
    %201 = arith.mulf %199, %200 : vector<5x384xf32>
    %202 = vector.broadcast %181 : vector<1x384xf32> to vector<5x384xf32>
    %203 = arith.addf %201, %202 : vector<5x384xf32>
    %204 = arith.truncf %203 : vector<5x384xf32> to vector<5x384xbf16>
    %c0_70 = arith.constant 0 : index
    %c0_71 = arith.constant 0 : index
    %c0_72 = arith.constant 0 : index
    %205 = vector.load %arg12[%c0_70, %c0_71, %c0_72] : memref<1x384x1536xbf16, #tpu.memory_space<vmem>>, vector<1x384x1536xbf16>
    %206 = vector.shape_cast %205 : vector<1x384x1536xbf16> to vector<384x1536xbf16>
    %cst_73 = arith.constant dense<0.000000e+00> : vector<5x1536xf32>
    %207 = tpu.matmul %204, %206, %cst_73 {dimension_numbers = #tpu.dot_dimension_numbers<[1], [0], [0], [1], [0, 0, 1, 1], [], []>} : vector<5x384xbf16>, vector<384x1536xbf16>, vector<5x1536xf32> -> vector<5x1536xf32>
    %c0_74 = arith.constant 0 : index
    %c0_75 = arith.constant 0 : index
    %c0_76 = arith.constant 0 : index
    %208 = vector.load %arg13[%c0_74, %c0_75, %c0_76] : memref<1x1x1536xf32, #tpu.memory_space<vmem>>, vector<1x1x1536xf32>
    %209 = vector.shape_cast %208 : vector<1x1x1536xf32> to vector<1x1536xf32>
    %210 = vector.broadcast %209 : vector<1x1536xf32> to vector<5x1536xf32>
    %211 = arith.addf %207, %210 : vector<5x1536xf32>
    %212 = arith.mulf %211, %211 : vector<5x1536xf32>
    %213 = arith.mulf %211, %212 : vector<5x1536xf32>
    %cst_77 = arith.constant 4.471500e-02 : f32
    %214 = vector.broadcast %cst_77 : f32 to vector<5x1536xf32>
    %215 = arith.mulf %214, %213 : vector<5x1536xf32>
    %216 = arith.addf %211, %215 : vector<5x1536xf32>
    %cst_78 = arith.constant 0.797884583 : f32
    %217 = vector.broadcast %cst_78 : f32 to vector<5x1536xf32>
    %218 = arith.mulf %217, %216 : vector<5x1536xf32>
    %219 = math.tanh %218 : vector<5x1536xf32>
    %cst_79 = arith.constant 1.000000e+00 : f32
    %220 = vector.broadcast %cst_79 : f32 to vector<5x1536xf32>
    %221 = arith.addf %220, %219 : vector<5x1536xf32>
    %cst_80 = arith.constant 5.000000e-01 : f32
    %222 = vector.broadcast %cst_80 : f32 to vector<5x1536xf32>
    %223 = arith.mulf %222, %221 : vector<5x1536xf32>
    %224 = arith.mulf %211, %223 : vector<5x1536xf32>
    %225 = arith.truncf %224 : vector<5x1536xf32> to vector<5x1536xbf16>
    %c0_81 = arith.constant 0 : index
    %c0_82 = arith.constant 0 : index
    %c0_83 = arith.constant 0 : index
    %226 = vector.load %arg14[%c0_81, %c0_82, %c0_83] : memref<1x1536x384xbf16, #tpu.memory_space<vmem>>, vector<1x1536x384xbf16>
    %227 = vector.shape_cast %226 : vector<1x1536x384xbf16> to vector<1536x384xbf16>
    %cst_84 = arith.constant dense<0.000000e+00> : vector<5x384xf32>
    %228 = tpu.matmul %225, %227, %cst_84 {dimension_numbers = #tpu.dot_dimension_numbers<[1], [0], [0], [1], [0, 0, 1, 1], [], []>} : vector<5x1536xbf16>, vector<1536x384xbf16>, vector<5x384xf32> -> vector<5x384xf32>
    %c0_85 = arith.constant 0 : index
    %c0_86 = arith.constant 0 : index
    %c0_87 = arith.constant 0 : index
    %229 = vector.load %arg15[%c0_85, %c0_86, %c0_87] : memref<1x1x384xf32, #tpu.memory_space<vmem>>, vector<1x1x384xf32>
    %230 = vector.shape_cast %229 : vector<1x1x384xf32> to vector<1x384xf32>
    %231 = vector.broadcast %230 : vector<1x384xf32> to vector<5x384xf32>
    %232 = arith.addf %228, %231 : vector<5x384xf32>
    %c0_88 = arith.constant 0 : index
    %c0_89 = arith.constant 0 : index
    %c0_90 = arith.constant 0 : index
    %233 = vector.load %arg16[%c0_88, %c0_89, %c0_90] : memref<1x1x384xf32, #tpu.memory_space<vmem>>, vector<1x1x384xf32>
    %234 = vector.shape_cast %233 : vector<1x1x384xf32> to vector<1x384xf32>
    %235 = vector.broadcast %234 : vector<1x384xf32> to vector<5x384xf32>
    %236 = arith.mulf %232, %235 : vector<5x384xf32>
    %237 = arith.addf %177, %236 : vector<5x384xf32>
    %c0_91 = arith.constant 0 : index
    %c0_92 = arith.constant 0 : index
    %238 = vector.load %arg18[%c0_91, %c0_92] : memref<5x384xf32, #tpu.memory_space<vmem>>, vector<5x384xf32>
    tpu.vector_store %arg18[%c0_91, %c0_92], %237 {strides = array<i32>} : memref<5x384xf32, #tpu.memory_space<vmem>>, vector<5x384xf32>,
    %c1_i32 = arith.constant 1 : i32
    %239 = arith.cmpi eq, %arg1, %c1_i32 : i32
    %240 = arith.extui %239 : i1 to i32
    %c0_i32_93 = arith.constant 0 : i32
    %241 = arith.cmpi ne, %240, %c0_i32_93 : i32
    scf.if %241 {
      %c0_94 = arith.constant 0 : index
      %c0_95 = arith.constant 0 : index
      %c0_96 = arith.constant 0 : index
      %242 = vector.load %arg17[%c0_94, %c0_95, %c0_96] : memref<1x5x384xf32, #tpu.memory_space<vmem>>, vector<1x5x384xf32>
      %243 = vector.shape_cast %242 : vector<1x5x384xf32> to vector<5x384xf32>
      %244 = vector.shape_cast %237 : vector<5x384xf32> to vector<1x5x384xf32>
      tpu.vector_store %arg17[%c0_94, %c0_95, %c0_96], %244 {strides = array<i32>} : memref<1x5x384xf32, #tpu.memory_space<vmem>>, vector<1x5x384xf32>,
    } else {
    }
    return
  }
  func.func @transform_0(%arg0: i32, %arg1: i32) -> (i32, i32, i32) {
    %c0_i32 = arith.constant 0 : i32
    %c0_i32_0 = arith.constant 0 : i32
    %c0_i32_1 = arith.constant 0 : i32
    return %arg0, %c0_i32, %c0_i32_0 : i32, i32, i32
  }
  func.func @transform_1(%arg0: i32, %arg1: i32) -> (i32, i32, i32) {
    %c0_i32 = arith.constant 0 : i32
    %c0_i32_0 = arith.constant 0 : i32
    %c0_i32_1 = arith.constant 0 : i32
    return %arg1, %c0_i32, %c0_i32_0 : i32, i32, i32
  }
  func.func @transform_2(%arg0: i32, %arg1: i32) -> (i32, i32, i32) {
    %c0_i32 = arith.constant 0 : i32
    %c0_i32_0 = arith.constant 0 : i32
    %c0_i32_1 = arith.constant 0 : i32
    return %arg1, %c0_i32, %c0_i32_0 : i32, i32, i32
  }
  func.func @transform_3(%arg0: i32, %arg1: i32) -> (i32, i32, i32) {
    %c0_i32 = arith.constant 0 : i32
    %c0_i32_0 = arith.constant 0 : i32
    %c0_i32_1 = arith.constant 0 : i32
    return %arg1, %c0_i32, %c0_i32_0 : i32, i32, i32
  }
  func.func @transform_4(%arg0: i32, %arg1: i32) -> (i32, i32, i32) {
    %c0_i32 = arith.constant 0 : i32
    %c0_i32_0 = arith.constant 0 : i32
    %c0_i32_1 = arith.constant 0 : i32
    return %arg1, %c0_i32, %c0_i32_0 : i32, i32, i32
  }
  func.func @transform_5(%arg0: i32, %arg1: i32) -> (i32, i32, i32) {
    %c0_i32 = arith.constant 0 : i32
    %c0_i32_0 = arith.constant 0 : i32
    %c0_i32_1 = arith.constant 0 : i32
    return %arg1, %c0_i32, %c0_i32_0 : i32, i32, i32
  }
  func.func @transform_6(%arg0: i32, %arg1: i32) -> (i32, i32, i32) {
    %c0_i32 = arith.constant 0 : i32
    %c0_i32_0 = arith.constant 0 : i32
    %c0_i32_1 = arith.constant 0 : i32
    return %arg1, %c0_i32, %c0_i32_0 : i32, i32, i32
  }
  func.func @transform_7(%arg0: i32, %arg1: i32) -> (i32, i32, i32) {
    %c0_i32 = arith.constant 0 : i32
    %c0_i32_0 = arith.constant 0 : i32
    %c0_i32_1 = arith.constant 0 : i32
    return %arg1, %c0_i32, %c0_i32_0 : i32, i32, i32
  }
  func.func @transform_8(%arg0: i32, %arg1: i32) -> (i32, i32, i32) {
    %c0_i32 = arith.constant 0 : i32
    %c0_i32_0 = arith.constant 0 : i32
    %c0_i32_1 = arith.constant 0 : i32
    return %arg1, %c0_i32, %c0_i32_0 : i32, i32, i32
  }
  func.func @transform_9(%arg0: i32, %arg1: i32) -> (i32, i32, i32) {
    %c0_i32 = arith.constant 0 : i32
    %c0_i32_0 = arith.constant 0 : i32
    %c0_i32_1 = arith.constant 0 : i32
    return %arg1, %c0_i32, %c0_i32_0 : i32, i32, i32
  }
  func.func @transform_10(%arg0: i32, %arg1: i32) -> (i32, i32, i32) {
    %c0_i32 = arith.constant 0 : i32
    %c0_i32_0 = arith.constant 0 : i32
    %c0_i32_1 = arith.constant 0 : i32
    return %arg1, %c0_i32, %c0_i32_0 : i32, i32, i32
  }
  func.func @transform_11(%arg0: i32, %arg1: i32) -> (i32, i32, i32) {
    %c0_i32 = arith.constant 0 : i32
    %c0_i32_0 = arith.constant 0 : i32
    %c0_i32_1 = arith.constant 0 : i32
    return %arg1, %c0_i32, %c0_i32_0 : i32, i32, i32
  }
  func.func @transform_12(%arg0: i32, %arg1: i32) -> (i32, i32, i32) {
    %c0_i32 = arith.constant 0 : i32
    %c0_i32_0 = arith.constant 0 : i32
    %c0_i32_1 = arith.constant 0 : i32
    return %arg1, %c0_i32, %c0_i32_0 : i32, i32, i32
  }
  func.func @transform_13(%arg0: i32, %arg1: i32) -> (i32, i32, i32) {
    %c0_i32 = arith.constant 0 : i32
    %c0_i32_0 = arith.constant 0 : i32
    %c0_i32_1 = arith.constant 0 : i32
    return %arg1, %c0_i32, %c0_i32_0 : i32, i32, i32
  }
  func.func @transform_14(%arg0: i32, %arg1: i32) -> (i32, i32, i32) {
    %c0_i32 = arith.constant 0 : i32
    %c0_i32_0 = arith.constant 0 : i32
    %c0_i32_1 = arith.constant 0 : i32
    return %arg1, %c0_i32, %c0_i32_0 : i32, i32, i32
  }
  func.func @transform_15(%arg0: i32, %arg1: i32) -> (i32, i32, i32) {
    %c0_i32 = arith.constant 0 : i32
    %c0_i32_0 = arith.constant 0 : i32
    %c0_i32_1 = arith.constant 0 : i32
    return %arg0, %c0_i32, %c0_i32_0 : i32, i32, i32
  }
}

</mosaic_0001>

<llo_original>
// kernel: dino_embedder_forward.5
$region0: #{dino_embedder_forward.5}
  #allocation0 [shape = 'u32[]', space=smem, size = 0x4, offset = 0x4, fixed_abs, tag = 'smem constant byte address 0x4 - core index']
  #allocation1 [shape = 'u32[144,128]{1,0:T(1,128)}', space=vmem, size = 0x12000, scoped, tag = 'internal scratch']
  %s0 = inlined_call_operand.vmem [shape: f32[2,384], index: 0, kind: input, shape index: {}]
  %s1 = inlined_call_operand.vmem [shape: f32[1,384], index: 1, kind: input, shape index: {}]
  %s2 = inlined_call_operand.vmem [shape: f32[1,384], index: 2, kind: input, shape index: {}]
  %s3 = inlined_call_operand.vmem [shape: bf16[384,512], index: 3, kind: input, shape index: {}]
  %s4 = inlined_call_operand.vmem [shape: f32[1,512], index: 4, kind: input, shape index: {}]
  %s5 = inlined_call_operand.hbm [shape: f32[2,512], index: 5, kind: output, shape index: {}]
  %s6 = sld [smem:[#allocation0]]
  $region30: #{dino_embedder_forward.5} parent=0
    _
  %s8 = ssub.s32 1, %s6
  %s9 = scalar_select 0, %s8, %s6
  $region1: #{dino_embedder_forward.5} parent=0
    #allocation2 [shape = 'u8[4096]{0}', space=vmem, size = 0x1000, scoped, tag = 'output window, operand 0, single buffered']
    #allocation3 [shape = 's32[1]{0}', space=sflag, size = 0x4, scoped, tag = 'scoped memory for dino_embedder_forward.5']
    %10 = vsyncpa [#allocation3], 0
    // Predicated region
    $region2: #{dino_embedder_forward.5} parent=1 // pred_check
      _
    $region3: #{dino_embedder_forward.5} parent=1 // pred_check_branch
      %12 = sbr.rel (0) target = $region5
    $region4: #{dino_embedder_forward.5} parent=1 // pred_region
      _
    $region5: #{dino_embedder_forward.5} parent=1 // pred_fallthru
      _
    // Predicated region
    $region6: #{dino_embedder_forward.5} parent=1 // pred_check
      _
    $region7: #{dino_embedder_forward.5} parent=1 // pred_check_branch
      %14 = sbr.rel (0) target = $region9
    $region8: #{dino_embedder_forward.5} parent=1 // pred_region
      _
    $region9: #{dino_embedder_forward.5} parent=1 // pred_fallthru
      _
    // Predicated region
    $region10: #{dino_embedder_forward.5} parent=1 // pred_check
      _
    $region11: #{dino_embedder_forward.5} parent=1 // pred_check_branch
      %16 = sbr.rel (0) target = $region13
    $region12: #{dino_embedder_forward.5} parent=1 // pred_region
      _
    $region13: #{dino_embedder_forward.5} parent=1 // pred_fallthru
      _
    // Predicated region
    $region14: #{dino_embedder_forward.5} parent=1 // pred_check
      _
    $region15: #{dino_embedder_forward.5} parent=1 // pred_check_branch
      %18 = sbr.rel (0) target = $region17
    $region16: #{dino_embedder_forward.5} parent=1 // pred_region
      _
    $region17: #{dino_embedder_forward.5} parent=1 // pred_fallthru
      _
    // Predicated region
    $region18: #{dino_embedder_forward.5} parent=1 // pred_check
      _
    $region19: #{dino_embedder_forward.5} parent=1 // pred_check_branch
      %20 = sbr.rel (0) target = $region21
    $region20: #{dino_embedder_forward.5} parent=1 // pred_region
      _
    $region21: #{dino_embedder_forward.5} parent=1 // pred_fallthru
      _
    %v22 = vld [vmem:[%s0] sm:$0x3f]
    %v23 = vld [vmem:[%s1] sm:$0x7]
    %v24 = vld [vmem:[%s2] sm:$0x7]
    %v26 = vcombine.high %v22, %v22
    %v28 = vunpack.c.l.s4 1983009808
    %v29 = vunpack.c.0.s8 %v28
    %v30 = vlaneseq
    %v31 = vshrl.u32 %v30, 7
    %v32 = vsub.s32 %v29, %v31
    %v33 = vrot.slane %v22, %v32
    %v35 = vunpack.c.l.s4 1983009808
    %v36 = vunpack.c.0.s8 %v35
    %v37 = vlaneseq
    %v38 = vshrl.u32 %v37, 7
    %v39 = vsub.s32 %v36, %v38
    %v40 = vrot.slane %v26, %v39
    %v41 = vcombine.high %v33, %v33
    %vm45 = vcmask 1041408
    %v46 = vsel %vm45, %v33, 0.0
    %v47 = vsel %vm45, %v41, 0.0
    %v48 = vadd.f32 %v46, %v47
    %v49 = vsel %vm45, %v40, 0.0
    %v50 = vadd.f32 %v48, %v49
    %51 = vadd.xlane.f32.xlu0 %v50
    %v52 = vpop.xlane.xlu0 %51
    %v53 = vrcp.pop 384.0
    %v54 = vmul.f32 %v52, %v53
    %v55 = vmul.f32 %v22, %v22
    %v57 = vcombine.high %v55, %v55
    %v59 = vunpack.c.l.s4 1983009808
    %v60 = vunpack.c.0.s8 %v59
    %v61 = vlaneseq
    %v62 = vshrl.u32 %v61, 7
    %v63 = vsub.s32 %v60, %v62
    %v64 = vrot.slane %v55, %v63
    %v66 = vunpack.c.l.s4 1983009808
    %v67 = vunpack.c.0.s8 %v66
    %v68 = vlaneseq
    %v69 = vshrl.u32 %v68, 7
    %v70 = vsub.s32 %v67, %v69
    %v71 = vrot.slane %v57, %v70
    %v72 = vcombine.high %v64, %v64
    %v76 = vsel %vm45, %v64, 0.0
    %v77 = vsel %vm45, %v72, 0.0
    %v78 = vadd.f32 %v76, %v77
    %v79 = vsel %vm45, %v71, 0.0
    %v80 = vadd.f32 %v78, %v79
    %81 = vadd.xlane.f32.xlu0 %v80
    %v82 = vpop.xlane.xlu0 %81
    %v83 = vmul.f32 %v82, %v53
    %v84 = vmul.f32 %v54, %v54
    %v85 = vsub.f32 %v83, %v84
    %v88 = vunpack.c.l.s4 269488144
    %v89 = vunpack.c.0.s8 %v88
    %v90 = vlaneseq
    %v91 = vshrl.u32 %v90, 7
    %v92 = vsub.s32 %v89, %v91
    %v93 = vrot.slane %v54, %v92
    %v95 = vsub.f32 %v22, %v93
    %v96 = vadd.f32 %v85, 1e-06
    %v97 = vrsqrt.pop %v96
    %v100 = vunpack.c.l.s4 269488144
    %v101 = vunpack.c.0.s8 %v100
    %v102 = vlaneseq
    %v103 = vshrl.u32 %v102, 7
    %v104 = vsub.s32 %v101, %v103
    %v105 = vrot.slane %v97, %v104
    %v107 = vmul.f32 %v95, %v105
    %v109 = vlaneseq
    %v110 = vshrl.u32 %v109, 7
    %v111 = vsub.s32 0, %v110
    %v112 = vrot.slane %v23, %v111
    %v113 = vlaneseq
    %v114 = vshrl.u32 %v113, 7
    %v115 = vsub.s32 1, %v114
    %v116 = vrot.slane %v23, %v115
    %v117 = vlaneseq
    %v118 = vshrl.u32 %v117, 7
    %v119 = vsub.s32 2, %v118
    %v120 = vrot.slane %v23, %v119
    %v121 = vcombine.low %v112, %v116
    %v123 = vunpack.c.l.s4 1983009808
    %v124 = vunpack.c.0.s8 %v123
    %v125 = vlaneseq
    %v126 = vshrl.u32 %v125, 7
    %v127 = vsub.s32 %v124, %v126
    %v128 = vrot.slane %v121, %v127
    %v130 = vunpack.c.l.s4 1983009808
    %v131 = vunpack.c.0.s8 %v130
    %v132 = vlaneseq
    %v133 = vshrl.u32 %v132, 7
    %v134 = vsub.s32 %v131, %v133
    %v135 = vrot.slane %v120, %v134
    %v136 = vcombine.low %v128, %v135
    %v138 = vmul.f32 %v107, %v136
    %v140 = vlaneseq
    %v141 = vshrl.u32 %v140, 7
    %v142 = vsub.s32 0, %v141
    %v143 = vrot.slane %v24, %v142
    %v144 = vlaneseq
    %v145 = vshrl.u32 %v144, 7
    %v146 = vsub.s32 1, %v145
    %v147 = vrot.slane %v24, %v146
    %v148 = vlaneseq
    %v149 = vshrl.u32 %v148, 7
    %v150 = vsub.s32 2, %v149
    %v151 = vrot.slane %v24, %v150
    %v152 = vcombine.low %v143, %v147
    %v154 = vunpack.c.l.s4 1983009808
    %v155 = vunpack.c.0.s8 %v154
    %v156 = vlaneseq
    %v157 = vshrl.u32 %v156, 7
    %v158 = vsub.s32 %v155, %v157
    %v159 = vrot.slane %v152, %v158
    %v161 = vunpack.c.l.s4 1983009808
    %v162 = vunpack.c.0.s8 %v161
    %v163 = vlaneseq
    %v164 = vshrl.u32 %v163, 7
    %v165 = vsub.s32 %v162, %v164
    %v166 = vrot.slane %v151, %v165
    %v167 = vcombine.low %v159, %v166
    %v169 = vadd.f32 %v138, %v167
    %v171 = vcombine.high %v169, %v169
    %v173 = vunpack.c.l.s4 1983009808
    %v174 = vunpack.c.0.s8 %v173
    %v175 = vlaneseq
    %v176 = vshrl.u32 %v175, 7
    %v177 = vsub.s32 %v174, %v176
    %v178 = vrot.slane %v169, %v177
    %v180 = vunpack.c.l.s4 1983009808
    %v181 = vunpack.c.0.s8 %v180
    %v182 = vlaneseq
    %v183 = vshrl.u32 %v182, 7
    %v184 = vsub.s32 %v181, %v183
    %v185 = vrot.slane %v171, %v184
    %v186 = vcombine.high %v178, %v178
    %v190 = vpack.c.bf16 %v178, %v178
    %v191 = vpack.c.bf16 %v186, %v186
    %v192 = vpack.c.bf16 %v185, %v185
    %v193 = vld [vmem:[%s3] sm:$0xff]
    %v194 = vld [vmem:[%s3 + $0x8] sm:$0xff]
    %v195 = vld [vmem:[%s3 + $0x10] sm:$0xff]
    %v196 = vld [vmem:[%s3 + $0x18] sm:$0xff]
    %v197 = vld [vmem:[%s3 + $0x20] sm:$0xff]
    %v198 = vld [vmem:[%s3 + $0x28] sm:$0xff]
    %v199 = vld [vmem:[%s3 + $0x30] sm:$0xff]
    %v200 = vld [vmem:[%s3 + $0x38] sm:$0xff]
    %v201 = vld [vmem:[%s3 + $0x40] sm:$0xff]
    %v202 = vld [vmem:[%s3 + $0x48] sm:$0xff]
    %v203 = vld [vmem:[%s3 + $0x50] sm:$0xff]
    %v204 = vld [vmem:[%s3 + $0x58] sm:$0xff]
    %v205 = vld [vmem:[%s3 + $0x60] sm:$0xff]
    %v206 = vld [vmem:[%s3 + $0x68] sm:$0xff]
    %v207 = vld [vmem:[%s3 + $0x70] sm:$0xff]
    %v208 = vld [vmem:[%s3 + $0x78] sm:$0xff]
    %v209 = vld [vmem:[%s3 + $0x80] sm:$0xff]
    %v210 = vld [vmem:[%s3 + $0x88] sm:$0xff]
    %v211 = vld [vmem:[%s3 + $0x90] sm:$0xff]
    %v212 = vld [vmem:[%s3 + $0x98] sm:$0xff]
    %v213 = vld [vmem:[%s3 + $0xa0] sm:$0xff]
    %v214 = vld [vmem:[%s3 + $0xa8] sm:$0xff]
    %v215 = vld [vmem:[%s3 + $0xb0] sm:$0xff]
    %v216 = vld [vmem:[%s3 + $0xb8] sm:$0xff]
    %v217 = vld [vmem:[%s3 + $0xc0] sm:$0xff]
    %v218 = vld [vmem:[%s3 + $0xc8] sm:$0xff]
    %v219 = vld [vmem:[%s3 + $0xd0] sm:$0xff]
    %v220 = vld [vmem:[%s3 + $0xd8] sm:$0xff]
    %v221 = vld [vmem:[%s3 + $0xe0] sm:$0xff]
    %v222 = vld [vmem:[%s3 + $0xe8] sm:$0xff]
    %v223 = vld [vmem:[%s3 + $0xf0] sm:$0xff]
    %v224 = vld [vmem:[%s3 + $0xf8] sm:$0xff]
    %v225 = vld [vmem:[%s3 + $0x100] sm:$0xff]
    %v226 = vld [vmem:[%s3 + $0x108] sm:$0xff]
    %v227 = vld [vmem:[%s3 + $0x110] sm:$0xff]
    %v228 = vld [vmem:[%s3 + $0x118] sm:$0xff]
    %v229 = vld [vmem:[%s3 + $0x120] sm:$0xff]
    %v230 = vld [vmem:[%s3 + $0x128] sm:$0xff]
    %v231 = vld [vmem:[%s3 + $0x130] sm:$0xff]
    %v232 = vld [vmem:[%s3 + $0x138] sm:$0xff]
    %v233 = vld [vmem:[%s3 + $0x140] sm:$0xff]
    %v234 = vld [vmem:[%s3 + $0x148] sm:$0xff]
    %v235 = vld [vmem:[%s3 + $0x150] sm:$0xff]
    %v236 = vld [vmem:[%s3 + $0x158] sm:$0xff]
    %v237 = vld [vmem:[%s3 + $0x160] sm:$0xff]
    %v238 = vld [vmem:[%s3 + $0x168] sm:$0xff]
    %v239 = vld [vmem:[%s3 + $0x170] sm:$0xff]
    %v240 = vld [vmem:[%s3 + $0x178] sm:$0xff]
    %v241 = vld [vmem:[%s3 + $0x180] sm:$0xff]
    %v242 = vld [vmem:[%s3 + $0x188] sm:$0xff]
    %v243 = vld [vmem:[%s3 + $0x190] sm:$0xff]
    %v244 = vld [vmem:[%s3 + $0x198] sm:$0xff]
    %v245 = vld [vmem:[%s3 + $0x1a0] sm:$0xff]
    %v246 = vld [vmem:[%s3 + $0x1a8] sm:$0xff]
    %v247 = vld [vmem:[%s3 + $0x1b0] sm:$0xff]
    %v248 = vld [vmem:[%s3 + $0x1b8] sm:$0xff]
    %v249 = vld [vmem:[%s3 + $0x1c0] sm:$0xff]
    %v250 = vld [vmem:[%s3 + $0x1c8] sm:$0xff]
    %v251 = vld [vmem:[%s3 + $0x1d0] sm:$0xff]
    %v252 = vld [vmem:[%s3 + $0x1d8] sm:$0xff]
    %v253 = vld [vmem:[%s3 + $0x1e0] sm:$0xff]
    %v254 = vld [vmem:[%s3 + $0x1e8] sm:$0xff]
    %v255 = vld [vmem:[%s3 + $0x1f0] sm:$0xff]
    %v256 = vld [vmem:[%s3 + $0x1f8] sm:$0xff]
    %v257 = vld [vmem:[%s3 + $0x200] sm:$0xff]
    %v258 = vld [vmem:[%s3 + $0x208] sm:$0xff]
    %v259 = vld [vmem:[%s3 + $0x210] sm:$0xff]
    %v260 = vld [vmem:[%s3 + $0x218] sm:$0xff]
    %v261 = vld [vmem:[%s3 + $0x220] sm:$0xff]
    %v262 = vld [vmem:[%s3 + $0x228] sm:$0xff]
    %v263 = vld [vmem:[%s3 + $0x230] sm:$0xff]
    %v264 = vld [vmem:[%s3 + $0x238] sm:$0xff]
    %v265 = vld [vmem:[%s3 + $0x240] sm:$0xff]
    %v266 = vld [vmem:[%s3 + $0x248] sm:$0xff]
    %v267 = vld [vmem:[%s3 + $0x250] sm:$0xff]
    %v268 = vld [vmem:[%s3 + $0x258] sm:$0xff]
    %v269 = vld [vmem:[%s3 + $0x260] sm:$0xff]
    %v270 = vld [vmem:[%s3 + $0x268] sm:$0xff]
    %v271 = vld [vmem:[%s3 + $0x270] sm:$0xff]
    %v272 = vld [vmem:[%s3 + $0x278] sm:$0xff]
    %v273 = vld [vmem:[%s3 + $0x280] sm:$0xff]
    %v274 = vld [vmem:[%s3 + $0x288] sm:$0xff]
    %v275 = vld [vmem:[%s3 + $0x290] sm:$0xff]
    %v276 = vld [vmem:[%s3 + $0x298] sm:$0xff]
    %v277 = vld [vmem:[%s3 + $0x2a0] sm:$0xff]
    %v278 = vld [vmem:[%s3 + $0x2a8] sm:$0xff]
    %v279 = vld [vmem:[%s3 + $0x2b0] sm:$0xff]
    %v280 = vld [vmem:[%s3 + $0x2b8] sm:$0xff]
    %v281 = vld [vmem:[%s3 + $0x2c0] sm:$0xff]
    %v282 = vld [vmem:[%s3 + $0x2c8] sm:$0xff]
    %v283 = vld [vmem:[%s3 + $0x2d0] sm:$0xff]
    %v284 = vld [vmem:[%s3 + $0x2d8] sm:$0xff]
    %v285 = vld [vmem:[%s3 + $0x2e0] sm:$0xff]
    %v286 = vld [vmem:[%s3 + $0x2e8] sm:$0xff]
    %v287 = vld [vmem:[%s3 + $0x2f0] sm:$0xff]
    %v288 = vld [vmem:[%s3 + $0x2f8] sm:$0xff]
    %v289 = vld [vmem:[%s4] sm:$0xf]
    %v291 = vlaneseq
    %v292 = vshrl.u32 %v291, 7
    %v293 = vsub.s32 0, %v292
    %v294 = vrot.slane %v289, %v293
    %v295 = vlaneseq
    %v296 = vshrl.u32 %v295, 7
    %v297 = vsub.s32 1, %v296
    %v298 = vrot.slane %v289, %v297
    %v299 = vlaneseq
    %v300 = vshrl.u32 %v299, 7
    %v301 = vsub.s32 2, %v300
    %v302 = vrot.slane %v289, %v301
    %v303 = vlaneseq
    %v304 = vshrl.u32 %v303, 7
    %v305 = vsub.s32 3, %v304
    %v306 = vrot.slane %v289, %v305
    %v407 = vunpack.c.l.b16 %v193
    %v408 = vunpack.c.h.b16 %v193
    %v409 = vunpack.c.l.b16 %v194
    %v410 = vunpack.c.h.b16 %v194
    %v411 = vunpack.c.l.b16 %v195
    %v412 = vunpack.c.h.b16 %v195
    %v413 = vunpack.c.l.b16 %v196
    %v414 = vunpack.c.h.b16 %v196
    %v415 = vunpack.c.l.b16 %v197
    %v416 = vunpack.c.h.b16 %v197
    %v417 = vunpack.c.l.b16 %v198
    %v418 = vunpack.c.h.b16 %v198
    %v419 = vunpack.c.l.b16 %v199
    %v420 = vunpack.c.h.b16 %v199
    %v421 = vunpack.c.l.b16 %v200
    %v422 = vunpack.c.h.b16 %v200
    %v423 = vunpack.c.l.b16 %v201
    %v424 = vunpack.c.h.b16 %v201
    %v425 = vunpack.c.l.b16 %v202
    %v426 = vunpack.c.h.b16 %v202
    %v427 = vunpack.c.l.b16 %v203
    %v428 = vunpack.c.h.b16 %v203
    %v429 = vunpack.c.l.b16 %v204
    %v430 = vunpack.c.h.b16 %v204
    %v431 = vunpack.c.l.b16 %v205
    %v432 = vunpack.c.h.b16 %v205
    %v433 = vunpack.c.l.b16 %v206
    %v434 = vunpack.c.h.b16 %v206
    %v435 = vunpack.c.l.b16 %v207
    %v436 = vunpack.c.h.b16 %v207
    %v437 = vunpack.c.l.b16 %v208
    %v438 = vunpack.c.h.b16 %v208
    %v439 = vunpack.c.l.b16 %v209
    %v440 = vunpack.c.h.b16 %v209
    %v441 = vunpack.c.l.b16 %v210
    %v442 = vunpack.c.h.b16 %v210
    %v443 = vunpack.c.l.b16 %v211
    %v444 = vunpack.c.h.b16 %v211
    %v445 = vunpack.c.l.b16 %v212
    %v446 = vunpack.c.h.b16 %v212
    %v447 = vunpack.c.l.b16 %v213
    %v448 = vunpack.c.h.b16 %v213
    %v449 = vunpack.c.l.b16 %v214
    %v450 = vunpack.c.h.b16 %v214
    %v451 = vunpack.c.l.b16 %v215
    %v452 = vunpack.c.h.b16 %v215
    %v453 = vunpack.c.l.b16 %v216
    %v454 = vunpack.c.h.b16 %v216
    %v455 = vunpack.c.l.b16 %v217
    %v456 = vunpack.c.h.b16 %v217
    %v457 = vunpack.c.l.b16 %v218
    %v458 = vunpack.c.h.b16 %v218
    %v459 = vunpack.c.l.b16 %v219
    %v460 = vunpack.c.h.b16 %v219
    %v461 = vunpack.c.l.b16 %v220
    %v462 = vunpack.c.h.b16 %v220
    %v463 = vunpack.c.l.b16 %v221
    %v464 = vunpack.c.h.b16 %v221
    %v465 = vunpack.c.l.b16 %v222
    %v466 = vunpack.c.h.b16 %v222
    %v467 = vunpack.c.l.b16 %v223
    %v468 = vunpack.c.h.b16 %v223
    %v469 = vunpack.c.l.b16 %v224
    %v470 = vunpack.c.h.b16 %v224
    %v471 = vunpack.c.l.b16 %v225
    %v472 = vunpack.c.h.b16 %v225
    %v473 = vunpack.c.l.b16 %v226
    %v474 = vunpack.c.h.b16 %v226
    %v475 = vunpack.c.l.b16 %v227
    %v476 = vunpack.c.h.b16 %v227
    %v477 = vunpack.c.l.b16 %v228
    %v478 = vunpack.c.h.b16 %v228
    %v479 = vunpack.c.l.b16 %v229
    %v480 = vunpack.c.h.b16 %v229
    %v481 = vunpack.c.l.b16 %v230
    %v482 = vunpack.c.h.b16 %v230
    %v483 = vunpack.c.l.b16 %v231
    %v484 = vunpack.c.h.b16 %v231
    %v485 = vunpack.c.l.b16 %v232
    %v486 = vunpack.c.h.b16 %v232
    %v487 = vunpack.c.l.b16 %v233
    %v488 = vunpack.c.h.b16 %v233
    %v489 = vunpack.c.l.b16 %v234
    %v490 = vunpack.c.h.b16 %v234
    %v491 = vunpack.c.l.b16 %v235
    %v492 = vunpack.c.h.b16 %v235
    %v493 = vunpack.c.l.b16 %v236
    %v494 = vunpack.c.h.b16 %v236
    %v495 = vunpack.c.l.b16 %v237
    %v496 = vunpack.c.h.b16 %v237
    %v497 = vunpack.c.l.b16 %v238
    %v498 = vunpack.c.h.b16 %v238
    %v499 = vunpack.c.l.b16 %v239
    %v500 = vunpack.c.h.b16 %v239
    %v501 = vunpack.c.l.b16 %v240
    %v502 = vunpack.c.h.b16 %v240
    %v503 = vunpack.c.l.b16 %v241
    %v504 = vunpack.c.h.b16 %v241
    %v505 = vunpack.c.l.b16 %v242
    %v506 = vunpack.c.h.b16 %v242
    %v507 = vunpack.c.l.b16 %v243
    %v508 = vunpack.c.h.b16 %v243
    %v509 = vunpack.c.l.b16 %v244
    %v510 = vunpack.c.h.b16 %v244
    %v511 = vunpack.c.l.b16 %v245
    %v512 = vunpack.c.h.b16 %v245
    %v513 = vunpack.c.l.b16 %v246
    %v514 = vunpack.c.h.b16 %v246
    %v515 = vunpack.c.l.b16 %v247
    %v516 = vunpack.c.h.b16 %v247
    %v517 = vunpack.c.l.b16 %v248
    %v518 = vunpack.c.h.b16 %v248
    %v519 = vunpack.c.l.b16 %v249
    %v520 = vunpack.c.h.b16 %v249
    %v521 = vunpack.c.l.b16 %v250
    %v522 = vunpack.c.h.b16 %v250
    %v523 = vunpack.c.l.b16 %v251
    %v524 = vunpack.c.h.b16 %v251
    %v525 = vunpack.c.l.b16 %v252
    %v526 = vunpack.c.h.b16 %v252
    %v527 = vunpack.c.l.b16 %v253
    %v528 = vunpack.c.h.b16 %v253
    %v529 = vunpack.c.l.b16 %v254
    %v530 = vunpack.c.h.b16 %v254
    %v531 = vunpack.c.l.b16 %v255
    %v532 = vunpack.c.h.b16 %v255
    %v533 = vunpack.c.l.b16 %v256
    %v534 = vunpack.c.h.b16 %v256
    %v535 = vunpack.c.l.b16 %v257
    %v536 = vunpack.c.h.b16 %v257
    %v537 = vunpack.c.l.b16 %v258
    %v538 = vunpack.c.h.b16 %v258
    %v539 = vunpack.c.l.b16 %v259
    %v540 = vunpack.c.h.b16 %v259
    %v541 = vunpack.c.l.b16 %v260
    %v542 = vunpack.c.h.b16 %v260
    %v543 = vunpack.c.l.b16 %v261
    %v544 = vunpack.c.h.b16 %v261
    %v545 = vunpack.c.l.b16 %v262
    %v546 = vunpack.c.h.b16 %v262
    %v547 = vunpack.c.l.b16 %v263
    %v548 = vunpack.c.h.b16 %v263
    %v549 = vunpack.c.l.b16 %v264
    %v550 = vunpack.c.h.b16 %v264
    %v551 = vunpack.c.l.b16 %v265
    %v552 = vunpack.c.h.b16 %v265
    %v553 = vunpack.c.l.b16 %v266
    %v554 = vunpack.c.h.b16 %v266
    %v555 = vunpack.c.l.b16 %v267
    %v556 = vunpack.c.h.b16 %v267
    %v557 = vunpack.c.l.b16 %v268
    %v558 = vunpack.c.h.b16 %v268
    %v559 = vunpack.c.l.b16 %v269
    %v560 = vunpack.c.h.b16 %v269
    %v561 = vunpack.c.l.b16 %v270
    %v562 = vunpack.c.h.b16 %v270
    %v563 = vunpack.c.l.b16 %v271
    %v564 = vunpack.c.h.b16 %v271
    %v565 = vunpack.c.l.b16 %v272
    %v566 = vunpack.c.h.b16 %v272
    %v567 = vunpack.c.l.b16 %v273
    %v568 = vunpack.c.h.b16 %v273
    %v569 = vunpack.c.l.b16 %v274
    %v570 = vunpack.c.h.b16 %v274
    %v571 = vunpack.c.l.b16 %v275
    %v572 = vunpack.c.h.b16 %v275
    %v573 = vunpack.c.l.b16 %v276
    %v574 = vunpack.c.h.b16 %v276
    %v575 = vunpack.c.l.b16 %v277
    %v576 = vunpack.c.h.b16 %v277
    %v577 = vunpack.c.l.b16 %v278
    %v578 = vunpack.c.h.b16 %v278
    %v579 = vunpack.c.l.b16 %v279
    %v580 = vunpack.c.h.b16 %v279
    %v581 = vunpack.c.l.b16 %v280
    %v582 = vunpack.c.h.b16 %v280
    %v583 = vunpack.c.l.b16 %v281
    %v584 = vunpack.c.h.b16 %v281
    %v585 = vunpack.c.l.b16 %v282
    %v586 = vunpack.c.h.b16 %v282
    %v587 = vunpack.c.l.b16 %v283
    %v588 = vunpack.c.h.b16 %v283
    %v589 = vunpack.c.l.b16 %v284
    %v590 = vunpack.c.h.b16 %v284
    %v591 = vunpack.c.l.b16 %v285
    %v592 = vunpack.c.h.b16 %v285
    %v593 = vunpack.c.l.b16 %v286
    %v594 = vunpack.c.h.b16 %v286
    %v595 = vunpack.c.l.b16 %v287
    %v596 = vunpack.c.h.b16 %v287
    %v597 = vunpack.c.l.b16 %v288
    %v598 = vunpack.c.h.b16 %v288
    %v599 = vpack.c.b16 %v411, %v407
    %v600 = vpack.c.b16 %v412, %v408
    %v601 = vpack.c.b16 %v413, %v409
    %v602 = vpack.c.b16 %v414, %v410
    %v603 = vpack.c.b16 %v419, %v415
    %v604 = vpack.c.b16 %v420, %v416
    %v605 = vpack.c.b16 %v421, %v417
    %v606 = vpack.c.b16 %v422, %v418
    %v607 = vpack.c.b16 %v427, %v423
    %v608 = vpack.c.b16 %v428, %v424
    %v609 = vpack.c.b16 %v429, %v425
    %v610 = vpack.c.b16 %v430, %v426
    %v611 = vpack.c.b16 %v435, %v431
    %v612 = vpack.c.b16 %v436, %v432
    %v613 = vpack.c.b16 %v437, %v433
    %v614 = vpack.c.b16 %v438, %v434
    %v615 = vpack.c.b16 %v443, %v439
    %v616 = vpack.c.b16 %v444, %v440
    %v617 = vpack.c.b16 %v445, %v441
    %v618 = vpack.c.b16 %v446, %v442
    %v619 = vpack.c.b16 %v451, %v447
    %v620 = vpack.c.b16 %v452, %v448
    %v621 = vpack.c.b16 %v453, %v449
    %v622 = vpack.c.b16 %v454, %v450
    %v623 = vpack.c.b16 %v459, %v455
    %v624 = vpack.c.b16 %v460, %v456
    %v625 = vpack.c.b16 %v461, %v457
    %v626 = vpack.c.b16 %v462, %v458
    %v627 = vpack.c.b16 %v467, %v463
    %v628 = vpack.c.b16 %v468, %v464
    %v629 = vpack.c.b16 %v469, %v465
    %v630 = vpack.c.b16 %v470, %v466
    %v631 = vpack.c.b16 %v475, %v471
    %v632 = vpack.c.b16 %v476, %v472
    %v633 = vpack.c.b16 %v477, %v473
    %v634 = vpack.c.b16 %v478, %v474
    %v635 = vpack.c.b16 %v483, %v479
    %v636 = vpack.c.b16 %v484, %v480
    %v637 = vpack.c.b16 %v485, %v481
    %v638 = vpack.c.b16 %v486, %v482
    %v639 = vpack.c.b16 %v491, %v487
    %v640 = vpack.c.b16 %v492, %v488
    %v641 = vpack.c.b16 %v493, %v489
    %v642 = vpack.c.b16 %v494, %v490
    %v643 = vpack.c.b16 %v499, %v495
    %v644 = vpack.c.b16 %v500, %v496
    %v645 = vpack.c.b16 %v501, %v497
    %v646 = vpack.c.b16 %v502, %v498
    %v647 = vpack.c.b16 %v507, %v503
    %v648 = vpack.c.b16 %v508, %v504
    %v649 = vpack.c.b16 %v509, %v505
    %v650 = vpack.c.b16 %v510, %v506
    %v651 = vpack.c.b16 %v515, %v511
    %v652 = vpack.c.b16 %v516, %v512
    %v653 = vpack.c.b16 %v517, %v513
    %v654 = vpack.c.b16 %v518, %v514
    %v655 = vpack.c.b16 %v523, %v519
    %v656 = vpack.c.b16 %v524, %v520
    %v657 = vpack.c.b16 %v525, %v521
    %v658 = vpack.c.b16 %v526, %v522
    %v659 = vpack.c.b16 %v531, %v527
    %v660 = vpack.c.b16 %v532, %v528
    %v661 = vpack.c.b16 %v533, %v529
    %v662 = vpack.c.b16 %v534, %v530
    %v663 = vpack.c.b16 %v539, %v535
    %v664 = vpack.c.b16 %v540, %v536
    %v665 = vpack.c.b16 %v541, %v537
    %v666 = vpack.c.b16 %v542, %v538
    %v667 = vpack.c.b16 %v547, %v543
    %v668 = vpack.c.b16 %v548, %v544
    %v669 = vpack.c.b16 %v549, %v545
    %v670 = vpack.c.b16 %v550, %v546
    %v671 = vpack.c.b16 %v555, %v551
    %v672 = vpack.c.b16 %v556, %v552
    %v673 = vpack.c.b16 %v557, %v553
    %v674 = vpack.c.b16 %v558, %v554
    %v675 = vpack.c.b16 %v563, %v559
    %v676 = vpack.c.b16 %v564, %v560
    %v677 = vpack.c.b16 %v565, %v561
    %v678 = vpack.c.b16 %v566, %v562
    %v679 = vpack.c.b16 %v571, %v567
    %v680 = vpack.c.b16 %v572, %v568
    %v681 = vpack.c.b16 %v573, %v569
    %v682 = vpack.c.b16 %v574, %v570
    %v683 = vpack.c.b16 %v579, %v575
    %v684 = vpack.c.b16 %v580, %v576
    %v685 = vpack.c.b16 %v581, %v577
    %v686 = vpack.c.b16 %v582, %v578
    %v687 = vpack.c.b16 %v587, %v583
    %v688 = vpack.c.b16 %v588, %v584
    %v689 = vpack.c.b16 %v589, %v585
    %v690 = vpack.c.b16 %v590, %v586
    %v691 = vpack.c.b16 %v595, %v591
    %v692 = vpack.c.b16 %v596, %v592
    %v693 = vpack.c.b16 %v597, %v593
    %v694 = vpack.c.b16 %v598, %v594
    %791 = vmatprep.subr.bf16.mxu0 %v600
    %792 = vmatpush1.bf16.msra.mxu0 %v599
    %793 = vmatprep.subr.bf16.mxu0 %v604
    %794 = vmatpush1.bf16.msra.mxu0 %v603
    %795 = vmatprep.subr.bf16.mxu0 %v608
    %796 = vmatpush1.bf16.msra.mxu0 %v607
    %797 = vmatprep.subr.bf16.mxu0 %v612
    %798 = vmatpush1.bf16.msra.mxu0 %v611
    %799 = vmatprep.subr.bf16.mxu0 %v616
    %800 = vmatpush1.bf16.msra.mxu0 %v615
    %801 = vmatprep.subr.bf16.mxu0 %v620
    %802 = vmatpush1.bf16.msra.mxu0 %v619
    %803 = vmatprep.subr.bf16.mxu0 %v624
    %804 = vmatpush1.bf16.msra.mxu0 %v623
    %805 = vmatprep.subr.bf16.mxu0 %v628
    %806 = vmatpush1.bf16.msra.mxu0 %v627
    %807 = vmatprep.subr.bf16.mxu0 %v632
    %808 = vmatpush1.bf16.msra.mxu0 %v631
    %809 = vmatprep.subr.bf16.mxu0 %v636
    %810 = vmatpush1.bf16.msra.mxu0 %v635
    %811 = vmatprep.subr.bf16.mxu0 %v640
    %812 = vmatpush1.bf16.msra.mxu0 %v639
    %813 = vmatprep.subr.bf16.mxu0 %v644
    %814 = vmatpush1.bf16.msra.mxu0 %v643
    %815 = vmatprep.subr.bf16.mxu0 %v648
    %816 = vmatpush1.bf16.msra.mxu0 %v647
    %817 = vmatprep.subr.bf16.mxu0 %v652
    %818 = vmatpush1.bf16.msra.mxu0 %v651
    %819 = vmatprep.subr.bf16.mxu0 %v656
    %820 = vmatpush1.bf16.msra.mxu0 %v655
    %821 = vmatprep.subr.bf16.mxu0 %v660
    %822 = vmatpush1.bf16.msra.mxu0 %v659
    %823 = vmatprep.mubr.bf16.mxu0 %v191
    %824 = vmatmul.mubr.bf16.gmra.mrb[0].mxu0 %v190
    %v825 = vpop.f32.mrb[0].mxu0
    %v826 = vadd.f32 %v294, %v825
    %v827 = vpop.f32.mrb[0].mxu0
    %v828 = vadd.f32 %v298, %v827
    %v829 = vpop.f32.mrb[0].mxu0
    %v830 = vpop.f32.mrb[0].mxu0
    %831 = vdwg.mxu0
    %832 = vmatprep.subr.bf16.mxu0 %v664
    %833 = vmatpush1.bf16.msra.mxu0 %v663
    %834 = vmatprep.subr.bf16.mxu0 %v668
    %835 = vmatpush1.bf16.msra.mxu0 %v667
    %836 = vmatprep.subr.bf16.mxu0 %v672
    %837 = vmatpush1.bf16.msra.mxu0 %v671
    %838 = vmatprep.subr.bf16.mxu0 %v676
    %839 = vmatpush1.bf16.msra.mxu0 %v675
    %840 = vmatprep.subr.bf16.mxu0 %v680
    %841 = vmatpush1.bf16.msra.mxu0 %v679
    %842 = vmatprep.subr.bf16.mxu0 %v684
    %843 = vmatpush1.bf16.msra.mxu0 %v683
    %844 = vmatprep.subr.bf16.mxu0 %v688
    %845 = vmatpush1.bf16.msra.mxu0 %v687
    %846 = vmatprep.subr.bf16.mxu0 %v692
    %847 = vmatpush1.bf16.msra.mxu0 %v691
    %848 = vmatprep.subr.bf16.mxu0 0
    %849 = vmatpush1.bf16.msra.mxu0 0
    %850 = vmatprep.subr.bf16.mxu0 0
    %851 = vmatpush1.bf16.msra.mxu0 0
    %852 = vmatprep.subr.bf16.mxu0 0
    %853 = vmatpush1.bf16.msra.mxu0 0
    %854 = vmatprep.subr.bf16.mxu0 0
    %855 = vmatpush1.bf16.msra.mxu0 0
    %856 = vmatprep.subr.bf16.mxu0 0
    %857 = vmatpush1.bf16.msra.mxu0 0
    %858 = vmatprep.subr.bf16.mxu0 0
    %859 = vmatpush1.bf16.msra.mxu0 0
    %860 = vmatprep.subr.bf16.mxu0 0
    %861 = vmatpush1.bf16.msra.mxu0 0
    %862 = vmatprep.subr.bf16.mxu0 0
    %863 = vmatpush1.bf16.msra.mxu0 0
    %864 = vmatprep.mubr.bf16.mxu0 0
    %865 = vmatmul.mubr.bf16.gmra.mrb[0].mxu0 %v192
    %v866 = vpop.f32.mrb[0].mxu0
    %v867 = vadd.f32 %v826, %v866
    %v868 = vpop.f32.mrb[0].mxu0
    %v869 = vadd.f32 %v828, %v868
    %v870 = vpop.f32.mrb[0].mxu0
    %v871 = vpop.f32.mrb[0].mxu0
    %872 = vdwg.mxu0
    %873 = vmatprep.subr.bf16.mxu0 %v602
    %874 = vmatpush1.bf16.msra.mxu0 %v601
    %875 = vmatprep.subr.bf16.mxu0 %v606
    %876 = vmatpush1.bf16.msra.mxu0 %v605
    %877 = vmatprep.subr.bf16.mxu0 %v610
    %878 = vmatpush1.bf16.msra.mxu0 %v609
    %879 = vmatprep.subr.bf16.mxu0 %v614
    %880 = vmatpush1.bf16.msra.mxu0 %v613
    %881 = vmatprep.subr.bf16.mxu0 %v618
    %882 = vmatpush1.bf16.msra.mxu0 %v617
    %883 = vmatprep.subr.bf16.mxu0 %v622
    %884 = vmatpush1.bf16.msra.mxu0 %v621
    %885 = vmatprep.subr.bf16.mxu0 %v626
    %886 = vmatpush1.bf16.msra.mxu0 %v625
    %887 = vmatprep.subr.bf16.mxu0 %v630
    %888 = vmatpush1.bf16.msra.mxu0 %v629
    %889 = vmatprep.subr.bf16.mxu0 %v634
    %890 = vmatpush1.bf16.msra.mxu0 %v633
    %891 = vmatprep.subr.bf16.mxu0 %v638
    %892 = vmatpush1.bf16.msra.mxu0 %v637
    %893 = vmatprep.subr.bf16.mxu0 %v642
    %894 = vmatpush1.bf16.msra.mxu0 %v641
    %895 = vmatprep.subr.bf16.mxu0 %v646
    %896 = vmatpush1.bf16.msra.mxu0 %v645
    %897 = vmatprep.subr.bf16.mxu0 %v650
    %898 = vmatpush1.bf16.msra.mxu0 %v649
    %899 = vmatprep.subr.bf16.mxu0 %v654
    %900 = vmatpush1.bf16.msra.mxu0 %v653
    %901 = vmatprep.subr.bf16.mxu0 %v658
    %902 = vmatpush1.bf16.msra.mxu0 %v657
    %903 = vmatprep.subr.bf16.mxu0 %v662
    %904 = vmatpush1.bf16.msra.mxu0 %v661
    %905 = vmatprep.mubr.bf16.mxu0 %v191
    %906 = vmatmul.mubr.bf16.gmra.mrb[0].mxu0 %v190
    %v907 = vpop.f32.mrb[0].mxu0
    %v908 = vadd.f32 %v302, %v907
    %v909 = vpop.f32.mrb[0].mxu0
    %v910 = vadd.f32 %v306, %v909
    %v911 = vpop.f32.mrb[0].mxu0
    %v912 = vpop.f32.mrb[0].mxu0
    %913 = vdwg.mxu0
    %914 = vmatprep.subr.bf16.mxu0 %v666
    %915 = vmatpush1.bf16.msra.mxu0 %v665
    %916 = vmatprep.subr.bf16.mxu0 %v670
    %917 = vmatpush1.bf16.msra.mxu0 %v669
    %918 = vmatprep.subr.bf16.mxu0 %v674
    %919 = vmatpush1.bf16.msra.mxu0 %v673
    %920 = vmatprep.subr.bf16.mxu0 %v678
    %921 = vmatpush1.bf16.msra.mxu0 %v677
    %922 = vmatprep.subr.bf16.mxu0 %v682
    %923 = vmatpush1.bf16.msra.mxu0 %v681
    %924 = vmatprep.subr.bf16.mxu0 %v686
    %925 = vmatpush1.bf16.msra.mxu0 %v685
    %926 = vmatprep.subr.bf16.mxu0 %v690
    %927 = vmatpush1.bf16.msra.mxu0 %v689
    %928 = vmatprep.subr.bf16.mxu0 %v694
    %929 = vmatpush1.bf16.msra.mxu0 %v693
    %930 = vmatprep.subr.bf16.mxu0 0
    %931 = vmatpush1.bf16.msra.mxu0 0
    %932 = vmatprep.subr.bf16.mxu0 0
    %933 = vmatpush1.bf16.msra.mxu0 0
    %934 = vmatprep.subr.bf16.mxu0 0
    %935 = vmatpush1.bf16.msra.mxu0 0
    %936 = vmatprep.subr.bf16.mxu0 0
    %937 = vmatpush1.bf16.msra.mxu0 0
    %938 = vmatprep.subr.bf16.mxu0 0
    %939 = vmatpush1.bf16.msra.mxu0 0
    %940 = vmatprep.subr.bf16.mxu0 0
    %941 = vmatpush1.bf16.msra.mxu0 0
    %942 = vmatprep.subr.bf16.mxu0 0
    %943 = vmatpush1.bf16.msra.mxu0 0
    %944 = vmatprep.subr.bf16.mxu0 0
    %945 = vmatpush1.bf16.msra.mxu0 0
    %946 = vmatprep.mubr.bf16.mxu0 0
    %947 = vmatmul.mubr.bf16.gmra.mrb[0].mxu0 %v192
    %v948 = vpop.f32.mrb[0].mxu0
    %v949 = vadd.f32 %v908, %v948
    %v950 = vpop.f32.mrb[0].mxu0
    %v951 = vadd.f32 %v910, %v950
    %v952 = vpop.f32.mrb[0].mxu0
    %v953 = vpop.f32.mrb[0].mxu0
    %954 = vdwg.mxu0
    %v959 = vcombine.low %v867, %v869
    %v960 = vcombine.low %v949, %v951
    %v962 = vunpack.c.l.s4 1983009808
    %v963 = vunpack.c.0.s8 %v962
    %v964 = vlaneseq
    %v965 = vshrl.u32 %v964, 7
    %v966 = vsub.s32 %v963, %v965
    %v967 = vrot.slane %v959, %v966
    %v969 = vunpack.c.l.s4 1983009808
    %v970 = vunpack.c.0.s8 %v969
    %v971 = vlaneseq
    %v972 = vshrl.u32 %v971, 7
    %v973 = vsub.s32 %v970, %v972
    %v974 = vrot.slane %v960, %v973
    %v975 = vcombine.low %v967, %v974
    %977 = vst [vmem:[#allocation2] sm:$0xff] %v975
    // Predicated region
    $region22: #{dino_embedder_forward.5} parent=1 // pred_check
      _
    $region23: #{dino_embedder_forward.5} parent=1 // pred_check_branch
      %979 = sbr.rel (0) target = $region25
    $region24: #{dino_embedder_forward.5} parent=1 // pred_region
      %s981 = ssub.s32 128, 128
      %982 = vsyncadd [#allocation3], %s981
      %s984 = sshll.u32 [#allocation2], 4
      %s985 = int_to_ptr.vmem [resolvable:$true] %s984
      %987 = dma.vmem_to_hbm [thread:$0]  %s985, 128, %s5, [#allocation3]
    $region25: #{dino_embedder_forward.5} parent=1 // pred_fallthru
      _
    // Predicated region
    $region26: #{dino_embedder_forward.5} parent=1 // pred_check
      _
    $region27: #{dino_embedder_forward.5} parent=1 // pred_check_branch
      %989 = sbr.rel (0) target = $region29
    $region28: #{dino_embedder_forward.5} parent=1 // pred_region
      %990 = dma.done [#allocation3], 128
    $region29: #{dino_embedder_forward.5} parent=1 // pred_fallthru
      _
    %991 = vsyncpa [#allocation3], 1

// kernel: dino_embedder_forward.3
$region0: #{dino_embedder_forward.3}
  #allocation0 [shape = 'u32[]', space=smem, size = 0x4, offset = 0x4, fixed_abs, tag = 'smem constant byte address 0x4 - core index']
  #allocation1 [shape = 'u32[144,128]{1,0:T(1,128)}', space=vmem, size = 0x12000, scoped, tag = 'internal scratch']
  %s0 = inlined_call_operand.vmem [shape: bf16[8,640], index: 0, kind: input, shape index: {}]
  %s1 = inlined_call_operand.hbm [shape: bf16[640,384], index: 1, kind: input, shape index: {}]
  %s2 = inlined_call_operand.hbm [shape: f32[1,384], index: 2, kind: input, shape index: {}]
  %s3 = inlined_call_operand.vmem [shape: f32[8,384], index: 3, kind: output, shape index: {}]
  %s4 = sld [smem:[#allocation0]]
  $region30: #{dino_embedder_forward.3} parent=0
    _
  %s6 = ssub.s32 1, %s4
  %s7 = scalar_select 0, %s6, %s4
  $region1: #{dino_embedder_forward.3} parent=0
    #allocation2 [shape = 'u8[491520]{0}', space=vmem, size = 0x78000, scoped, tag = 'input window, operand 1, single buffered']
    #allocation3 [shape = 's32[1]{0}', space=sflag, size = 0x4, scoped, tag = 'scoped memory for dino_embedder_forward.3']
    #allocation4 [shape = 'u8[1536]{0}', space=vmem, size = 0x800, scoped, tag = 'input window, operand 2, single buffered']
    #allocation5 [shape = 's32[1]{0}', space=sflag, size = 0x4, scoped, tag = 'scoped memory for dino_embedder_forward.3']
    %8 = vsyncpa [#allocation3], 0
    %9 = vsyncpa [#allocation5], 0
    // Predicated region
    $region2: #{dino_embedder_forward.3} parent=1 // pred_check
      _
    $region3: #{dino_embedder_forward.3} parent=1 // pred_check_branch
      %11 = sbr.rel (0) target = $region5
    $region4: #{dino_embedder_forward.3} parent=1 // pred_region
      _
    $region5: #{dino_embedder_forward.3} parent=1 // pred_fallthru
      _
    // Predicated region
    $region6: #{dino_embedder_forward.3} parent=1 // pred_check
      _
    $region7: #{dino_embedder_forward.3} parent=1 // pred_check_branch
      %13 = sbr.rel (0) target = $region9
    $region8: #{dino_embedder_forward.3} parent=1 // pred_region
      %s15 = ssub.s32 15360, 15360
      %16 = vsyncadd [#allocation3], %s15
      %s17 = sshll.u32 [#allocation2], 4
      %s18 = int_to_ptr.vmem [resolvable:$true] %s17
      %23 = dma.hbm_to_vmem [thread:$0]  %s1, 15360, %s18, [#allocation3], 192, 192, 12
    $region9: #{dino_embedder_forward.3} parent=1 // pred_fallthru
      _
    // Predicated region
    $region10: #{dino_embedder_forward.3} parent=1 // pred_check
      _
    $region11: #{dino_embedder_forward.3} parent=1 // pred_check_branch
      %25 = sbr.rel (0) target = $region13
    $region12: #{dino_embedder_forward.3} parent=1 // pred_region
      %s27 = ssub.s32 48, 48
      %28 = vsyncadd [#allocation5], %s27
      %s30 = sshll.u32 [#allocation4], 4
      %s31 = int_to_ptr.vmem [resolvable:$true] %s30
      %33 = dma.hbm_to_vmem [thread:$0]  %s2, 48, %s31, [#allocation5]
    $region13: #{dino_embedder_forward.3} parent=1 // pred_fallthru
      _
    // Predicated region
    $region14: #{dino_embedder_forward.3} parent=1 // pred_check
      _
    $region15: #{dino_embedder_forward.3} parent=1 // pred_check_branch
      %35 = sbr.rel (0) target = $region17
    $region16: #{dino_embedder_forward.3} parent=1 // pred_region
      %36 = dma.done [#allocation3], 15360
    $region17: #{dino_embedder_forward.3} parent=1 // pred_fallthru
      _
    // Predicated region
    $region18: #{dino_embedder_forward.3} parent=1 // pred_check
      _
    $region19: #{dino_embedder_forward.3} parent=1 // pred_check_branch
      %38 = sbr.rel (0) target = $region21
    $region20: #{dino_embedder_forward.3} parent=1 // pred_region
      %39 = dma.done [#allocation5], 48
    $region21: #{dino_embedder_forward.3} parent=1 // pred_fallthru
      _
    %v41 = vld [vmem:[%s0] sm:$0xff]
    %v42 = vld [vmem:[%s0 + $0x8] sm:$0xff]
    %v43 = vld [vmem:[%s0 + $0x10] sm:$0xf]
    %v44 = vld [vmem:[#allocation2] sm:$0xff]
    %v45 = vld [vmem:[#allocation2 + $0x8] sm:$0xf]
    %v46 = vld [vmem:[#allocation2 + $0xc] sm:$0xff]
    %v47 = vld [vmem:[#allocation2 + $0x14] sm:$0xf]
    %v48 = vld [vmem:[#allocation2 + $0x18] sm:$0xff]
    %v49 = vld [vmem:[#allocation2 + $0x20] sm:$0xf]
    %v50 = vld [vmem:[#allocation2 + $0x24] sm:$0xff]
    %v51 = vld [vmem:[#allocation2 + $0x2c] sm:$0xf]
    %v52 = vld [vmem:[#allocation2 + $0x30] sm:$0xff]
    %v53 = vld [vmem:[#allocation2 + $0x38] sm:$0xf]
    %v54 = vld [vmem:[#allocation2 + $0x3c] sm:$0xff]
    %v55 = vld [vmem:[#allocation2 + $0x44] sm:$0xf]
    %v56 = vld [vmem:[#allocation2 + $0x48] sm:$0xff]
    %v57 = vld [vmem:[#allocation2 + $0x50] sm:$0xf]
    %v58 = vld [vmem:[#allocation2 + $0x54] sm:$0xff]
    %v59 = vld [vmem:[#allocation2 + $0x5c] sm:$0xf]
    %v60 = vld [vmem:[#allocation2 + $0x60] sm:$0xff]
    %v61 = vld [vmem:[#allocation2 + $0x68] sm:$0xf]
    %v62 = vld [vmem:[#allocation2 + $0x6c] sm:$0xff]
    %v63 = vld [vmem:[#allocation2 + $0x74] sm:$0xf]
    %v64 = vld [vmem:[#allocation2 + $0x78] sm:$0xff]
    %v65 = vld [vmem:[#allocation2 + $0x80] sm:$0xf]
    %v66 = vld [vmem:[#allocation2 + $0x84] sm:$0xff]
    %v67 = vld [vmem:[#allocation2 + $0x8c] sm:$0xf]
    %v68 = vld [vmem:[#allocation2 + $0x90] sm:$0xff]
    %v69 = vld [vmem:[#allocation2 + $0x98] sm:$0xf]
    %v70 = vld [vmem:[#allocation2 + $0x9c] sm:$0xff]
    %v71 = vld [vmem:[#allocation2 + $0xa4] sm:$0xf]
    %v72 = vld [vmem:[#allocation2 + $0xa8] sm:$0xff]
    %v73 = vld [vmem:[#allocation2 + $0xb0] sm:$0xf]
    %v74 = vld [vmem:[#allocation2 + $0xb4] sm:$0xff]
    %v75 = vld [vmem:[#allocation2 + $0xbc] sm:$0xf]
    %v76 = vld [vmem:[#allocation2 + $0xc0] sm:$0xff]
    %v77 = vld [vmem:[#allocation2 + $0xc8] sm:$0xf]
    %v78 = vld [vmem:[#allocation2 + $0xcc] sm:$0xff]
    %v79 = vld [vmem:[#allocation2 + $0xd4] sm:$0xf]
    %v80 = vld [vmem:[#allocation2 + $0xd8] sm:$0xff]
    %v81 = vld [vmem:[#allocation2 + $0xe0] sm:$0xf]
    %v82 = vld [vmem:[#allocation2 + $0xe4] sm:$0xff]
    %v83 = vld [vmem:[#allocation2 + $0xec] sm:$0xf]
    %v84 = vld [vmem:[#allocation2 + $0xf0] sm:$0xff]
    %v85 = vld [vmem:[#allocation2 + $0xf8] sm:$0xf]
    %v86 = vld [vmem:[#allocation2 + $0xfc] sm:$0xff]
    %v87 = vld [vmem:[#allocation2 + $0x104] sm:$0xf]
    %v88 = vld [vmem:[#allocation2 + $0x108] sm:$0xff]
    %v89 = vld [vmem:[#allocation2 + $0x110] sm:$0xf]
    %v90 = vld [vmem:[#allocation2 + $0x114] sm:$0xff]
    %v91 = vld [vmem:[#allocation2 + $0x11c] sm:$0xf]
    %v92 = vld [vmem:[#allocation2 + $0x120] sm:$0xff]
    %v93 = vld [vmem:[#allocation2 + $0x128] sm:$0xf]
    %v94 = vld [vmem:[#allocation2 + $0x12c] sm:$0xff]
    %v95 = vld [vmem:[#allocation2 + $0x134] sm:$0xf]
    %v96 = vld [vmem:[#allocation2 + $0x138] sm:$0xff]
    %v97 = vld [vmem:[#allocation2 + $0x140] sm:$0xf]
    %v98 = vld [vmem:[#allocation2 + $0x144] sm:$0xff]
    %v99 = vld [vmem:[#allocation2 + $0x14c] sm:$0xf]
    %v100 = vld [vmem:[#allocation2 + $0x150] sm:$0xff]
    %v101 = vld [vmem:[#allocation2 + $0x158] sm:$0xf]
    %v102 = vld [vmem:[#allocation2 + $0x15c] sm:$0xff]
    %v103 = vld [vmem:[#allocation2 + $0x164] sm:$0xf]
    %v104 = vld [vmem:[#allocation2 + $0x168] sm:$0xff]
    %v105 = vld [vmem:[#allocation2 + $0x170] sm:$0xf]
    %v106 = vld [vmem:[#allocation2 + $0x174] sm:$0xff]
    %v107 = vld [vmem:[#allocation2 + $0x17c] sm:$0xf]
    %v108 = vld [vmem:[#allocation2 + $0x180] sm:$0xff]
    %v109 = vld [vmem:[#allocation2 + $0x188] sm:$0xf]
    %v110 = vld [vmem:[#allocation2 + $0x18c] sm:$0xff]
    %v111 = vld [vmem:[#allocation2 + $0x194] sm:$0xf]
    %v112 = vld [vmem:[#allocation2 + $0x198] sm:$0xff]
    %v113 = vld [vmem:[#allocation2 + $0x1a0] sm:$0xf]
    %v114 = vld [vmem:[#allocation2 + $0x1a4] sm:$0xff]
    %v115 = vld [vmem:[#allocation2 + $0x1ac] sm:$0xf]
    %v116 = vld [vmem:[#allocation2 + $0x1b0] sm:$0xff]
    %v117 = vld [vmem:[#allocation2 + $0x1b8] sm:$0xf]
    %v118 = vld [vmem:[#allocation2 + $0x1bc] sm:$0xff]
    %v119 = vld [vmem:[#allocation2 + $0x1c4] sm:$0xf]
    %v120 = vld [vmem:[#allocation2 + $0x1c8] sm:$0xff]
    %v121 = vld [vmem:[#allocation2 + $0x1d0] sm:$0xf]
    %v122 = vld [vmem:[#allocation2 + $0x1d4] sm:$0xff]
    %v123 = vld [vmem:[#allocation2 + $0x1dc] sm:$0xf]
    %v124 = vld [vmem:[#allocation2 + $0x1e0] sm:$0xff]
    %v125 = vld [vmem:[#allocation2 + $0x1e8] sm:$0xf]
    %v126 = vld [vmem:[#allocation2 + $0x1ec] sm:$0xff]
    %v127 = vld [vmem:[#allocation2 + $0x1f4] sm:$0xf]
    %v128 = vld [vmem:[#allocation2 + $0x1f8] sm:$0xff]
    %v129 = vld [vmem:[#allocation2 + $0x200] sm:$0xf]
    %v130 = vld [vmem:[#allocation2 + $0x204] sm:$0xff]
    %v131 = vld [vmem:[#allocation2 + $0x20c] sm:$0xf]
    %v132 = vld [vmem:[#allocation2 + $0x210] sm:$0xff]
    %v133 = vld [vmem:[#allocation2 + $0x218] sm:$0xf]
    %v134 = vld [vmem:[#allocation2 + $0x21c] sm:$0xff]
    %v135 = vld [vmem:[#allocation2 + $0x224] sm:$0xf]
    %v136 = vld [vmem:[#allocation2 + $0x228] sm:$0xff]
    %v137 = vld [vmem:[#allocation2 + $0x230] sm:$0xf]
    %v138 = vld [vmem:[#allocation2 + $0x234] sm:$0xff]
    %v139 = vld [vmem:[#allocation2 + $0x23c] sm:$0xf]
    %v140 = vld [vmem:[#allocation2 + $0x240] sm:$0xff]
    %v141 = vld [vmem:[#allocation2 + $0x248] sm:$0xf]
    %v142 = vld [vmem:[#allocation2 + $0x24c] sm:$0xff]
    %v143 = vld [vmem:[#allocation2 + $0x254] sm:$0xf]
    %v144 = vld [vmem:[#allocation2 + $0x258] sm:$0xff]
    %v145 = vld [vmem:[#allocation2 + $0x260] sm:$0xf]
    %v146 = vld [vmem:[#allocation2 + $0x264] sm:$0xff]
    %v147 = vld [vmem:[#allocation2 + $0x26c] sm:$0xf]
    %v148 = vld [vmem:[#allocation2 + $0x270] sm:$0xff]
    %v149 = vld [vmem:[#allocation2 + $0x278] sm:$0xf]
    %v150 = vld [vmem:[#allocation2 + $0x27c] sm:$0xff]
    %v151 = vld [vmem:[#allocation2 + $0x284] sm:$0xf]
    %v152 = vld [vmem:[#allocation2 + $0x288] sm:$0xff]
    %v153 = vld [vmem:[#allocation2 + $0x290] sm:$0xf]
    %v154 = vld [vmem:[#allocation2 + $0x294] sm:$0xff]
    %v155 = vld [vmem:[#allocation2 + $0x29c] sm:$0xf]
    %v156 = vld [vmem:[#allocation2 + $0x2a0] sm:$0xff]
    %v157 = vld [vmem:[#allocation2 + $0x2a8] sm:$0xf]
    %v158 = vld [vmem:[#allocation2 + $0x2ac] sm:$0xff]
    %v159 = vld [vmem:[#allocation2 + $0x2b4] sm:$0xf]
    %v160 = vld [vmem:[#allocation2 + $0x2b8] sm:$0xff]
    %v161 = vld [vmem:[#allocation2 + $0x2c0] sm:$0xf]
    %v162 = vld [vmem:[#allocation2 + $0x2c4] sm:$0xff]
    %v163 = vld [vmem:[#allocation2 + $0x2cc] sm:$0xf]
    %v164 = vld [vmem:[#allocation2 + $0x2d0] sm:$0xff]
    %v165 = vld [vmem:[#allocation2 + $0x2d8] sm:$0xf]
    %v166 = vld [vmem:[#allocation2 + $0x2dc] sm:$0xff]
    %v167 = vld [vmem:[#allocation2 + $0x2e4] sm:$0xf]
    %v168 = vld [vmem:[#allocation2 + $0x2e8] sm:$0xff]
    %v169 = vld [vmem:[#allocation2 + $0x2f0] sm:$0xf]
    %v170 = vld [vmem:[#allocation2 + $0x2f4] sm:$0xff]
    %v171 = vld [vmem:[#allocation2 + $0x2fc] sm:$0xf]
    %v172 = vld [vmem:[#allocation2 + $0x300] sm:$0xff]
    %v173 = vld [vmem:[#allocation2 + $0x308] sm:$0xf]
    %v174 = vld [vmem:[#allocation2 + $0x30c] sm:$0xff]
    %v175 = vld [vmem:[#allocation2 + $0x314] sm:$0xf]
    %v176 = vld [vmem:[#allocation2 + $0x318] sm:$0xff]
    %v177 = vld [vmem:[#allocation2 + $0x320] sm:$0xf]
    %v178 = vld [vmem:[#allocation2 + $0x324] sm:$0xff]
    %v179 = vld [vmem:[#allocation2 + $0x32c] sm:$0xf]
    %v180 = vld [vmem:[#allocation2 + $0x330] sm:$0xff]
    %v181 = vld [vmem:[#allocation2 + $0x338] sm:$0xf]
    %v182 = vld [vmem:[#allocation2 + $0x33c] sm:$0xff]
    %v183 = vld [vmem:[#allocation2 + $0x344] sm:$0xf]
    %v184 = vld [vmem:[#allocation2 + $0x348] sm:$0xff]
    %v185 = vld [vmem:[#allocation2 + $0x350] sm:$0xf]
    %v186 = vld [vmem:[#allocation2 + $0x354] sm:$0xff]
    %v187 = vld [vmem:[#allocation2 + $0x35c] sm:$0xf]
    %v188 = vld [vmem:[#allocation2 + $0x360] sm:$0xff]
    %v189 = vld [vmem:[#allocation2 + $0x368] sm:$0xf]
    %v190 = vld [vmem:[#allocation2 + $0x36c] sm:$0xff]
    %v191 = vld [vmem:[#allocation2 + $0x374] sm:$0xf]
    %v192 = vld [vmem:[#allocation2 + $0x378] sm:$0xff]
    %v193 = vld [vmem:[#allocation2 + $0x380] sm:$0xf]
    %v194 = vld [vmem:[#allocation2 + $0x384] sm:$0xff]
    %v195 = vld [vmem:[#allocation2 + $0x38c] sm:$0xf]
    %v196 = vld [vmem:[#allocation2 + $0x390] sm:$0xff]
    %v197 = vld [vmem:[#allocation2 + $0x398] sm:$0xf]
    %v198 = vld [vmem:[#allocation2 + $0x39c] sm:$0xff]
    %v199 = vld [vmem:[#allocation2 + $0x3a4] sm:$0xf]
    %v200 = vld [vmem:[#allocation2 + $0x3a8] sm:$0xff]
    %v201 = vld [vmem:[#allocation2 + $0x3b0] sm:$0xf]
    %v202 = vld [vmem:[#allocation2 + $0x3b4] sm:$0xff]
    %v203 = vld [vmem:[#allocation2 + $0x3bc] sm:$0xf]
    %v204 = vld [vmem:[#allocation4] sm:$0x7]
    %v206 = vlaneseq
    %v207 = vshrl.u32 %v206, 7
    %v208 = vsub.s32 0, %v207
    %v209 = vrot.slane %v204, %v208
    %v210 = vlaneseq
    %v211 = vshrl.u32 %v210, 7
    %v212 = vsub.s32 1, %v211
    %v213 = vrot.slane %v204, %v212
    %v214 = vlaneseq
    %v215 = vshrl.u32 %v214, 7
    %v216 = vsub.s32 2, %v215
    %v217 = vrot.slane %v204, %v216
    %v224 = vunpack.c.l.b16 %v41
    %v225 = vunpack.c.h.b16 %v41
    %v226 = vunpack.c.l.b16 %v42
    %v227 = vunpack.c.h.b16 %v42
    %v228 = vunpack.c.l.b16 %v43
    %v229 = vpack.c.b16 %v224, %v224
    %v230 = vpack.c.b16 %v225, %v225
    %v231 = vpack.c.b16 %v226, %v226
    %v232 = vpack.c.b16 %v227, %v227
    %v233 = vpack.c.b16 %v228, %v228
    %v399 = vunpack.c.l.b16 %v44
    %v400 = vunpack.c.h.b16 %v44
    %v401 = vunpack.c.l.b16 %v45
    %v402 = vunpack.c.l.b16 %v46
    %v403 = vunpack.c.h.b16 %v46
    %v404 = vunpack.c.l.b16 %v47
    %v405 = vunpack.c.l.b16 %v48
    %v406 = vunpack.c.h.b16 %v48
    %v407 = vunpack.c.l.b16 %v49
    %v408 = vunpack.c.l.b16 %v50
    %v409 = vunpack.c.h.b16 %v50
    %v410 = vunpack.c.l.b16 %v51
    %v411 = vunpack.c.l.b16 %v52
    %v412 = vunpack.c.h.b16 %v52
    %v413 = vunpack.c.l.b16 %v53
    %v414 = vunpack.c.l.b16 %v54
    %v415 = vunpack.c.h.b16 %v54
    %v416 = vunpack.c.l.b16 %v55
    %v417 = vunpack.c.l.b16 %v56
    %v418 = vunpack.c.h.b16 %v56
    %v419 = vunpack.c.l.b16 %v57
    %v420 = vunpack.c.l.b16 %v58
    %v421 = vunpack.c.h.b16 %v58
    %v422 = vunpack.c.l.b16 %v59
    %v423 = vunpack.c.l.b16 %v60
    %v424 = vunpack.c.h.b16 %v60
    %v425 = vunpack.c.l.b16 %v61
    %v426 = vunpack.c.l.b16 %v62
    %v427 = vunpack.c.h.b16 %v62
    %v428 = vunpack.c.l.b16 %v63
    %v429 = vunpack.c.l.b16 %v64
    %v430 = vunpack.c.h.b16 %v64
    %v431 = vunpack.c.l.b16 %v65
    %v432 = vunpack.c.l.b16 %v66
    %v433 = vunpack.c.h.b16 %v66
    %v434 = vunpack.c.l.b16 %v67
    %v435 = vunpack.c.l.b16 %v68
    %v436 = vunpack.c.h.b16 %v68
    %v437 = vunpack.c.l.b16 %v69
    %v438 = vunpack.c.l.b16 %v70
    %v439 = vunpack.c.h.b16 %v70
    %v440 = vunpack.c.l.b16 %v71
    %v441 = vunpack.c.l.b16 %v72
    %v442 = vunpack.c.h.b16 %v72
    %v443 = vunpack.c.l.b16 %v73
    %v444 = vunpack.c.l.b16 %v74
    %v445 = vunpack.c.h.b16 %v74
    %v446 = vunpack.c.l.b16 %v75
    %v447 = vunpack.c.l.b16 %v76
    %v448 = vunpack.c.h.b16 %v76
    %v449 = vunpack.c.l.b16 %v77
    %v450 = vunpack.c.l.b16 %v78
    %v451 = vunpack.c.h.b16 %v78
    %v452 = vunpack.c.l.b16 %v79
    %v453 = vunpack.c.l.b16 %v80
    %v454 = vunpack.c.h.b16 %v80
    %v455 = vunpack.c.l.b16 %v81
    %v456 = vunpack.c.l.b16 %v82
    %v457 = vunpack.c.h.b16 %v82
    %v458 = vunpack.c.l.b16 %v83
    %v459 = vunpack.c.l.b16 %v84
    %v460 = vunpack.c.h.b16 %v84
    %v461 = vunpack.c.l.b16 %v85
    %v462 = vunpack.c.l.b16 %v86
    %v463 = vunpack.c.h.b16 %v86
    %v464 = vunpack.c.l.b16 %v87
    %v465 = vunpack.c.l.b16 %v88
    %v466 = vunpack.c.h.b16 %v88
    %v467 = vunpack.c.l.b16 %v89
    %v468 = vunpack.c.l.b16 %v90
    %v469 = vunpack.c.h.b16 %v90
    %v470 = vunpack.c.l.b16 %v91
    %v471 = vunpack.c.l.b16 %v92
    %v472 = vunpack.c.h.b16 %v92
    %v473 = vunpack.c.l.b16 %v93
    %v474 = vunpack.c.l.b16 %v94
    %v475 = vunpack.c.h.b16 %v94
    %v476 = vunpack.c.l.b16 %v95
    %v477 = vunpack.c.l.b16 %v96
    %v478 = vunpack.c.h.b16 %v96
    %v479 = vunpack.c.l.b16 %v97
    %v480 = vunpack.c.l.b16 %v98
    %v481 = vunpack.c.h.b16 %v98
    %v482 = vunpack.c.l.b16 %v99
    %v483 = vunpack.c.l.b16 %v100
    %v484 = vunpack.c.h.b16 %v100
    %v485 = vunpack.c.l.b16 %v101
    %v486 = vunpack.c.l.b16 %v102
    %v487 = vunpack.c.h.b16 %v102
    %v488 = vunpack.c.l.b16 %v103
    %v489 = vunpack.c.l.b16 %v104
    %v490 = vunpack.c.h.b16 %v104
    %v491 = vunpack.c.l.b16 %v105
    %v492 = vunpack.c.l.b16 %v106
    %v493 = vunpack.c.h.b16 %v106
    %v494 = vunpack.c.l.b16 %v107
    %v495 = vunpack.c.l.b16 %v108
    %v496 = vunpack.c.h.b16 %v108
    %v497 = vunpack.c.l.b16 %v109
    %v498 = vunpack.c.l.b16 %v110
    %v499 = vunpack.c.h.b16 %v110
    %v500 = vunpack.c.l.b16 %v111
    %v501 = vunpack.c.l.b16 %v112
    %v502 = vunpack.c.h.b16 %v112
    %v503 = vunpack.c.l.b16 %v113
    %v504 = vunpack.c.l.b16 %v114
    %v505 = vunpack.c.h.b16 %v114
    %v506 = vunpack.c.l.b16 %v115
    %v507 = vunpack.c.l.b16 %v116
    %v508 = vunpack.c.h.b16 %v116
    %v509 = vunpack.c.l.b16 %v117
    %v510 = vunpack.c.l.b16 %v118
    %v511 = vunpack.c.h.b16 %v118
    %v512 = vunpack.c.l.b16 %v119
    %v513 = vunpack.c.l.b16 %v120
    %v514 = vunpack.c.h.b16 %v120
    %v515 = vunpack.c.l.b16 %v121
    %v516 = vunpack.c.l.b16 %v122
    %v517 = vunpack.c.h.b16 %v122
    %v518 = vunpack.c.l.b16 %v123
    %v519 = vunpack.c.l.b16 %v124
    %v520 = vunpack.c.h.b16 %v124
    %v521 = vunpack.c.l.b16 %v125
    %v522 = vunpack.c.l.b16 %v126
    %v523 = vunpack.c.h.b16 %v126
    %v524 = vunpack.c.l.b16 %v127
    %v525 = vunpack.c.l.b16 %v128
    %v526 = vunpack.c.h.b16 %v128
    %v527 = vunpack.c.l.b16 %v129
    %v528 = vunpack.c.l.b16 %v130
    %v529 = vunpack.c.h.b16 %v130
    %v530 = vunpack.c.l.b16 %v131
    %v531 = vunpack.c.l.b16 %v132
    %v532 = vunpack.c.h.b16 %v132
    %v533 = vunpack.c.l.b16 %v133
    %v534 = vunpack.c.l.b16 %v134
    %v535 = vunpack.c.h.b16 %v134
    %v536 = vunpack.c.l.b16 %v135
    %v537 = vunpack.c.l.b16 %v136
    %v538 = vunpack.c.h.b16 %v136
    %v539 = vunpack.c.l.b16 %v137
    %v540 = vunpack.c.l.b16 %v138
    %v541 = vunpack.c.h.b16 %v138
    %v542 = vunpack.c.l.b16 %v139
    %v543 = vunpack.c.l.b16 %v140
    %v544 = vunpack.c.h.b16 %v140
    %v545 = vunpack.c.l.b16 %v141
    %v546 = vunpack.c.l.b16 %v142
    %v547 = vunpack.c.h.b16 %v142
    %v548 = vunpack.c.l.b16 %v143
    %v549 = vunpack.c.l.b16 %v144
    %v550 = vunpack.c.h.b16 %v144
    %v551 = vunpack.c.l.b16 %v145
    %v552 = vunpack.c.l.b16 %v146
    %v553 = vunpack.c.h.b16 %v146
    %v554 = vunpack.c.l.b16 %v147
    %v555 = vunpack.c.l.b16 %v148
    %v556 = vunpack.c.h.b16 %v148
    %v557 = vunpack.c.l.b16 %v149
    %v558 = vunpack.c.l.b16 %v150
    %v559 = vunpack.c.h.b16 %v150
    %v560 = vunpack.c.l.b16 %v151
    %v561 = vunpack.c.l.b16 %v152
    %v562 = vunpack.c.h.b16 %v152
    %v563 = vunpack.c.l.b16 %v153
    %v564 = vunpack.c.l.b16 %v154
    %v565 = vunpack.c.h.b16 %v154
    %v566 = vunpack.c.l.b16 %v155
    %v567 = vunpack.c.l.b16 %v156
    %v568 = vunpack.c.h.b16 %v156
    %v569 = vunpack.c.l.b16 %v157
    %v570 = vunpack.c.l.b16 %v158
    %v571 = vunpack.c.h.b16 %v158
    %v572 = vunpack.c.l.b16 %v159
    %v573 = vunpack.c.l.b16 %v160
    %v574 = vunpack.c.h.b16 %v160
    %v575 = vunpack.c.l.b16 %v161
    %v576 = vunpack.c.l.b16 %v162
    %v577 = vunpack.c.h.b16 %v162
    %v578 = vunpack.c.l.b16 %v163
    %v579 = vunpack.c.l.b16 %v164
    %v580 = vunpack.c.h.b16 %v164
    %v581 = vunpack.c.l.b16 %v165
    %v582 = vunpack.c.l.b16 %v166
    %v583 = vunpack.c.h.b16 %v166
    %v584 = vunpack.c.l.b16 %v167
    %v585 = vunpack.c.l.b16 %v168
    %v586 = vunpack.c.h.b16 %v168
    %v587 = vunpack.c.l.b16 %v169
    %v588 = vunpack.c.l.b16 %v170
    %v589 = vunpack.c.h.b16 %v170
    %v590 = vunpack.c.l.b16 %v171
    %v591 = vunpack.c.l.b16 %v172
    %v592 = vunpack.c.h.b16 %v172
    %v593 = vunpack.c.l.b16 %v173
    %v594 = vunpack.c.l.b16 %v174
    %v595 = vunpack.c.h.b16 %v174
    %v596 = vunpack.c.l.b16 %v175
    %v597 = vunpack.c.l.b16 %v176
    %v598 = vunpack.c.h.b16 %v176
    %v599 = vunpack.c.l.b16 %v177
    %v600 = vunpack.c.l.b16 %v178
    %v601 = vunpack.c.h.b16 %v178
    %v602 = vunpack.c.l.b16 %v179
    %v603 = vunpack.c.l.b16 %v180
    %v604 = vunpack.c.h.b16 %v180
    %v605 = vunpack.c.l.b16 %v181
    %v606 = vunpack.c.l.b16 %v182
    %v607 = vunpack.c.h.b16 %v182
    %v608 = vunpack.c.l.b16 %v183
    %v609 = vunpack.c.l.b16 %v184
    %v610 = vunpack.c.h.b16 %v184
    %v611 = vunpack.c.l.b16 %v185
    %v612 = vunpack.c.l.b16 %v186
    %v613 = vunpack.c.h.b16 %v186
    %v614 = vunpack.c.l.b16 %v187
    %v615 = vunpack.c.l.b16 %v188
    %v616 = vunpack.c.h.b16 %v188
    %v617 = vunpack.c.l.b16 %v189
    %v618 = vunpack.c.l.b16 %v190
    %v619 = vunpack.c.h.b16 %v190
    %v620 = vunpack.c.l.b16 %v191
    %v621 = vunpack.c.l.b16 %v192
    %v622 = vunpack.c.h.b16 %v192
    %v623 = vunpack.c.l.b16 %v193
    %v624 = vunpack.c.l.b16 %v194
    %v625 = vunpack.c.h.b16 %v194
    %v626 = vunpack.c.l.b16 %v195
    %v627 = vunpack.c.l.b16 %v196
    %v628 = vunpack.c.h.b16 %v196
    %v629 = vunpack.c.l.b16 %v197
    %v630 = vunpack.c.l.b16 %v198
    %v631 = vunpack.c.h.b16 %v198
    %v632 = vunpack.c.l.b16 %v199
    %v633 = vunpack.c.l.b16 %v200
    %v634 = vunpack.c.h.b16 %v200
    %v635 = vunpack.c.l.b16 %v201
    %v636 = vunpack.c.l.b16 %v202
    %v637 = vunpack.c.h.b16 %v202
    %v638 = vunpack.c.l.b16 %v203
    %v639 = vpack.c.b16 %v402, %v399
    %v640 = vpack.c.b16 %v403, %v400
    %v641 = vpack.c.b16 %v404, %v401
    %v642 = vpack.c.b16 %v408, %v405
    %v643 = vpack.c.b16 %v409, %v406
    %v644 = vpack.c.b16 %v410, %v407
    %v645 = vpack.c.b16 %v414, %v411
    %v646 = vpack.c.b16 %v415, %v412
    %v647 = vpack.c.b16 %v416, %v413
    %v648 = vpack.c.b16 %v420, %v417
    %v649 = vpack.c.b16 %v421, %v418
    %v650 = vpack.c.b16 %v422, %v419
    %v651 = vpack.c.b16 %v426, %v423
    %v652 = vpack.c.b16 %v427, %v424
    %v653 = vpack.c.b16 %v428, %v425
    %v654 = vpack.c.b16 %v432, %v429
    %v655 = vpack.c.b16 %v433, %v430
    %v656 = vpack.c.b16 %v434, %v431
    %v657 = vpack.c.b16 %v438, %v435
    %v658 = vpack.c.b16 %v439, %v436
    %v659 = vpack.c.b16 %v440, %v437
    %v660 = vpack.c.b16 %v444, %v441
    %v661 = vpack.c.b16 %v445, %v442
    %v662 = vpack.c.b16 %v446, %v443
    %v663 = vpack.c.b16 %v450, %v447
    %v664 = vpack.c.b16 %v451, %v448
    %v665 = vpack.c.b16 %v452, %v449
    %v666 = vpack.c.b16 %v456, %v453
    %v667 = vpack.c.b16 %v457, %v454
    %v668 = vpack.c.b16 %v458, %v455
    %v669 = vpack.c.b16 %v462, %v459
    %v670 = vpack.c.b16 %v463, %v460
    %v671 = vpack.c.b16 %v464, %v461
    %v672 = vpack.c.b16 %v468, %v465
    %v673 = vpack.c.b16 %v469, %v466
    %v674 = vpack.c.b16 %v470, %v467
    %v675 = vpack.c.b16 %v474, %v471
    %v676 = vpack.c.b16 %v475, %v472
    %v677 = vpack.c.b16 %v476, %v473
    %v678 = vpack.c.b16 %v480, %v477
    %v679 = vpack.c.b16 %v481, %v478
    %v680 = vpack.c.b16 %v482, %v479
    %v681 = vpack.c.b16 %v486, %v483
    %v682 = vpack.c.b16 %v487, %v484
    %v683 = vpack.c.b16 %v488, %v485
    %v684 = vpack.c.b16 %v492, %v489
    %v685 = vpack.c.b16 %v493, %v490
    %v686 = vpack.c.b16 %v494, %v491
    %v687 = vpack.c.b16 %v498, %v495
    %v688 = vpack.c.b16 %v499, %v496
    %v689 = vpack.c.b16 %v500, %v497
    %v690 = vpack.c.b16 %v504, %v501
    %v691 = vpack.c.b16 %v505, %v502
    %v692 = vpack.c.b16 %v506, %v503
    %v693 = vpack.c.b16 %v510, %v507
    %v694 = vpack.c.b16 %v511, %v508
    %v695 = vpack.c.b16 %v512, %v509
    %v696 = vpack.c.b16 %v516, %v513
    %v697 = vpack.c.b16 %v517, %v514
    %v698 = vpack.c.b16 %v518, %v515
    %v699 = vpack.c.b16 %v522, %v519
    %v700 = vpack.c.b16 %v523, %v520
    %v701 = vpack.c.b16 %v524, %v521
    %v702 = vpack.c.b16 %v528, %v525
    %v703 = vpack.c.b16 %v529, %v526
    %v704 = vpack.c.b16 %v530, %v527
    %v705 = vpack.c.b16 %v534, %v531
    %v706 = vpack.c.b16 %v535, %v532
    %v707 = vpack.c.b16 %v536, %v533
    %v708 = vpack.c.b16 %v540, %v537
    %v709 = vpack.c.b16 %v541, %v538
    %v710 = vpack.c.b16 %v542, %v539
    %v711 = vpack.c.b16 %v546, %v543
    %v712 = vpack.c.b16 %v547, %v544
    %v713 = vpack.c.b16 %v548, %v545
    %v714 = vpack.c.b16 %v552, %v549
    %v715 = vpack.c.b16 %v553, %v550
    %v716 = vpack.c.b16 %v554, %v551
    %v717 = vpack.c.b16 %v558, %v555
    %v718 = vpack.c.b16 %v559, %v556
    %v719 = vpack.c.b16 %v560, %v557
    %v720 = vpack.c.b16 %v564, %v561
    %v721 = vpack.c.b16 %v565, %v562
    %v722 = vpack.c.b16 %v566, %v563
    %v723 = vpack.c.b16 %v570, %v567
    %v724 = vpack.c.b16 %v571, %v568
    %v725 = vpack.c.b16 %v572, %v569
    %v726 = vpack.c.b16 %v576, %v573
    %v727 = vpack.c.b16 %v577, %v574
    %v728 = vpack.c.b16 %v578, %v575
    %v729 = vpack.c.b16 %v582, %v579
    %v730 = vpack.c.b16 %v583, %v580
    %v731 = vpack.c.b16 %v584, %v581
    %v732 = vpack.c.b16 %v588, %v585
    %v733 = vpack.c.b16 %v589, %v586
    %v734 = vpack.c.b16 %v590, %v587
    %v735 = vpack.c.b16 %v594, %v591
    %v736 = vpack.c.b16 %v595, %v592
    %v737 = vpack.c.b16 %v596, %v593
    %v738 = vpack.c.b16 %v600, %v597
    %v739 = vpack.c.b16 %v601, %v598
    %v740 = vpack.c.b16 %v602, %v599
    %v741 = vpack.c.b16 %v606, %v603
    %v742 = vpack.c.b16 %v607, %v604
    %v743 = vpack.c.b16 %v608, %v605
    %v744 = vpack.c.b16 %v612, %v609
    %v745 = vpack.c.b16 %v613, %v610
    %v746 = vpack.c.b16 %v614, %v611
    %v747 = vpack.c.b16 %v618, %v615
    %v748 = vpack.c.b16 %v619, %v616
    %v749 = vpack.c.b16 %v620, %v617
    %v750 = vpack.c.b16 %v624, %v621
    %v751 = vpack.c.b16 %v625, %v622
    %v752 = vpack.c.b16 %v626, %v623
    %v753 = vpack.c.b16 %v630, %v627
    %v754 = vpack.c.b16 %v631, %v628
    %v755 = vpack.c.b16 %v632, %v629
    %v756 = vpack.c.b16 %v636, %v633
    %v757 = vpack.c.b16 %v637, %v634
    %v758 = vpack.c.b16 %v638, %v635
    %879 = vmatprep.subr.bf16.mxu0 %v640
    %880 = vmatpush1.bf16.msra.mxu0 %v639
    %881 = vmatprep.subr.bf16.mxu0 %v643
    %882 = vmatpush1.bf16.msra.mxu0 %v642
    %883 = vmatprep.subr.bf16.mxu0 %v646
    %884 = vmatpush1.bf16.msra.mxu0 %v645
    %885 = vmatprep.subr.bf16.mxu0 %v649
    %886 = vmatpush1.bf16.msra.mxu0 %v648
    %887 = vmatprep.subr.bf16.mxu0 %v652
    %888 = vmatpush1.bf16.msra.mxu0 %v651
    %889 = vmatprep.subr.bf16.mxu0 %v655
    %890 = vmatpush1.bf16.msra.mxu0 %v654
    %891 = vmatprep.subr.bf16.mxu0 %v658
    %892 = vmatpush1.bf16.msra.mxu0 %v657
    %893 = vmatprep.subr.bf16.mxu0 %v661
    %894 = vmatpush1.bf16.msra.mxu0 %v660
    %895 = vmatprep.subr.bf16.mxu0 %v664
    %896 = vmatpush1.bf16.msra.mxu0 %v663
    %897 = vmatprep.subr.bf16.mxu0 %v667
    %898 = vmatpush1.bf16.msra.mxu0 %v666
    %899 = vmatprep.subr.bf16.mxu0 %v670
    %900 = vmatpush1.bf16.msra.mxu0 %v669
    %901 = vmatprep.subr.bf16.mxu0 %v673
    %902 = vmatpush1.bf16.msra.mxu0 %v672
    %903 = vmatprep.subr.bf16.mxu0 %v676
    %904 = vmatpush1.bf16.msra.mxu0 %v675
    %905 = vmatprep.subr.bf16.mxu0 %v679
    %906 = vmatpush1.bf16.msra.mxu0 %v678
    %907 = vmatprep.subr.bf16.mxu0 %v682
    %908 = vmatpush1.bf16.msra.mxu0 %v681
    %909 = vmatprep.subr.bf16.mxu0 %v685
    %910 = vmatpush1.bf16.msra.mxu0 %v684
    %911 = vmatprep.mubr.bf16.mxu0 %v230
    %912 = vmatmul.mubr.bf16.gmra.mrb[0].mxu0 %v229
    %v913 = vpop.f32.mrb[0].mxu0
    %v914 = vadd.f32 %v209, %v913
    %v915 = vpop.f32.mrb[0].mxu0
    %v916 = vadd.f32 %v213, %v915
    %v917 = vpop.f32.mrb[0].mxu0
    %v918 = vpop.f32.mrb[0].mxu0
    %919 = vdwg.mxu0
    %920 = vmatprep.subr.bf16.mxu0 %v688
    %921 = vmatpush1.bf16.msra.mxu0 %v687
    %922 = vmatprep.subr.bf16.mxu0 %v691
    %923 = vmatpush1.bf16.msra.mxu0 %v690
    %924 = vmatprep.subr.bf16.mxu0 %v694
    %925 = vmatpush1.bf16.msra.mxu0 %v693
    %926 = vmatprep.subr.bf16.mxu0 %v697
    %927 = vmatpush1.bf16.msra.mxu0 %v696
    %928 = vmatprep.subr.bf16.mxu0 %v700
    %929 = vmatpush1.bf16.msra.mxu0 %v699
    %930 = vmatprep.subr.bf16.mxu0 %v703
    %931 = vmatpush1.bf16.msra.mxu0 %v702
    %932 = vmatprep.subr.bf16.mxu0 %v706
    %933 = vmatpush1.bf16.msra.mxu0 %v705
    %934 = vmatprep.subr.bf16.mxu0 %v709
    %935 = vmatpush1.bf16.msra.mxu0 %v708
    %936 = vmatprep.subr.bf16.mxu0 %v712
    %937 = vmatpush1.bf16.msra.mxu0 %v711
    %938 = vmatprep.subr.bf16.mxu0 %v715
    %939 = vmatpush1.bf16.msra.mxu0 %v714
    %940 = vmatprep.subr.bf16.mxu0 %v718
    %941 = vmatpush1.bf16.msra.mxu0 %v717
    %942 = vmatprep.subr.bf16.mxu0 %v721
    %943 = vmatpush1.bf16.msra.mxu0 %v720
    %944 = vmatprep.subr.bf16.mxu0 %v724
    %945 = vmatpush1.bf16.msra.mxu0 %v723
    %946 = vmatprep.subr.bf16.mxu0 %v727
    %947 = vmatpush1.bf16.msra.mxu0 %v726
    %948 = vmatprep.subr.bf16.mxu0 %v730
    %949 = vmatpush1.bf16.msra.mxu0 %v729
    %950 = vmatprep.subr.bf16.mxu0 %v733
    %951 = vmatpush1.bf16.msra.mxu0 %v732
    %952 = vmatprep.mubr.bf16.mxu0 %v232
    %953 = vmatmul.mubr.bf16.gmra.mrb[0].mxu0 %v231
    %v954 = vpop.f32.mrb[0].mxu0
    %v955 = vadd.f32 %v914, %v954
    %v956 = vpop.f32.mrb[0].mxu0
    %v957 = vadd.f32 %v916, %v956
    %v958 = vpop.f32.mrb[0].mxu0
    %v959 = vpop.f32.mrb[0].mxu0
    %960 = vdwg.mxu0
    %961 = vmatprep.subr.bf16.mxu0 %v736
    %962 = vmatpush1.bf16.msra.mxu0 %v735
    %963 = vmatprep.subr.bf16.mxu0 %v739
    %964 = vmatpush1.bf16.msra.mxu0 %v738
    %965 = vmatprep.subr.bf16.mxu0 %v742
    %966 = vmatpush1.bf16.msra.mxu0 %v741
    %967 = vmatprep.subr.bf16.mxu0 %v745
    %968 = vmatpush1.bf16.msra.mxu0 %v744
    %969 = vmatprep.subr.bf16.mxu0 %v748
    %970 = vmatpush1.bf16.msra.mxu0 %v747
    %971 = vmatprep.subr.bf16.mxu0 %v751
    %972 = vmatpush1.bf16.msra.mxu0 %v750
    %973 = vmatprep.subr.bf16.mxu0 %v754
    %974 = vmatpush1.bf16.msra.mxu0 %v753
    %975 = vmatprep.subr.bf16.mxu0 %v757
    %976 = vmatpush1.bf16.msra.mxu0 %v756
    %977 = vmatprep.subr.bf16.mxu0 0
    %978 = vmatpush1.bf16.msra.mxu0 0
    %979 = vmatprep.subr.bf16.mxu0 0
    %980 = vmatpush1.bf16.msra.mxu0 0
    %981 = vmatprep.subr.bf16.mxu0 0
    %982 = vmatpush1.bf16.msra.mxu0 0
    %983 = vmatprep.subr.bf16.mxu0 0
    %984 = vmatpush1.bf16.msra.mxu0 0
    %985 = vmatprep.subr.bf16.mxu0 0
    %986 = vmatpush1.bf16.msra.mxu0 0
    %987 = vmatprep.subr.bf16.mxu0 0
    %988 = vmatpush1.bf16.msra.mxu0 0
    %989 = vmatprep.subr.bf16.mxu0 0
    %990 = vmatpush1.bf16.msra.mxu0 0
    %991 = vmatprep.subr.bf16.mxu0 0
    %992 = vmatpush1.bf16.msra.mxu0 0
    %993 = vmatprep.mubr.bf16.mxu0 0
    %994 = vmatmul.mubr.bf16.gmra.mrb[0].mxu0 %v233
    %v995 = vpop.f32.mrb[0].mxu0
    %v996 = vadd.f32 %v955, %v995
    %v997 = vpop.f32.mrb[0].mxu0
    %v998 = vadd.f32 %v957, %v997
    %v999 = vpop.f32.mrb[0].mxu0
    %v1000 = vpop.f32.mrb[0].mxu0
    %1001 = vdwg.mxu0
    %1002 = vmatprep.subr.bf16.mxu0 0
    %1003 = vmatpush1.bf16.msra.mxu0 %v641
    %1004 = vmatprep.subr.bf16.mxu0 0
    %1005 = vmatpush1.bf16.msra.mxu0 %v644
    %1006 = vmatprep.subr.bf16.mxu0 0
    %1007 = vmatpush1.bf16.msra.mxu0 %v647
    %1008 = vmatprep.subr.bf16.mxu0 0
    %1009 = vmatpush1.bf16.msra.mxu0 %v650
    %1010 = vmatprep.subr.bf16.mxu0 0
    %1011 = vmatpush1.bf16.msra.mxu0 %v653
    %1012 = vmatprep.subr.bf16.mxu0 0
    %1013 = vmatpush1.bf16.msra.mxu0 %v656
    %1014 = vmatprep.subr.bf16.mxu0 0
    %1015 = vmatpush1.bf16.msra.mxu0 %v659
    %1016 = vmatprep.subr.bf16.mxu0 0
    %1017 = vmatpush1.bf16.msra.mxu0 %v662
    %1018 = vmatprep.subr.bf16.mxu0 0
    %1019 = vmatpush1.bf16.msra.mxu0 %v665
    %1020 = vmatprep.subr.bf16.mxu0 0
    %1021 = vmatpush1.bf16.msra.mxu0 %v668
    %1022 = vmatprep.subr.bf16.mxu0 0
    %1023 = vmatpush1.bf16.msra.mxu0 %v671
    %1024 = vmatprep.subr.bf16.mxu0 0
    %1025 = vmatpush1.bf16.msra.mxu0 %v674
    %1026 = vmatprep.subr.bf16.mxu0 0
    %1027 = vmatpush1.bf16.msra.mxu0 %v677
    %1028 = vmatprep.subr.bf16.mxu0 0
    %1029 = vmatpush1.bf16.msra.mxu0 %v680
    %1030 = vmatprep.subr.bf16.mxu0 0
    %1031 = vmatpush1.bf16.msra.mxu0 %v683
    %1032 = vmatprep.subr.bf16.mxu0 0
    %1033 = vmatpush1.bf16.msra.mxu0 %v686
    %1034 = vmatprep.mubr.bf16.mxu0 %v230
    %1035 = vmatmul.mubr.bf16.gmra.mrb[0].mxu0 %v229
    %v1036 = vpop.f32.mrb[0].mxu0
    %v1037 = vadd.f32 %v217, %v1036
    %v1038 = vpop.f32.mrb[0].mxu0
    %v1039 = vpop.f32.mrb[0].mxu0
    %v1040 = vpop.f32.mrb[0].mxu0
    %1041 = vdwg.mxu0
    %1042 = vmatprep.subr.bf16.mxu0 0
    %1043 = vmatpush1.bf16.msra.mxu0 %v689
    %1044 = vmatprep.subr.bf16.mxu0 0
    %1045 = vmatpush1.bf16.msra.mxu0 %v692
    %1046 = vmatprep.subr.bf16.mxu0 0
    %1047 = vmatpush1.bf16.msra.mxu0 %v695
    %1048 = vmatprep.subr.bf16.mxu0 0
    %1049 = vmatpush1.bf16.msra.mxu0 %v698
    %1050 = vmatprep.subr.bf16.mxu0 0
    %1051 = vmatpush1.bf16.msra.mxu0 %v701
    %1052 = vmatprep.subr.bf16.mxu0 0
    %1053 = vmatpush1.bf16.msra.mxu0 %v704
    %1054 = vmatprep.subr.bf16.mxu0 0
    %1055 = vmatpush1.bf16.msra.mxu0 %v707
    %1056 = vmatprep.subr.bf16.mxu0 0
    %1057 = vmatpush1.bf16.msra.mxu0 %v710
    %1058 = vmatprep.subr.bf16.mxu0 0
    %1059 = vmatpush1.bf16.msra.mxu0 %v713
    %1060 = vmatprep.subr.bf16.mxu0 0
    %1061 = vmatpush1.bf16.msra.mxu0 %v716
    %1062 = vmatprep.subr.bf16.mxu0 0
    %1063 = vmatpush1.bf16.msra.mxu0 %v719
    %1064 = vmatprep.subr.bf16.mxu0 0
    %1065 = vmatpush1.bf16.msra.mxu0 %v722
    %1066 = vmatprep.subr.bf16.mxu0 0
    %1067 = vmatpush1.bf16.msra.mxu0 %v725
    %1068 = vmatprep.subr.bf16.mxu0 0
    %1069 = vmatpush1.bf16.msra.mxu0 %v728
    %1070 = vmatprep.subr.bf16.mxu0 0
    %1071 = vmatpush1.bf16.msra.mxu0 %v731
    %1072 = vmatprep.subr.bf16.mxu0 0
    %1073 = vmatpush1.bf16.msra.mxu0 %v734
    %1074 = vmatprep.mubr.bf16.mxu0 %v232
    %1075 = vmatmul.mubr.bf16.gmra.mrb[0].mxu0 %v231
    %v1076 = vpop.f32.mrb[0].mxu0
    %v1077 = vadd.f32 %v1037, %v1076
    %v1078 = vpop.f32.mrb[0].mxu0
    %v1079 = vpop.f32.mrb[0].mxu0
    %v1080 = vpop.f32.mrb[0].mxu0
    %1081 = vdwg.mxu0
    %1082 = vmatprep.subr.bf16.mxu0 0
    %1083 = vmatpush1.bf16.msra.mxu0 %v737
    %1084 = vmatprep.subr.bf16.mxu0 0
    %1085 = vmatpush1.bf16.msra.mxu0 %v740
    %1086 = vmatprep.subr.bf16.mxu0 0
    %1087 = vmatpush1.bf16.msra.mxu0 %v743
    %1088 = vmatprep.subr.bf16.mxu0 0
    %1089 = vmatpush1.bf16.msra.mxu0 %v746
    %1090 = vmatprep.subr.bf16.mxu0 0
    %1091 = vmatpush1.bf16.msra.mxu0 %v749
    %1092 = vmatprep.subr.bf16.mxu0 0
    %1093 = vmatpush1.bf16.msra.mxu0 %v752
    %1094 = vmatprep.subr.bf16.mxu0 0
    %1095 = vmatpush1.bf16.msra.mxu0 %v755
    %1096 = vmatprep.subr.bf16.mxu0 0
    %1097 = vmatpush1.bf16.msra.mxu0 %v758
    %1098 = vmatprep.subr.bf16.mxu0 0
    %1099 = vmatpush1.bf16.msra.mxu0 0
    %1100 = vmatprep.subr.bf16.mxu0 0
    %1101 = vmatpush1.bf16.msra.mxu0 0
    %1102 = vmatprep.subr.bf16.mxu0 0
    %1103 = vmatpush1.bf16.msra.mxu0 0
    %1104 = vmatprep.subr.bf16.mxu0 0
    %1105 = vmatpush1.bf16.msra.mxu0 0
    %1106 = vmatprep.subr.bf16.mxu0 0
    %1107 = vmatpush1.bf16.msra.mxu0 0
    %1108 = vmatprep.subr.bf16.mxu0 0
    %1109 = vmatpush1.bf16.msra.mxu0 0
    %1110 = vmatprep.subr.bf16.mxu0 0
    %1111 = vmatpush1.bf16.msra.mxu0 0
    %1112 = vmatprep.subr.bf16.mxu0 0
    %1113 = vmatpush1.bf16.msra.mxu0 0
    %1114 = vmatprep.mubr.bf16.mxu0 0
    %1115 = vmatmul.mubr.bf16.gmra.mrb[0].mxu0 %v233
    %v1116 = vpop.f32.mrb[0].mxu0
    %v1117 = vadd.f32 %v1077, %v1116
    %v1118 = vpop.f32.mrb[0].mxu0
    %v1119 = vpop.f32.mrb[0].mxu0
    %v1120 = vpop.f32.mrb[0].mxu0
    %1121 = vdwg.mxu0
    %1122 = vst [vmem:[%s3] sm:$0xff] %v996
    %1123 = vst [vmem:[%s3 + $0x8] sm:$0xff] %v998
    %1124 = vst [vmem:[%s3 + $0x10] sm:$0xff] %v1117
    // Predicated region
    $region22: #{dino_embedder_forward.3} parent=1 // pred_check
      _
    $region23: #{dino_embedder_forward.3} parent=1 // pred_check_branch
      %1126 = sbr.rel (0) target = $region25
    $region24: #{dino_embedder_forward.3} parent=1 // pred_region
      _
    $region25: #{dino_embedder_forward.3} parent=1 // pred_fallthru
      _
    // Predicated region
    $region26: #{dino_embedder_forward.3} parent=1 // pred_check
      _
    $region27: #{dino_embedder_forward.3} parent=1 // pred_check_branch
      %1128 = sbr.rel (0) target = $region29
    $region28: #{dino_embedder_forward.3} parent=1 // pred_region
      _
    $region29: #{dino_embedder_forward.3} parent=1 // pred_fallthru
      _
    %1129 = vsyncpa [#allocation3], 1
    %1130 = vsyncpa [#allocation5], 1

// kernel: dino_embedder_forward.4
$region0: #{dino_embedder_forward.4}
  #allocation0 [shape = 'u32[]', space=smem, size = 0x4, offset = 0x4, fixed_abs, tag = 'smem constant byte address 0x4 - core index']
  #allocation1 [shape = 'u32[144,128]{1,0:T(1,128)}', space=vmem, size = 0x12000, scoped, tag = 'internal scratch']
  #allocation2 [shape = 'f32[5,384]{1,0:T(8,128)}', space=vmem, size = 0x3000, scoped, tag = 'scratch operand']
  %s0 = inlined_call_operand.vmem [shape: f32[2,5,384], index: 0, kind: input, shape index: {}]
  %s1 = inlined_call_operand.hbm [shape: f32[2,1,384], index: 1, kind: input, shape index: {}]
  %s2 = inlined_call_operand.hbm [shape: f32[2,1,384], index: 2, kind: input, shape index: {}]
  %s3 = inlined_call_operand.hbm [shape: bf16[2,384,1152], index: 3, kind: input, shape index: {}]
  %s4 = inlined_call_operand.hbm [shape: f32[2,1,1152], index: 4, kind: input, shape index: {}]
  %s5 = inlined_call_operand.hbm [shape: bf16[2,384,384], index: 5, kind: input, shape index: {}]
  %s6 = inlined_call_operand.hbm [shape: f32[2,1,384], index: 6, kind: input, shape index: {}]
  %s7 = inlined_call_operand.hbm [shape: f32[2,1,384], index: 7, kind: input, shape index: {}]
  %s8 = inlined_call_operand.hbm [shape: f32[2,1,384], index: 8, kind: input, shape index: {}]
  %s9 = inlined_call_operand.hbm [shape: f32[2,1,384], index: 9, kind: input, shape index: {}]
  %s10 = inlined_call_operand.hbm [shape: bf16[2,384,1536], index: 10, kind: input, shape index: {}]
  %s11 = inlined_call_operand.hbm [shape: f32[2,1,1536], index: 11, kind: input, shape index: {}]
  %s12 = inlined_call_operand.hbm [shape: bf16[2,1536,384], index: 12, kind: input, shape index: {}]
  %s13 = inlined_call_operand.hbm [shape: f32[2,1,384], index: 13, kind: input, shape index: {}]
  %s14 = inlined_call_operand.hbm [shape: f32[2,1,384], index: 14, kind: input, shape index: {}]
  %s15 = inlined_call_operand.vmem [shape: f32[2,5,384], index: 15, kind: output, shape index: {}]
  %s16 = sld [smem:[#allocation0]]
  $region157: #{dino_embedder_forward.4} parent=0
    _
  %s18 = ssub.s32 1, %s16
  %s19 = scalar_select 0, %s18, %s16
  $region1: #{dino_embedder_forward.4} parent=0
    #allocation3 [shape = 'u8[3072]{0}', space=vmem, size = 0xc00, scoped, tag = 'input window, operand 1']
    #allocation4 [shape = 's32[2]{0}', space=sflag, size = 0x8, scoped, tag = 'scoped memory for dino_embedder_forward.4']
    #allocation5 [shape = 'u8[3072]{0}', space=vmem, size = 0xc00, scoped, tag = 'input window, operand 2']
    #allocation6 [shape = 's32[2]{0}', space=sflag, size = 0x8, scoped, tag = 'scoped memory for dino_embedder_forward.4']
    #allocation7 [shape = 'u8[1769472]{0}', space=vmem, size = 0x1b0000, scoped, tag = 'input window, operand 3']
    #allocation8 [shape = 'u8[9216]{0}', space=vmem, size = 0x2400, scoped, tag = 'input window, operand 4']
    #allocation9 [shape = 's32[2]{0}', space=sflag, size = 0x8, scoped, tag = 'scoped memory for dino_embedder_forward.4']
    #allocation10 [shape = 'u8[589824]{0}', space=vmem, size = 0x90000, scoped, tag = 'input window, operand 5']
    #allocation11 [shape = 'u8[3072]{0}', space=vmem, size = 0xc00, scoped, tag = 'input window, operand 6']
    #allocation12 [shape = 's32[2]{0}', space=sflag, size = 0x8, scoped, tag = 'scoped memory for dino_embedder_forward.4']
    #allocation13 [shape = 'u8[3072]{0}', space=vmem, size = 0xc00, scoped, tag = 'input window, operand 7']
    #allocation14 [shape = 'u8[3072]{0}', space=vmem, size = 0xc00, scoped, tag = 'input window, operand 8']
    #allocation15 [shape = 's32[2]{0}', space=sflag, size = 0x8, scoped, tag = 'scoped memory for dino_embedder_forward.4']
    #allocation16 [shape = 'u8[3072]{0}', space=vmem, size = 0xc00, scoped, tag = 'input window, operand 9']
    #allocation17 [shape = 'u8[2359296]{0}', space=vmem, size = 0x240000, scoped, tag = 'input window, operand 10']
    #allocation18 [shape = 's32[2]{0}', space=sflag, size = 0x8, scoped, tag = 'scoped memory for dino_embedder_forward.4']
    #allocation19 [shape = 'u8[12288]{0}', space=vmem, size = 0x3000, scoped, tag = 'input window, operand 11']
    #allocation20 [shape = 'u8[2359296]{0}', space=vmem, size = 0x240000, scoped, tag = 'input window, operand 12']
    #allocation21 [shape = 's32[2]{0}', space=sflag, size = 0x8, scoped, tag = 'scoped memory for dino_embedder_forward.4']
    #allocation22 [shape = 'u8[3072]{0}', space=vmem, size = 0xc00, scoped, tag = 'input window, operand 13']
    #allocation23 [shape = 'u8[3072]{0}', space=vmem, size = 0xc00, scoped, tag = 'input window, operand 14']
    #allocation24 [shape = 's32[2]{0}', space=sflag, size = 0x8, scoped, tag = 'scoped memory for dino_embedder_forward.4']
    %20 = vsyncpa [#allocation4], 0
    %s21 = scalar_lea.sflag [#allocation4], 1
    %22 = vsyncpa %s21, 0
    %23 = vsyncpa [#allocation6], 0
    %s24 = scalar_lea.sflag [#allocation6], 1
    %25 = vsyncpa %s24, 0
    %26 = vsyncpa [#allocation9], 0
    %s27 = scalar_lea.sflag [#allocation9], 1
    %28 = vsyncpa %s27, 0
    %29 = vsyncpa [#allocation12], 0
    %s30 = scalar_lea.sflag [#allocation12], 1
    %31 = vsyncpa %s30, 0
    %32 = vsyncpa [#allocation15], 0
    %s33 = scalar_lea.sflag [#allocation15], 1
    %34 = vsyncpa %s33, 0
    %35 = vsyncpa [#allocation18], 0
    %s36 = scalar_lea.sflag [#allocation18], 1
    %37 = vsyncpa %s36, 0
    %38 = vsyncpa [#allocation21], 0
    %s39 = scalar_lea.sflag [#allocation21], 1
    %40 = vsyncpa %s39, 0
    %41 = vsyncpa [#allocation24], 0
    %s42 = scalar_lea.sflag [#allocation24], 1
    %43 = vsyncpa %s42, 0
    loop: start=0, step=1, limit=6
    $region2: #{dino_embedder_forward.4} parent=1 // loop_pre_header
      _
    $region3: #{dino_embedder_forward.4} parent=1 // loop_header
      %s45 = sphi 0, %s49
      %p46 = scmp.ge.s32.totalorder %s45, 6
      %s52 = sphi 0, %s64
      %s53 = sphi 0, %s60
      %s54 = sphi 0, %s52
      %s55 = sphi 0, %s53
      %s56 = sphi 0, %s54
      %s57 = sphi 0, %s55
      %s67 = sphi 0, %s69
      %s70 = sphi 0, %s67
      %s71 = sphi 0, %s70
      %s87 = sphi 0, %s71
      %s93 = sphi 0, %s95
      %s96 = sphi 0, %s93
      %s97 = sphi 0, %s96
      %s113 = sphi 0, %s97
      %s119 = sphi 0, %s121
      %s122 = sphi 0, %s119
      %s123 = sphi 0, %s122
      %s139 = sphi 0, %s123
      %s145 = sphi 0, %s147
      %s148 = sphi 0, %s145
      %s149 = sphi 0, %s148
      %s165 = sphi 0, %s149
      %s171 = sphi 0, %s173
      %s174 = sphi 0, %s171
      %s175 = sphi 0, %s174
      %s191 = sphi 0, %s175
      %s197 = sphi 0, %s199
      %s200 = sphi 0, %s197
      %s201 = sphi 0, %s200
      %s217 = sphi 0, %s201
      %s223 = sphi 0, %s225
      %s226 = sphi 0, %s223
      %s227 = sphi 0, %s226
      %s243 = sphi 0, %s227
      %s249 = sphi 0, %s251
      %s252 = sphi 0, %s249
      %s253 = sphi 0, %s252
      %s269 = sphi 0, %s253
      %s275 = sphi 0, %s277
      %s278 = sphi 0, %s275
      %s279 = sphi 0, %s278
      %s295 = sphi 0, %s279
      %s301 = sphi 0, %s303
      %s304 = sphi 0, %s301
      %s305 = sphi 0, %s304
      %s321 = sphi 0, %s305
      %s327 = sphi 0, %s329
      %s330 = sphi 0, %s327
      %s331 = sphi 0, %s330
      %s347 = sphi 0, %s331
      %s353 = sphi 0, %s355
      %s356 = sphi 0, %s353
      %s357 = sphi 0, %s356
      %s373 = sphi 0, %s357
      %s379 = sphi 0, %s381
      %s382 = sphi 0, %s379
      %s383 = sphi 0, %s382
      %s399 = sphi 0, %s383
      %s405 = sphi 0, %s407
      %s408 = sphi 0, %s405
      %s409 = sphi 0, %s408
      %s425 = sphi 0, %s409
      %s431 = sphi 0, %s433
      %s434 = sphi 0, %s431
      %s435 = sphi 0, %s434
      %s451 = sphi 0, %s435
      %s457 = sphi 0, %s459
      %s460 = sphi 0, %s457
      %s461 = sphi 0, %s460
      %s477 = sphi 0, %s461
    $region4: #{dino_embedder_forward.4} parent=1 // loop_header_branch
      %48 = sbr.rel (%p46) target = $region8
    $region5: #{dino_embedder_forward.4} parent=1 // loop_body
      %s50 = ssub.s32 %s45, 1
      %s51 = ssub.s32 %s45, 2
      %s58 = sadd.s32 1, %s53
      %p59 = scmp.ge.s32.totalorder %s58, 2
      %s60 = scalar_select %p59, 0, %s58
      %s61 = sadd.s32 1, %s52
      %s62 = scalar_select %p59, %s61, %s52
      %p63 = scmp.ge.s32.totalorder %s62, 2
      %s64 = scalar_select %p63, 0, %s62
      %s65 = ssub.s32 %s52, %s64
      %p66 = scmp.eq.s32.totalorder %s65, 0
      %s68 = sadd.s32 %s67, 1
      %s69 = scalar_select %p66, %s67, %s68
      %p72 = pneg %p66
      %p73 = scmp.eq.s32.totalorder %s45, 3
      %p74 = por %p72, %p73
      %p75 = scmp.ne.s32.totalorder %s67, %s70
      %p76 = scmp.eq.s32.totalorder %s45, 0
      %p77 = por %p75, %p76
      %p78 = scmp.ne.s32.totalorder %s67, %s70
      %p79 = scmp.eq.s32.totalorder %s50, 3
      %p80 = por %p78, %p79
      %p81 = scmp.ne.s32.totalorder %s70, %s71
      %p82 = scmp.eq.s32.totalorder %s50, 0
      %p83 = por %p81, %p82
      %p84 = scmp.ne.s32.totalorder %s70, %s71
      %p85 = scmp.eq.s32.totalorder %s51, 3
      %p86 = por %p84, %p85
      %p88 = scmp.ne.s32.totalorder %s71, %s87
      %p89 = scmp.eq.s32.totalorder %s51, 0
      %p90 = por %p88, %p89
      %s91 = ssub.s32 %s53, %s60
      %p92 = scmp.eq.s32.totalorder %s91, 0
      %s94 = sadd.s32 %s93, 1
      %s95 = scalar_select %p92, %s93, %s94
      %p98 = pneg %p92
      %p99 = scmp.eq.s32.totalorder %s45, 3
      %p100 = por %p98, %p99
      %p101 = scmp.ne.s32.totalorder %s93, %s96
      %p102 = scmp.eq.s32.totalorder %s45, 0
      %p103 = por %p101, %p102
      %p104 = scmp.ne.s32.totalorder %s93, %s96
      %p105 = scmp.eq.s32.totalorder %s50, 3
      %p106 = por %p104, %p105
      %p107 = scmp.ne.s32.totalorder %s96, %s97
      %p108 = scmp.eq.s32.totalorder %s50, 0
      %p109 = por %p107, %p108
      %p110 = scmp.ne.s32.totalorder %s96, %s97
      %p111 = scmp.eq.s32.totalorder %s51, 3
      %p112 = por %p110, %p111
      %p114 = scmp.ne.s32.totalorder %s97, %s113
      %p115 = scmp.eq.s32.totalorder %s51, 0
      %p116 = por %p114, %p115
      %s117 = ssub.s32 %s53, %s60
      %p118 = scmp.eq.s32.totalorder %s117, 0
      %s120 = sadd.s32 %s119, 1
      %s121 = scalar_select %p118, %s119, %s120
      %p124 = pneg %p118
      %p125 = scmp.eq.s32.totalorder %s45, 3
      %p126 = por %p124, %p125
      %p127 = scmp.ne.s32.totalorder %s119, %s122
      %p128 = scmp.eq.s32.totalorder %s45, 0
      %p129 = por %p127, %p128
      %p130 = scmp.ne.s32.totalorder %s119, %s122
      %p131 = scmp.eq.s32.totalorder %s50, 3
      %p132 = por %p130, %p131
      %p133 = scmp.ne.s32.totalorder %s122, %s123
      %p134 = scmp.eq.s32.totalorder %s50, 0
      %p135 = por %p133, %p134
      %p136 = scmp.ne.s32.totalorder %s122, %s123
      %p137 = scmp.eq.s32.totalorder %s51, 3
      %p138 = por %p136, %p137
      %p140 = scmp.ne.s32.totalorder %s123, %s139
      %p141 = scmp.eq.s32.totalorder %s51, 0
      %p142 = por %p140, %p141
      %s143 = ssub.s32 %s53, %s60
      %p144 = scmp.eq.s32.totalorder %s143, 0
      %s146 = sadd.s32 %s145, 1
      %s147 = scalar_select %p144, %s145, %s146
      %p150 = pneg %p144
      %p151 = scmp.eq.s32.totalorder %s45, 3
      %p152 = por %p150, %p151
      %p153 = scmp.ne.s32.totalorder %s145, %s148
      %p154 = scmp.eq.s32.totalorder %s45, 0
      %p155 = por %p153, %p154
      %p156 = scmp.ne.s32.totalorder %s145, %s148
      %p157 = scmp.eq.s32.totalorder %s50, 3
      %p158 = por %p156, %p157
      %p159 = scmp.ne.s32.totalorder %s148, %s149
      %p160 = scmp.eq.s32.totalorder %s50, 0
      %p161 = por %p159, %p160
      %p162 = scmp.ne.s32.totalorder %s148, %s149
      %p163 = scmp.eq.s32.totalorder %s51, 3
      %p164 = por %p162, %p163
      %p166 = scmp.ne.s32.totalorder %s149, %s165
      %p167 = scmp.eq.s32.totalorder %s51, 0
      %p168 = por %p166, %p167
      %s169 = ssub.s32 %s53, %s60
      %p170 = scmp.eq.s32.totalorder %s169, 0
      %s172 = sadd.s32 %s171, 1
      %s173 = scalar_select %p170, %s171, %s172
      %p176 = pneg %p170
      %p177 = scmp.eq.s32.totalorder %s45, 3
      %p178 = por %p176, %p177
      %p179 = scmp.ne.s32.totalorder %s171, %s174
      %p180 = scmp.eq.s32.totalorder %s45, 0
      %p181 = por %p179, %p180
      %p182 = scmp.ne.s32.totalorder %s171, %s174
      %p183 = scmp.eq.s32.totalorder %s50, 3
      %p184 = por %p182, %p183
      %p185 = scmp.ne.s32.totalorder %s174, %s175
      %p186 = scmp.eq.s32.totalorder %s50, 0
      %p187 = por %p185, %p186
      %p188 = scmp.ne.s32.totalorder %s174, %s175
      %p189 = scmp.eq.s32.totalorder %s51, 3
      %p190 = por %p188, %p189
      %p192 = scmp.ne.s32.totalorder %s175, %s191
      %p193 = scmp.eq.s32.totalorder %s51, 0
      %p194 = por %p192, %p193
      %s195 = ssub.s32 %s53, %s60
      %p196 = scmp.eq.s32.totalorder %s195, 0
      %s198 = sadd.s32 %s197, 1
      %s199 = scalar_select %p196, %s197, %s198
      %p202 = pneg %p196
      %p203 = scmp.eq.s32.totalorder %s45, 3
      %p204 = por %p202, %p203
      %p205 = scmp.ne.s32.totalorder %s197, %s200
      %p206 = scmp.eq.s32.totalorder %s45, 0
      %p207 = por %p205, %p206
      %p208 = scmp.ne.s32.totalorder %s197, %s200
      %p209 = scmp.eq.s32.totalorder %s50, 3
      %p210 = por %p208, %p209
      %p211 = scmp.ne.s32.totalorder %s200, %s201
      %p212 = scmp.eq.s32.totalorder %s50, 0
      %p213 = por %p211, %p212
      %p214 = scmp.ne.s32.totalorder %s200, %s201
      %p215 = scmp.eq.s32.totalorder %s51, 3
      %p216 = por %p214, %p215
      %p218 = scmp.ne.s32.totalorder %s201, %s217
      %p219 = scmp.eq.s32.totalorder %s51, 0
      %p220 = por %p218, %p219
      %s221 = ssub.s32 %s53, %s60
      %p222 = scmp.eq.s32.totalorder %s221, 0
      %s224 = sadd.s32 %s223, 1
      %s225 = scalar_select %p222, %s223, %s224
      %p228 = pneg %p222
      %p229 = scmp.eq.s32.totalorder %s45, 3
      %p230 = por %p228, %p229
      %p231 = scmp.ne.s32.totalorder %s223, %s226
      %p232 = scmp.eq.s32.totalorder %s45, 0
      %p233 = por %p231, %p232
      %p234 = scmp.ne.s32.totalorder %s223, %s226
      %p235 = scmp.eq.s32.totalorder %s50, 3
      %p236 = por %p234, %p235
      %p237 = scmp.ne.s32.totalorder %s226, %s227
      %p238 = scmp.eq.s32.totalorder %s50, 0
      %p239 = por %p237, %p238
      %p240 = scmp.ne.s32.totalorder %s226, %s227
      %p241 = scmp.eq.s32.totalorder %s51, 3
      %p242 = por %p240, %p241
      %p244 = scmp.ne.s32.totalorder %s227, %s243
      %p245 = scmp.eq.s32.totalorder %s51, 0
      %p246 = por %p244, %p245
      %s247 = ssub.s32 %s53, %s60
      %p248 = scmp.eq.s32.totalorder %s247, 0
      %s250 = sadd.s32 %s249, 1
      %s251 = scalar_select %p248, %s249, %s250
      %p254 = pneg %p248
      %p255 = scmp.eq.s32.totalorder %s45, 3
      %p256 = por %p254, %p255
      %p257 = scmp.ne.s32.totalorder %s249, %s252
      %p258 = scmp.eq.s32.totalorder %s45, 0
      %p259 = por %p257, %p258
      %p260 = scmp.ne.s32.totalorder %s249, %s252
      %p261 = scmp.eq.s32.totalorder %s50, 3
      %p262 = por %p260, %p261
      %p263 = scmp.ne.s32.totalorder %s252, %s253
      %p264 = scmp.eq.s32.totalorder %s50, 0
      %p265 = por %p263, %p264
      %p266 = scmp.ne.s32.totalorder %s252, %s253
      %p267 = scmp.eq.s32.totalorder %s51, 3
      %p268 = por %p266, %p267
      %p270 = scmp.ne.s32.totalorder %s253, %s269
      %p271 = scmp.eq.s32.totalorder %s51, 0
      %p272 = por %p270, %p271
      %s273 = ssub.s32 %s53, %s60
      %p274 = scmp.eq.s32.totalorder %s273, 0
      %s276 = sadd.s32 %s275, 1
      %s277 = scalar_select %p274, %s275, %s276
      %p280 = pneg %p274
      %p281 = scmp.eq.s32.totalorder %s45, 3
      %p282 = por %p280, %p281
      %p283 = scmp.ne.s32.totalorder %s275, %s278
      %p284 = scmp.eq.s32.totalorder %s45, 0
      %p285 = por %p283, %p284
      %p286 = scmp.ne.s32.totalorder %s275, %s278
      %p287 = scmp.eq.s32.totalorder %s50, 3
      %p288 = por %p286, %p287
      %p289 = scmp.ne.s32.totalorder %s278, %s279
      %p290 = scmp.eq.s32.totalorder %s50, 0
      %p291 = por %p289, %p290
      %p292 = scmp.ne.s32.totalorder %s278, %s279
      %p293 = scmp.eq.s32.totalorder %s51, 3
      %p294 = por %p292, %p293
      %p296 = scmp.ne.s32.totalorder %s279, %s295
      %p297 = scmp.eq.s32.totalorder %s51, 0
      %p298 = por %p296, %p297
      %s299 = ssub.s32 %s53, %s60
      %p300 = scmp.eq.s32.totalorder %s299, 0
      %s302 = sadd.s32 %s301, 1
      %s303 = scalar_select %p300, %s301, %s302
      %p306 = pneg %p300
      %p307 = scmp.eq.s32.totalorder %s45, 3
      %p308 = por %p306, %p307
      %p309 = scmp.ne.s32.totalorder %s301, %s304
      %p310 = scmp.eq.s32.totalorder %s45, 0
      %p311 = por %p309, %p310
      %p312 = scmp.ne.s32.totalorder %s301, %s304
      %p313 = scmp.eq.s32.totalorder %s50, 3
      %p314 = por %p312, %p313
      %p315 = scmp.ne.s32.totalorder %s304, %s305
      %p316 = scmp.eq.s32.totalorder %s50, 0
      %p317 = por %p315, %p316
      %p318 = scmp.ne.s32.totalorder %s304, %s305
      %p319 = scmp.eq.s32.totalorder %s51, 3
      %p320 = por %p318, %p319
      %p322 = scmp.ne.s32.totalorder %s305, %s321
      %p323 = scmp.eq.s32.totalorder %s51, 0
      %p324 = por %p322, %p323
      %s325 = ssub.s32 %s53, %s60
      %p326 = scmp.eq.s32.totalorder %s325, 0
      %s328 = sadd.s32 %s327, 1
      %s329 = scalar_select %p326, %s327, %s328
      %p332 = pneg %p326
      %p333 = scmp.eq.s32.totalorder %s45, 3
      %p334 = por %p332, %p333
      %p335 = scmp.ne.s32.totalorder %s327, %s330
      %p336 = scmp.eq.s32.totalorder %s45, 0
      %p337 = por %p335, %p336
      %p338 = scmp.ne.s32.totalorder %s327, %s330
      %p339 = scmp.eq.s32.totalorder %s50, 3
      %p340 = por %p338, %p339
      %p341 = scmp.ne.s32.totalorder %s330, %s331
      %p342 = scmp.eq.s32.totalorder %s50, 0
      %p343 = por %p341, %p342
      %p344 = scmp.ne.s32.totalorder %s330, %s331
      %p345 = scmp.eq.s32.totalorder %s51, 3
      %p346 = por %p344, %p345
      %p348 = scmp.ne.s32.totalorder %s331, %s347
      %p349 = scmp.eq.s32.totalorder %s51, 0
      %p350 = por %p348, %p349
      %s351 = ssub.s32 %s53, %s60
      %p352 = scmp.eq.s32.totalorder %s351, 0
      %s354 = sadd.s32 %s353, 1
      %s355 = scalar_select %p352, %s353, %s354
      %p358 = pneg %p352
      %p359 = scmp.eq.s32.totalorder %s45, 3
      %p360 = por %p358, %p359
      %p361 = scmp.ne.s32.totalorder %s353, %s356
      %p362 = scmp.eq.s32.totalorder %s45, 0
      %p363 = por %p361, %p362
      %p364 = scmp.ne.s32.totalorder %s353, %s356
      %p365 = scmp.eq.s32.totalorder %s50, 3
      %p366 = por %p364, %p365
      %p367 = scmp.ne.s32.totalorder %s356, %s357
      %p368 = scmp.eq.s32.totalorder %s50, 0
      %p369 = por %p367, %p368
      %p370 = scmp.ne.s32.totalorder %s356, %s357
      %p371 = scmp.eq.s32.totalorder %s51, 3
      %p372 = por %p370, %p371
      %p374 = scmp.ne.s32.totalorder %s357, %s373
      %p375 = scmp.eq.s32.totalorder %s51, 0
      %p376 = por %p374, %p375
      %s377 = ssub.s32 %s53, %s60
      %p378 = scmp.eq.s32.totalorder %s377, 0
      %s380 = sadd.s32 %s379, 1
      %s381 = scalar_select %p378, %s379, %s380
      %p384 = pneg %p378
      %p385 = scmp.eq.s32.totalorder %s45, 3
      %p386 = por %p384, %p385
      %p387 = scmp.ne.s32.totalorder %s379, %s382
      %p388 = scmp.eq.s32.totalorder %s45, 0
      %p389 = por %p387, %p388
      %p390 = scmp.ne.s32.totalorder %s379, %s382
      %p391 = scmp.eq.s32.totalorder %s50, 3
      %p392 = por %p390, %p391
      %p393 = scmp.ne.s32.totalorder %s382, %s383
      %p394 = scmp.eq.s32.totalorder %s50, 0
      %p395 = por %p393, %p394
      %p396 = scmp.ne.s32.totalorder %s382, %s383
      %p397 = scmp.eq.s32.totalorder %s51, 3
      %p398 = por %p396, %p397
      %p400 = scmp.ne.s32.totalorder %s383, %s399
      %p401 = scmp.eq.s32.totalorder %s51, 0
      %p402 = por %p400, %p401
      %s403 = ssub.s32 %s53, %s60
      %p404 = scmp.eq.s32.totalorder %s403, 0
      %s406 = sadd.s32 %s405, 1
      %s407 = scalar_select %p404, %s405, %s406
      %p410 = pneg %p404
      %p411 = scmp.eq.s32.totalorder %s45, 3
      %p412 = por %p410, %p411
      %p413 = scmp.ne.s32.totalorder %s405, %s408
      %p414 = scmp.eq.s32.totalorder %s45, 0
      %p415 = por %p413, %p414
      %p416 = scmp.ne.s32.totalorder %s405, %s408
      %p417 = scmp.eq.s32.totalorder %s50, 3
      %p418 = por %p416, %p417
      %p419 = scmp.ne.s32.totalorder %s408, %s409
      %p420 = scmp.eq.s32.totalorder %s50, 0
      %p421 = por %p419, %p420
      %p422 = scmp.ne.s32.totalorder %s408, %s409
      %p423 = scmp.eq.s32.totalorder %s51, 3
      %p424 = por %p422, %p423
      %p426 = scmp.ne.s32.totalorder %s409, %s425
      %p427 = scmp.eq.s32.totalorder %s51, 0
      %p428 = por %p426, %p427
      %s429 = ssub.s32 %s53, %s60
      %p430 = scmp.eq.s32.totalorder %s429, 0
      %s432 = sadd.s32 %s431, 1
      %s433 = scalar_select %p430, %s431, %s432
      %p436 = pneg %p430
      %p437 = scmp.eq.s32.totalorder %s45, 3
      %p438 = por %p436, %p437
      %p439 = scmp.ne.s32.totalorder %s431, %s434
      %p440 = scmp.eq.s32.totalorder %s45, 0
      %p441 = por %p439, %p440
      %p442 = scmp.ne.s32.totalorder %s431, %s434
      %p443 = scmp.eq.s32.totalorder %s50, 3
      %p444 = por %p442, %p443
      %p445 = scmp.ne.s32.totalorder %s434, %s435
      %p446 = scmp.eq.s32.totalorder %s50, 0
      %p447 = por %p445, %p446
      %p448 = scmp.ne.s32.totalorder %s434, %s435
      %p449 = scmp.eq.s32.totalorder %s51, 3
      %p450 = por %p448, %p449
      %p452 = scmp.ne.s32.totalorder %s435, %s451
      %p453 = scmp.eq.s32.totalorder %s51, 0
      %p454 = por %p452, %p453
      %s455 = ssub.s32 %s52, %s64
      %p456 = scmp.eq.s32.totalorder %s455, 0
      %s458 = sadd.s32 %s457, 1
      %s459 = scalar_select %p456, %s457, %s458
      %p462 = pneg %p456
      %p463 = scmp.eq.s32.totalorder %s45, 3
      %p464 = por %p462, %p463
      %p465 = scmp.ne.s32.totalorder %s457, %s460
      %p466 = scmp.eq.s32.totalorder %s45, 0
      %p467 = por %p465, %p466
      %p468 = scmp.ne.s32.totalorder %s457, %s460
      %p469 = scmp.eq.s32.totalorder %s50, 3
      %p470 = por %p468, %p469
      %p471 = scmp.ne.s32.totalorder %s460, %s461
      %p472 = scmp.eq.s32.totalorder %s50, 0
      %p473 = por %p471, %p472
      %p474 = scmp.ne.s32.totalorder %s460, %s461
      %p475 = scmp.eq.s32.totalorder %s51, 3
      %p476 = por %p474, %p475
      %p478 = scmp.ne.s32.totalorder %s461, %s477
      %p479 = scmp.eq.s32.totalorder %s51, 0
      %p480 = por %p478, %p479
      %p481 = scmp.le.s32.totalorder 1, %s45
      %p482 = scmp.lt.s32.totalorder %s45, 5
      %p483 = pnand %p481, %p482
      %p484 = pneg %p483
      // Predicated region
      $region9: #{dino_embedder_forward.4} parent=5 // pred_check
        _
      $region10: #{dino_embedder_forward.4} parent=5 // pred_check_branch
        %486 = sbr.rel (%p483) target = $region12
      $region11: #{dino_embedder_forward.4} parent=5 // pred_region
        %s487 = ssub.s32 %s45, 1
      $region12: #{dino_embedder_forward.4} parent=5 // pred_fallthru
        _
      %p488 = scmp.lt.s32.totalorder %s45, 4
      // Predicated region
      $region13: #{dino_embedder_forward.4} parent=5 // pred_check
        %p489 = pneg %p488
      $region14: #{dino_embedder_forward.4} parent=5 // pred_check_branch
        %491 = sbr.rel (%p489) target = $region16
      $region15: #{dino_embedder_forward.4} parent=5 // pred_region
        // Predicated region
        $region17: #{dino_embedder_forward.4} parent=15 // pred_check
          %p492 = pneg %p77
        $region18: #{dino_embedder_forward.4} parent=15 // pred_check_branch
          %494 = sbr.rel (%p492) target = $region20
        $region19: #{dino_embedder_forward.4} parent=15 // pred_region
          %p495 = scmp.lt.s32.totalorder %s52, 1
          %s496 = scalar_select %p495, %s52, 1
          %s497 = smul.addr %s496, 3
          %s498 = smul.addr %s497, 8
          %s499 = scalar_lea.vmem %s0, %s498
        $region20: #{dino_embedder_forward.4} parent=15 // pred_fallthru
          _
        // Predicated region
        $region21: #{dino_embedder_forward.4} parent=15 // pred_check
          %p500 = pneg %p103
        $region22: #{dino_embedder_forward.4} parent=15 // pred_check_branch
          %502 = sbr.rel (%p500) target = $region24
        $region23: #{dino_embedder_forward.4} parent=15 // pred_region
          %s503 = sand.u32 %s93, 1
          %s504 = scalar_lea.sflag [#allocation4], %s503
          %s505 = sand.u32 %s93, 1
          %s506 = smul.addr %s505, 3
          %s507 = scalar_lea.vmem [#allocation3], %s506
          %s509 = ssub.s32 48, 48
          %510 = vsyncadd %s504, %s509
          %s511 = smul.addr %s53, 3
          %s512 = smul.addr %s511, 16
          %s513 = scalar_lea.hbm %s1, %s512
          %s515 = sshll.u32 %s507, 4
          %s516 = int_to_ptr.vmem [resolvable:$true] %s515
          %518 = dma.hbm_to_vmem [thread:$0]  %s513, 48, %s516, %s504
        $region24: #{dino_embedder_forward.4} parent=15 // pred_fallthru
          _
        // Predicated region
        $region25: #{dino_embedder_forward.4} parent=15 // pred_check
          %p519 = pneg %p129
        $region26: #{dino_embedder_forward.4} parent=15 // pred_check_branch
          %521 = sbr.rel (%p519) target = $region28
        $region27: #{dino_embedder_forward.4} parent=15 // pred_region
          %s522 = sand.u32 %s45, 1
          %s523 = scalar_lea.sflag [#allocation6], %s522
          %s524 = sand.u32 %s119, 1
          %s525 = smul.addr %s524, 3
          %s526 = scalar_lea.vmem [#allocation5], %s525
          %s528 = ssub.s32 48, 48
          %529 = vsyncadd %s523, %s528
          %s530 = smul.addr %s53, 3
          %s531 = smul.addr %s530, 16
          %s532 = scalar_lea.hbm %s2, %s531
          %s534 = sshll.u32 %s526, 4
          %s535 = int_to_ptr.vmem [resolvable:$true] %s534
          %537 = dma.hbm_to_vmem [thread:$0]  %s532, 48, %s535, %s523
        $region28: #{dino_embedder_forward.4} parent=15 // pred_fallthru
          _
        // Predicated region
        $region29: #{dino_embedder_forward.4} parent=15 // pred_check
          %p538 = pneg %p155
        $region30: #{dino_embedder_forward.4} parent=15 // pred_check_branch
          %540 = sbr.rel (%p538) target = $region32
        $region31: #{dino_embedder_forward.4} parent=15 // pred_region
          %s541 = sand.u32 %s45, 1
          %s542 = scalar_lea.sflag [#allocation6], %s541
          %s543 = sand.u32 %s145, 1
          %s544 = smul.addr %s543, 1728
          %s545 = scalar_lea.vmem [#allocation7], %s544
          %s547 = ssub.s32 27648, 27648
          %548 = vsyncadd %s542, %s547
          %s549 = smul.addr %s53, 432
          %s550 = smul.addr %s549, 64
          %s551 = scalar_lea.hbm %s3, %s550
          %s552 = sshll.u32 %s545, 4
          %s553 = int_to_ptr.vmem [resolvable:$true] %s552
          %558 = dma.hbm_to_vmem [thread:$0]  %s551, 27648, %s553, %s542, 576, 576, 36
        $region32: #{dino_embedder_forward.4} parent=15 // pred_fallthru
          _
        // Predicated region
        $region33: #{dino_embedder_forward.4} parent=15 // pred_check
          %p559 = pneg %p181
        $region34: #{dino_embedder_forward.4} parent=15 // pred_check_branch
          %561 = sbr.rel (%p559) target = $region36
        $region35: #{dino_embedder_forward.4} parent=15 // pred_region
          %s562 = sand.u32 %s45, 1
          %s563 = scalar_lea.sflag [#allocation9], %s562
          %s564 = sand.u32 %s171, 1
          %s565 = smul.addr %s564, 9
          %s566 = scalar_lea.vmem [#allocation8], %s565
          %s568 = ssub.s32 144, 144
          %569 = vsyncadd %s563, %s568
          %s570 = smul.addr %s53, 9
          %s571 = smul.addr %s570, 16
          %s572 = scalar_lea.hbm %s4, %s571
          %s574 = sshll.u32 %s566, 4
          %s575 = int_to_ptr.vmem [resolvable:$true] %s574
          %577 = dma.hbm_to_vmem [thread:$0]  %s572, 144, %s575, %s563
        $region36: #{dino_embedder_forward.4} parent=15 // pred_fallthru
          _
        // Predicated region
        $region37: #{dino_embedder_forward.4} parent=15 // pred_check
          %p578 = pneg %p207
        $region38: #{dino_embedder_forward.4} parent=15 // pred_check_branch
          %580 = sbr.rel (%p578) target = $region40
        $region39: #{dino_embedder_forward.4} parent=15 // pred_region
          %s581 = sand.u32 %s45, 1
          %s582 = scalar_lea.sflag [#allocation9], %s581
          %s583 = sand.u32 %s197, 1
          %s584 = smul.addr %s583, 576
          %s585 = scalar_lea.vmem [#allocation10], %s584
          %s587 = ssub.s32 9216, 9216
          %588 = vsyncadd %s582, %s587
          %s589 = smul.addr %s53, 144
          %s590 = smul.addr %s589, 64
          %s591 = scalar_lea.hbm %s5, %s590
          %s592 = sshll.u32 %s585, 4
          %s593 = int_to_ptr.vmem [resolvable:$true] %s592
          %598 = dma.hbm_to_vmem [thread:$0]  %s591, 9216, %s593, %s582, 192, 192, 12
        $region40: #{dino_embedder_forward.4} parent=15 // pred_fallthru
          _
        // Predicated region
        $region41: #{dino_embedder_forward.4} parent=15 // pred_check
          %p599 = pneg %p233
        $region42: #{dino_embedder_forward.4} parent=15 // pred_check_branch
          %601 = sbr.rel (%p599) target = $region44
        $region43: #{dino_embedder_forward.4} parent=15 // pred_region
          %s602 = sand.u32 %s45, 1
          %s603 = scalar_lea.sflag [#allocation12], %s602
          %s604 = sand.u32 %s223, 1
          %s605 = smul.addr %s604, 3
          %s606 = scalar_lea.vmem [#allocation11], %s605
          %s608 = ssub.s32 48, 48
          %609 = vsyncadd %s603, %s608
          %s610 = smul.addr %s53, 3
          %s611 = smul.addr %s610, 16
          %s612 = scalar_lea.hbm %s6, %s611
          %s614 = sshll.u32 %s606, 4
          %s615 = int_to_ptr.vmem [resolvable:$true] %s614
          %617 = dma.hbm_to_vmem [thread:$0]  %s612, 48, %s615, %s603
        $region44: #{dino_embedder_forward.4} parent=15 // pred_fallthru
          _
        // Predicated region
        $region45: #{dino_embedder_forward.4} parent=15 // pred_check
          %p618 = pneg %p259
        $region46: #{dino_embedder_forward.4} parent=15 // pred_check_branch
          %620 = sbr.rel (%p618) target = $region48
        $region47: #{dino_embedder_forward.4} parent=15 // pred_region
          %s621 = sand.u32 %s45, 1
          %s622 = scalar_lea.sflag [#allocation12], %s621
          %s623 = sand.u32 %s249, 1
          %s624 = smul.addr %s623, 3
          %s625 = scalar_lea.vmem [#allocation13], %s624
          %s627 = ssub.s32 48, 48
          %628 = vsyncadd %s622, %s627
          %s629 = smul.addr %s53, 3
          %s630 = smul.addr %s629, 16
          %s631 = scalar_lea.hbm %s7, %s630
          %s633 = sshll.u32 %s625, 4
          %s634 = int_to_ptr.vmem [resolvable:$true] %s633
          %636 = dma.hbm_to_vmem [thread:$0]  %s631, 48, %s634, %s622
        $region48: #{dino_embedder_forward.4} parent=15 // pred_fallthru
          _
        // Predicated region
        $region49: #{dino_embedder_forward.4} parent=15 // pred_check
          %p637 = pneg %p285
        $region50: #{dino_embedder_forward.4} parent=15 // pred_check_branch
          %639 = sbr.rel (%p637) target = $region52
        $region51: #{dino_embedder_forward.4} parent=15 // pred_region
          %s640 = sand.u32 %s45, 1
          %s641 = scalar_lea.sflag [#allocation15], %s640
          %s642 = sand.u32 %s275, 1
          %s643 = smul.addr %s642, 3
          %s644 = scalar_lea.vmem [#allocation14], %s643
          %s646 = ssub.s32 48, 48
          %647 = vsyncadd %s641, %s646
          %s648 = smul.addr %s53, 3
          %s649 = smul.addr %s648, 16
          %s650 = scalar_lea.hbm %s8, %s649
          %s652 = sshll.u32 %s644, 4
          %s653 = int_to_ptr.vmem [resolvable:$true] %s652
          %655 = dma.hbm_to_vmem [thread:$0]  %s650, 48, %s653, %s641
        $region52: #{dino_embedder_forward.4} parent=15 // pred_fallthru
          _
        // Predicated region
        $region53: #{dino_embedder_forward.4} parent=15 // pred_check
          %p656 = pneg %p311
        $region54: #{dino_embedder_forward.4} parent=15 // pred_check_branch
          %658 = sbr.rel (%p656) target = $region56
        $region55: #{dino_embedder_forward.4} parent=15 // pred_region
          %s659 = sand.u32 %s45, 1
          %s660 = scalar_lea.sflag [#allocation15], %s659
          %s661 = sand.u32 %s301, 1
          %s662 = smul.addr %s661, 3
          %s663 = scalar_lea.vmem [#allocation16], %s662
          %s665 = ssub.s32 48, 48
          %666 = vsyncadd %s660, %s665
          %s667 = smul.addr %s53, 3
          %s668 = smul.addr %s667, 16
          %s669 = scalar_lea.hbm %s9, %s668
          %s671 = sshll.u32 %s663, 4
          %s672 = int_to_ptr.vmem [resolvable:$true] %s671
          %674 = dma.hbm_to_vmem [thread:$0]  %s669, 48, %s672, %s660
        $region56: #{dino_embedder_forward.4} parent=15 // pred_fallthru
          _
        // Predicated region
        $region57: #{dino_embedder_forward.4} parent=15 // pred_check
          %p675 = pneg %p337
        $region58: #{dino_embedder_forward.4} parent=15 // pred_check_branch
          %677 = sbr.rel (%p675) target = $region60
        $region59: #{dino_embedder_forward.4} parent=15 // pred_region
          %s678 = sand.u32 %s45, 1
          %s679 = scalar_lea.sflag [#allocation18], %s678
          %s680 = sand.u32 %s327, 1
          %s681 = smul.addr %s680, 2304
          %s682 = scalar_lea.vmem [#allocation17], %s681
          %s684 = ssub.s32 36864, 36864
          %685 = vsyncadd %s679, %s684
          %s686 = smul.addr %s53, 576
          %s687 = smul.addr %s686, 64
          %s688 = scalar_lea.hbm %s10, %s687
          %s689 = sshll.u32 %s682, 4
          %s690 = int_to_ptr.vmem [resolvable:$true] %s689
          %695 = dma.hbm_to_vmem [thread:$0]  %s688, 36864, %s690, %s679, 768, 768, 48
        $region60: #{dino_embedder_forward.4} parent=15 // pred_fallthru
          _
        // Predicated region
        $region61: #{dino_embedder_forward.4} parent=15 // pred_check
          %p696 = pneg %p363
        $region62: #{dino_embedder_forward.4} parent=15 // pred_check_branch
          %698 = sbr.rel (%p696) target = $region64
        $region63: #{dino_embedder_forward.4} parent=15 // pred_region
          %s699 = sand.u32 %s45, 1
          %s700 = scalar_lea.sflag [#allocation18], %s699
          %s701 = sand.u32 %s353, 1
          %s702 = smul.addr %s701, 12
          %s703 = scalar_lea.vmem [#allocation19], %s702
          %s705 = ssub.s32 192, 192
          %706 = vsyncadd %s700, %s705
          %s707 = smul.addr %s53, 12
          %s708 = smul.addr %s707, 16
          %s709 = scalar_lea.hbm %s11, %s708
          %s711 = sshll.u32 %s703, 4
          %s712 = int_to_ptr.vmem [resolvable:$true] %s711
          %714 = dma.hbm_to_vmem [thread:$0]  %s709, 192, %s712, %s700
        $region64: #{dino_embedder_forward.4} parent=15 // pred_fallthru
          _
        // Predicated region
        $region65: #{dino_embedder_forward.4} parent=15 // pred_check
          %p715 = pneg %p389
        $region66: #{dino_embedder_forward.4} parent=15 // pred_check_branch
          %717 = sbr.rel (%p715) target = $region68
        $region67: #{dino_embedder_forward.4} parent=15 // pred_region
          %s718 = sand.u32 %s45, 1
          %s719 = scalar_lea.sflag [#allocation21], %s718
          %s720 = sand.u32 %s379, 1
          %s721 = smul.addr %s720, 2304
          %s722 = scalar_lea.vmem [#allocation20], %s721
          %s724 = ssub.s32 36864, 36864
          %725 = vsyncadd %s719, %s724
          %s726 = smul.addr %s53, 576
          %s727 = smul.addr %s726, 64
          %s728 = scalar_lea.hbm %s12, %s727
          %s729 = sshll.u32 %s722, 4
          %s730 = int_to_ptr.vmem [resolvable:$true] %s729
          %735 = dma.hbm_to_vmem [thread:$0]  %s728, 36864, %s730, %s719, 192, 192, 12
        $region68: #{dino_embedder_forward.4} parent=15 // pred_fallthru
          _
        // Predicated region
        $region69: #{dino_embedder_forward.4} parent=15 // pred_check
          %p736 = pneg %p415
        $region70: #{dino_embedder_forward.4} parent=15 // pred_check_branch
          %738 = sbr.rel (%p736) target = $region72
        $region71: #{dino_embedder_forward.4} parent=15 // pred_region
          %s739 = sand.u32 %s45, 1
          %s740 = scalar_lea.sflag [#allocation21], %s739
          %s741 = sand.u32 %s405, 1
          %s742 = smul.addr %s741, 3
          %s743 = scalar_lea.vmem [#allocation22], %s742
          %s745 = ssub.s32 48, 48
          %746 = vsyncadd %s740, %s745
          %s747 = smul.addr %s53, 3
          %s748 = smul.addr %s747, 16
          %s749 = scalar_lea.hbm %s13, %s748
          %s751 = sshll.u32 %s743, 4
          %s752 = int_to_ptr.vmem [resolvable:$true] %s751
          %754 = dma.hbm_to_vmem [thread:$0]  %s749, 48, %s752, %s740
        $region72: #{dino_embedder_forward.4} parent=15 // pred_fallthru
          _
        // Predicated region
        $region73: #{dino_embedder_forward.4} parent=15 // pred_check
          %p755 = pneg %p441
        $region74: #{dino_embedder_forward.4} parent=15 // pred_check_branch
          %757 = sbr.rel (%p755) target = $region76
        $region75: #{dino_embedder_forward.4} parent=15 // pred_region
          %s758 = sand.u32 %s431, 1
          %s759 = scalar_lea.sflag [#allocation24], %s758
          %s760 = sand.u32 %s431, 1
          %s761 = smul.addr %s760, 3
          %s762 = scalar_lea.vmem [#allocation23], %s761
          %s764 = ssub.s32 48, 48
          %765 = vsyncadd %s759, %s764
          %s766 = smul.addr %s53, 3
          %s767 = smul.addr %s766, 16
          %s768 = scalar_lea.hbm %s14, %s767
          %s770 = sshll.u32 %s762, 4
          %s771 = int_to_ptr.vmem [resolvable:$true] %s770
          %773 = dma.hbm_to_vmem [thread:$0]  %s768, 48, %s771, %s759
        $region76: #{dino_embedder_forward.4} parent=15 // pred_fallthru
          _
      $region16: #{dino_embedder_forward.4} parent=5 // pred_fallthru
        _
      %p774 = scmp.le.s32.totalorder 1, %s45
      %p775 = scmp.lt.s32.totalorder %s45, 5
      %p776 = pnand %p774, %p775
      %p777 = pneg %p776
      // Predicated region
      $region77: #{dino_embedder_forward.4} parent=5 // pred_check
        _
      $region78: #{dino_embedder_forward.4} parent=5 // pred_check_branch
        %779 = sbr.rel (%p776) target = $region80
      $region79: #{dino_embedder_forward.4} parent=5 // pred_region
        %s780 = ssub.s32 %s45, 1
        %s781 = sand.u32 %s96, 1
        %s782 = scalar_lea.sflag [#allocation4], %s781
        %s783 = sand.u32 %s96, 1
        %s784 = smul.addr %s783, 3
        %s785 = scalar_lea.vmem [#allocation3], %s784
        // Predicated region
        $region81: #{dino_embedder_forward.4} parent=79 // pred_check
          %p786 = pneg %p109
        $region82: #{dino_embedder_forward.4} parent=79 // pred_check_branch
          %788 = sbr.rel (%p786) target = $region84
        $region83: #{dino_embedder_forward.4} parent=79 // pred_region
          %789 = dma.done %s782, 48
        $region84: #{dino_embedder_forward.4} parent=79 // pred_fallthru
          _
        %s790 = sand.u32 %s50, 1
        %s791 = scalar_lea.sflag [#allocation6], %s790
        %s792 = sand.u32 %s122, 1
        %s793 = smul.addr %s792, 3
        %s794 = scalar_lea.vmem [#allocation5], %s793
        // Predicated region
        $region85: #{dino_embedder_forward.4} parent=79 // pred_check
          %p795 = pneg %p135
        $region86: #{dino_embedder_forward.4} parent=79 // pred_check_branch
          %797 = sbr.rel (%p795) target = $region88
        $region87: #{dino_embedder_forward.4} parent=79 // pred_region
          %798 = dma.done %s791, 48
        $region88: #{dino_embedder_forward.4} parent=79 // pred_fallthru
          _
        %s799 = sand.u32 %s50, 1
        %s800 = scalar_lea.sflag [#allocation6], %s799
        %s801 = sand.u32 %s148, 1
        %s802 = smul.addr %s801, 1728
        %s803 = scalar_lea.vmem [#allocation7], %s802
        // Predicated region
        $region89: #{dino_embedder_forward.4} parent=79 // pred_check
          %p804 = pneg %p161
        $region90: #{dino_embedder_forward.4} parent=79 // pred_check_branch
          %806 = sbr.rel (%p804) target = $region92
        $region91: #{dino_embedder_forward.4} parent=79 // pred_region
          %807 = dma.done %s800, 27648
        $region92: #{dino_embedder_forward.4} parent=79 // pred_fallthru
          _
        %s808 = sand.u32 %s50, 1
        %s809 = scalar_lea.sflag [#allocation9], %s808
        %s810 = sand.u32 %s174, 1
        %s811 = smul.addr %s810, 9
        %s812 = scalar_lea.vmem [#allocation8], %s811
        // Predicated region
        $region93: #{dino_embedder_forward.4} parent=79 // pred_check
          %p813 = pneg %p187
        $region94: #{dino_embedder_forward.4} parent=79 // pred_check_branch
          %815 = sbr.rel (%p813) target = $region96
        $region95: #{dino_embedder_forward.4} parent=79 // pred_region
          %816 = dma.done %s809, 144
        $region96: #{dino_embedder_forward.4} parent=79 // pred_fallthru
          _
        %s817 = sand.u32 %s50, 1
        %s818 = scalar_lea.sflag [#allocation9], %s817
        %s819 = sand.u32 %s200, 1
        %s820 = smul.addr %s819, 576
        %s821 = scalar_lea.vmem [#allocation10], %s820
        // Predicated region
        $region97: #{dino_embedder_forward.4} parent=79 // pred_check
          %p822 = pneg %p213
        $region98: #{dino_embedder_forward.4} parent=79 // pred_check_branch
          %824 = sbr.rel (%p822) target = $region100
        $region99: #{dino_embedder_forward.4} parent=79 // pred_region
          %825 = dma.done %s818, 9216
        $region100: #{dino_embedder_forward.4} parent=79 // pred_fallthru
          _
        %s826 = sand.u32 %s50, 1
        %s827 = scalar_lea.sflag [#allocation12], %s826
        %s828 = sand.u32 %s226, 1
        %s829 = smul.addr %s828, 3
        %s830 = scalar_lea.vmem [#allocation11], %s829
        // Predicated region
        $region101: #{dino_embedder_forward.4} parent=79 // pred_check
          %p831 = pneg %p239
        $region102: #{dino_embedder_forward.4} parent=79 // pred_check_branch
          %833 = sbr.rel (%p831) target = $region104
        $region103: #{dino_embedder_forward.4} parent=79 // pred_region
          %834 = dma.done %s827, 48
        $region104: #{dino_embedder_forward.4} parent=79 // pred_fallthru
          _
        %s835 = sand.u32 %s50, 1
        %s836 = scalar_lea.sflag [#allocation12], %s835
        %s837 = sand.u32 %s252, 1
        %s838 = smul.addr %s837, 3
        %s839 = scalar_lea.vmem [#allocation13], %s838
        // Predicated region
        $region105: #{dino_embedder_forward.4} parent=79 // pred_check
          %p840 = pneg %p265
        $region106: #{dino_embedder_forward.4} parent=79 // pred_check_branch
          %842 = sbr.rel (%p840) target = $region108
        $region107: #{dino_embedder_forward.4} parent=79 // pred_region
          %843 = dma.done %s836, 48
        $region108: #{dino_embedder_forward.4} parent=79 // pred_fallthru
          _
        %s844 = sand.u32 %s50, 1
        %s845 = scalar_lea.sflag [#allocation15], %s844
        %s846 = sand.u32 %s278, 1
        %s847 = smul.addr %s846, 3
        %s848 = scalar_lea.vmem [#allocation14], %s847
        // Predicated region
        $region109: #{dino_embedder_forward.4} parent=79 // pred_check
          %p849 = pneg %p291
        $region110: #{dino_embedder_forward.4} parent=79 // pred_check_branch
          %851 = sbr.rel (%p849) target = $region112
        $region111: #{dino_embedder_forward.4} parent=79 // pred_region
          %852 = dma.done %s845, 48
        $region112: #{dino_embedder_forward.4} parent=79 // pred_fallthru
          _
        %s853 = sand.u32 %s50, 1
        %s854 = scalar_lea.sflag [#allocation15], %s853
        %s855 = sand.u32 %s304, 1
        %s856 = smul.addr %s855, 3
        %s857 = scalar_lea.vmem [#allocation16], %s856
        // Predicated region
        $region113: #{dino_embedder_forward.4} parent=79 // pred_check
          %p858 = pneg %p317
        $region114: #{dino_embedder_forward.4} parent=79 // pred_check_branch
          %860 = sbr.rel (%p858) target = $region116
        $region115: #{dino_embedder_forward.4} parent=79 // pred_region
          %861 = dma.done %s854, 48
        $region116: #{dino_embedder_forward.4} parent=79 // pred_fallthru
          _
        %s862 = sand.u32 %s50, 1
        %s863 = scalar_lea.sflag [#allocation18], %s862
        %s864 = sand.u32 %s330, 1
        %s865 = smul.addr %s864, 2304
        %s866 = scalar_lea.vmem [#allocation17], %s865
        // Predicated region
        $region117: #{dino_embedder_forward.4} parent=79 // pred_check
          %p867 = pneg %p343
        $region118: #{dino_embedder_forward.4} parent=79 // pred_check_branch
          %869 = sbr.rel (%p867) target = $region120
        $region119: #{dino_embedder_forward.4} parent=79 // pred_region
          %870 = dma.done %s863, 36864
        $region120: #{dino_embedder_forward.4} parent=79 // pred_fallthru
          _
        %s871 = sand.u32 %s50, 1
        %s872 = scalar_lea.sflag [#allocation18], %s871
        %s873 = sand.u32 %s356, 1
        %s874 = smul.addr %s873, 12
        %s875 = scalar_lea.vmem [#allocation19], %s874
        // Predicated region
        $region121: #{dino_embedder_forward.4} parent=79 // pred_check
          %p876 = pneg %p369
        $region122: #{dino_embedder_forward.4} parent=79 // pred_check_branch
          %878 = sbr.rel (%p876) target = $region124
        $region123: #{dino_embedder_forward.4} parent=79 // pred_region
          %879 = dma.done %s872, 192
        $region124: #{dino_embedder_forward.4} parent=79 // pred_fallthru
          _
        %s880 = sand.u32 %s50, 1
        %s881 = scalar_lea.sflag [#allocation21], %s880
        %s882 = sand.u32 %s382, 1
        %s883 = smul.addr %s882, 2304
        %s884 = scalar_lea.vmem [#allocation20], %s883
        // Predicated region
        $region125: #{dino_embedder_forward.4} parent=79 // pred_check
          %p885 = pneg %p395
        $region126: #{dino_embedder_forward.4} parent=79 // pred_check_branch
          %887 = sbr.rel (%p885) target = $region128
        $region127: #{dino_embedder_forward.4} parent=79 // pred_region
          %888 = dma.done %s881, 36864
        $region128: #{dino_embedder_forward.4} parent=79 // pred_fallthru
          _
        %s889 = sand.u32 %s50, 1
        %s890 = scalar_lea.sflag [#allocation21], %s889
        %s891 = sand.u32 %s408, 1
        %s892 = smul.addr %s891, 3
        %s893 = scalar_lea.vmem [#allocation22], %s892
        // Predicated region
        $region129: #{dino_embedder_forward.4} parent=79 // pred_check
          %p894 = pneg %p421
        $region130: #{dino_embedder_forward.4} parent=79 // pred_check_branch
          %896 = sbr.rel (%p894) target = $region132
        $region131: #{dino_embedder_forward.4} parent=79 // pred_region
          %897 = dma.done %s890, 48
        $region132: #{dino_embedder_forward.4} parent=79 // pred_fallthru
          _
        %s898 = sand.u32 %s434, 1
        %s899 = scalar_lea.sflag [#allocation24], %s898
        %s900 = sand.u32 %s434, 1
        %s901 = smul.addr %s900, 3
        %s902 = scalar_lea.vmem [#allocation23], %s901
        // Predicated region
        $region133: #{dino_embedder_forward.4} parent=79 // pred_check
          %p903 = pneg %p447
        $region134: #{dino_embedder_forward.4} parent=79 // pred_check_branch
          %905 = sbr.rel (%p903) target = $region136
        $region135: #{dino_embedder_forward.4} parent=79 // pred_region
          %906 = dma.done %s899, 48
        $region136: #{dino_embedder_forward.4} parent=79 // pred_fallthru
          _
        %p907 = scmp.lt.s32.totalorder %s54, 1
        %s908 = scalar_select %p907, %s54, 1
        %s909 = smul.addr %s908, 3
        %s910 = smul.addr %s909, 8
        %s911 = scalar_lea.vmem %s0, %s910
        %p912 = pneg %p83
        %p913 = pneg %p80
        %s914 = sand.u32 %s96, 1
        %s915 = scalar_lea.sflag [#allocation4], %s914
        %s916 = sand.u32 %s96, 1
        %s917 = smul.addr %s916, 3
        %s918 = scalar_lea.vmem [#allocation3], %s917
        %p919 = pneg %p109
        %p920 = pneg %p106
        %s921 = sand.u32 %s50, 1
        %s922 = scalar_lea.sflag [#allocation6], %s921
        %s923 = sand.u32 %s122, 1
        %s924 = smul.addr %s923, 3
        %s925 = scalar_lea.vmem [#allocation5], %s924
        %p926 = pneg %p135
        %p927 = pneg %p132
        %s928 = sand.u32 %s50, 1
        %s929 = scalar_lea.sflag [#allocation6], %s928
        %s930 = sand.u32 %s148, 1
        %s931 = smul.addr %s930, 1728
        %s932 = scalar_lea.vmem [#allocation7], %s931
        %p933 = pneg %p161
        %p934 = pneg %p158
        %s935 = sand.u32 %s50, 1
        %s936 = scalar_lea.sflag [#allocation9], %s935
        %s937 = sand.u32 %s174, 1
        %s938 = smul.addr %s937, 9
        %s939 = scalar_lea.vmem [#allocation8], %s938
        %p940 = pneg %p187
        %p941 = pneg %p184
        %s942 = sand.u32 %s50, 1
        %s943 = scalar_lea.sflag [#allocation9], %s942
        %s944 = sand.u32 %s200, 1
        %s945 = smul.addr %s944, 576
        %s946 = scalar_lea.vmem [#allocation10], %s945
        %p947 = pneg %p213
        %p948 = pneg %p210
        %s949 = sand.u32 %s50, 1
        %s950 = scalar_lea.sflag [#allocation12], %s949
        %s951 = sand.u32 %s226, 1
        %s952 = smul.addr %s951, 3
        %s953 = scalar_lea.vmem [#allocation11], %s952
        %p954 = pneg %p239
        %p955 = pneg %p236
        %s956 = sand.u32 %s50, 1
        %s957 = scalar_lea.sflag [#allocation12], %s956
        %s958 = sand.u32 %s252, 1
        %s959 = smul.addr %s958, 3
        %s960 = scalar_lea.vmem [#allocation13], %s959
        %p961 = pneg %p265
        %p962 = pneg %p262
        %s963 = sand.u32 %s50, 1
        %s964 = scalar_lea.sflag [#allocation15], %s963
        %s965 = sand.u32 %s278, 1
        %s966 = smul.addr %s965, 3
        %s967 = scalar_lea.vmem [#allocation14], %s966
        %p968 = pneg %p291
        %p969 = pneg %p288
        %s970 = sand.u32 %s50, 1
        %s971 = scalar_lea.sflag [#allocation15], %s970
        %s972 = sand.u32 %s304, 1
        %s973 = smul.addr %s972, 3
        %s974 = scalar_lea.vmem [#allocation16], %s973
        %p975 = pneg %p317
        %p976 = pneg %p314
        %s977 = sand.u32 %s50, 1
        %s978 = scalar_lea.sflag [#allocation18], %s977
        %s979 = sand.u32 %s330, 1
        %s980 = smul.addr %s979, 2304
        %s981 = scalar_lea.vmem [#allocation17], %s980
        %p982 = pneg %p343
        %p983 = pneg %p340
        %s984 = sand.u32 %s50, 1
        %s985 = scalar_lea.sflag [#allocation18], %s984
        %s986 = sand.u32 %s356, 1
        %s987 = smul.addr %s986, 12
        %s988 = scalar_lea.vmem [#allocation19], %s987
        %p989 = pneg %p369
        %p990 = pneg %p366
        %s991 = sand.u32 %s50, 1
        %s992 = scalar_lea.sflag [#allocation21], %s991
        %s993 = sand.u32 %s382, 1
        %s994 = smul.addr %s993, 2304
        %s995 = scalar_lea.vmem [#allocation20], %s994
        %p996 = pneg %p395
        %p997 = pneg %p392
        %s998 = sand.u32 %s50, 1
        %s999 = scalar_lea.sflag [#allocation21], %s998
        %s1000 = sand.u32 %s408, 1
        %s1001 = smul.addr %s1000, 3
        %s1002 = scalar_lea.vmem [#allocation22], %s1001
        %p1003 = pneg %p421
        %p1004 = pneg %p418
        %s1005 = sand.u32 %s434, 1
        %s1006 = scalar_lea.sflag [#allocation24], %s1005
        %s1007 = sand.u32 %s434, 1
        %s1008 = smul.addr %s1007, 3
        %s1009 = scalar_lea.vmem [#allocation23], %s1008
        %p1010 = pneg %p447
        %p1011 = pneg %p444
        %p1012 = pneg %p473
        %p1013 = pneg %p470
        %p1014 = scmp.lt.s32.totalorder %s54, 1
        %s1015 = scalar_select %p1014, %s54, 1
        %s1016 = smul.addr %s1015, 3
        %s1017 = smul.addr %s1016, 8
        %s1018 = scalar_lea.vmem %s15, %s1017
        %p1019 = scmp.lt.s32.totalorder %s54, 1
        %s1020 = scalar_select %p1019, %s54, 1
        %s1021 = smul.addr %s1020, 3
        %s1022 = smul.addr %s1021, 8
        %s1023 = scalar_lea.vmem %s0, %s1022
        %p1024 = scmp.lt.s32.totalorder %s54, 1
        %s1025 = scalar_select %p1024, %s54, 1
        %s1026 = smul.addr %s1025, 3
        %s1027 = smul.addr %s1026, 8
        %s1028 = scalar_lea.vmem %s15, %s1027
        %p1030 = scmp.eq.s32.totalorder %s55, 0
        // Predicated region
        $region137: #{dino_embedder_forward.4} parent=79 // pred_check
          %p1031 = pneg %p1030
        $region138: #{dino_embedder_forward.4} parent=79 // pred_check_branch
          %1033 = sbr.rel (%p1031) target = $region140
        $region139: #{dino_embedder_forward.4} parent=79 // pred_region
          %v1034 = vld [vmem:[%s1023] sm:$0x1f]
          %v1035 = vld [vmem:[%s1023 + $0x8] sm:$0x1f]
          %v1036 = vld [vmem:[%s1023 + $0x10] sm:$0x1f]
          %1037 = vst [vmem:[#allocation2] sm:$0x1f] %v1034
          %1038 = vst [vmem:[#allocation2 + $0x8] sm:$0x1f] %v1035
          %1039 = vst [vmem:[#allocation2 + $0x10] sm:$0x1f] %v1036
        $region140: #{dino_embedder_forward.4} parent=79 // pred_fallthru
          _
        %v1040 = vld [vmem:[#allocation2] sm:$0x1f]
        %v1041 = vld [vmem:[#allocation2 + $0x8] sm:$0x1f]
        %v1042 = vld [vmem:[#allocation2 + $0x10] sm:$0x1f]
        %v1043 = vld [vmem:[%s785] sm:$0x7]
        %v1044 = vld [vmem:[%s794] sm:$0x7]
        %vm1045 = vcmask 1044480
        %v1046 = vsel %vm1045, %v1040, 0.0
        %v1047 = vsel %vm1045, %v1041, 0.0
        %v1048 = vadd.f32 %v1046, %v1047
        %v1049 = vsel %vm1045, %v1042, 0.0
        %v1050 = vadd.f32 %v1048, %v1049
        %1051 = vadd.xlane.f32.xlu0 %v1050
        %v1052 = vpop.xlane.xlu0 %1051
        %v1053 = vrcp.pop 384.0
        %v1054 = vmul.f32 %v1052, %v1053
        %v1055 = vmul.f32 %v1040, %v1040
        %v1056 = vmul.f32 %v1041, %v1041
        %v1057 = vmul.f32 %v1042, %v1042
        %v1058 = vsel %vm1045, %v1055, 0.0
        %v1059 = vsel %vm1045, %v1056, 0.0
        %v1060 = vadd.f32 %v1058, %v1059
        %v1061 = vsel %vm1045, %v1057, 0.0
        %v1062 = vadd.f32 %v1060, %v1061
        %1063 = vadd.xlane.f32.xlu0 %v1062
        %v1064 = vpop.xlane.xlu0 %1063
        %v1065 = vmul.f32 %v1064, %v1053
        %v1066 = vmul.f32 %v1054, %v1054
        %v1067 = vsub.f32 %v1065, %v1066
        %v1068 = vsub.f32 %v1040, %v1054
        %v1069 = vsub.f32 %v1041, %v1054
        %v1070 = vsub.f32 %v1042, %v1054
        %v1071 = vadd.f32 %v1067, 1e-06
        %v1072 = vrsqrt.pop %v1071
        %v1073 = vmul.f32 %v1068, %v1072
        %v1074 = vmul.f32 %v1069, %v1072
        %v1075 = vmul.f32 %v1070, %v1072
        %v1077 = vlaneseq
        %v1078 = vshrl.u32 %v1077, 7
        %v1079 = vsub.s32 0, %v1078
        %v1080 = vrot.slane %v1043, %v1079
        %v1081 = vlaneseq
        %v1082 = vshrl.u32 %v1081, 7
        %v1083 = vsub.s32 1, %v1082
        %v1084 = vrot.slane %v1043, %v1083
        %v1085 = vlaneseq
        %v1086 = vshrl.u32 %v1085, 7
        %v1087 = vsub.s32 2, %v1086
        %v1088 = vrot.slane %v1043, %v1087
        %v1092 = vmul.f32 %v1073, %v1080
        %v1093 = vmul.f32 %v1074, %v1084
        %v1094 = vmul.f32 %v1075, %v1088
        %v1096 = vlaneseq
        %v1097 = vshrl.u32 %v1096, 7
        %v1098 = vsub.s32 0, %v1097
        %v1099 = vrot.slane %v1044, %v1098
        %v1100 = vlaneseq
        %v1101 = vshrl.u32 %v1100, 7
        %v1102 = vsub.s32 1, %v1101
        %v1103 = vrot.slane %v1044, %v1102
        %v1104 = vlaneseq
        %v1105 = vshrl.u32 %v1104, 7
        %v1106 = vsub.s32 2, %v1105
        %v1107 = vrot.slane %v1044, %v1106
        %v1111 = vadd.f32 %v1092, %v1099
        %v1112 = vadd.f32 %v1093, %v1103
        %v1113 = vadd.f32 %v1094, %v1107
        %v1114 = vpack.c.bf16 %v1111, %v1111
        %v1115 = vpack.c.bf16 %v1112, %v1112
        %v1116 = vpack.c.bf16 %v1113, %v1113
        %v1117 = vld [vmem:[%s803] sm:$0xff]
        %v1118 = vld [vmem:[%s803 + $0x8] sm:$0xff]
        %v1119 = vld [vmem:[%s803 + $0x10] sm:$0xff]
        %v1120 = vld [vmem:[%s803 + $0x18] sm:$0xff]
        %v1121 = vld [vmem:[%s803 + $0x20] sm:$0xf]
        %v1122 = vld [vmem:[%s803 + $0x24] sm:$0xff]
        %v1123 = vld [vmem:[%s803 + $0x2c] sm:$0xff]
        %v1124 = vld [vmem:[%s803 + $0x34] sm:$0xff]
        %v1125 = vld [vmem:[%s803 + $0x3c] sm:$0xff]
        %v1126 = vld [vmem:[%s803 + $0x44] sm:$0xf]
        %v1127 = vld [vmem:[%s803 + $0x48] sm:$0xff]
        %v1128 = vld [vmem:[%s803 + $0x50] sm:$0xff]
        %v1129 = vld [vmem:[%s803 + $0x58] sm:$0xff]
        %v1130 = vld [vmem:[%s803 + $0x60] sm:$0xff]
        %v1131 = vld [vmem:[%s803 + $0x68] sm:$0xf]
        %v1132 = vld [vmem:[%s803 + $0x6c] sm:$0xff]
        %v1133 = vld [vmem:[%s803 + $0x74] sm:$0xff]
        %v1134 = vld [vmem:[%s803 + $0x7c] sm:$0xff]
        %v1135 = vld [vmem:[%s803 + $0x84] sm:$0xff]
        %v1136 = vld [vmem:[%s803 + $0x8c] sm:$0xf]
        %v1137 = vld [vmem:[%s803 + $0x90] sm:$0xff]
        %v1138 = vld [vmem:[%s803 + $0x98] sm:$0xff]
        %v1139 = vld [vmem:[%s803 + $0xa0] sm:$0xff]
        %v1140 = vld [vmem:[%s803 + $0xa8] sm:$0xff]
        %v1141 = vld [vmem:[%s803 + $0xb0] sm:$0xf]
        %v1142 = vld [vmem:[%s803 + $0xb4] sm:$0xff]
        %v1143 = vld [vmem:[%s803 + $0xbc] sm:$0xff]
        %v1144 = vld [vmem:[%s803 + $0xc4] sm:$0xff]
        %v1145 = vld [vmem:[%s803 + $0xcc] sm:$0xff]
        %v1146 = vld [vmem:[%s803 + $0xd4] sm:$0xf]
        %v1147 = vld [vmem:[%s803 + $0xd8] sm:$0xff]
        %v1148 = vld [vmem:[%s803 + $0xe0] sm:$0xff]
        %v1149 = vld [vmem:[%s803 + $0xe8] sm:$0xff]
        %v1150 = vld [vmem:[%s803 + $0xf0] sm:$0xff]
        %v1151 = vld [vmem:[%s803 + $0xf8] sm:$0xf]
        %v1152 = vld [vmem:[%s803 + $0xfc] sm:$0xff]
        %v1153 = vld [vmem:[%s803 + $0x104] sm:$0xff]
        %v1154 = vld [vmem:[%s803 + $0x10c] sm:$0xff]
        %v1155 = vld [vmem:[%s803 + $0x114] sm:$0xff]
        %v1156 = vld [vmem:[%s803 + $0x11c] sm:$0xf]
        %v1157 = vld [vmem:[%s803 + $0x120] sm:$0xff]
        %v1158 = vld [vmem:[%s803 + $0x128] sm:$0xff]
        %v1159 = vld [vmem:[%s803 + $0x130] sm:$0xff]
        %v1160 = vld [vmem:[%s803 + $0x138] sm:$0xff]
        %v1161 = vld [vmem:[%s803 + $0x140] sm:$0xf]
        %v1162 = vld [vmem:[%s803 + $0x144] sm:$0xff]
        %v1163 = vld [vmem:[%s803 + $0x14c] sm:$0xff]
        %v1164 = vld [vmem:[%s803 + $0x154] sm:$0xff]
        %v1165 = vld [vmem:[%s803 + $0x15c] sm:$0xff]
        %v1166 = vld [vmem:[%s803 + $0x164] sm:$0xf]
        %v1167 = vld [vmem:[%s803 + $0x168] sm:$0xff]
        %v1168 = vld [vmem:[%s803 + $0x170] sm:$0xff]
        %v1169 = vld [vmem:[%s803 + $0x178] sm:$0xff]
        %v1170 = vld [vmem:[%s803 + $0x180] sm:$0xff]
        %v1171 = vld [vmem:[%s803 + $0x188] sm:$0xf]
        %v1172 = vld [vmem:[%s803 + $0x18c] sm:$0xff]
        %v1173 = vld [vmem:[%s803 + $0x194] sm:$0xff]
        %v1174 = vld [vmem:[%s803 + $0x19c] sm:$0xff]
        %v1175 = vld [vmem:[%s803 + $0x1a4] sm:$0xff]
        %v1176 = vld [vmem:[%s803 + $0x1ac] sm:$0xf]
        %v1177 = vld [vmem:[%s803 + $0x1b0] sm:$0xff]
        %v1178 = vld [vmem:[%s803 + $0x1b8] sm:$0xff]
        %v1179 = vld [vmem:[%s803 + $0x1c0] sm:$0xff]
        %v1180 = vld [vmem:[%s803 + $0x1c8] sm:$0xff]
        %v1181 = vld [vmem:[%s803 + $0x1d0] sm:$0xf]
        %v1182 = vld [vmem:[%s803 + $0x1d4] sm:$0xff]
        %v1183 = vld [vmem:[%s803 + $0x1dc] sm:$0xff]
        %v1184 = vld [vmem:[%s803 + $0x1e4] sm:$0xff]
        %v1185 = vld [vmem:[%s803 + $0x1ec] sm:$0xff]
        %v1186 = vld [vmem:[%s803 + $0x1f4] sm:$0xf]
        %v1187 = vld [vmem:[%s803 + $0x1f8] sm:$0xff]
        %v1188 = vld [vmem:[%s803 + $0x200] sm:$0xff]
        %v1189 = vld [vmem:[%s803 + $0x208] sm:$0xff]
        %v1190 = vld [vmem:[%s803 + $0x210] sm:$0xff]
        %v1191 = vld [vmem:[%s803 + $0x218] sm:$0xf]
        %v1192 = vld [vmem:[%s803 + $0x21c] sm:$0xff]
        %v1193 = vld [vmem:[%s803 + $0x224] sm:$0xff]
        %v1194 = vld [vmem:[%s803 + $0x22c] sm:$0xff]
        %v1195 = vld [vmem:[%s803 + $0x234] sm:$0xff]
        %v1196 = vld [vmem:[%s803 + $0x23c] sm:$0xf]
        %v1197 = vld [vmem:[%s803 + $0x240] sm:$0xff]
        %v1198 = vld [vmem:[%s803 + $0x248] sm:$0xff]
        %v1199 = vld [vmem:[%s803 + $0x250] sm:$0xff]
        %v1200 = vld [vmem:[%s803 + $0x258] sm:$0xff]
        %v1201 = vld [vmem:[%s803 + $0x260] sm:$0xf]
        %v1202 = vld [vmem:[%s803 + $0x264] sm:$0xff]
        %v1203 = vld [vmem:[%s803 + $0x26c] sm:$0xff]
        %v1204 = vld [vmem:[%s803 + $0x274] sm:$0xff]
        %v1205 = vld [vmem:[%s803 + $0x27c] sm:$0xff]
        %v1206 = vld [vmem:[%s803 + $0x284] sm:$0xf]
        %v1207 = vld [vmem:[%s803 + $0x288] sm:$0xff]
        %v1208 = vld [vmem:[%s803 + $0x290] sm:$0xff]
        %v1209 = vld [vmem:[%s803 + $0x298] sm:$0xff]
        %v1210 = vld [vmem:[%s803 + $0x2a0] sm:$0xff]
        %v1211 = vld [vmem:[%s803 + $0x2a8] sm:$0xf]
        %v1212 = vld [vmem:[%s803 + $0x2ac] sm:$0xff]
        %v1213 = vld [vmem:[%s803 + $0x2b4] sm:$0xff]
        %v1214 = vld [vmem:[%s803 + $0x2bc] sm:$0xff]
        %v1215 = vld [vmem:[%s803 + $0x2c4] sm:$0xff]
        %v1216 = vld [vmem:[%s803 + $0x2cc] sm:$0xf]
        %v1217 = vld [vmem:[%s803 + $0x2d0] sm:$0xff]
        %v1218 = vld [vmem:[%s803 + $0x2d8] sm:$0xff]
        %v1219 = vld [vmem:[%s803 + $0x2e0] sm:$0xff]
        %v1220 = vld [vmem:[%s803 + $0x2e8] sm:$0xff]
        %v1221 = vld [vmem:[%s803 + $0x2f0] sm:$0xf]
        %v1222 = vld [vmem:[%s803 + $0x2f4] sm:$0xff]
        %v1223 = vld [vmem:[%s803 + $0x2fc] sm:$0xff]
        %v1224 = vld [vmem:[%s803 + $0x304] sm:$0xff]
        %v1225 = vld [vmem:[%s803 + $0x30c] sm:$0xff]
        %v1226 = vld [vmem:[%s803 + $0x314] sm:$0xf]
        %v1227 = vld [vmem:[%s803 + $0x318] sm:$0xff]
        %v1228 = vld [vmem:[%s803 + $0x320] sm:$0xff]
        %v1229 = vld [vmem:[%s803 + $0x328] sm:$0xff]
        %v1230 = vld [vmem:[%s803 + $0x330] sm:$0xff]
        %v1231 = vld [vmem:[%s803 + $0x338] sm:$0xf]
        %v1232 = vld [vmem:[%s803 + $0x33c] sm:$0xff]
        %v1233 = vld [vmem:[%s803 + $0x344] sm:$0xff]
        %v1234 = vld [vmem:[%s803 + $0x34c] sm:$0xff]
        %v1235 = vld [vmem:[%s803 + $0x354] sm:$0xff]
        %v1236 = vld [vmem:[%s803 + $0x35c] sm:$0xf]
        %v1237 = vld [vmem:[%s803 + $0x360] sm:$0xff]
        %v1238 = vld [vmem:[%s803 + $0x368] sm:$0xff]
        %v1239 = vld [vmem:[%s803 + $0x370] sm:$0xff]
        %v1240 = vld [vmem:[%s803 + $0x378] sm:$0xff]
        %v1241 = vld [vmem:[%s803 + $0x380] sm:$0xf]
        %v1242 = vld [vmem:[%s803 + $0x384] sm:$0xff]
        %v1243 = vld [vmem:[%s803 + $0x38c] sm:$0xff]
        %v1244 = vld [vmem:[%s803 + $0x394] sm:$0xff]
        %v1245 = vld [vmem:[%s803 + $0x39c] sm:$0xff]
        %v1246 = vld [vmem:[%s803 + $0x3a4] sm:$0xf]
        %v1247 = vld [vmem:[%s803 + $0x3a8] sm:$0xff]
        %v1248 = vld [vmem:[%s803 + $0x3b0] sm:$0xff]
        %v1249 = vld [vmem:[%s803 + $0x3b8] sm:$0xff]
        %v1250 = vld [vmem:[%s803 + $0x3c0] sm:$0xff]
        %v1251 = vld [vmem:[%s803 + $0x3c8] sm:$0xf]
        %v1252 = vld [vmem:[%s803 + $0x3cc] sm:$0xff]
        %v1253 = vld [vmem:[%s803 + $0x3d4] sm:$0xff]
        %v1254 = vld [vmem:[%s803 + $0x3dc] sm:$0xff]
        %v1255 = vld [vmem:[%s803 + $0x3e4] sm:$0xff]
        %v1256 = vld [vmem:[%s803 + $0x3ec] sm:$0xf]
        %v1257 = vld [vmem:[%s803 + $0x3f0] sm:$0xff]
        %v1258 = vld [vmem:[%s803 + $0x3f8] sm:$0xff]
        %v1259 = vld [vmem:[%s803 + $0x400] sm:$0xff]
        %v1260 = vld [vmem:[%s803 + $0x408] sm:$0xff]
        %v1261 = vld [vmem:[%s803 + $0x410] sm:$0xf]
        %v1262 = vld [vmem:[%s803 + $0x414] sm:$0xff]
        %v1263 = vld [vmem:[%s803 + $0x41c] sm:$0xff]
        %v1264 = vld [vmem:[%s803 + $0x424] sm:$0xff]
        %v1265 = vld [vmem:[%s803 + $0x42c] sm:$0xff]
        %v1266 = vld [vmem:[%s803 + $0x434] sm:$0xf]
        %v1267 = vld [vmem:[%s803 + $0x438] sm:$0xff]
        %v1268 = vld [vmem:[%s803 + $0x440] sm:$0xff]
        %v1269 = vld [vmem:[%s803 + $0x448] sm:$0xff]
        %v1270 = vld [vmem:[%s803 + $0x450] sm:$0xff]
        %v1271 = vld [vmem:[%s803 + $0x458] sm:$0xf]
        %v1272 = vld [vmem:[%s803 + $0x45c] sm:$0xff]
        %v1273 = vld [vmem:[%s803 + $0x464] sm:$0xff]
        %v1274 = vld [vmem:[%s803 + $0x46c] sm:$0xff]
        %v1275 = vld [vmem:[%s803 + $0x474] sm:$0xff]
        %v1276 = vld [vmem:[%s803 + $0x47c] sm:$0xf]
        %v1277 = vld [vmem:[%s803 + $0x480] sm:$0xff]
        %v1278 = vld [vmem:[%s803 + $0x488] sm:$0xff]
        %v1279 = vld [vmem:[%s803 + $0x490] sm:$0xff]
        %v1280 = vld [vmem:[%s803 + $0x498] sm:$0xff]
        %v1281 = vld [vmem:[%s803 + $0x4a0] sm:$0xf]
        %v1282 = vld [vmem:[%s803 + $0x4a4] sm:$0xff]
        %v1283 = vld [vmem:[%s803 + $0x4ac] sm:$0xff]
        %v1284 = vld [vmem:[%s803 + $0x4b4] sm:$0xff]
        %v1285 = vld [vmem:[%s803 + $0x4bc] sm:$0xff]
        %v1286 = vld [vmem:[%s803 + $0x4c4] sm:$0xf]
        %v1287 = vld [vmem:[%s803 + $0x4c8] sm:$0xff]
        %v1288 = vld [vmem:[%s803 + $0x4d0] sm:$0xff]
        %v1289 = vld [vmem:[%s803 + $0x4d8] sm:$0xff]
        %v1290 = vld [vmem:[%s803 + $0x4e0] sm:$0xff]
        %v1291 = vld [vmem:[%s803 + $0x4e8] sm:$0xf]
        %v1292 = vld [vmem:[%s803 + $0x4ec] sm:$0xff]
        %v1293 = vld [vmem:[%s803 + $0x4f4] sm:$0xff]
        %v1294 = vld [vmem:[%s803 + $0x4fc] sm:$0xff]
        %v1295 = vld [vmem:[%s803 + $0x504] sm:$0xff]
        %v1296 = vld [vmem:[%s803 + $0x50c] sm:$0xf]
        %v1297 = vld [vmem:[%s803 + $0x510] sm:$0xff]
        %v1298 = vld [vmem:[%s803 + $0x518] sm:$0xff]
        %v1299 = vld [vmem:[%s803 + $0x520] sm:$0xff]
        %v1300 = vld [vmem:[%s803 + $0x528] sm:$0xff]
        %v1301 = vld [vmem:[%s803 + $0x530] sm:$0xf]
        %v1302 = vld [vmem:[%s803 + $0x534] sm:$0xff]
        %v1303 = vld [vmem:[%s803 + $0x53c] sm:$0xff]
        %v1304 = vld [vmem:[%s803 + $0x544] sm:$0xff]
        %v1305 = vld [vmem:[%s803 + $0x54c] sm:$0xff]
        %v1306 = vld [vmem:[%s803 + $0x554] sm:$0xf]
        %v1307 = vld [vmem:[%s803 + $0x558] sm:$0xff]
        %v1308 = vld [vmem:[%s803 + $0x560] sm:$0xff]
        %v1309 = vld [vmem:[%s803 + $0x568] sm:$0xff]
        %v1310 = vld [vmem:[%s803 + $0x570] sm:$0xff]
        %v1311 = vld [vmem:[%s803 + $0x578] sm:$0xf]
        %v1312 = vld [vmem:[%s803 + $0x57c] sm:$0xff]
        %v1313 = vld [vmem:[%s803 + $0x584] sm:$0xff]
        %v1314 = vld [vmem:[%s803 + $0x58c] sm:$0xff]
        %v1315 = vld [vmem:[%s803 + $0x594] sm:$0xff]
        %v1316 = vld [vmem:[%s803 + $0x59c] sm:$0xf]
        %v1317 = vld [vmem:[%s803 + $0x5a0] sm:$0xff]
        %v1318 = vld [vmem:[%s803 + $0x5a8] sm:$0xff]
        %v1319 = vld [vmem:[%s803 + $0x5b0] sm:$0xff]
        %v1320 = vld [vmem:[%s803 + $0x5b8] sm:$0xff]
        %v1321 = vld [vmem:[%s803 + $0x5c0] sm:$0xf]
        %v1322 = vld [vmem:[%s803 + $0x5c4] sm:$0xff]
        %v1323 = vld [vmem:[%s803 + $0x5cc] sm:$0xff]
        %v1324 = vld [vmem:[%s803 + $0x5d4] sm:$0xff]
        %v1325 = vld [vmem:[%s803 + $0x5dc] sm:$0xff]
        %v1326 = vld [vmem:[%s803 + $0x5e4] sm:$0xf]
        %v1327 = vld [vmem:[%s803 + $0x5e8] sm:$0xff]
        %v1328 = vld [vmem:[%s803 + $0x5f0] sm:$0xff]
        %v1329 = vld [vmem:[%s803 + $0x5f8] sm:$0xff]
        %v1330 = vld [vmem:[%s803 + $0x600] sm:$0xff]
        %v1331 = vld [vmem:[%s803 + $0x608] sm:$0xf]
        %v1332 = vld [vmem:[%s803 + $0x60c] sm:$0xff]
        %v1333 = vld [vmem:[%s803 + $0x614] sm:$0xff]
        %v1334 = vld [vmem:[%s803 + $0x61c] sm:$0xff]
        %v1335 = vld [vmem:[%s803 + $0x624] sm:$0xff]
        %v1336 = vld [vmem:[%s803 + $0x62c] sm:$0xf]
        %v1337 = vld [vmem:[%s803 + $0x630] sm:$0xff]
        %v1338 = vld [vmem:[%s803 + $0x638] sm:$0xff]
        %v1339 = vld [vmem:[%s803 + $0x640] sm:$0xff]
        %v1340 = vld [vmem:[%s803 + $0x648] sm:$0xff]
        %v1341 = vld [vmem:[%s803 + $0x650] sm:$0xf]
        %v1342 = vld [vmem:[%s803 + $0x654] sm:$0xff]
        %v1343 = vld [vmem:[%s803 + $0x65c] sm:$0xff]
        %v1344 = vld [vmem:[%s803 + $0x664] sm:$0xff]
        %v1345 = vld [vmem:[%s803 + $0x66c] sm:$0xff]
        %v1346 = vld [vmem:[%s803 + $0x674] sm:$0xf]
        %v1347 = vld [vmem:[%s803 + $0x678] sm:$0xff]
        %v1348 = vld [vmem:[%s803 + $0x680] sm:$0xff]
        %v1349 = vld [vmem:[%s803 + $0x688] sm:$0xff]
        %v1350 = vld [vmem:[%s803 + $0x690] sm:$0xff]
        %v1351 = vld [vmem:[%s803 + $0x698] sm:$0xf]
        %v1352 = vld [vmem:[%s803 + $0x69c] sm:$0xff]
        %v1353 = vld [vmem:[%s803 + $0x6a4] sm:$0xff]
        %v1354 = vld [vmem:[%s803 + $0x6ac] sm:$0xff]
        %v1355 = vld [vmem:[%s803 + $0x6b4] sm:$0xff]
        %v1356 = vld [vmem:[%s803 + $0x6bc] sm:$0xf]
        %v1357 = vld [vmem:[%s812] sm:$0xff]
        %v1358 = vld [vmem:[%s812 + $0x8] sm:$0x1]
        %v1361 = vlaneseq
        %v1362 = vshrl.u32 %v1361, 7
        %v1363 = vsub.s32 0, %v1362
        %v1364 = vrot.slane %v1357, %v1363
        %v1365 = vlaneseq
        %v1366 = vshrl.u32 %v1365, 7
        %v1367 = vsub.s32 1, %v1366
        %v1368 = vrot.slane %v1357, %v1367
        %v1369 = vlaneseq
        %v1370 = vshrl.u32 %v1369, 7
        %v1371 = vsub.s32 2, %v1370
        %v1372 = vrot.slane %v1357, %v1371
        %v1373 = vlaneseq
        %v1374 = vshrl.u32 %v1373, 7
        %v1375 = vsub.s32 3, %v1374
        %v1376 = vrot.slane %v1357, %v1375
        %v1377 = vlaneseq
        %v1378 = vshrl.u32 %v1377, 7
        %v1379 = vsub.s32 4, %v1378
        %v1380 = vrot.slane %v1357, %v1379
        %v1381 = vlaneseq
        %v1382 = vshrl.u32 %v1381, 7
        %v1383 = vsub.s32 5, %v1382
        %v1384 = vrot.slane %v1357, %v1383
        %v1385 = vlaneseq
        %v1386 = vshrl.u32 %v1385, 7
        %v1387 = vsub.s32 6, %v1386
        %v1388 = vrot.slane %v1357, %v1387
        %v1389 = vlaneseq
        %v1390 = vshrl.u32 %v1389, 7
        %v1391 = vsub.s32 7, %v1390
        %v1392 = vrot.slane %v1357, %v1391
        %v1393 = vlaneseq
        %v1394 = vshrl.u32 %v1393, 7
        %v1395 = vsub.s32 0, %v1394
        %v1396 = vrot.slane %v1358, %v1395
        %v1646 = vunpack.c.l.b16 %v1117
        %v1647 = vunpack.c.h.b16 %v1117
        %v1648 = vunpack.c.l.b16 %v1118
        %v1649 = vunpack.c.h.b16 %v1118
        %v1650 = vunpack.c.l.b16 %v1119
        %v1651 = vunpack.c.h.b16 %v1119
        %v1652 = vunpack.c.l.b16 %v1120
        %v1653 = vunpack.c.h.b16 %v1120
        %v1654 = vunpack.c.l.b16 %v1121
        %v1655 = vunpack.c.l.b16 %v1122
        %v1656 = vunpack.c.h.b16 %v1122
        %v1657 = vunpack.c.l.b16 %v1123
        %v1658 = vunpack.c.h.b16 %v1123
        %v1659 = vunpack.c.l.b16 %v1124
        %v1660 = vunpack.c.h.b16 %v1124
        %v1661 = vunpack.c.l.b16 %v1125
        %v1662 = vunpack.c.h.b16 %v1125
        %v1663 = vunpack.c.l.b16 %v1126
        %v1664 = vunpack.c.l.b16 %v1127
        %v1665 = vunpack.c.h.b16 %v1127
        %v1666 = vunpack.c.l.b16 %v1128
        %v1667 = vunpack.c.h.b16 %v1128
        %v1668 = vunpack.c.l.b16 %v1129
        %v1669 = vunpack.c.h.b16 %v1129
        %v1670 = vunpack.c.l.b16 %v1130
        %v1671 = vunpack.c.h.b16 %v1130
        %v1672 = vunpack.c.l.b16 %v1131
        %v1673 = vunpack.c.l.b16 %v1132
        %v1674 = vunpack.c.h.b16 %v1132
        %v1675 = vunpack.c.l.b16 %v1133
        %v1676 = vunpack.c.h.b16 %v1133
        %v1677 = vunpack.c.l.b16 %v1134
        %v1678 = vunpack.c.h.b16 %v1134
        %v1679 = vunpack.c.l.b16 %v1135
        %v1680 = vunpack.c.h.b16 %v1135
        %v1681 = vunpack.c.l.b16 %v1136
        %v1682 = vunpack.c.l.b16 %v1137
        %v1683 = vunpack.c.h.b16 %v1137
        %v1684 = vunpack.c.l.b16 %v1138
        %v1685 = vunpack.c.h.b16 %v1138
        %v1686 = vunpack.c.l.b16 %v1139
        %v1687 = vunpack.c.h.b16 %v1139
        %v1688 = vunpack.c.l.b16 %v1140
        %v1689 = vunpack.c.h.b16 %v1140
        %v1690 = vunpack.c.l.b16 %v1141
        %v1691 = vunpack.c.l.b16 %v1142
        %v1692 = vunpack.c.h.b16 %v1142
        %v1693 = vunpack.c.l.b16 %v1143
        %v1694 = vunpack.c.h.b16 %v1143
        %v1695 = vunpack.c.l.b16 %v1144
        %v1696 = vunpack.c.h.b16 %v1144
        %v1697 = vunpack.c.l.b16 %v1145
        %v1698 = vunpack.c.h.b16 %v1145
        %v1699 = vunpack.c.l.b16 %v1146
        %v1700 = vunpack.c.l.b16 %v1147
        %v1701 = vunpack.c.h.b16 %v1147
        %v1702 = vunpack.c.l.b16 %v1148
        %v1703 = vunpack.c.h.b16 %v1148
        %v1704 = vunpack.c.l.b16 %v1149
        %v1705 = vunpack.c.h.b16 %v1149
        %v1706 = vunpack.c.l.b16 %v1150
        %v1707 = vunpack.c.h.b16 %v1150
        %v1708 = vunpack.c.l.b16 %v1151
        %v1709 = vunpack.c.l.b16 %v1152
        %v1710 = vunpack.c.h.b16 %v1152
        %v1711 = vunpack.c.l.b16 %v1153
        %v1712 = vunpack.c.h.b16 %v1153
        %v1713 = vunpack.c.l.b16 %v1154
        %v1714 = vunpack.c.h.b16 %v1154
        %v1715 = vunpack.c.l.b16 %v1155
        %v1716 = vunpack.c.h.b16 %v1155
        %v1717 = vunpack.c.l.b16 %v1156
        %v1718 = vunpack.c.l.b16 %v1157
        %v1719 = vunpack.c.h.b16 %v1157
        %v1720 = vunpack.c.l.b16 %v1158
        %v1721 = vunpack.c.h.b16 %v1158
        %v1722 = vunpack.c.l.b16 %v1159
        %v1723 = vunpack.c.h.b16 %v1159
        %v1724 = vunpack.c.l.b16 %v1160
        %v1725 = vunpack.c.h.b16 %v1160
        %v1726 = vunpack.c.l.b16 %v1161
        %v1727 = vunpack.c.l.b16 %v1162
        %v1728 = vunpack.c.h.b16 %v1162
        %v1729 = vunpack.c.l.b16 %v1163
        %v1730 = vunpack.c.h.b16 %v1163
        %v1731 = vunpack.c.l.b16 %v1164
        %v1732 = vunpack.c.h.b16 %v1164
        %v1733 = vunpack.c.l.b16 %v1165
        %v1734 = vunpack.c.h.b16 %v1165
        %v1735 = vunpack.c.l.b16 %v1166
        %v1736 = vunpack.c.l.b16 %v1167
        %v1737 = vunpack.c.h.b16 %v1167
        %v1738 = vunpack.c.l.b16 %v1168
        %v1739 = vunpack.c.h.b16 %v1168
        %v1740 = vunpack.c.l.b16 %v1169
        %v1741 = vunpack.c.h.b16 %v1169
        %v1742 = vunpack.c.l.b16 %v1170
        %v1743 = vunpack.c.h.b16 %v1170
        %v1744 = vunpack.c.l.b16 %v1171
        %v1745 = vunpack.c.l.b16 %v1172
        %v1746 = vunpack.c.h.b16 %v1172
        %v1747 = vunpack.c.l.b16 %v1173
        %v1748 = vunpack.c.h.b16 %v1173
        %v1749 = vunpack.c.l.b16 %v1174
        %v1750 = vunpack.c.h.b16 %v1174
        %v1751 = vunpack.c.l.b16 %v1175
        %v1752 = vunpack.c.h.b16 %v1175
        %v1753 = vunpack.c.l.b16 %v1176
        %v1754 = vunpack.c.l.b16 %v1177
        %v1755 = vunpack.c.h.b16 %v1177
        %v1756 = vunpack.c.l.b16 %v1178
        %v1757 = vunpack.c.h.b16 %v1178
        %v1758 = vunpack.c.l.b16 %v1179
        %v1759 = vunpack.c.h.b16 %v1179
        %v1760 = vunpack.c.l.b16 %v1180
        %v1761 = vunpack.c.h.b16 %v1180
        %v1762 = vunpack.c.l.b16 %v1181
        %v1763 = vunpack.c.l.b16 %v1182
        %v1764 = vunpack.c.h.b16 %v1182
        %v1765 = vunpack.c.l.b16 %v1183
        %v1766 = vunpack.c.h.b16 %v1183
        %v1767 = vunpack.c.l.b16 %v1184
        %v1768 = vunpack.c.h.b16 %v1184
        %v1769 = vunpack.c.l.b16 %v1185
        %v1770 = vunpack.c.h.b16 %v1185
        %v1771 = vunpack.c.l.b16 %v1186
        %v1772 = vunpack.c.l.b16 %v1187
        %v1773 = vunpack.c.h.b16 %v1187
        %v1774 = vunpack.c.l.b16 %v1188
        %v1775 = vunpack.c.h.b16 %v1188
        %v1776 = vunpack.c.l.b16 %v1189
        %v1777 = vunpack.c.h.b16 %v1189
        %v1778 = vunpack.c.l.b16 %v1190
        %v1779 = vunpack.c.h.b16 %v1190
        %v1780 = vunpack.c.l.b16 %v1191
        %v1781 = vunpack.c.l.b16 %v1192
        %v1782 = vunpack.c.h.b16 %v1192
        %v1783 = vunpack.c.l.b16 %v1193
        %v1784 = vunpack.c.h.b16 %v1193
        %v1785 = vunpack.c.l.b16 %v1194
        %v1786 = vunpack.c.h.b16 %v1194
        %v1787 = vunpack.c.l.b16 %v1195
        %v1788 = vunpack.c.h.b16 %v1195
        %v1789 = vunpack.c.l.b16 %v1196
        %v1790 = vunpack.c.l.b16 %v1197
        %v1791 = vunpack.c.h.b16 %v1197
        %v1792 = vunpack.c.l.b16 %v1198
        %v1793 = vunpack.c.h.b16 %v1198
        %v1794 = vunpack.c.l.b16 %v1199
        %v1795 = vunpack.c.h.b16 %v1199
        %v1796 = vunpack.c.l.b16 %v1200
        %v1797 = vunpack.c.h.b16 %v1200
        %v1798 = vunpack.c.l.b16 %v1201
        %v1799 = vunpack.c.l.b16 %v1202
        %v1800 = vunpack.c.h.b16 %v1202
        %v1801 = vunpack.c.l.b16 %v1203
        %v1802 = vunpack.c.h.b16 %v1203
        %v1803 = vunpack.c.l.b16 %v1204
        %v1804 = vunpack.c.h.b16 %v1204
        %v1805 = vunpack.c.l.b16 %v1205
        %v1806 = vunpack.c.h.b16 %v1205
        %v1807 = vunpack.c.l.b16 %v1206
        %v1808 = vunpack.c.l.b16 %v1207
        %v1809 = vunpack.c.h.b16 %v1207
        %v1810 = vunpack.c.l.b16 %v1208
        %v1811 = vunpack.c.h.b16 %v1208
        %v1812 = vunpack.c.l.b16 %v1209
        %v1813 = vunpack.c.h.b16 %v1209
        %v1814 = vunpack.c.l.b16 %v1210
        %v1815 = vunpack.c.h.b16 %v1210
        %v1816 = vunpack.c.l.b16 %v1211
        %v1817 = vunpack.c.l.b16 %v1212
        %v1818 = vunpack.c.h.b16 %v1212
        %v1819 = vunpack.c.l.b16 %v1213
        %v1820 = vunpack.c.h.b16 %v1213
        %v1821 = vunpack.c.l.b16 %v1214
        %v1822 = vunpack.c.h.b16 %v1214
        %v1823 = vunpack.c.l.b16 %v1215
        %v1824 = vunpack.c.h.b16 %v1215
        %v1825 = vunpack.c.l.b16 %v1216
        %v1826 = vunpack.c.l.b16 %v1217
        %v1827 = vunpack.c.h.b16 %v1217
        %v1828 = vunpack.c.l.b16 %v1218
        %v1829 = vunpack.c.h.b16 %v1218
        %v1830 = vunpack.c.l.b16 %v1219
        %v1831 = vunpack.c.h.b16 %v1219
        %v1832 = vunpack.c.l.b16 %v1220
        %v1833 = vunpack.c.h.b16 %v1220
        %v1834 = vunpack.c.l.b16 %v1221
        %v1835 = vunpack.c.l.b16 %v1222
        %v1836 = vunpack.c.h.b16 %v1222
        %v1837 = vunpack.c.l.b16 %v1223
        %v1838 = vunpack.c.h.b16 %v1223
        %v1839 = vunpack.c.l.b16 %v1224
        %v1840 = vunpack.c.h.b16 %v1224
        %v1841 = vunpack.c.l.b16 %v1225
        %v1842 = vunpack.c.h.b16 %v1225
        %v1843 = vunpack.c.l.b16 %v1226
        %v1844 = vunpack.c.l.b16 %v1227
        %v1845 = vunpack.c.h.b16 %v1227
        %v1846 = vunpack.c.l.b16 %v1228
        %v1847 = vunpack.c.h.b16 %v1228
        %v1848 = vunpack.c.l.b16 %v1229
        %v1849 = vunpack.c.h.b16 %v1229
        %v1850 = vunpack.c.l.b16 %v1230
        %v1851 = vunpack.c.h.b16 %v1230
        %v1852 = vunpack.c.l.b16 %v1231
        %v1853 = vunpack.c.l.b16 %v1232
        %v1854 = vunpack.c.h.b16 %v1232
        %v1855 = vunpack.c.l.b16 %v1233
        %v1856 = vunpack.c.h.b16 %v1233
        %v1857 = vunpack.c.l.b16 %v1234
        %v1858 = vunpack.c.h.b16 %v1234
        %v1859 = vunpack.c.l.b16 %v1235
        %v1860 = vunpack.c.h.b16 %v1235
        %v1861 = vunpack.c.l.b16 %v1236
        %v1862 = vunpack.c.l.b16 %v1237
        %v1863 = vunpack.c.h.b16 %v1237
        %v1864 = vunpack.c.l.b16 %v1238
        %v1865 = vunpack.c.h.b16 %v1238
        %v1866 = vunpack.c.l.b16 %v1239
        %v1867 = vunpack.c.h.b16 %v1239
        %v1868 = vunpack.c.l.b16 %v1240
        %v1869 = vunpack.c.h.b16 %v1240
        %v1870 = vunpack.c.l.b16 %v1241
        %v1871 = vunpack.c.l.b16 %v1242
        %v1872 = vunpack.c.h.b16 %v1242
        %v1873 = vunpack.c.l.b16 %v1243
        %v1874 = vunpack.c.h.b16 %v1243
        %v1875 = vunpack.c.l.b16 %v1244
        %v1876 = vunpack.c.h.b16 %v1244
        %v1877 = vunpack.c.l.b16 %v1245
        %v1878 = vunpack.c.h.b16 %v1245
        %v1879 = vunpack.c.l.b16 %v1246
        %v1880 = vunpack.c.l.b16 %v1247
        %v1881 = vunpack.c.h.b16 %v1247
        %v1882 = vunpack.c.l.b16 %v1248
        %v1883 = vunpack.c.h.b16 %v1248
        %v1884 = vunpack.c.l.b16 %v1249
        %v1885 = vunpack.c.h.b16 %v1249
        %v1886 = vunpack.c.l.b16 %v1250
        %v1887 = vunpack.c.h.b16 %v1250
        %v1888 = vunpack.c.l.b16 %v1251
        %v1889 = vunpack.c.l.b16 %v1252
        %v1890 = vunpack.c.h.b16 %v1252
        %v1891 = vunpack.c.l.b16 %v1253
        %v1892 = vunpack.c.h.b16 %v1253
        %v1893 = vunpack.c.l.b16 %v1254
        %v1894 = vunpack.c.h.b16 %v1254
        %v1895 = vunpack.c.l.b16 %v1255
        %v1896 = vunpack.c.h.b16 %v1255
        %v1897 = vunpack.c.l.b16 %v1256
        %v1898 = vunpack.c.l.b16 %v1257
        %v1899 = vunpack.c.h.b16 %v1257
        %v1900 = vunpack.c.l.b16 %v1258
        %v1901 = vunpack.c.h.b16 %v1258
        %v1902 = vunpack.c.l.b16 %v1259
        %v1903 = vunpack.c.h.b16 %v1259
        %v1904 = vunpack.c.l.b16 %v1260
        %v1905 = vunpack.c.h.b16 %v1260
        %v1906 = vunpack.c.l.b16 %v1261
        %v1907 = vunpack.c.l.b16 %v1262
        %v1908 = vunpack.c.h.b16 %v1262
        %v1909 = vunpack.c.l.b16 %v1263
        %v1910 = vunpack.c.h.b16 %v1263
        %v1911 = vunpack.c.l.b16 %v1264
        %v1912 = vunpack.c.h.b16 %v1264
        %v1913 = vunpack.c.l.b16 %v1265
        %v1914 = vunpack.c.h.b16 %v1265
        %v1915 = vunpack.c.l.b16 %v1266
        %v1916 = vunpack.c.l.b16 %v1267
        %v1917 = vunpack.c.h.b16 %v1267
        %v1918 = vunpack.c.l.b16 %v1268
        %v1919 = vunpack.c.h.b16 %v1268
        %v1920 = vunpack.c.l.b16 %v1269
        %v1921 = vunpack.c.h.b16 %v1269
        %v1922 = vunpack.c.l.b16 %v1270
        %v1923 = vunpack.c.h.b16 %v1270
        %v1924 = vunpack.c.l.b16 %v1271
        %v1925 = vunpack.c.l.b16 %v1272
        %v1926 = vunpack.c.h.b16 %v1272
        %v1927 = vunpack.c.l.b16 %v1273
        %v1928 = vunpack.c.h.b16 %v1273
        %v1929 = vunpack.c.l.b16 %v1274
        %v1930 = vunpack.c.h.b16 %v1274
        %v1931 = vunpack.c.l.b16 %v1275
        %v1932 = vunpack.c.h.b16 %v1275
        %v1933 = vunpack.c.l.b16 %v1276
        %v1934 = vunpack.c.l.b16 %v1277
        %v1935 = vunpack.c.h.b16 %v1277
        %v1936 = vunpack.c.l.b16 %v1278
        %v1937 = vunpack.c.h.b16 %v1278
        %v1938 = vunpack.c.l.b16 %v1279
        %v1939 = vunpack.c.h.b16 %v1279
        %v1940 = vunpack.c.l.b16 %v1280
        %v1941 = vunpack.c.h.b16 %v1280
        %v1942 = vunpack.c.l.b16 %v1281
        %v1943 = vunpack.c.l.b16 %v1282
        %v1944 = vunpack.c.h.b16 %v1282
        %v1945 = vunpack.c.l.b16 %v1283
        %v1946 = vunpack.c.h.b16 %v1283
        %v1947 = vunpack.c.l.b16 %v1284
        %v1948 = vunpack.c.h.b16 %v1284
        %v1949 = vunpack.c.l.b16 %v1285
        %v1950 = vunpack.c.h.b16 %v1285
        %v1951 = vunpack.c.l.b16 %v1286
        %v1952 = vunpack.c.l.b16 %v1287
        %v1953 = vunpack.c.h.b16 %v1287
        %v1954 = vunpack.c.l.b16 %v1288
        %v1955 = vunpack.c.h.b16 %v1288
        %v1956 = vunpack.c.l.b16 %v1289
        %v1957 = vunpack.c.h.b16 %v1289
        %v1958 = vunpack.c.l.b16 %v1290
        %v1959 = vunpack.c.h.b16 %v1290
        %v1960 = vunpack.c.l.b16 %v1291
        %v1961 = vunpack.c.l.b16 %v1292
        %v1962 = vunpack.c.h.b16 %v1292
        %v1963 = vunpack.c.l.b16 %v1293
        %v1964 = vunpack.c.h.b16 %v1293
        %v1965 = vunpack.c.l.b16 %v1294
        %v1966 = vunpack.c.h.b16 %v1294
        %v1967 = vunpack.c.l.b16 %v1295
        %v1968 = vunpack.c.h.b16 %v1295
        %v1969 = vunpack.c.l.b16 %v1296
        %v1970 = vunpack.c.l.b16 %v1297
        %v1971 = vunpack.c.h.b16 %v1297
        %v1972 = vunpack.c.l.b16 %v1298
        %v1973 = vunpack.c.h.b16 %v1298
        %v1974 = vunpack.c.l.b16 %v1299
        %v1975 = vunpack.c.h.b16 %v1299
        %v1976 = vunpack.c.l.b16 %v1300
        %v1977 = vunpack.c.h.b16 %v1300
        %v1978 = vunpack.c.l.b16 %v1301
        %v1979 = vunpack.c.l.b16 %v1302
        %v1980 = vunpack.c.h.b16 %v1302
        %v1981 = vunpack.c.l.b16 %v1303
        %v1982 = vunpack.c.h.b16 %v1303
        %v1983 = vunpack.c.l.b16 %v1304
        %v1984 = vunpack.c.h.b16 %v1304
        %v1985 = vunpack.c.l.b16 %v1305
        %v1986 = vunpack.c.h.b16 %v1305
        %v1987 = vunpack.c.l.b16 %v1306
        %v1988 = vunpack.c.l.b16 %v1307
        %v1989 = vunpack.c.h.b16 %v1307
        %v1990 = vunpack.c.l.b16 %v1308
        %v1991 = vunpack.c.h.b16 %v1308
        %v1992 = vunpack.c.l.b16 %v1309
        %v1993 = vunpack.c.h.b16 %v1309
        %v1994 = vunpack.c.l.b16 %v1310
        %v1995 = vunpack.c.h.b16 %v1310
        %v1996 = vunpack.c.l.b16 %v1311
        %v1997 = vunpack.c.l.b16 %v1312
        %v1998 = vunpack.c.h.b16 %v1312
        %v1999 = vunpack.c.l.b16 %v1313
        %v2000 = vunpack.c.h.b16 %v1313
        %v2001 = vunpack.c.l.b16 %v1314
        %v2002 = vunpack.c.h.b16 %v1314
        %v2003 = vunpack.c.l.b16 %v1315
        %v2004 = vunpack.c.h.b16 %v1315
        %v2005 = vunpack.c.l.b16 %v1316
        %v2006 = vunpack.c.l.b16 %v1317
        %v2007 = vunpack.c.h.b16 %v1317
        %v2008 = vunpack.c.l.b16 %v1318
        %v2009 = vunpack.c.h.b16 %v1318
        %v2010 = vunpack.c.l.b16 %v1319
        %v2011 = vunpack.c.h.b16 %v1319
        %v2012 = vunpack.c.l.b16 %v1320
        %v2013 = vunpack.c.h.b16 %v1320
        %v2014 = vunpack.c.l.b16 %v1321
        %v2015 = vunpack.c.l.b16 %v1322
        %v2016 = vunpack.c.h.b16 %v1322
        %v2017 = vunpack.c.l.b16 %v1323
        %v2018 = vunpack.c.h.b16 %v1323
        %v2019 = vunpack.c.l.b16 %v1324
        %v2020 = vunpack.c.h.b16 %v1324
        %v2021 = vunpack.c.l.b16 %v1325
        %v2022 = vunpack.c.h.b16 %v1325
        %v2023 = vunpack.c.l.b16 %v1326
        %v2024 = vunpack.c.l.b16 %v1327
        %v2025 = vunpack.c.h.b16 %v1327
        %v2026 = vunpack.c.l.b16 %v1328
        %v2027 = vunpack.c.h.b16 %v1328
        %v2028 = vunpack.c.l.b16 %v1329
        %v2029 = vunpack.c.h.b16 %v1329
        %v2030 = vunpack.c.l.b16 %v1330
        %v2031 = vunpack.c.h.b16 %v1330
        %v2032 = vunpack.c.l.b16 %v1331
        %v2033 = vunpack.c.l.b16 %v1332
        %v2034 = vunpack.c.h.b16 %v1332
        %v2035 = vunpack.c.l.b16 %v1333
        %v2036 = vunpack.c.h.b16 %v1333
        %v2037 = vunpack.c.l.b16 %v1334
        %v2038 = vunpack.c.h.b16 %v1334
        %v2039 = vunpack.c.l.b16 %v1335
        %v2040 = vunpack.c.h.b16 %v1335
        %v2041 = vunpack.c.l.b16 %v1336
        %v2042 = vunpack.c.l.b16 %v1337
        %v2043 = vunpack.c.h.b16 %v1337
        %v2044 = vunpack.c.l.b16 %v1338
        %v2045 = vunpack.c.h.b16 %v1338
        %v2046 = vunpack.c.l.b16 %v1339
        %v2047 = vunpack.c.h.b16 %v1339
        %v2048 = vunpack.c.l.b16 %v1340
        %v2049 = vunpack.c.h.b16 %v1340
        %v2050 = vunpack.c.l.b16 %v1341
        %v2051 = vunpack.c.l.b16 %v1342
        %v2052 = vunpack.c.h.b16 %v1342
        %v2053 = vunpack.c.l.b16 %v1343
        %v2054 = vunpack.c.h.b16 %v1343
        %v2055 = vunpack.c.l.b16 %v1344
        %v2056 = vunpack.c.h.b16 %v1344
        %v2057 = vunpack.c.l.b16 %v1345
        %v2058 = vunpack.c.h.b16 %v1345
        %v2059 = vunpack.c.l.b16 %v1346
        %v2060 = vunpack.c.l.b16 %v1347
        %v2061 = vunpack.c.h.b16 %v1347
        %v2062 = vunpack.c.l.b16 %v1348
        %v2063 = vunpack.c.h.b16 %v1348
        %v2064 = vunpack.c.l.b16 %v1349
        %v2065 = vunpack.c.h.b16 %v1349
        %v2066 = vunpack.c.l.b16 %v1350
        %v2067 = vunpack.c.h.b16 %v1350
        %v2068 = vunpack.c.l.b16 %v1351
        %v2069 = vunpack.c.l.b16 %v1352
        %v2070 = vunpack.c.h.b16 %v1352
        %v2071 = vunpack.c.l.b16 %v1353
        %v2072 = vunpack.c.h.b16 %v1353
        %v2073 = vunpack.c.l.b16 %v1354
        %v2074 = vunpack.c.h.b16 %v1354
        %v2075 = vunpack.c.l.b16 %v1355
        %v2076 = vunpack.c.h.b16 %v1355
        %v2077 = vunpack.c.l.b16 %v1356
        %v2078 = vpack.c.b16 %v1655, %v1646
        %v2079 = vpack.c.b16 %v1656, %v1647
        %v2080 = vpack.c.b16 %v1657, %v1648
        %v2081 = vpack.c.b16 %v1658, %v1649
        %v2082 = vpack.c.b16 %v1659, %v1650
        %v2083 = vpack.c.b16 %v1660, %v1651
        %v2084 = vpack.c.b16 %v1661, %v1652
        %v2085 = vpack.c.b16 %v1662, %v1653
        %v2086 = vpack.c.b16 %v1663, %v1654
        %v2087 = vpack.c.b16 %v1673, %v1664
        %v2088 = vpack.c.b16 %v1674, %v1665
        %v2089 = vpack.c.b16 %v1675, %v1666
        %v2090 = vpack.c.b16 %v1676, %v1667
        %v2091 = vpack.c.b16 %v1677, %v1668
        %v2092 = vpack.c.b16 %v1678, %v1669
        %v2093 = vpack.c.b16 %v1679, %v1670
        %v2094 = vpack.c.b16 %v1680, %v1671
        %v2095 = vpack.c.b16 %v1681, %v1672
        %v2096 = vpack.c.b16 %v1691, %v1682
        %v2097 = vpack.c.b16 %v1692, %v1683
        %v2098 = vpack.c.b16 %v1693, %v1684
        %v2099 = vpack.c.b16 %v1694, %v1685
        %v2100 = vpack.c.b16 %v1695, %v1686
        %v2101 = vpack.c.b16 %v1696, %v1687
        %v2102 = vpack.c.b16 %v1697, %v1688
        %v2103 = vpack.c.b16 %v1698, %v1689
        %v2104 = vpack.c.b16 %v1699, %v1690
        %v2105 = vpack.c.b16 %v1709, %v1700
        %v2106 = vpack.c.b16 %v1710, %v1701
        %v2107 = vpack.c.b16 %v1711, %v1702
        %v2108 = vpack.c.b16 %v1712, %v1703
        %v2109 = vpack.c.b16 %v1713, %v1704
        %v2110 = vpack.c.b16 %v1714, %v1705
        %v2111 = vpack.c.b16 %v1715, %v1706
        %v2112 = vpack.c.b16 %v1716, %v1707
        %v2113 = vpack.c.b16 %v1717, %v1708
        %v2114 = vpack.c.b16 %v1727, %v1718
        %v2115 = vpack.c.b16 %v1728, %v1719
        %v2116 = vpack.c.b16 %v1729, %v1720
        %v2117 = vpack.c.b16 %v1730, %v1721
        %v2118 = vpack.c.b16 %v1731, %v1722
        %v2119 = vpack.c.b16 %v1732, %v1723
        %v2120 = vpack.c.b16 %v1733, %v1724
        %v2121 = vpack.c.b16 %v1734, %v1725
        %v2122 = vpack.c.b16 %v1735, %v1726
        %v2123 = vpack.c.b16 %v1745, %v1736
        %v2124 = vpack.c.b16 %v1746, %v1737
        %v2125 = vpack.c.b16 %v1747, %v1738
        %v2126 = vpack.c.b16 %v1748, %v1739
        %v2127 = vpack.c.b16 %v1749, %v1740
        %v2128 = vpack.c.b16 %v1750, %v1741
        %v2129 = vpack.c.b16 %v1751, %v1742
        %v2130 = vpack.c.b16 %v1752, %v1743
        %v2131 = vpack.c.b16 %v1753, %v1744
        %v2132 = vpack.c.b16 %v1763, %v1754
        %v2133 = vpack.c.b16 %v1764, %v1755
        %v2134 = vpack.c.b16 %v1765, %v1756
        %v2135 = vpack.c.b16 %v1766, %v1757
        %v2136 = vpack.c.b16 %v1767, %v1758
        %v2137 = vpack.c.b16 %v1768, %v1759
        %v2138 = vpack.c.b16 %v1769, %v1760
        %v2139 = vpack.c.b16 %v1770, %v1761
        %v2140 = vpack.c.b16 %v1771, %v1762
        %v2141 = vpack.c.b16 %v1781, %v1772
        %v2142 = vpack.c.b16 %v1782, %v1773
        %v2143 = vpack.c.b16 %v1783, %v1774
        %v2144 = vpack.c.b16 %v1784, %v1775
        %v2145 = vpack.c.b16 %v1785, %v1776
        %v2146 = vpack.c.b16 %v1786, %v1777
        %v2147 = vpack.c.b16 %v1787, %v1778
        %v2148 = vpack.c.b16 %v1788, %v1779
        %v2149 = vpack.c.b16 %v1789, %v1780
        %v2150 = vpack.c.b16 %v1799, %v1790
        %v2151 = vpack.c.b16 %v1800, %v1791
        %v2152 = vpack.c.b16 %v1801, %v1792
        %v2153 = vpack.c.b16 %v1802, %v1793
        %v2154 = vpack.c.b16 %v1803, %v1794
        %v2155 = vpack.c.b16 %v1804, %v1795
        %v2156 = vpack.c.b16 %v1805, %v1796
        %v2157 = vpack.c.b16 %v1806, %v1797
        %v2158 = vpack.c.b16 %v1807, %v1798
        %v2159 = vpack.c.b16 %v1817, %v1808
        %v2160 = vpack.c.b16 %v1818, %v1809
        %v2161 = vpack.c.b16 %v1819, %v1810
        %v2162 = vpack.c.b16 %v1820, %v1811
        %v2163 = vpack.c.b16 %v1821, %v1812
        %v2164 = vpack.c.b16 %v1822, %v1813
        %v2165 = vpack.c.b16 %v1823, %v1814
        %v2166 = vpack.c.b16 %v1824, %v1815
        %v2167 = vpack.c.b16 %v1825, %v1816
        %v2168 = vpack.c.b16 %v1835, %v1826
        %v2169 = vpack.c.b16 %v1836, %v1827
        %v2170 = vpack.c.b16 %v1837, %v1828
        %v2171 = vpack.c.b16 %v1838, %v1829
        %v2172 = vpack.c.b16 %v1839, %v1830
        %v2173 = vpack.c.b16 %v1840, %v1831
        %v2174 = vpack.c.b16 %v1841, %v1832
        %v2175 = vpack.c.b16 %v1842, %v1833
        %v2176 = vpack.c.b16 %v1843, %v1834
        %v2177 = vpack.c.b16 %v1853, %v1844
        %v2178 = vpack.c.b16 %v1854, %v1845
        %v2179 = vpack.c.b16 %v1855, %v1846
        %v2180 = vpack.c.b16 %v1856, %v1847
        %v2181 = vpack.c.b16 %v1857, %v1848
        %v2182 = vpack.c.b16 %v1858, %v1849
        %v2183 = vpack.c.b16 %v1859, %v1850
        %v2184 = vpack.c.b16 %v1860, %v1851
        %v2185 = vpack.c.b16 %v1861, %v1852
        %v2186 = vpack.c.b16 %v1871, %v1862
        %v2187 = vpack.c.b16 %v1872, %v1863
        %v2188 = vpack.c.b16 %v1873, %v1864
        %v2189 = vpack.c.b16 %v1874, %v1865
        %v2190 = vpack.c.b16 %v1875, %v1866
        %v2191 = vpack.c.b16 %v1876, %v1867
        %v2192 = vpack.c.b16 %v1877, %v1868
        %v2193 = vpack.c.b16 %v1878, %v1869
        %v2194 = vpack.c.b16 %v1879, %v1870
        %v2195 = vpack.c.b16 %v1889, %v1880
        %v2196 = vpack.c.b16 %v1890, %v1881
        %v2197 = vpack.c.b16 %v1891, %v1882
        %v2198 = vpack.c.b16 %v1892, %v1883
        %v2199 = vpack.c.b16 %v1893, %v1884
        %v2200 = vpack.c.b16 %v1894, %v1885
        %v2201 = vpack.c.b16 %v1895, %v1886
        %v2202 = vpack.c.b16 %v1896, %v1887
        %v2203 = vpack.c.b16 %v1897, %v1888
        %v2204 = vpack.c.b16 %v1907, %v1898
        %v2205 = vpack.c.b16 %v1908, %v1899
        %v2206 = vpack.c.b16 %v1909, %v1900
        %v2207 = vpack.c.b16 %v1910, %v1901
        %v2208 = vpack.c.b16 %v1911, %v1902
        %v2209 = vpack.c.b16 %v1912, %v1903
        %v2210 = vpack.c.b16 %v1913, %v1904
        %v2211 = vpack.c.b16 %v1914, %v1905
        %v2212 = vpack.c.b16 %v1915, %v1906
        %v2213 = vpack.c.b16 %v1925, %v1916
        %v2214 = vpack.c.b16 %v1926, %v1917
        %v2215 = vpack.c.b16 %v1927, %v1918
        %v2216 = vpack.c.b16 %v1928, %v1919
        %v2217 = vpack.c.b16 %v1929, %v1920
        %v2218 = vpack.c.b16 %v1930, %v1921
        %v2219 = vpack.c.b16 %v1931, %v1922
        %v2220 = vpack.c.b16 %v1932, %v1923
        %v2221 = vpack.c.b16 %v1933, %v1924
        %v2222 = vpack.c.b16 %v1943, %v1934
        %v2223 = vpack.c.b16 %v1944, %v1935
        %v2224 = vpack.c.b16 %v1945, %v1936
        %v2225 = vpack.c.b16 %v1946, %v1937
        %v2226 = vpack.c.b16 %v1947, %v1938
        %v2227 = vpack.c.b16 %v1948, %v1939
        %v2228 = vpack.c.b16 %v1949, %v1940
        %v2229 = vpack.c.b16 %v1950, %v1941
        %v2230 = vpack.c.b16 %v1951, %v1942
        %v2231 = vpack.c.b16 %v1961, %v1952
        %v2232 = vpack.c.b16 %v1962, %v1953
        %v2233 = vpack.c.b16 %v1963, %v1954
        %v2234 = vpack.c.b16 %v1964, %v1955
        %v2235 = vpack.c.b16 %v1965, %v1956
        %v2236 = vpack.c.b16 %v1966, %v1957
        %v2237 = vpack.c.b16 %v1967, %v1958
        %v2238 = vpack.c.b16 %v1968, %v1959
        %v2239 = vpack.c.b16 %v1969, %v1960
        %v2240 = vpack.c.b16 %v1979, %v1970
        %v2241 = vpack.c.b16 %v1980, %v1971
        %v2242 = vpack.c.b16 %v1981, %v1972
        %v2243 = vpack.c.b16 %v1982, %v1973
        %v2244 = vpack.c.b16 %v1983, %v1974
        %v2245 = vpack.c.b16 %v1984, %v1975
        %v2246 = vpack.c.b16 %v1985, %v1976
        %v2247 = vpack.c.b16 %v1986, %v1977
        %v2248 = vpack.c.b16 %v1987, %v1978
        %v2249 = vpack.c.b16 %v1997, %v1988
        %v2250 = vpack.c.b16 %v1998, %v1989
        %v2251 = vpack.c.b16 %v1999, %v1990
        %v2252 = vpack.c.b16 %v2000, %v1991
        %v2253 = vpack.c.b16 %v2001, %v1992
        %v2254 = vpack.c.b16 %v2002, %v1993
        %v2255 = vpack.c.b16 %v2003, %v1994
        %v2256 = vpack.c.b16 %v2004, %v1995
        %v2257 = vpack.c.b16 %v2005, %v1996
        %v2258 = vpack.c.b16 %v2015, %v2006
        %v2259 = vpack.c.b16 %v2016, %v2007
        %v2260 = vpack.c.b16 %v2017, %v2008
        %v2261 = vpack.c.b16 %v2018, %v2009
        %v2262 = vpack.c.b16 %v2019, %v2010
        %v2263 = vpack.c.b16 %v2020, %v2011
        %v2264 = vpack.c.b16 %v2021, %v2012
        %v2265 = vpack.c.b16 %v2022, %v2013
        %v2266 = vpack.c.b16 %v2023, %v2014
        %v2267 = vpack.c.b16 %v2033, %v2024
        %v2268 = vpack.c.b16 %v2034, %v2025
        %v2269 = vpack.c.b16 %v2035, %v2026
        %v2270 = vpack.c.b16 %v2036, %v2027
        %v2271 = vpack.c.b16 %v2037, %v2028
        %v2272 = vpack.c.b16 %v2038, %v2029
        %v2273 = vpack.c.b16 %v2039, %v2030
        %v2274 = vpack.c.b16 %v2040, %v2031
        %v2275 = vpack.c.b16 %v2041, %v2032
        %v2276 = vpack.c.b16 %v2051, %v2042
        %v2277 = vpack.c.b16 %v2052, %v2043
        %v2278 = vpack.c.b16 %v2053, %v2044
        %v2279 = vpack.c.b16 %v2054, %v2045
        %v2280 = vpack.c.b16 %v2055, %v2046
        %v2281 = vpack.c.b16 %v2056, %v2047
        %v2282 = vpack.c.b16 %v2057, %v2048
        %v2283 = vpack.c.b16 %v2058, %v2049
        %v2284 = vpack.c.b16 %v2059, %v2050
        %v2285 = vpack.c.b16 %v2069, %v2060
        %v2286 = vpack.c.b16 %v2070, %v2061
        %v2287 = vpack.c.b16 %v2071, %v2062
        %v2288 = vpack.c.b16 %v2072, %v2063
        %v2289 = vpack.c.b16 %v2073, %v2064
        %v2290 = vpack.c.b16 %v2074, %v2065
        %v2291 = vpack.c.b16 %v2075, %v2066
        %v2292 = vpack.c.b16 %v2076, %v2067
        %v2293 = vpack.c.b16 %v2077, %v2068
        %2510 = vmatprep.subr.bf16.mxu0 %v2079
        %2511 = vmatpush1.bf16.msra.mxu0 %v2078
        %2512 = vmatprep.subr.bf16.mxu0 %v2088
        %2513 = vmatpush1.bf16.msra.mxu0 %v2087
        %2514 = vmatprep.subr.bf16.mxu0 %v2097
        %2515 = vmatpush1.bf16.msra.mxu0 %v2096
        %2516 = vmatprep.subr.bf16.mxu0 %v2106
        %2517 = vmatpush1.bf16.msra.mxu0 %v2105
        %2518 = vmatprep.subr.bf16.mxu0 %v2115
        %2519 = vmatpush1.bf16.msra.mxu0 %v2114
        %2520 = vmatprep.subr.bf16.mxu0 %v2124
        %2521 = vmatpush1.bf16.msra.mxu0 %v2123
        %2522 = vmatprep.subr.bf16.mxu0 %v2133
        %2523 = vmatpush1.bf16.msra.mxu0 %v2132
        %2524 = vmatprep.subr.bf16.mxu0 %v2142
        %2525 = vmatpush1.bf16.msra.mxu0 %v2141
        %2526 = vmatprep.subr.bf16.mxu0 %v2151
        %2527 = vmatpush1.bf16.msra.mxu0 %v2150
        %2528 = vmatprep.subr.bf16.mxu0 %v2160
        %2529 = vmatpush1.bf16.msra.mxu0 %v2159
        %2530 = vmatprep.subr.bf16.mxu0 %v2169
        %2531 = vmatpush1.bf16.msra.mxu0 %v2168
        %2532 = vmatprep.subr.bf16.mxu0 %v2178
        %2533 = vmatpush1.bf16.msra.mxu0 %v2177
        %2534 = vmatprep.subr.bf16.mxu0 %v2187
        %2535 = vmatpush1.bf16.msra.mxu0 %v2186
        %2536 = vmatprep.subr.bf16.mxu0 %v2196
        %2537 = vmatpush1.bf16.msra.mxu0 %v2195
        %2538 = vmatprep.subr.bf16.mxu0 %v2205
        %2539 = vmatpush1.bf16.msra.mxu0 %v2204
        %2540 = vmatprep.subr.bf16.mxu0 %v2214
        %2541 = vmatpush1.bf16.msra.mxu0 %v2213
        %2542 = vmatprep.mubr.bf16.mxu0 %v1115
        %2543 = vmatmul.mubr.bf16.gmra.mrb[0].mxu0 %v1114
        %v2544 = vpop.f32.mrb[0].mxu0
        %v2545 = vadd.f32 %v1364, %v2544
        %v2546 = vpop.f32.mrb[0].mxu0
        %v2547 = vadd.f32 %v1368, %v2546
        %v2548 = vpop.f32.mrb[0].mxu0
        %v2549 = vpop.f32.mrb[0].mxu0
        %2550 = vdwg.mxu0
        %2551 = vmatprep.subr.bf16.mxu0 %v2223
        %2552 = vmatpush1.bf16.msra.mxu0 %v2222
        %2553 = vmatprep.subr.bf16.mxu0 %v2232
        %2554 = vmatpush1.bf16.msra.mxu0 %v2231
        %2555 = vmatprep.subr.bf16.mxu0 %v2241
        %2556 = vmatpush1.bf16.msra.mxu0 %v2240
        %2557 = vmatprep.subr.bf16.mxu0 %v2250
        %2558 = vmatpush1.bf16.msra.mxu0 %v2249
        %2559 = vmatprep.subr.bf16.mxu0 %v2259
        %2560 = vmatpush1.bf16.msra.mxu0 %v2258
        %2561 = vmatprep.subr.bf16.mxu0 %v2268
        %2562 = vmatpush1.bf16.msra.mxu0 %v2267
        %2563 = vmatprep.subr.bf16.mxu0 %v2277
        %2564 = vmatpush1.bf16.msra.mxu0 %v2276
        %2565 = vmatprep.subr.bf16.mxu0 %v2286
        %2566 = vmatpush1.bf16.msra.mxu0 %v2285
        %2567 = vmatprep.subr.bf16.mxu0 0
        %2568 = vmatpush1.bf16.msra.mxu0 0
        %2569 = vmatprep.subr.bf16.mxu0 0
        %2570 = vmatpush1.bf16.msra.mxu0 0
        %2571 = vmatprep.subr.bf16.mxu0 0
        %2572 = vmatpush1.bf16.msra.mxu0 0
        %2573 = vmatprep.subr.bf16.mxu0 0
        %2574 = vmatpush1.bf16.msra.mxu0 0
        %2575 = vmatprep.subr.bf16.mxu0 0
        %2576 = vmatpush1.bf16.msra.mxu0 0
        %2577 = vmatprep.subr.bf16.mxu0 0
        %2578 = vmatpush1.bf16.msra.mxu0 0
        %2579 = vmatprep.subr.bf16.mxu0 0
        %2580 = vmatpush1.bf16.msra.mxu0 0
        %2581 = vmatprep.subr.bf16.mxu0 0
        %2582 = vmatpush1.bf16.msra.mxu0 0
        %2583 = vmatprep.mubr.bf16.mxu0 0
        %2584 = vmatmul.mubr.bf16.gmra.mrb[0].mxu0 %v1116
        %v2585 = vpop.f32.mrb[0].mxu0
        %v2586 = vadd.f32 %v2545, %v2585
        %v2587 = vpop.f32.mrb[0].mxu0
        %v2588 = vadd.f32 %v2547, %v2587
        %v2589 = vpop.f32.mrb[0].mxu0
        %v2590 = vpop.f32.mrb[0].mxu0
        %2591 = vdwg.mxu0
        %2592 = vmatprep.subr.bf16.mxu0 %v2081
        %2593 = vmatpush1.bf16.msra.mxu0 %v2080
        %2594 = vmatprep.subr.bf16.mxu0 %v2090
        %2595 = vmatpush1.bf16.msra.mxu0 %v2089
        %2596 = vmatprep.subr.bf16.mxu0 %v2099
        %2597 = vmatpush1.bf16.msra.mxu0 %v2098
        %2598 = vmatprep.subr.bf16.mxu0 %v2108
        %2599 = vmatpush1.bf16.msra.mxu0 %v2107
        %2600 = vmatprep.subr.bf16.mxu0 %v2117
        %2601 = vmatpush1.bf16.msra.mxu0 %v2116
        %2602 = vmatprep.subr.bf16.mxu0 %v2126
        %2603 = vmatpush1.bf16.msra.mxu0 %v2125
        %2604 = vmatprep.subr.bf16.mxu0 %v2135
        %2605 = vmatpush1.bf16.msra.mxu0 %v2134
        %2606 = vmatprep.subr.bf16.mxu0 %v2144
        %2607 = vmatpush1.bf16.msra.mxu0 %v2143
        %2608 = vmatprep.subr.bf16.mxu0 %v2153
        %2609 = vmatpush1.bf16.msra.mxu0 %v2152
        %2610 = vmatprep.subr.bf16.mxu0 %v2162
        %2611 = vmatpush1.bf16.msra.mxu0 %v2161
        %2612 = vmatprep.subr.bf16.mxu0 %v2171
        %2613 = vmatpush1.bf16.msra.mxu0 %v2170
        %2614 = vmatprep.subr.bf16.mxu0 %v2180
        %2615 = vmatpush1.bf16.msra.mxu0 %v2179
        %2616 = vmatprep.subr.bf16.mxu0 %v2189
        %2617 = vmatpush1.bf16.msra.mxu0 %v2188
        %2618 = vmatprep.subr.bf16.mxu0 %v2198
        %2619 = vmatpush1.bf16.msra.mxu0 %v2197
        %2620 = vmatprep.subr.bf16.mxu0 %v2207
        %2621 = vmatpush1.bf16.msra.mxu0 %v2206
        %2622 = vmatprep.subr.bf16.mxu0 %v2216
        %2623 = vmatpush1.bf16.msra.mxu0 %v2215
        %2624 = vmatprep.mubr.bf16.mxu0 %v1115
        %2625 = vmatmul.mubr.bf16.gmra.mrb[0].mxu0 %v1114
        %v2626 = vpop.f32.mrb[0].mxu0
        %v2627 = vadd.f32 %v1372, %v2626
        %v2628 = vpop.f32.mrb[0].mxu0
        %v2629 = vadd.f32 %v1376, %v2628
        %v2630 = vpop.f32.mrb[0].mxu0
        %v2631 = vpop.f32.mrb[0].mxu0
        %2632 = vdwg.mxu0
        %2633 = vmatprep.subr.bf16.mxu0 %v2225
        %2634 = vmatpush1.bf16.msra.mxu0 %v2224
        %2635 = vmatprep.subr.bf16.mxu0 %v2234
        %2636 = vmatpush1.bf16.msra.mxu0 %v2233
        %2637 = vmatprep.subr.bf16.mxu0 %v2243
        %2638 = vmatpush1.bf16.msra.mxu0 %v2242
        %2639 = vmatprep.subr.bf16.mxu0 %v2252
        %2640 = vmatpush1.bf16.msra.mxu0 %v2251
        %2641 = vmatprep.subr.bf16.mxu0 %v2261
        %2642 = vmatpush1.bf16.msra.mxu0 %v2260
        %2643 = vmatprep.subr.bf16.mxu0 %v2270
        %2644 = vmatpush1.bf16.msra.mxu0 %v2269
        %2645 = vmatprep.subr.bf16.mxu0 %v2279
        %2646 = vmatpush1.bf16.msra.mxu0 %v2278
        %2647 = vmatprep.subr.bf16.mxu0 %v2288
        %2648 = vmatpush1.bf16.msra.mxu0 %v2287
        %2649 = vmatprep.subr.bf16.mxu0 0
        %2650 = vmatpush1.bf16.msra.mxu0 0
        %2651 = vmatprep.subr.bf16.mxu0 0
        %2652 = vmatpush1.bf16.msra.mxu0 0
        %2653 = vmatprep.subr.bf16.mxu0 0
        %2654 = vmatpush1.bf16.msra.mxu0 0
        %2655 = vmatprep.subr.bf16.mxu0 0
        %2656 = vmatpush1.bf16.msra.mxu0 0
        %2657 = vmatprep.subr.bf16.mxu0 0
        %2658 = vmatpush1.bf16.msra.mxu0 0
        %2659 = vmatprep.subr.bf16.mxu0 0
        %2660 = vmatpush1.bf16.msra.mxu0 0
        %2661 = vmatprep.subr.bf16.mxu0 0
        %2662 = vmatpush1.bf16.msra.mxu0 0
        %2663 = vmatprep.subr.bf16.mxu0 0
        %2664 = vmatpush1.bf16.msra.mxu0 0
        %2665 = vmatprep.mubr.bf16.mxu0 0
        %2666 = vmatmul.mubr.bf16.gmra.mrb[0].mxu0 %v1116
        %v2667 = vpop.f32.mrb[0].mxu0
        %v2668 = vadd.f32 %v2627, %v2667
        %v2669 = vpop.f32.mrb[0].mxu0
        %v2670 = vadd.f32 %v2629, %v2669
        %v2671 = vpop.f32.mrb[0].mxu0
        %v2672 = vpop.f32.mrb[0].mxu0
        %2673 = vdwg.mxu0
        %2674 = vmatprep.subr.bf16.mxu0 %v2083
        %2675 = vmatpush1.bf16.msra.mxu0 %v2082
        %2676 = vmatprep.subr.bf16.mxu0 %v2092
        %2677 = vmatpush1.bf16.msra.mxu0 %v2091
        %2678 = vmatprep.subr.bf16.mxu0 %v2101
        %2679 = vmatpush1.bf16.msra.mxu0 %v2100
        %2680 = vmatprep.subr.bf16.mxu0 %v2110
        %2681 = vmatpush1.bf16.msra.mxu0 %v2109
        %2682 = vmatprep.subr.bf16.mxu0 %v2119
        %2683 = vmatpush1.bf16.msra.mxu0 %v2118
        %2684 = vmatprep.subr.bf16.mxu0 %v2128
        %2685 = vmatpush1.bf16.msra.mxu0 %v2127
        %2686 = vmatprep.subr.bf16.mxu0 %v2137
        %2687 = vmatpush1.bf16.msra.mxu0 %v2136
        %2688 = vmatprep.subr.bf16.mxu0 %v2146
        %2689 = vmatpush1.bf16.msra.mxu0 %v2145
        %2690 = vmatprep.subr.bf16.mxu0 %v2155
        %2691 = vmatpush1.bf16.msra.mxu0 %v2154
        %2692 = vmatprep.subr.bf16.mxu0 %v2164
        %2693 = vmatpush1.bf16.msra.mxu0 %v2163
        %2694 = vmatprep.subr.bf16.mxu0 %v2173
        %2695 = vmatpush1.bf16.msra.mxu0 %v2172
        %2696 = vmatprep.subr.bf16.mxu0 %v2182
        %2697 = vmatpush1.bf16.msra.mxu0 %v2181
        %2698 = vmatprep.subr.bf16.mxu0 %v2191
        %2699 = vmatpush1.bf16.msra.mxu0 %v2190
        %2700 = vmatprep.subr.bf16.mxu0 %v2200
        %2701 = vmatpush1.bf16.msra.mxu0 %v2199
        %2702 = vmatprep.subr.bf16.mxu0 %v2209
        %2703 = vmatpush1.bf16.msra.mxu0 %v2208
        %2704 = vmatprep.subr.bf16.mxu0 %v2218
        %2705 = vmatpush1.bf16.msra.mxu0 %v2217
        %2706 = vmatprep.mubr.bf16.mxu0 %v1115
        %2707 = vmatmul.mubr.bf16.gmra.mrb[0].mxu0 %v1114
        %v2708 = vpop.f32.mrb[0].mxu0
        %v2709 = vadd.f32 %v1380, %v2708
        %v2710 = vpop.f32.mrb[0].mxu0
        %v2711 = vadd.f32 %v1384, %v2710
        %v2712 = vpop.f32.mrb[0].mxu0
        %v2713 = vpop.f32.mrb[0].mxu0
        %2714 = vdwg.mxu0
        %2715 = vmatprep.subr.bf16.mxu0 %v2227
        %2716 = vmatpush1.bf16.msra.mxu0 %v2226
        %2717 = vmatprep.subr.bf16.mxu0 %v2236
        %2718 = vmatpush1.bf16.msra.mxu0 %v2235
        %2719 = vmatprep.subr.bf16.mxu0 %v2245
        %2720 = vmatpush1.bf16.msra.mxu0 %v2244
        %2721 = vmatprep.subr.bf16.mxu0 %v2254
        %2722 = vmatpush1.bf16.msra.mxu0 %v2253
        %2723 = vmatprep.subr.bf16.mxu0 %v2263
        %2724 = vmatpush1.bf16.msra.mxu0 %v2262
        %2725 = vmatprep.subr.bf16.mxu0 %v2272
        %2726 = vmatpush1.bf16.msra.mxu0 %v2271
        %2727 = vmatprep.subr.bf16.mxu0 %v2281
        %2728 = vmatpush1.bf16.msra.mxu0 %v2280
        %2729 = vmatprep.subr.bf16.mxu0 %v2290
        %2730 = vmatpush1.bf16.msra.mxu0 %v2289
        %2731 = vmatprep.subr.bf16.mxu0 0
        %2732 = vmatpush1.bf16.msra.mxu0 0
        %2733 = vmatprep.subr.bf16.mxu0 0
        %2734 = vmatpush1.bf16.msra.mxu0 0
        %2735 = vmatprep.subr.bf16.mxu0 0
        %2736 = vmatpush1.bf16.msra.mxu0 0
        %2737 = vmatprep.subr.bf16.mxu0 0
        %2738 = vmatpush1.bf16.msra.mxu0 0
        %2739 = vmatprep.subr.bf16.mxu0 0
        %2740 = vmatpush1.bf16.msra.mxu0 0
        %2741 = vmatprep.subr.bf16.mxu0 0
        %2742 = vmatpush1.bf16.msra.mxu0 0
        %2743 = vmatprep.subr.bf16.mxu0 0
        %2744 = vmatpush1.bf16.msra.mxu0 0
        %2745 = vmatprep.subr.bf16.mxu0 0
        %2746 = vmatpush1.bf16.msra.mxu0 0
        %2747 = vmatprep.mubr.bf16.mxu0 0
        %2748 = vmatmul.mubr.bf16.gmra.mrb[0].mxu0 %v1116
        %v2749 = vpop.f32.mrb[0].mxu0
        %v2750 = vadd.f32 %v2709, %v2749
        %v2751 = vpop.f32.mrb[0].mxu0
        %v2752 = vadd.f32 %v2711, %v2751
        %v2753 = vpop.f32.mrb[0].mxu0
        %v2754 = vpop.f32.mrb[0].mxu0
        %2755 = vdwg.mxu0
        %2756 = vmatprep.subr.bf16.mxu0 %v2085
        %2757 = vmatpush1.bf16.msra.mxu0 %v2084
        %2758 = vmatprep.subr.bf16.mxu0 %v2094
        %2759 = vmatpush1.bf16.msra.mxu0 %v2093
        %2760 = vmatprep.subr.bf16.mxu0 %v2103
        %2761 = vmatpush1.bf16.msra.mxu0 %v2102
        %2762 = vmatprep.subr.bf16.mxu0 %v2112
        %2763 = vmatpush1.bf16.msra.mxu0 %v2111
        %2764 = vmatprep.subr.bf16.mxu0 %v2121
        %2765 = vmatpush1.bf16.msra.mxu0 %v2120
        %2766 = vmatprep.subr.bf16.mxu0 %v2130
        %2767 = vmatpush1.bf16.msra.mxu0 %v2129
        %2768 = vmatprep.subr.bf16.mxu0 %v2139
        %2769 = vmatpush1.bf16.msra.mxu0 %v2138
        %2770 = vmatprep.subr.bf16.mxu0 %v2148
        %2771 = vmatpush1.bf16.msra.mxu0 %v2147
        %2772 = vmatprep.subr.bf16.mxu0 %v2157
        %2773 = vmatpush1.bf16.msra.mxu0 %v2156
        %2774 = vmatprep.subr.bf16.mxu0 %v2166
        %2775 = vmatpush1.bf16.msra.mxu0 %v2165
        %2776 = vmatprep.subr.bf16.mxu0 %v2175
        %2777 = vmatpush1.bf16.msra.mxu0 %v2174
        %2778 = vmatprep.subr.bf16.mxu0 %v2184
        %2779 = vmatpush1.bf16.msra.mxu0 %v2183
        %2780 = vmatprep.subr.bf16.mxu0 %v2193
        %2781 = vmatpush1.bf16.msra.mxu0 %v2192
        %2782 = vmatprep.subr.bf16.mxu0 %v2202
        %2783 = vmatpush1.bf16.msra.mxu0 %v2201
        %2784 = vmatprep.subr.bf16.mxu0 %v2211
        %2785 = vmatpush1.bf16.msra.mxu0 %v2210
        %2786 = vmatprep.subr.bf16.mxu0 %v2220
        %2787 = vmatpush1.bf16.msra.mxu0 %v2219
        %2788 = vmatprep.mubr.bf16.mxu0 %v1115
        %2789 = vmatmul.mubr.bf16.gmra.mrb[0].mxu0 %v1114
        %v2790 = vpop.f32.mrb[0].mxu0
        %v2791 = vadd.f32 %v1388, %v2790
        %v2792 = vpop.f32.mrb[0].mxu0
        %v2793 = vadd.f32 %v1392, %v2792
        %v2794 = vpop.f32.mrb[0].mxu0
        %v2795 = vpop.f32.mrb[0].mxu0
        %2796 = vdwg.mxu0
        %2797 = vmatprep.subr.bf16.mxu0 %v2229
        %2798 = vmatpush1.bf16.msra.mxu0 %v2228
        %2799 = vmatprep.subr.bf16.mxu0 %v2238
        %2800 = vmatpush1.bf16.msra.mxu0 %v2237
        %2801 = vmatprep.subr.bf16.mxu0 %v2247
        %2802 = vmatpush1.bf16.msra.mxu0 %v2246
        %2803 = vmatprep.subr.bf16.mxu0 %v2256
        %2804 = vmatpush1.bf16.msra.mxu0 %v2255
        %2805 = vmatprep.subr.bf16.mxu0 %v2265
        %2806 = vmatpush1.bf16.msra.mxu0 %v2264
        %2807 = vmatprep.subr.bf16.mxu0 %v2274
        %2808 = vmatpush1.bf16.msra.mxu0 %v2273
        %2809 = vmatprep.subr.bf16.mxu0 %v2283
        %2810 = vmatpush1.bf16.msra.mxu0 %v2282
        %2811 = vmatprep.subr.bf16.mxu0 %v2292
        %2812 = vmatpush1.bf16.msra.mxu0 %v2291
        %2813 = vmatprep.subr.bf16.mxu0 0
        %2814 = vmatpush1.bf16.msra.mxu0 0
        %2815 = vmatprep.subr.bf16.mxu0 0
        %2816 = vmatpush1.bf16.msra.mxu0 0
        %2817 = vmatprep.subr.bf16.mxu0 0
        %2818 = vmatpush1.bf16.msra.mxu0 0
        %2819 = vmatprep.subr.bf16.mxu0 0
        %2820 = vmatpush1.bf16.msra.mxu0 0
        %2821 = vmatprep.subr.bf16.mxu0 0
        %2822 = vmatpush1.bf16.msra.mxu0 0
        %2823 = vmatprep.subr.bf16.mxu0 0
        %2824 = vmatpush1.bf16.msra.mxu0 0
        %2825 = vmatprep.subr.bf16.mxu0 0
        %2826 = vmatpush1.bf16.msra.mxu0 0
        %2827 = vmatprep.subr.bf16.mxu0 0
        %2828 = vmatpush1.bf16.msra.mxu0 0
        %2829 = vmatprep.mubr.bf16.mxu0 0
        %2830 = vmatmul.mubr.bf16.gmra.mrb[0].mxu0 %v1116
        %v2831 = vpop.f32.mrb[0].mxu0
        %v2832 = vadd.f32 %v2791, %v2831
        %v2833 = vpop.f32.mrb[0].mxu0
        %v2834 = vadd.f32 %v2793, %v2833
        %v2835 = vpop.f32.mrb[0].mxu0
        %v2836 = vpop.f32.mrb[0].mxu0
        %2837 = vdwg.mxu0
        %2838 = vmatprep.subr.bf16.mxu0 0
        %2839 = vmatpush1.bf16.msra.mxu0 %v2086
        %2840 = vmatprep.subr.bf16.mxu0 0
        %2841 = vmatpush1.bf16.msra.mxu0 %v2095
        %2842 = vmatprep.subr.bf16.mxu0 0
        %2843 = vmatpush1.bf16.msra.mxu0 %v2104
        %2844 = vmatprep.subr.bf16.mxu0 0
        %2845 = vmatpush1.bf16.msra.mxu0 %v2113
        %2846 = vmatprep.subr.bf16.mxu0 0
        %2847 = vmatpush1.bf16.msra.mxu0 %v2122
        %2848 = vmatprep.subr.bf16.mxu0 0
        %2849 = vmatpush1.bf16.msra.mxu0 %v2131
        %2850 = vmatprep.subr.bf16.mxu0 0
        %2851 = vmatpush1.bf16.msra.mxu0 %v2140
        %2852 = vmatprep.subr.bf16.mxu0 0
        %2853 = vmatpush1.bf16.msra.mxu0 %v2149
        %2854 = vmatprep.subr.bf16.mxu0 0
        %2855 = vmatpush1.bf16.msra.mxu0 %v2158
        %2856 = vmatprep.subr.bf16.mxu0 0
        %2857 = vmatpush1.bf16.msra.mxu0 %v2167
        %2858 = vmatprep.subr.bf16.mxu0 0
        %2859 = vmatpush1.bf16.msra.mxu0 %v2176
        %2860 = vmatprep.subr.bf16.mxu0 0
        %2861 = vmatpush1.bf16.msra.mxu0 %v2185
        %2862 = vmatprep.subr.bf16.mxu0 0
        %2863 = vmatpush1.bf16.msra.mxu0 %v2194
        %2864 = vmatprep.subr.bf16.mxu0 0
        %2865 = vmatpush1.bf16.msra.mxu0 %v2203
        %2866 = vmatprep.subr.bf16.mxu0 0
        %2867 = vmatpush1.bf16.msra.mxu0 %v2212
        %2868 = vmatprep.subr.bf16.mxu0 0
        %2869 = vmatpush1.bf16.msra.mxu0 %v2221
        %2870 = vmatprep.mubr.bf16.mxu0 %v1115
        %2871 = vmatmul.mubr.bf16.gmra.mrb[0].mxu0 %v1114
        %v2872 = vpop.f32.mrb[0].mxu0
        %v2873 = vadd.f32 %v1396, %v2872
        %v2874 = vpop.f32.mrb[0].mxu0
        %v2875 = vpop.f32.mrb[0].mxu0
        %v2876 = vpop.f32.mrb[0].mxu0
        %2877 = vdwg.mxu0
        %2878 = vmatprep.subr.bf16.mxu0 0
        %2879 = vmatpush1.bf16.msra.mxu0 %v2230
        %2880 = vmatprep.subr.bf16.mxu0 0
        %2881 = vmatpush1.bf16.msra.mxu0 %v2239
        %2882 = vmatprep.subr.bf16.mxu0 0
        %2883 = vmatpush1.bf16.msra.mxu0 %v2248
        %2884 = vmatprep.subr.bf16.mxu0 0
        %2885 = vmatpush1.bf16.msra.mxu0 %v2257
        %2886 = vmatprep.subr.bf16.mxu0 0
        %2887 = vmatpush1.bf16.msra.mxu0 %v2266
        %2888 = vmatprep.subr.bf16.mxu0 0
        %2889 = vmatpush1.bf16.msra.mxu0 %v2275
        %2890 = vmatprep.subr.bf16.mxu0 0
        %2891 = vmatpush1.bf16.msra.mxu0 %v2284
        %2892 = vmatprep.subr.bf16.mxu0 0
        %2893 = vmatpush1.bf16.msra.mxu0 %v2293
        %2894 = vmatprep.subr.bf16.mxu0 0
        %2895 = vmatpush1.bf16.msra.mxu0 0
        %2896 = vmatprep.subr.bf16.mxu0 0
        %2897 = vmatpush1.bf16.msra.mxu0 0
        %2898 = vmatprep.subr.bf16.mxu0 0
        %2899 = vmatpush1.bf16.msra.mxu0 0
        %2900 = vmatprep.subr.bf16.mxu0 0
        %2901 = vmatpush1.bf16.msra.mxu0 0
        %2902 = vmatprep.subr.bf16.mxu0 0
        %2903 = vmatpush1.bf16.msra.mxu0 0
        %2904 = vmatprep.subr.bf16.mxu0 0
        %2905 = vmatpush1.bf16.msra.mxu0 0
        %2906 = vmatprep.subr.bf16.mxu0 0
        %2907 = vmatpush1.bf16.msra.mxu0 0
        %2908 = vmatprep.subr.bf16.mxu0 0
        %2909 = vmatpush1.bf16.msra.mxu0 0
        %2910 = vmatprep.mubr.bf16.mxu0 0
        %2911 = vmatmul.mubr.bf16.gmra.mrb[0].mxu0 %v1116
        %v2912 = vpop.f32.mrb[0].mxu0
        %v2913 = vadd.f32 %v2873, %v2912
        %v2914 = vpop.f32.mrb[0].mxu0
        %v2915 = vpop.f32.mrb[0].mxu0
        %v2916 = vpop.f32.mrb[0].mxu0
        %2917 = vdwg.mxu0
        %v2918 = vpack.c.bf16 %v2586, %v2586
        %v2919 = vpack.c.bf16 %v2670, %v2670
        %v2920 = vpack.c.bf16 %v2832, %v2832
        %vm2921 = vcmask 523264
        %v2923 = vsel %vm2921, %v2918, 0
        %v2926 = vsel %vm2921, %v2919, 0
        %2928 = vmatprep.subr.bf16.mxu0 0
        %2929 = vmatpush1.bf16.xpose.msra.mxu0 %v2926
        %2930 = vmatprep.subr.bf16.mxu0 0
        %2931 = vmatpush1.bf16.xpose.msra.mxu0 0
        %2932 = vmatprep.subr.bf16.mxu0 0
        %2933 = vmatpush1.bf16.xpose.msra.mxu0 0
        %2934 = vmatprep.subr.bf16.mxu0 0
        %2935 = vmatpush1.bf16.xpose.msra.mxu0 0
        %2936 = vmatprep.subr.bf16.mxu0 0
        %2937 = vmatpush1.bf16.xpose.msra.mxu0 0
        %2938 = vmatprep.subr.bf16.mxu0 0
        %2939 = vmatpush1.bf16.xpose.msra.mxu0 0
        %2940 = vmatprep.subr.bf16.mxu0 0
        %2941 = vmatpush1.bf16.xpose.msra.mxu0 0
        %2942 = vmatprep.subr.bf16.mxu0 0
        %2943 = vmatpush1.bf16.xpose.msra.mxu0 0
        %2944 = vmatprep.subr.bf16.mxu0 0
        %2945 = vmatpush1.bf16.xpose.msra.mxu0 0
        %2946 = vmatprep.subr.bf16.mxu0 0
        %2947 = vmatpush1.bf16.xpose.msra.mxu0 0
        %2948 = vmatprep.subr.bf16.mxu0 0
        %2949 = vmatpush1.bf16.xpose.msra.mxu0 0
        %2950 = vmatprep.subr.bf16.mxu0 0
        %2951 = vmatpush1.bf16.xpose.msra.mxu0 0
        %2952 = vmatprep.subr.bf16.mxu0 0
        %2953 = vmatpush1.bf16.xpose.msra.mxu0 0
        %2954 = vmatprep.subr.bf16.mxu0 0
        %2955 = vmatpush1.bf16.xpose.msra.mxu0 0
        %2956 = vmatprep.subr.bf16.mxu0 0
        %2957 = vmatpush1.bf16.xpose.msra.mxu0 0
        %2958 = vmatprep.subr.bf16.mxu0 0
        %2959 = vmatpush1.bf16.xpose.msra.mxu0 0
        %2960 = vmatprep.mubr.bf16.mxu0 0
        %2961 = vmatmul.mubr.bf16.gmra.mrb[0].mxu0 %v2923
        %v2962 = vpop.f32.mrb[0].mxu0
        %v2963 = vadd.f32 0.0, %v2962
        %v2964 = vpop.f32.mrb[0].mxu0
        %v2965 = vpop.f32.mrb[0].mxu0
        %v2966 = vpop.f32.mrb[0].mxu0
        %2967 = vdwg.mxu0
        %v2968 = vmul.f32 %v2963, 0.125
        %vm2969 = vcmask 36864
        %v2970 = vsel %vm2969, %v2968, -inf
        %2971 = vmax.xlane.f32.xlu0 %v2970
        %v2972 = vpop.xlane.xlu0 %2971
        %v2973 = vsub.f32 %v2968, %v2972
        %v2974 = vmul.f32 %v2973, 1.442695
        %v2975 = vpow.pop %v2974
        %v2976 = vsel %vm2969, %v2975, 0.0
        %2977 = vadd.xlane.f32.xlu0 %v2976
        %v2978 = vpop.xlane.xlu0 %2977
        %v2979 = vrcp.pop %v2978
        %v2980 = vmul.f32 %v2975, %v2979
        %v2981 = vpack.c.bf16 %v2980, %v2980
        %vm2982 = vcmask 39936
        %v2984 = vsel %vm2982, %v2981, 0
        %vm2986 = vcmask 1041408
        %vm2987 = vcmask 1042432
        %v2988 = vsel %vm2986, 4294967295, 65535
        %v2989 = vsel %vm2987, %v2988, 0
        %v2991 = vand.u32 %v2920, %v2989
        %2993 = vmatprep.subr.bf16.mxu0 0
        %2994 = vmatpush1.bf16.msra.mxu0 %v2991
        %2995 = vmatprep.subr.bf16.mxu0 0
        %2996 = vmatpush1.bf16.msra.mxu0 0
        %2997 = vmatprep.subr.bf16.mxu0 0
        %2998 = vmatpush1.bf16.msra.mxu0 0
        %2999 = vmatprep.subr.bf16.mxu0 0
        %3000 = vmatpush1.bf16.msra.mxu0 0
        %3001 = vmatprep.subr.bf16.mxu0 0
        %3002 = vmatpush1.bf16.msra.mxu0 0
        %3003 = vmatprep.subr.bf16.mxu0 0
        %3004 = vmatpush1.bf16.msra.mxu0 0
        %3005 = vmatprep.subr.bf16.mxu0 0
        %3006 = vmatpush1.bf16.msra.mxu0 0
        %3007 = vmatprep.subr.bf16.mxu0 0
        %3008 = vmatpush1.bf16.msra.mxu0 0
        %3009 = vmatprep.subr.bf16.mxu0 0
        %3010 = vmatpush1.bf16.msra.mxu0 0
        %3011 = vmatprep.subr.bf16.mxu0 0
        %3012 = vmatpush1.bf16.msra.mxu0 0
        %3013 = vmatprep.subr.bf16.mxu0 0
        %3014 = vmatpush1.bf16.msra.mxu0 0
        %3015 = vmatprep.subr.bf16.mxu0 0
        %3016 = vmatpush1.bf16.msra.mxu0 0
        %3017 = vmatprep.subr.bf16.mxu0 0
        %3018 = vmatpush1.bf16.msra.mxu0 0
        %3019 = vmatprep.subr.bf16.mxu0 0
        %3020 = vmatpush1.bf16.msra.mxu0 0
        %3021 = vmatprep.subr.bf16.mxu0 0
        %3022 = vmatpush1.bf16.msra.mxu0 0
        %3023 = vmatprep.subr.bf16.mxu0 0
        %3024 = vmatpush1.bf16.msra.mxu0 0
        %3025 = vmatprep.mubr.bf16.mxu0 0
        %3026 = vmatmul.mubr.bf16.gmra.mrb[0].mxu0 %v2984
        %v3027 = vpop.f32.mrb[0].mxu0
        %v3028 = vadd.f32 0.0, %v3027
        %v3029 = vpop.f32.mrb[0].mxu0
        %v3030 = vpop.f32.mrb[0].mxu0
        %v3031 = vpop.f32.mrb[0].mxu0
        %3032 = vdwg.mxu0
        %3034 = vrot.lane.b32.xlu0 %v2918, 64
        %v3035 = vpop.permute.xlu0 %3034
        %3037 = vrot.lane.b32.xlu0 %v2919, 64
        %v3038 = vpop.permute.xlu0 %3037
        %v3040 = vsel %vm2921, %v3035, 0
        %v3043 = vsel %vm2921, %v3038, 0
        %3045 = vmatprep.subr.bf16.mxu0 0
        %3046 = vmatpush1.bf16.xpose.msra.mxu0 %v3043
        %3047 = vmatprep.subr.bf16.mxu0 0
        %3048 = vmatpush1.bf16.xpose.msra.mxu0 0
        %3049 = vmatprep.subr.bf16.mxu0 0
        %3050 = vmatpush1.bf16.xpose.msra.mxu0 0
        %3051 = vmatprep.subr.bf16.mxu0 0
        %3052 = vmatpush1.bf16.xpose.msra.mxu0 0
        %3053 = vmatprep.subr.bf16.mxu0 0
        %3054 = vmatpush1.bf16.xpose.msra.mxu0 0
        %3055 = vmatprep.subr.bf16.mxu0 0
        %3056 = vmatpush1.bf16.xpose.msra.mxu0 0
        %3057 = vmatprep.subr.bf16.mxu0 0
        %3058 = vmatpush1.bf16.xpose.msra.mxu0 0
        %3059 = vmatprep.subr.bf16.mxu0 0
        %3060 = vmatpush1.bf16.xpose.msra.mxu0 0
        %3061 = vmatprep.subr.bf16.mxu0 0
        %3062 = vmatpush1.bf16.xpose.msra.mxu0 0
        %3063 = vmatprep.subr.bf16.mxu0 0
        %3064 = vmatpush1.bf16.xpose.msra.mxu0 0
        %3065 = vmatprep.subr.bf16.mxu0 0
        %3066 = vmatpush1.bf16.xpose.msra.mxu0 0
        %3067 = vmatprep.subr.bf16.mxu0 0
        %3068 = vmatpush1.bf16.xpose.msra.mxu0 0
        %3069 = vmatprep.subr.bf16.mxu0 0
        %3070 = vmatpush1.bf16.xpose.msra.mxu0 0
        %3071 = vmatprep.subr.bf16.mxu0 0
        %3072 = vmatpush1.bf16.xpose.msra.mxu0 0
        %3073 = vmatprep.subr.bf16.mxu0 0
        %3074 = vmatpush1.bf16.xpose.msra.mxu0 0
        %3075 = vmatprep.subr.bf16.mxu0 0
        %3076 = vmatpush1.bf16.xpose.msra.mxu0 0
        %3077 = vmatprep.mubr.bf16.mxu0 0
        %3078 = vmatmul.mubr.bf16.gmra.mrb[0].mxu0 %v3040
        %v3079 = vpop.f32.mrb[0].mxu0
        %v3080 = vadd.f32 0.0, %v3079
        %v3081 = vpop.f32.mrb[0].mxu0
        %v3082 = vpop.f32.mrb[0].mxu0
        %v3083 = vpop.f32.mrb[0].mxu0
        %3084 = vdwg.mxu0
        %v3085 = vmul.f32 %v3080, 0.125
        %v3086 = vsel %vm2969, %v3085, -inf
        %3087 = vmax.xlane.f32.xlu0 %v3086
        %v3088 = vpop.xlane.xlu0 %3087
        %v3089 = vsub.f32 %v3085, %v3088
        %v3090 = vmul.f32 %v3089, 1.442695
        %v3091 = vpow.pop %v3090
        %v3092 = vsel %vm2969, %v3091, 0.0
        %3093 = vadd.xlane.f32.xlu0 %v3092
        %v3094 = vpop.xlane.xlu0 %3093
        %v3095 = vrcp.pop %v3094
        %v3096 = vmul.f32 %v3091, %v3095
        %v3097 = vpack.c.bf16 %v3096, %v3096
        %3099 = vrot.lane.b32.xlu0 %v2920, 64
        %v3100 = vpop.permute.xlu0 %3099
        %v3102 = vsel %vm2982, %v3097, 0
        %v3105 = vand.u32 %v3100, %v2989
        %3107 = vmatprep.subr.bf16.mxu0 0
        %3108 = vmatpush1.bf16.msra.mxu0 %v3105
        %3109 = vmatprep.subr.bf16.mxu0 0
        %3110 = vmatpush1.bf16.msra.mxu0 0
        %3111 = vmatprep.subr.bf16.mxu0 0
        %3112 = vmatpush1.bf16.msra.mxu0 0
        %3113 = vmatprep.subr.bf16.mxu0 0
        %3114 = vmatpush1.bf16.msra.mxu0 0
        %3115 = vmatprep.subr.bf16.mxu0 0
        %3116 = vmatpush1.bf16.msra.mxu0 0
        %3117 = vmatprep.subr.bf16.mxu0 0
        %3118 = vmatpush1.bf16.msra.mxu0 0
        %3119 = vmatprep.subr.bf16.mxu0 0
        %3120 = vmatpush1.bf16.msra.mxu0 0
        %3121 = vmatprep.subr.bf16.mxu0 0
        %3122 = vmatpush1.bf16.msra.mxu0 0
        %3123 = vmatprep.subr.bf16.mxu0 0
        %3124 = vmatpush1.bf16.msra.mxu0 0
        %3125 = vmatprep.subr.bf16.mxu0 0
        %3126 = vmatpush1.bf16.msra.mxu0 0
        %3127 = vmatprep.subr.bf16.mxu0 0
        %3128 = vmatpush1.bf16.msra.mxu0 0
        %3129 = vmatprep.subr.bf16.mxu0 0
        %3130 = vmatpush1.bf16.msra.mxu0 0
        %3131 = vmatprep.subr.bf16.mxu0 0
        %3132 = vmatpush1.bf16.msra.mxu0 0
        %3133 = vmatprep.subr.bf16.mxu0 0
        %3134 = vmatpush1.bf16.msra.mxu0 0
        %3135 = vmatprep.subr.bf16.mxu0 0
        %3136 = vmatpush1.bf16.msra.mxu0 0
        %3137 = vmatprep.subr.bf16.mxu0 0
        %3138 = vmatpush1.bf16.msra.mxu0 0
        %3139 = vmatprep.mubr.bf16.mxu0 0
        %3140 = vmatmul.mubr.bf16.gmra.mrb[0].mxu0 %v3102
        %v3141 = vpop.f32.mrb[0].mxu0
        %v3142 = vadd.f32 0.0, %v3141
        %v3143 = vpop.f32.mrb[0].mxu0
        %v3144 = vpop.f32.mrb[0].mxu0
        %v3145 = vpop.f32.mrb[0].mxu0
        %3146 = vdwg.mxu0
        %v3147 = vpack.c.bf16 %v2588, %v2588
        %v3148 = vpack.c.bf16 %v2750, %v2750
        %v3149 = vpack.c.bf16 %v2834, %v2834
        %v3151 = vsel %vm2921, %v3147, 0
        %v3154 = vsel %vm2921, %v3148, 0
        %3156 = vmatprep.subr.bf16.mxu0 0
        %3157 = vmatpush1.bf16.xpose.msra.mxu0 %v3154
        %3158 = vmatprep.subr.bf16.mxu0 0
        %3159 = vmatpush1.bf16.xpose.msra.mxu0 0
        %3160 = vmatprep.subr.bf16.mxu0 0
        %3161 = vmatpush1.bf16.xpose.msra.mxu0 0
        %3162 = vmatprep.subr.bf16.mxu0 0
        %3163 = vmatpush1.bf16.xpose.msra.mxu0 0
        %3164 = vmatprep.subr.bf16.mxu0 0
        %3165 = vmatpush1.bf16.xpose.msra.mxu0 0
        %3166 = vmatprep.subr.bf16.mxu0 0
        %3167 = vmatpush1.bf16.xpose.msra.mxu0 0
        %3168 = vmatprep.subr.bf16.mxu0 0
        %3169 = vmatpush1.bf16.xpose.msra.mxu0 0
        %3170 = vmatprep.subr.bf16.mxu0 0
        %3171 = vmatpush1.bf16.xpose.msra.mxu0 0
        %3172 = vmatprep.subr.bf16.mxu0 0
        %3173 = vmatpush1.bf16.xpose.msra.mxu0 0
        %3174 = vmatprep.subr.bf16.mxu0 0
        %3175 = vmatpush1.bf16.xpose.msra.mxu0 0
        %3176 = vmatprep.subr.bf16.mxu0 0
        %3177 = vmatpush1.bf16.xpose.msra.mxu0 0
        %3178 = vmatprep.subr.bf16.mxu0 0
        %3179 = vmatpush1.bf16.xpose.msra.mxu0 0
        %3180 = vmatprep.subr.bf16.mxu0 0
        %3181 = vmatpush1.bf16.xpose.msra.mxu0 0
        %3182 = vmatprep.subr.bf16.mxu0 0
        %3183 = vmatpush1.bf16.xpose.msra.mxu0 0
        %3184 = vmatprep.subr.bf16.mxu0 0
        %3185 = vmatpush1.bf16.xpose.msra.mxu0 0
        %3186 = vmatprep.subr.bf16.mxu0 0
        %3187 = vmatpush1.bf16.xpose.msra.mxu0 0
        %3188 = vmatprep.mubr.bf16.mxu0 0
        %3189 = vmatmul.mubr.bf16.gmra.mrb[0].mxu0 %v3151
        %v3190 = vpop.f32.mrb[0].mxu0
        %v3191 = vadd.f32 0.0, %v3190
        %v3192 = vpop.f32.mrb[0].mxu0
        %v3193 = vpop.f32.mrb[0].mxu0
        %v3194 = vpop.f32.mrb[0].mxu0
        %3195 = vdwg.mxu0
        %v3196 = vmul.f32 %v3191, 0.125
        %v3197 = vsel %vm2969, %v3196, -inf
        %3198 = vmax.xlane.f32.xlu0 %v3197
        %v3199 = vpop.xlane.xlu0 %3198
        %v3200 = vsub.f32 %v3196, %v3199
        %v3201 = vmul.f32 %v3200, 1.442695
        %v3202 = vpow.pop %v3201
        %v3203 = vsel %vm2969, %v3202, 0.0
        %3204 = vadd.xlane.f32.xlu0 %v3203
        %v3205 = vpop.xlane.xlu0 %3204
        %v3206 = vrcp.pop %v3205
        %v3207 = vmul.f32 %v3202, %v3206
        %v3208 = vpack.c.bf16 %v3207, %v3207
        %v3210 = vsel %vm2982, %v3208, 0
        %v3213 = vand.u32 %v3149, %v2989
        %3215 = vmatprep.subr.bf16.mxu0 0
        %3216 = vmatpush1.bf16.msra.mxu0 %v3213
        %3217 = vmatprep.subr.bf16.mxu0 0
        %3218 = vmatpush1.bf16.msra.mxu0 0
        %3219 = vmatprep.subr.bf16.mxu0 0
        %3220 = vmatpush1.bf16.msra.mxu0 0
        %3221 = vmatprep.subr.bf16.mxu0 0
        %3222 = vmatpush1.bf16.msra.mxu0 0
        %3223 = vmatprep.subr.bf16.mxu0 0
        %3224 = vmatpush1.bf16.msra.mxu0 0
        %3225 = vmatprep.subr.bf16.mxu0 0
        %3226 = vmatpush1.bf16.msra.mxu0 0
        %3227 = vmatprep.subr.bf16.mxu0 0
        %3228 = vmatpush1.bf16.msra.mxu0 0
        %3229 = vmatprep.subr.bf16.mxu0 0
        %3230 = vmatpush1.bf16.msra.mxu0 0
        %3231 = vmatprep.subr.bf16.mxu0 0
        %3232 = vmatpush1.bf16.msra.mxu0 0
        %3233 = vmatprep.subr.bf16.mxu0 0
        %3234 = vmatpush1.bf16.msra.mxu0 0
        %3235 = vmatprep.subr.bf16.mxu0 0
        %3236 = vmatpush1.bf16.msra.mxu0 0
        %3237 = vmatprep.subr.bf16.mxu0 0
        %3238 = vmatpush1.bf16.msra.mxu0 0
        %3239 = vmatprep.subr.bf16.mxu0 0
        %3240 = vmatpush1.bf16.msra.mxu0 0
        %3241 = vmatprep.subr.bf16.mxu0 0
        %3242 = vmatpush1.bf16.msra.mxu0 0
        %3243 = vmatprep.subr.bf16.mxu0 0
        %3244 = vmatpush1.bf16.msra.mxu0 0
        %3245 = vmatprep.subr.bf16.mxu0 0
        %3246 = vmatpush1.bf16.msra.mxu0 0
        %3247 = vmatprep.mubr.bf16.mxu0 0
        %3248 = vmatmul.mubr.bf16.gmra.mrb[0].mxu0 %v3210
        %v3249 = vpop.f32.mrb[0].mxu0
        %v3250 = vadd.f32 0.0, %v3249
        %v3251 = vpop.f32.mrb[0].mxu0
        %v3252 = vpop.f32.mrb[0].mxu0
        %v3253 = vpop.f32.mrb[0].mxu0
        %3254 = vdwg.mxu0
        %3256 = vrot.lane.b32.xlu0 %v3147, 64
        %v3257 = vpop.permute.xlu0 %3256
        %3259 = vrot.lane.b32.xlu0 %v3148, 64
        %v3260 = vpop.permute.xlu0 %3259
        %v3262 = vsel %vm2921, %v3257, 0
        %v3265 = vsel %vm2921, %v3260, 0
        %3267 = vmatprep.subr.bf16.mxu0 0
        %3268 = vmatpush1.bf16.xpose.msra.mxu0 %v3265
        %3269 = vmatprep.subr.bf16.mxu0 0
        %3270 = vmatpush1.bf16.xpose.msra.mxu0 0
        %3271 = vmatprep.subr.bf16.mxu0 0
        %3272 = vmatpush1.bf16.xpose.msra.mxu0 0
        %3273 = vmatprep.subr.bf16.mxu0 0
        %3274 = vmatpush1.bf16.xpose.msra.mxu0 0
        %3275 = vmatprep.subr.bf16.mxu0 0
        %3276 = vmatpush1.bf16.xpose.msra.mxu0 0
        %3277 = vmatprep.subr.bf16.mxu0 0
        %3278 = vmatpush1.bf16.xpose.msra.mxu0 0
        %3279 = vmatprep.subr.bf16.mxu0 0
        %3280 = vmatpush1.bf16.xpose.msra.mxu0 0
        %3281 = vmatprep.subr.bf16.mxu0 0
        %3282 = vmatpush1.bf16.xpose.msra.mxu0 0
        %3283 = vmatprep.subr.bf16.mxu0 0
        %3284 = vmatpush1.bf16.xpose.msra.mxu0 0
        %3285 = vmatprep.subr.bf16.mxu0 0
        %3286 = vmatpush1.bf16.xpose.msra.mxu0 0
        %3287 = vmatprep.subr.bf16.mxu0 0
        %3288 = vmatpush1.bf16.xpose.msra.mxu0 0
        %3289 = vmatprep.subr.bf16.mxu0 0
        %3290 = vmatpush1.bf16.xpose.msra.mxu0 0
        %3291 = vmatprep.subr.bf16.mxu0 0
        %3292 = vmatpush1.bf16.xpose.msra.mxu0 0
        %3293 = vmatprep.subr.bf16.mxu0 0
        %3294 = vmatpush1.bf16.xpose.msra.mxu0 0
        %3295 = vmatprep.subr.bf16.mxu0 0
        %3296 = vmatpush1.bf16.xpose.msra.mxu0 0
        %3297 = vmatprep.subr.bf16.mxu0 0
        %3298 = vmatpush1.bf16.xpose.msra.mxu0 0
        %3299 = vmatprep.mubr.bf16.mxu0 0
        %3300 = vmatmul.mubr.bf16.gmra.mrb[0].mxu0 %v3262
        %v3301 = vpop.f32.mrb[0].mxu0
        %v3302 = vadd.f32 0.0, %v3301
        %v3303 = vpop.f32.mrb[0].mxu0
        %v3304 = vpop.f32.mrb[0].mxu0
        %v3305 = vpop.f32.mrb[0].mxu0
        %3306 = vdwg.mxu0
        %v3307 = vmul.f32 %v3302, 0.125
        %v3308 = vsel %vm2969, %v3307, -inf
        %3309 = vmax.xlane.f32.xlu0 %v3308
        %v3310 = vpop.xlane.xlu0 %3309
        %v3311 = vsub.f32 %v3307, %v3310
        %v3312 = vmul.f32 %v3311, 1.442695
        %v3313 = vpow.pop %v3312
        %v3314 = vsel %vm2969, %v3313, 0.0
        %3315 = vadd.xlane.f32.xlu0 %v3314
        %v3316 = vpop.xlane.xlu0 %3315
        %v3317 = vrcp.pop %v3316
        %v3318 = vmul.f32 %v3313, %v3317
        %v3319 = vpack.c.bf16 %v3318, %v3318
        %3321 = vrot.lane.b32.xlu0 %v3149, 64
        %v3322 = vpop.permute.xlu0 %3321
        %v3324 = vsel %vm2982, %v3319, 0
        %v3327 = vand.u32 %v3322, %v2989
        %3329 = vmatprep.subr.bf16.mxu0 0
        %3330 = vmatpush1.bf16.msra.mxu0 %v3327
        %3331 = vmatprep.subr.bf16.mxu0 0
        %3332 = vmatpush1.bf16.msra.mxu0 0
        %3333 = vmatprep.subr.bf16.mxu0 0
        %3334 = vmatpush1.bf16.msra.mxu0 0
        %3335 = vmatprep.subr.bf16.mxu0 0
        %3336 = vmatpush1.bf16.msra.mxu0 0
        %3337 = vmatprep.subr.bf16.mxu0 0
        %3338 = vmatpush1.bf16.msra.mxu0 0
        %3339 = vmatprep.subr.bf16.mxu0 0
        %3340 = vmatpush1.bf16.msra.mxu0 0
        %3341 = vmatprep.subr.bf16.mxu0 0
        %3342 = vmatpush1.bf16.msra.mxu0 0
        %3343 = vmatprep.subr.bf16.mxu0 0
        %3344 = vmatpush1.bf16.msra.mxu0 0
        %3345 = vmatprep.subr.bf16.mxu0 0
        %3346 = vmatpush1.bf16.msra.mxu0 0
        %3347 = vmatprep.subr.bf16.mxu0 0
        %3348 = vmatpush1.bf16.msra.mxu0 0
        %3349 = vmatprep.subr.bf16.mxu0 0
        %3350 = vmatpush1.bf16.msra.mxu0 0
        %3351 = vmatprep.subr.bf16.mxu0 0
        %3352 = vmatpush1.bf16.msra.mxu0 0
        %3353 = vmatprep.subr.bf16.mxu0 0
        %3354 = vmatpush1.bf16.msra.mxu0 0
        %3355 = vmatprep.subr.bf16.mxu0 0
        %3356 = vmatpush1.bf16.msra.mxu0 0
        %3357 = vmatprep.subr.bf16.mxu0 0
        %3358 = vmatpush1.bf16.msra.mxu0 0
        %3359 = vmatprep.subr.bf16.mxu0 0
        %3360 = vmatpush1.bf16.msra.mxu0 0
        %3361 = vmatprep.mubr.bf16.mxu0 0
        %3362 = vmatmul.mubr.bf16.gmra.mrb[0].mxu0 %v3324
        %v3363 = vpop.f32.mrb[0].mxu0
        %v3364 = vadd.f32 0.0, %v3363
        %v3365 = vpop.f32.mrb[0].mxu0
        %v3366 = vpop.f32.mrb[0].mxu0
        %v3367 = vpop.f32.mrb[0].mxu0
        %3368 = vdwg.mxu0
        %v3369 = vpack.c.bf16 %v2668, %v2668
        %v3370 = vpack.c.bf16 %v2752, %v2752
        %v3371 = vpack.c.bf16 %v2913, %v2913
        %v3373 = vsel %vm2921, %v3369, 0
        %v3376 = vsel %vm2921, %v3370, 0
        %3378 = vmatprep.subr.bf16.mxu0 0
        %3379 = vmatpush1.bf16.xpose.msra.mxu0 %v3376
        %3380 = vmatprep.subr.bf16.mxu0 0
        %3381 = vmatpush1.bf16.xpose.msra.mxu0 0
        %3382 = vmatprep.subr.bf16.mxu0 0
        %3383 = vmatpush1.bf16.xpose.msra.mxu0 0
        %3384 = vmatprep.subr.bf16.mxu0 0
        %3385 = vmatpush1.bf16.xpose.msra.mxu0 0
        %3386 = vmatprep.subr.bf16.mxu0 0
        %3387 = vmatpush1.bf16.xpose.msra.mxu0 0
        %3388 = vmatprep.subr.bf16.mxu0 0
        %3389 = vmatpush1.bf16.xpose.msra.mxu0 0
        %3390 = vmatprep.subr.bf16.mxu0 0
        %3391 = vmatpush1.bf16.xpose.msra.mxu0 0
        %3392 = vmatprep.subr.bf16.mxu0 0
        %3393 = vmatpush1.bf16.xpose.msra.mxu0 0
        %3394 = vmatprep.subr.bf16.mxu0 0
        %3395 = vmatpush1.bf16.xpose.msra.mxu0 0
        %3396 = vmatprep.subr.bf16.mxu0 0
        %3397 = vmatpush1.bf16.xpose.msra.mxu0 0
        %3398 = vmatprep.subr.bf16.mxu0 0
        %3399 = vmatpush1.bf16.xpose.msra.mxu0 0
        %3400 = vmatprep.subr.bf16.mxu0 0
        %3401 = vmatpush1.bf16.xpose.msra.mxu0 0
        %3402 = vmatprep.subr.bf16.mxu0 0
        %3403 = vmatpush1.bf16.xpose.msra.mxu0 0
        %3404 = vmatprep.subr.bf16.mxu0 0
        %3405 = vmatpush1.bf16.xpose.msra.mxu0 0
        %3406 = vmatprep.subr.bf16.mxu0 0
        %3407 = vmatpush1.bf16.xpose.msra.mxu0 0
        %3408 = vmatprep.subr.bf16.mxu0 0
        %3409 = vmatpush1.bf16.xpose.msra.mxu0 0
        %3410 = vmatprep.mubr.bf16.mxu0 0
        %3411 = vmatmul.mubr.bf16.gmra.mrb[0].mxu0 %v3373
        %v3412 = vpop.f32.mrb[0].mxu0
        %v3413 = vadd.f32 0.0, %v3412
        %v3414 = vpop.f32.mrb[0].mxu0
        %v3415 = vpop.f32.mrb[0].mxu0
        %v3416 = vpop.f32.mrb[0].mxu0
        %3417 = vdwg.mxu0
        %v3418 = vmul.f32 %v3413, 0.125
        %v3419 = vsel %vm2969, %v3418, -inf
        %3420 = vmax.xlane.f32.xlu0 %v3419
        %v3421 = vpop.xlane.xlu0 %3420
        %v3422 = vsub.f32 %v3418, %v3421
        %v3423 = vmul.f32 %v3422, 1.442695
        %v3424 = vpow.pop %v3423
        %v3425 = vsel %vm2969, %v3424, 0.0
        %3426 = vadd.xlane.f32.xlu0 %v3425
        %v3427 = vpop.xlane.xlu0 %3426
        %v3428 = vrcp.pop %v3427
        %v3429 = vmul.f32 %v3424, %v3428
        %v3430 = vpack.c.bf16 %v3429, %v3429
        %v3432 = vsel %vm2982, %v3430, 0
        %v3435 = vand.u32 %v3371, %v2989
        %3437 = vmatprep.subr.bf16.mxu0 0
        %3438 = vmatpush1.bf16.msra.mxu0 %v3435
        %3439 = vmatprep.subr.bf16.mxu0 0
        %3440 = vmatpush1.bf16.msra.mxu0 0
        %3441 = vmatprep.subr.bf16.mxu0 0
        %3442 = vmatpush1.bf16.msra.mxu0 0
        %3443 = vmatprep.subr.bf16.mxu0 0
        %3444 = vmatpush1.bf16.msra.mxu0 0
        %3445 = vmatprep.subr.bf16.mxu0 0
        %3446 = vmatpush1.bf16.msra.mxu0 0
        %3447 = vmatprep.subr.bf16.mxu0 0
        %3448 = vmatpush1.bf16.msra.mxu0 0
        %3449 = vmatprep.subr.bf16.mxu0 0
        %3450 = vmatpush1.bf16.msra.mxu0 0
        %3451 = vmatprep.subr.bf16.mxu0 0
        %3452 = vmatpush1.bf16.msra.mxu0 0
        %3453 = vmatprep.subr.bf16.mxu0 0
        %3454 = vmatpush1.bf16.msra.mxu0 0
        %3455 = vmatprep.subr.bf16.mxu0 0
        %3456 = vmatpush1.bf16.msra.mxu0 0
        %3457 = vmatprep.subr.bf16.mxu0 0
        %3458 = vmatpush1.bf16.msra.mxu0 0
        %3459 = vmatprep.subr.bf16.mxu0 0
        %3460 = vmatpush1.bf16.msra.mxu0 0
        %3461 = vmatprep.subr.bf16.mxu0 0
        %3462 = vmatpush1.bf16.msra.mxu0 0
        %3463 = vmatprep.subr.bf16.mxu0 0
        %3464 = vmatpush1.bf16.msra.mxu0 0
        %3465 = vmatprep.subr.bf16.mxu0 0
        %3466 = vmatpush1.bf16.msra.mxu0 0
        %3467 = vmatprep.subr.bf16.mxu0 0
        %3468 = vmatpush1.bf16.msra.mxu0 0
        %3469 = vmatprep.mubr.bf16.mxu0 0
        %3470 = vmatmul.mubr.bf16.gmra.mrb[0].mxu0 %v3432
        %v3471 = vpop.f32.mrb[0].mxu0
        %v3472 = vadd.f32 0.0, %v3471
        %v3473 = vpop.f32.mrb[0].mxu0
        %v3474 = vpop.f32.mrb[0].mxu0
        %v3475 = vpop.f32.mrb[0].mxu0
        %3476 = vdwg.mxu0
        %3478 = vrot.lane.b32.xlu0 %v3369, 64
        %v3479 = vpop.permute.xlu0 %3478
        %3481 = vrot.lane.b32.xlu0 %v3370, 64
        %v3482 = vpop.permute.xlu0 %3481
        %v3484 = vsel %vm2921, %v3479, 0
        %v3487 = vsel %vm2921, %v3482, 0
        %3489 = vmatprep.subr.bf16.mxu0 0
        %3490 = vmatpush1.bf16.xpose.msra.mxu0 %v3487
        %3491 = vmatprep.subr.bf16.mxu0 0
        %3492 = vmatpush1.bf16.xpose.msra.mxu0 0
        %3493 = vmatprep.subr.bf16.mxu0 0
        %3494 = vmatpush1.bf16.xpose.msra.mxu0 0
        %3495 = vmatprep.subr.bf16.mxu0 0
        %3496 = vmatpush1.bf16.xpose.msra.mxu0 0
        %3497 = vmatprep.subr.bf16.mxu0 0
        %3498 = vmatpush1.bf16.xpose.msra.mxu0 0
        %3499 = vmatprep.subr.bf16.mxu0 0
        %3500 = vmatpush1.bf16.xpose.msra.mxu0 0
        %3501 = vmatprep.subr.bf16.mxu0 0
        %3502 = vmatpush1.bf16.xpose.msra.mxu0 0
        %3503 = vmatprep.subr.bf16.mxu0 0
        %3504 = vmatpush1.bf16.xpose.msra.mxu0 0
        %3505 = vmatprep.subr.bf16.mxu0 0
        %3506 = vmatpush1.bf16.xpose.msra.mxu0 0
        %3507 = vmatprep.subr.bf16.mxu0 0
        %3508 = vmatpush1.bf16.xpose.msra.mxu0 0
        %3509 = vmatprep.subr.bf16.mxu0 0
        %3510 = vmatpush1.bf16.xpose.msra.mxu0 0
        %3511 = vmatprep.subr.bf16.mxu0 0
        %3512 = vmatpush1.bf16.xpose.msra.mxu0 0
        %3513 = vmatprep.subr.bf16.mxu0 0
        %3514 = vmatpush1.bf16.xpose.msra.mxu0 0
        %3515 = vmatprep.subr.bf16.mxu0 0
        %3516 = vmatpush1.bf16.xpose.msra.mxu0 0
        %3517 = vmatprep.subr.bf16.mxu0 0
        %3518 = vmatpush1.bf16.xpose.msra.mxu0 0
        %3519 = vmatprep.subr.bf16.mxu0 0
        %3520 = vmatpush1.bf16.xpose.msra.mxu0 0
        %3521 = vmatprep.mubr.bf16.mxu0 0
        %3522 = vmatmul.mubr.bf16.gmra.mrb[0].mxu0 %v3484
        %v3523 = vpop.f32.mrb[0].mxu0
        %v3524 = vadd.f32 0.0, %v3523
        %v3525 = vpop.f32.mrb[0].mxu0
        %v3526 = vpop.f32.mrb[0].mxu0
        %v3527 = vpop.f32.mrb[0].mxu0
        %3528 = vdwg.mxu0
        %v3529 = vmul.f32 %v3524, 0.125
        %v3530 = vsel %vm2969, %v3529, -inf
        %3531 = vmax.xlane.f32.xlu0 %v3530
        %v3532 = vpop.xlane.xlu0 %3531
        %v3533 = vsub.f32 %v3529, %v3532
        %v3534 = vmul.f32 %v3533, 1.442695
        %v3535 = vpow.pop %v3534
        %v3536 = vsel %vm2969, %v3535, 0.0
        %3537 = vadd.xlane.f32.xlu0 %v3536
        %v3538 = vpop.xlane.xlu0 %3537
        %v3539 = vrcp.pop %v3538
        %v3540 = vmul.f32 %v3535, %v3539
        %v3541 = vpack.c.bf16 %v3540, %v3540
        %3543 = vrot.lane.b32.xlu0 %v3371, 64
        %v3544 = vpop.permute.xlu0 %3543
        %v3546 = vsel %vm2982, %v3541, 0
        %v3549 = vand.u32 %v3544, %v2989
        %3551 = vmatprep.subr.bf16.mxu0 0
        %3552 = vmatpush1.bf16.msra.mxu0 %v3549
        %3553 = vmatprep.subr.bf16.mxu0 0
        %3554 = vmatpush1.bf16.msra.mxu0 0
        %3555 = vmatprep.subr.bf16.mxu0 0
        %3556 = vmatpush1.bf16.msra.mxu0 0
        %3557 = vmatprep.subr.bf16.mxu0 0
        %3558 = vmatpush1.bf16.msra.mxu0 0
        %3559 = vmatprep.subr.bf16.mxu0 0
        %3560 = vmatpush1.bf16.msra.mxu0 0
        %3561 = vmatprep.subr.bf16.mxu0 0
        %3562 = vmatpush1.bf16.msra.mxu0 0
        %3563 = vmatprep.subr.bf16.mxu0 0
        %3564 = vmatpush1.bf16.msra.mxu0 0
        %3565 = vmatprep.subr.bf16.mxu0 0
        %3566 = vmatpush1.bf16.msra.mxu0 0
        %3567 = vmatprep.subr.bf16.mxu0 0
        %3568 = vmatpush1.bf16.msra.mxu0 0
        %3569 = vmatprep.subr.bf16.mxu0 0
        %3570 = vmatpush1.bf16.msra.mxu0 0
        %3571 = vmatprep.subr.bf16.mxu0 0
        %3572 = vmatpush1.bf16.msra.mxu0 0
        %3573 = vmatprep.subr.bf16.mxu0 0
        %3574 = vmatpush1.bf16.msra.mxu0 0
        %3575 = vmatprep.subr.bf16.mxu0 0
        %3576 = vmatpush1.bf16.msra.mxu0 0
        %3577 = vmatprep.subr.bf16.mxu0 0
        %3578 = vmatpush1.bf16.msra.mxu0 0
        %3579 = vmatprep.subr.bf16.mxu0 0
        %3580 = vmatpush1.bf16.msra.mxu0 0
        %3581 = vmatprep.subr.bf16.mxu0 0
        %3582 = vmatpush1.bf16.msra.mxu0 0
        %3583 = vmatprep.mubr.bf16.mxu0 0
        %3584 = vmatmul.mubr.bf16.gmra.mrb[0].mxu0 %v3546
        %v3585 = vpop.f32.mrb[0].mxu0
        %v3586 = vadd.f32 0.0, %v3585
        %v3587 = vpop.f32.mrb[0].mxu0
        %v3588 = vpop.f32.mrb[0].mxu0
        %v3589 = vpop.f32.mrb[0].mxu0
        %3590 = vdwg.mxu0
        %3592 = vrot.lane.b32.xlu0 %v3142, 64
        %v3593 = vpop.permute.xlu0 %3592
        %3596 = vrot.lane.b32.xlu0 %v3364, 64
        %v3597 = vpop.permute.xlu0 %3596
        %3600 = vrot.lane.b32.xlu0 %v3586, 64
        %v3601 = vpop.permute.xlu0 %3600
        %v3603 = vsel %vm2921, %v3028, %v3593
        %v3604 = vsel %vm2921, %v3250, %v3597
        %v3605 = vsel %vm2921, %v3472, %v3601
        %v3606 = vpack.c.bf16 %v3603, %v3603
        %v3607 = vpack.c.bf16 %v3604, %v3604
        %v3608 = vpack.c.bf16 %v3605, %v3605
        %v3609 = vld [vmem:[%s821] sm:$0xff]
        %v3610 = vld [vmem:[%s821 + $0x8] sm:$0xf]
        %v3611 = vld [vmem:[%s821 + $0xc] sm:$0xff]
        %v3612 = vld [vmem:[%s821 + $0x14] sm:$0xf]
        %v3613 = vld [vmem:[%s821 + $0x18] sm:$0xff]
        %v3614 = vld [vmem:[%s821 + $0x20] sm:$0xf]
        %v3615 = vld [vmem:[%s821 + $0x24] sm:$0xff]
        %v3616 = vld [vmem:[%s821 + $0x2c] sm:$0xf]
        %v3617 = vld [vmem:[%s821 + $0x30] sm:$0xff]
        %v3618 = vld [vmem:[%s821 + $0x38] sm:$0xf]
        %v3619 = vld [vmem:[%s821 + $0x3c] sm:$0xff]
        %v3620 = vld [vmem:[%s821 + $0x44] sm:$0xf]
        %v3621 = vld [vmem:[%s821 + $0x48] sm:$0xff]
        %v3622 = vld [vmem:[%s821 + $0x50] sm:$0xf]
        %v3623 = vld [vmem:[%s821 + $0x54] sm:$0xff]
        %v3624 = vld [vmem:[%s821 + $0x5c] sm:$0xf]
        %v3625 = vld [vmem:[%s821 + $0x60] sm:$0xff]
        %v3626 = vld [vmem:[%s821 + $0x68] sm:$0xf]
        %v3627 = vld [vmem:[%s821 + $0x6c] sm:$0xff]
        %v3628 = vld [vmem:[%s821 + $0x74] sm:$0xf]
        %v3629 = vld [vmem:[%s821 + $0x78] sm:$0xff]
        %v3630 = vld [vmem:[%s821 + $0x80] sm:$0xf]
        %v3631 = vld [vmem:[%s821 + $0x84] sm:$0xff]
        %v3632 = vld [vmem:[%s821 + $0x8c] sm:$0xf]
        %v3633 = vld [vmem:[%s821 + $0x90] sm:$0xff]
        %v3634 = vld [vmem:[%s821 + $0x98] sm:$0xf]
        %v3635 = vld [vmem:[%s821 + $0x9c] sm:$0xff]
        %v3636 = vld [vmem:[%s821 + $0xa4] sm:$0xf]
        %v3637 = vld [vmem:[%s821 + $0xa8] sm:$0xff]
        %v3638 = vld [vmem:[%s821 + $0xb0] sm:$0xf]
        %v3639 = vld [vmem:[%s821 + $0xb4] sm:$0xff]
        %v3640 = vld [vmem:[%s821 + $0xbc] sm:$0xf]
        %v3641 = vld [vmem:[%s821 + $0xc0] sm:$0xff]
        %v3642 = vld [vmem:[%s821 + $0xc8] sm:$0xf]
        %v3643 = vld [vmem:[%s821 + $0xcc] sm:$0xff]
        %v3644 = vld [vmem:[%s821 + $0xd4] sm:$0xf]
        %v3645 = vld [vmem:[%s821 + $0xd8] sm:$0xff]
        %v3646 = vld [vmem:[%s821 + $0xe0] sm:$0xf]
        %v3647 = vld [vmem:[%s821 + $0xe4] sm:$0xff]
        %v3648 = vld [vmem:[%s821 + $0xec] sm:$0xf]
        %v3649 = vld [vmem:[%s821 + $0xf0] sm:$0xff]
        %v3650 = vld [vmem:[%s821 + $0xf8] sm:$0xf]
        %v3651 = vld [vmem:[%s821 + $0xfc] sm:$0xff]
        %v3652 = vld [vmem:[%s821 + $0x104] sm:$0xf]
        %v3653 = vld [vmem:[%s821 + $0x108] sm:$0xff]
        %v3654 = vld [vmem:[%s821 + $0x110] sm:$0xf]
        %v3655 = vld [vmem:[%s821 + $0x114] sm:$0xff]
        %v3656 = vld [vmem:[%s821 + $0x11c] sm:$0xf]
        %v3657 = vld [vmem:[%s821 + $0x120] sm:$0xff]
        %v3658 = vld [vmem:[%s821 + $0x128] sm:$0xf]
        %v3659 = vld [vmem:[%s821 + $0x12c] sm:$0xff]
        %v3660 = vld [vmem:[%s821 + $0x134] sm:$0xf]
        %v3661 = vld [vmem:[%s821 + $0x138] sm:$0xff]
        %v3662 = vld [vmem:[%s821 + $0x140] sm:$0xf]
        %v3663 = vld [vmem:[%s821 + $0x144] sm:$0xff]
        %v3664 = vld [vmem:[%s821 + $0x14c] sm:$0xf]
        %v3665 = vld [vmem:[%s821 + $0x150] sm:$0xff]
        %v3666 = vld [vmem:[%s821 + $0x158] sm:$0xf]
        %v3667 = vld [vmem:[%s821 + $0x15c] sm:$0xff]
        %v3668 = vld [vmem:[%s821 + $0x164] sm:$0xf]
        %v3669 = vld [vmem:[%s821 + $0x168] sm:$0xff]
        %v3670 = vld [vmem:[%s821 + $0x170] sm:$0xf]
        %v3671 = vld [vmem:[%s821 + $0x174] sm:$0xff]
        %v3672 = vld [vmem:[%s821 + $0x17c] sm:$0xf]
        %v3673 = vld [vmem:[%s821 + $0x180] sm:$0xff]
        %v3674 = vld [vmem:[%s821 + $0x188] sm:$0xf]
        %v3675 = vld [vmem:[%s821 + $0x18c] sm:$0xff]
        %v3676 = vld [vmem:[%s821 + $0x194] sm:$0xf]
        %v3677 = vld [vmem:[%s821 + $0x198] sm:$0xff]
        %v3678 = vld [vmem:[%s821 + $0x1a0] sm:$0xf]
        %v3679 = vld [vmem:[%s821 + $0x1a4] sm:$0xff]
        %v3680 = vld [vmem:[%s821 + $0x1ac] sm:$0xf]
        %v3681 = vld [vmem:[%s821 + $0x1b0] sm:$0xff]
        %v3682 = vld [vmem:[%s821 + $0x1b8] sm:$0xf]
        %v3683 = vld [vmem:[%s821 + $0x1bc] sm:$0xff]
        %v3684 = vld [vmem:[%s821 + $0x1c4] sm:$0xf]
        %v3685 = vld [vmem:[%s821 + $0x1c8] sm:$0xff]
        %v3686 = vld [vmem:[%s821 + $0x1d0] sm:$0xf]
        %v3687 = vld [vmem:[%s821 + $0x1d4] sm:$0xff]
        %v3688 = vld [vmem:[%s821 + $0x1dc] sm:$0xf]
        %v3689 = vld [vmem:[%s821 + $0x1e0] sm:$0xff]
        %v3690 = vld [vmem:[%s821 + $0x1e8] sm:$0xf]
        %v3691 = vld [vmem:[%s821 + $0x1ec] sm:$0xff]
        %v3692 = vld [vmem:[%s821 + $0x1f4] sm:$0xf]
        %v3693 = vld [vmem:[%s821 + $0x1f8] sm:$0xff]
        %v3694 = vld [vmem:[%s821 + $0x200] sm:$0xf]
        %v3695 = vld [vmem:[%s821 + $0x204] sm:$0xff]
        %v3696 = vld [vmem:[%s821 + $0x20c] sm:$0xf]
        %v3697 = vld [vmem:[%s821 + $0x210] sm:$0xff]
        %v3698 = vld [vmem:[%s821 + $0x218] sm:$0xf]
        %v3699 = vld [vmem:[%s821 + $0x21c] sm:$0xff]
        %v3700 = vld [vmem:[%s821 + $0x224] sm:$0xf]
        %v3701 = vld [vmem:[%s821 + $0x228] sm:$0xff]
        %v3702 = vld [vmem:[%s821 + $0x230] sm:$0xf]
        %v3703 = vld [vmem:[%s821 + $0x234] sm:$0xff]
        %v3704 = vld [vmem:[%s821 + $0x23c] sm:$0xf]
        %v3705 = vld [vmem:[%s830] sm:$0x7]
        %v3707 = vlaneseq
        %v3708 = vshrl.u32 %v3707, 7
        %v3709 = vsub.s32 0, %v3708
        %v3710 = vrot.slane %v3705, %v3709
        %v3711 = vlaneseq
        %v3712 = vshrl.u32 %v3711, 7
        %v3713 = vsub.s32 1, %v3712
        %v3714 = vrot.slane %v3705, %v3713
        %v3715 = vlaneseq
        %v3716 = vshrl.u32 %v3715, 7
        %v3717 = vsub.s32 2, %v3716
        %v3718 = vrot.slane %v3705, %v3717
        %v3818 = vunpack.c.l.b16 %v3609
        %v3819 = vunpack.c.h.b16 %v3609
        %v3820 = vunpack.c.l.b16 %v3610
        %v3821 = vunpack.c.l.b16 %v3611
        %v3822 = vunpack.c.h.b16 %v3611
        %v3823 = vunpack.c.l.b16 %v3612
        %v3824 = vunpack.c.l.b16 %v3613
        %v3825 = vunpack.c.h.b16 %v3613
        %v3826 = vunpack.c.l.b16 %v3614
        %v3827 = vunpack.c.l.b16 %v3615
        %v3828 = vunpack.c.h.b16 %v3615
        %v3829 = vunpack.c.l.b16 %v3616
        %v3830 = vunpack.c.l.b16 %v3617
        %v3831 = vunpack.c.h.b16 %v3617
        %v3832 = vunpack.c.l.b16 %v3618
        %v3833 = vunpack.c.l.b16 %v3619
        %v3834 = vunpack.c.h.b16 %v3619
        %v3835 = vunpack.c.l.b16 %v3620
        %v3836 = vunpack.c.l.b16 %v3621
        %v3837 = vunpack.c.h.b16 %v3621
        %v3838 = vunpack.c.l.b16 %v3622
        %v3839 = vunpack.c.l.b16 %v3623
        %v3840 = vunpack.c.h.b16 %v3623
        %v3841 = vunpack.c.l.b16 %v3624
        %v3842 = vunpack.c.l.b16 %v3625
        %v3843 = vunpack.c.h.b16 %v3625
        %v3844 = vunpack.c.l.b16 %v3626
        %v3845 = vunpack.c.l.b16 %v3627
        %v3846 = vunpack.c.h.b16 %v3627
        %v3847 = vunpack.c.l.b16 %v3628
        %v3848 = vunpack.c.l.b16 %v3629
        %v3849 = vunpack.c.h.b16 %v3629
        %v3850 = vunpack.c.l.b16 %v3630
        %v3851 = vunpack.c.l.b16 %v3631
        %v3852 = vunpack.c.h.b16 %v3631
        %v3853 = vunpack.c.l.b16 %v3632
        %v3854 = vunpack.c.l.b16 %v3633
        %v3855 = vunpack.c.h.b16 %v3633
        %v3856 = vunpack.c.l.b16 %v3634
        %v3857 = vunpack.c.l.b16 %v3635
        %v3858 = vunpack.c.h.b16 %v3635
        %v3859 = vunpack.c.l.b16 %v3636
        %v3860 = vunpack.c.l.b16 %v3637
        %v3861 = vunpack.c.h.b16 %v3637
        %v3862 = vunpack.c.l.b16 %v3638
        %v3863 = vunpack.c.l.b16 %v3639
        %v3864 = vunpack.c.h.b16 %v3639
        %v3865 = vunpack.c.l.b16 %v3640
        %v3866 = vunpack.c.l.b16 %v3641
        %v3867 = vunpack.c.h.b16 %v3641
        %v3868 = vunpack.c.l.b16 %v3642
        %v3869 = vunpack.c.l.b16 %v3643
        %v3870 = vunpack.c.h.b16 %v3643
        %v3871 = vunpack.c.l.b16 %v3644
        %v3872 = vunpack.c.l.b16 %v3645
        %v3873 = vunpack.c.h.b16 %v3645
        %v3874 = vunpack.c.l.b16 %v3646
        %v3875 = vunpack.c.l.b16 %v3647
        %v3876 = vunpack.c.h.b16 %v3647
        %v3877 = vunpack.c.l.b16 %v3648
        %v3878 = vunpack.c.l.b16 %v3649
        %v3879 = vunpack.c.h.b16 %v3649
        %v3880 = vunpack.c.l.b16 %v3650
        %v3881 = vunpack.c.l.b16 %v3651
        %v3882 = vunpack.c.h.b16 %v3651
        %v3883 = vunpack.c.l.b16 %v3652
        %v3884 = vunpack.c.l.b16 %v3653
        %v3885 = vunpack.c.h.b16 %v3653
        %v3886 = vunpack.c.l.b16 %v3654
        %v3887 = vunpack.c.l.b16 %v3655
        %v3888 = vunpack.c.h.b16 %v3655
        %v3889 = vunpack.c.l.b16 %v3656
        %v3890 = vunpack.c.l.b16 %v3657
        %v3891 = vunpack.c.h.b16 %v3657
        %v3892 = vunpack.c.l.b16 %v3658
        %v3893 = vunpack.c.l.b16 %v3659
        %v3894 = vunpack.c.h.b16 %v3659
        %v3895 = vunpack.c.l.b16 %v3660
        %v3896 = vunpack.c.l.b16 %v3661
        %v3897 = vunpack.c.h.b16 %v3661
        %v3898 = vunpack.c.l.b16 %v3662
        %v3899 = vunpack.c.l.b16 %v3663
        %v3900 = vunpack.c.h.b16 %v3663
        %v3901 = vunpack.c.l.b16 %v3664
        %v3902 = vunpack.c.l.b16 %v3665
        %v3903 = vunpack.c.h.b16 %v3665
        %v3904 = vunpack.c.l.b16 %v3666
        %v3905 = vunpack.c.l.b16 %v3667
        %v3906 = vunpack.c.h.b16 %v3667
        %v3907 = vunpack.c.l.b16 %v3668
        %v3908 = vunpack.c.l.b16 %v3669
        %v3909 = vunpack.c.h.b16 %v3669
        %v3910 = vunpack.c.l.b16 %v3670
        %v3911 = vunpack.c.l.b16 %v3671
        %v3912 = vunpack.c.h.b16 %v3671
        %v3913 = vunpack.c.l.b16 %v3672
        %v3914 = vunpack.c.l.b16 %v3673
        %v3915 = vunpack.c.h.b16 %v3673
        %v3916 = vunpack.c.l.b16 %v3674
        %v3917 = vunpack.c.l.b16 %v3675
        %v3918 = vunpack.c.h.b16 %v3675
        %v3919 = vunpack.c.l.b16 %v3676
        %v3920 = vunpack.c.l.b16 %v3677
        %v3921 = vunpack.c.h.b16 %v3677
        %v3922 = vunpack.c.l.b16 %v3678
        %v3923 = vunpack.c.l.b16 %v3679
        %v3924 = vunpack.c.h.b16 %v3679
        %v3925 = vunpack.c.l.b16 %v3680
        %v3926 = vunpack.c.l.b16 %v3681
        %v3927 = vunpack.c.h.b16 %v3681
        %v3928 = vunpack.c.l.b16 %v3682
        %v3929 = vunpack.c.l.b16 %v3683
        %v3930 = vunpack.c.h.b16 %v3683
        %v3931 = vunpack.c.l.b16 %v3684
        %v3932 = vunpack.c.l.b16 %v3685
        %v3933 = vunpack.c.h.b16 %v3685
        %v3934 = vunpack.c.l.b16 %v3686
        %v3935 = vunpack.c.l.b16 %v3687
        %v3936 = vunpack.c.h.b16 %v3687
        %v3937 = vunpack.c.l.b16 %v3688
        %v3938 = vunpack.c.l.b16 %v3689
        %v3939 = vunpack.c.h.b16 %v3689
        %v3940 = vunpack.c.l.b16 %v3690
        %v3941 = vunpack.c.l.b16 %v3691
        %v3942 = vunpack.c.h.b16 %v3691
        %v3943 = vunpack.c.l.b16 %v3692
        %v3944 = vunpack.c.l.b16 %v3693
        %v3945 = vunpack.c.h.b16 %v3693
        %v3946 = vunpack.c.l.b16 %v3694
        %v3947 = vunpack.c.l.b16 %v3695
        %v3948 = vunpack.c.h.b16 %v3695
        %v3949 = vunpack.c.l.b16 %v3696
        %v3950 = vunpack.c.l.b16 %v3697
        %v3951 = vunpack.c.h.b16 %v3697
        %v3952 = vunpack.c.l.b16 %v3698
        %v3953 = vunpack.c.l.b16 %v3699
        %v3954 = vunpack.c.h.b16 %v3699
        %v3955 = vunpack.c.l.b16 %v3700
        %v3956 = vunpack.c.l.b16 %v3701
        %v3957 = vunpack.c.h.b16 %v3701
        %v3958 = vunpack.c.l.b16 %v3702
        %v3959 = vunpack.c.l.b16 %v3703
        %v3960 = vunpack.c.h.b16 %v3703
        %v3961 = vunpack.c.l.b16 %v3704
        %v3962 = vpack.c.b16 %v3821, %v3818
        %v3963 = vpack.c.b16 %v3822, %v3819
        %v3964 = vpack.c.b16 %v3823, %v3820
        %v3965 = vpack.c.b16 %v3827, %v3824
        %v3966 = vpack.c.b16 %v3828, %v3825
        %v3967 = vpack.c.b16 %v3829, %v3826
        %v3968 = vpack.c.b16 %v3833, %v3830
        %v3969 = vpack.c.b16 %v3834, %v3831
        %v3970 = vpack.c.b16 %v3835, %v3832
        %v3971 = vpack.c.b16 %v3839, %v3836
        %v3972 = vpack.c.b16 %v3840, %v3837
        %v3973 = vpack.c.b16 %v3841, %v3838
        %v3974 = vpack.c.b16 %v3845, %v3842
        %v3975 = vpack.c.b16 %v3846, %v3843
        %v3976 = vpack.c.b16 %v3847, %v3844
        %v3977 = vpack.c.b16 %v3851, %v3848
        %v3978 = vpack.c.b16 %v3852, %v3849
        %v3979 = vpack.c.b16 %v3853, %v3850
        %v3980 = vpack.c.b16 %v3857, %v3854
        %v3981 = vpack.c.b16 %v3858, %v3855
        %v3982 = vpack.c.b16 %v3859, %v3856
        %v3983 = vpack.c.b16 %v3863, %v3860
        %v3984 = vpack.c.b16 %v3864, %v3861
        %v3985 = vpack.c.b16 %v3865, %v3862
        %v3986 = vpack.c.b16 %v3869, %v3866
        %v3987 = vpack.c.b16 %v3870, %v3867
        %v3988 = vpack.c.b16 %v3871, %v3868
        %v3989 = vpack.c.b16 %v3875, %v3872
        %v3990 = vpack.c.b16 %v3876, %v3873
        %v3991 = vpack.c.b16 %v3877, %v3874
        %v3992 = vpack.c.b16 %v3881, %v3878
        %v3993 = vpack.c.b16 %v3882, %v3879
        %v3994 = vpack.c.b16 %v3883, %v3880
        %v3995 = vpack.c.b16 %v3887, %v3884
        %v3996 = vpack.c.b16 %v3888, %v3885
        %v3997 = vpack.c.b16 %v3889, %v3886
        %v3998 = vpack.c.b16 %v3893, %v3890
        %v3999 = vpack.c.b16 %v3894, %v3891
        %v4000 = vpack.c.b16 %v3895, %v3892
        %v4001 = vpack.c.b16 %v3899, %v3896
        %v4002 = vpack.c.b16 %v3900, %v3897
        %v4003 = vpack.c.b16 %v3901, %v3898
        %v4004 = vpack.c.b16 %v3905, %v3902
        %v4005 = vpack.c.b16 %v3906, %v3903
        %v4006 = vpack.c.b16 %v3907, %v3904
        %v4007 = vpack.c.b16 %v3911, %v3908
        %v4008 = vpack.c.b16 %v3912, %v3909
        %v4009 = vpack.c.b16 %v3913, %v3910
        %v4010 = vpack.c.b16 %v3917, %v3914
        %v4011 = vpack.c.b16 %v3918, %v3915
        %v4012 = vpack.c.b16 %v3919, %v3916
        %v4013 = vpack.c.b16 %v3923, %v3920
        %v4014 = vpack.c.b16 %v3924, %v3921
        %v4015 = vpack.c.b16 %v3925, %v3922
        %v4016 = vpack.c.b16 %v3929, %v3926
        %v4017 = vpack.c.b16 %v3930, %v3927
        %v4018 = vpack.c.b16 %v3931, %v3928
        %v4019 = vpack.c.b16 %v3935, %v3932
        %v4020 = vpack.c.b16 %v3936, %v3933
        %v4021 = vpack.c.b16 %v3937, %v3934
        %v4022 = vpack.c.b16 %v3941, %v3938
        %v4023 = vpack.c.b16 %v3942, %v3939
        %v4024 = vpack.c.b16 %v3943, %v3940
        %v4025 = vpack.c.b16 %v3947, %v3944
        %v4026 = vpack.c.b16 %v3948, %v3945
        %v4027 = vpack.c.b16 %v3949, %v3946
        %v4028 = vpack.c.b16 %v3953, %v3950
        %v4029 = vpack.c.b16 %v3954, %v3951
        %v4030 = vpack.c.b16 %v3955, %v3952
        %v4031 = vpack.c.b16 %v3959, %v3956
        %v4032 = vpack.c.b16 %v3960, %v3957
        %v4033 = vpack.c.b16 %v3961, %v3958
        %4106 = vmatprep.subr.bf16.mxu0 %v3963
        %4107 = vmatpush1.bf16.msra.mxu0 %v3962
        %4108 = vmatprep.subr.bf16.mxu0 %v3966
        %4109 = vmatpush1.bf16.msra.mxu0 %v3965
        %4110 = vmatprep.subr.bf16.mxu0 %v3969
        %4111 = vmatpush1.bf16.msra.mxu0 %v3968
        %4112 = vmatprep.subr.bf16.mxu0 %v3972
        %4113 = vmatpush1.bf16.msra.mxu0 %v3971
        %4114 = vmatprep.subr.bf16.mxu0 %v3975
        %4115 = vmatpush1.bf16.msra.mxu0 %v3974
        %4116 = vmatprep.subr.bf16.mxu0 %v3978
        %4117 = vmatpush1.bf16.msra.mxu0 %v3977
        %4118 = vmatprep.subr.bf16.mxu0 %v3981
        %4119 = vmatpush1.bf16.msra.mxu0 %v3980
        %4120 = vmatprep.subr.bf16.mxu0 %v3984
        %4121 = vmatpush1.bf16.msra.mxu0 %v3983
        %4122 = vmatprep.subr.bf16.mxu0 %v3987
        %4123 = vmatpush1.bf16.msra.mxu0 %v3986
        %4124 = vmatprep.subr.bf16.mxu0 %v3990
        %4125 = vmatpush1.bf16.msra.mxu0 %v3989
        %4126 = vmatprep.subr.bf16.mxu0 %v3993
        %4127 = vmatpush1.bf16.msra.mxu0 %v3992
        %4128 = vmatprep.subr.bf16.mxu0 %v3996
        %4129 = vmatpush1.bf16.msra.mxu0 %v3995
        %4130 = vmatprep.subr.bf16.mxu0 %v3999
        %4131 = vmatpush1.bf16.msra.mxu0 %v3998
        %4132 = vmatprep.subr.bf16.mxu0 %v4002
        %4133 = vmatpush1.bf16.msra.mxu0 %v4001
        %4134 = vmatprep.subr.bf16.mxu0 %v4005
        %4135 = vmatpush1.bf16.msra.mxu0 %v4004
        %4136 = vmatprep.subr.bf16.mxu0 %v4008
        %4137 = vmatpush1.bf16.msra.mxu0 %v4007
        %4138 = vmatprep.mubr.bf16.mxu0 %v3607
        %4139 = vmatmul.mubr.bf16.gmra.mrb[0].mxu0 %v3606
        %v4140 = vpop.f32.mrb[0].mxu0
        %v4141 = vadd.f32 %v3710, %v4140
        %v4142 = vpop.f32.mrb[0].mxu0
        %v4143 = vadd.f32 %v3714, %v4142
        %v4144 = vpop.f32.mrb[0].mxu0
        %v4145 = vpop.f32.mrb[0].mxu0
        %4146 = vdwg.mxu0
        %4147 = vmatprep.subr.bf16.mxu0 %v4011
        %4148 = vmatpush1.bf16.msra.mxu0 %v4010
        %4149 = vmatprep.subr.bf16.mxu0 %v4014
        %4150 = vmatpush1.bf16.msra.mxu0 %v4013
        %4151 = vmatprep.subr.bf16.mxu0 %v4017
        %4152 = vmatpush1.bf16.msra.mxu0 %v4016
        %4153 = vmatprep.subr.bf16.mxu0 %v4020
        %4154 = vmatpush1.bf16.msra.mxu0 %v4019
        %4155 = vmatprep.subr.bf16.mxu0 %v4023
        %4156 = vmatpush1.bf16.msra.mxu0 %v4022
        %4157 = vmatprep.subr.bf16.mxu0 %v4026
        %4158 = vmatpush1.bf16.msra.mxu0 %v4025
        %4159 = vmatprep.subr.bf16.mxu0 %v4029
        %4160 = vmatpush1.bf16.msra.mxu0 %v4028
        %4161 = vmatprep.subr.bf16.mxu0 %v4032
        %4162 = vmatpush1.bf16.msra.mxu0 %v4031
        %4163 = vmatprep.subr.bf16.mxu0 0
        %4164 = vmatpush1.bf16.msra.mxu0 0
        %4165 = vmatprep.subr.bf16.mxu0 0
        %4166 = vmatpush1.bf16.msra.mxu0 0
        %4167 = vmatprep.subr.bf16.mxu0 0
        %4168 = vmatpush1.bf16.msra.mxu0 0
        %4169 = vmatprep.subr.bf16.mxu0 0
        %4170 = vmatpush1.bf16.msra.mxu0 0
        %4171 = vmatprep.subr.bf16.mxu0 0
        %4172 = vmatpush1.bf16.msra.mxu0 0
        %4173 = vmatprep.subr.bf16.mxu0 0
        %4174 = vmatpush1.bf16.msra.mxu0 0
        %4175 = vmatprep.subr.bf16.mxu0 0
        %4176 = vmatpush1.bf16.msra.mxu0 0
        %4177 = vmatprep.subr.bf16.mxu0 0
        %4178 = vmatpush1.bf16.msra.mxu0 0
        %4179 = vmatprep.mubr.bf16.mxu0 0
        %4180 = vmatmul.mubr.bf16.gmra.mrb[0].mxu0 %v3608
        %v4181 = vpop.f32.mrb[0].mxu0
        %v4182 = vadd.f32 %v4141, %v4181
        %v4183 = vpop.f32.mrb[0].mxu0
        %v4184 = vadd.f32 %v4143, %v4183
        %v4185 = vpop.f32.mrb[0].mxu0
        %v4186 = vpop.f32.mrb[0].mxu0
        %4187 = vdwg.mxu0
        %4188 = vmatprep.subr.bf16.mxu0 0
        %4189 = vmatpush1.bf16.msra.mxu0 %v3964
        %4190 = vmatprep.subr.bf16.mxu0 0
        %4191 = vmatpush1.bf16.msra.mxu0 %v3967
        %4192 = vmatprep.subr.bf16.mxu0 0
        %4193 = vmatpush1.bf16.msra.mxu0 %v3970
        %4194 = vmatprep.subr.bf16.mxu0 0
        %4195 = vmatpush1.bf16.msra.mxu0 %v3973
        %4196 = vmatprep.subr.bf16.mxu0 0
        %4197 = vmatpush1.bf16.msra.mxu0 %v3976
        %4198 = vmatprep.subr.bf16.mxu0 0
        %4199 = vmatpush1.bf16.msra.mxu0 %v3979
        %4200 = vmatprep.subr.bf16.mxu0 0
        %4201 = vmatpush1.bf16.msra.mxu0 %v3982
        %4202 = vmatprep.subr.bf16.mxu0 0
        %4203 = vmatpush1.bf16.msra.mxu0 %v3985
        %4204 = vmatprep.subr.bf16.mxu0 0
        %4205 = vmatpush1.bf16.msra.mxu0 %v3988
        %4206 = vmatprep.subr.bf16.mxu0 0
        %4207 = vmatpush1.bf16.msra.mxu0 %v3991
        %4208 = vmatprep.subr.bf16.mxu0 0
        %4209 = vmatpush1.bf16.msra.mxu0 %v3994
        %4210 = vmatprep.subr.bf16.mxu0 0
        %4211 = vmatpush1.bf16.msra.mxu0 %v3997
        %4212 = vmatprep.subr.bf16.mxu0 0
        %4213 = vmatpush1.bf16.msra.mxu0 %v4000
        %4214 = vmatprep.subr.bf16.mxu0 0
        %4215 = vmatpush1.bf16.msra.mxu0 %v4003
        %4216 = vmatprep.subr.bf16.mxu0 0
        %4217 = vmatpush1.bf16.msra.mxu0 %v4006
        %4218 = vmatprep.subr.bf16.mxu0 0
        %4219 = vmatpush1.bf16.msra.mxu0 %v4009
        %4220 = vmatprep.mubr.bf16.mxu0 %v3607
        %4221 = vmatmul.mubr.bf16.gmra.mrb[0].mxu0 %v3606
        %v4222 = vpop.f32.mrb[0].mxu0
        %v4223 = vadd.f32 %v3718, %v4222
        %v4224 = vpop.f32.mrb[0].mxu0
        %v4225 = vpop.f32.mrb[0].mxu0
        %v4226 = vpop.f32.mrb[0].mxu0
        %4227 = vdwg.mxu0
        %4228 = vmatprep.subr.bf16.mxu0 0
        %4229 = vmatpush1.bf16.msra.mxu0 %v4012
        %4230 = vmatprep.subr.bf16.mxu0 0
        %4231 = vmatpush1.bf16.msra.mxu0 %v4015
        %4232 = vmatprep.subr.bf16.mxu0 0
        %4233 = vmatpush1.bf16.msra.mxu0 %v4018
        %4234 = vmatprep.subr.bf16.mxu0 0
        %4235 = vmatpush1.bf16.msra.mxu0 %v4021
        %4236 = vmatprep.subr.bf16.mxu0 0
        %4237 = vmatpush1.bf16.msra.mxu0 %v4024
        %4238 = vmatprep.subr.bf16.mxu0 0
        %4239 = vmatpush1.bf16.msra.mxu0 %v4027
        %4240 = vmatprep.subr.bf16.mxu0 0
        %4241 = vmatpush1.bf16.msra.mxu0 %v4030
        %4242 = vmatprep.subr.bf16.mxu0 0
        %4243 = vmatpush1.bf16.msra.mxu0 %v4033
        %4244 = vmatprep.subr.bf16.mxu0 0
        %4245 = vmatpush1.bf16.msra.mxu0 0
        %4246 = vmatprep.subr.bf16.mxu0 0
        %4247 = vmatpush1.bf16.msra.mxu0 0
        %4248 = vmatprep.subr.bf16.mxu0 0
        %4249 = vmatpush1.bf16.msra.mxu0 0
        %4250 = vmatprep.subr.bf16.mxu0 0
        %4251 = vmatpush1.bf16.msra.mxu0 0
        %4252 = vmatprep.subr.bf16.mxu0 0
        %4253 = vmatpush1.bf16.msra.mxu0 0
        %4254 = vmatprep.subr.bf16.mxu0 0
        %4255 = vmatpush1.bf16.msra.mxu0 0
        %4256 = vmatprep.subr.bf16.mxu0 0
        %4257 = vmatpush1.bf16.msra.mxu0 0
        %4258 = vmatprep.subr.bf16.mxu0 0
        %4259 = vmatpush1.bf16.msra.mxu0 0
        %4260 = vmatprep.mubr.bf16.mxu0 0
        %4261 = vmatmul.mubr.bf16.gmra.mrb[0].mxu0 %v3608
        %v4262 = vpop.f32.mrb[0].mxu0
        %v4263 = vadd.f32 %v4223, %v4262
        %v4264 = vpop.f32.mrb[0].mxu0
        %v4265 = vpop.f32.mrb[0].mxu0
        %v4266 = vpop.f32.mrb[0].mxu0
        %4267 = vdwg.mxu0
        %v4268 = vld [vmem:[%s839] sm:$0x7]
        %v4270 = vlaneseq
        %v4271 = vshrl.u32 %v4270, 7
        %v4272 = vsub.s32 0, %v4271
        %v4273 = vrot.slane %v4268, %v4272
        %v4274 = vlaneseq
        %v4275 = vshrl.u32 %v4274, 7
        %v4276 = vsub.s32 1, %v4275
        %v4277 = vrot.slane %v4268, %v4276
        %v4278 = vlaneseq
        %v4279 = vshrl.u32 %v4278, 7
        %v4280 = vsub.s32 2, %v4279
        %v4281 = vrot.slane %v4268, %v4280
        %v4285 = vmul.f32 %v4182, %v4273
        %v4286 = vmul.f32 %v4184, %v4277
        %v4287 = vmul.f32 %v4263, %v4281
        %v4288 = vadd.f32 %v1040, %v4285
        %v4289 = vadd.f32 %v1041, %v4286
        %v4290 = vadd.f32 %v1042, %v4287
        %v4291 = vld [vmem:[%s848] sm:$0x7]
        %v4292 = vld [vmem:[%s857] sm:$0x7]
        %v4293 = vsel %vm1045, %v4288, 0.0
        %v4294 = vsel %vm1045, %v4289, 0.0
        %v4295 = vadd.f32 %v4293, %v4294
        %v4296 = vsel %vm1045, %v4290, 0.0
        %v4297 = vadd.f32 %v4295, %v4296
        %4298 = vadd.xlane.f32.xlu0 %v4297
        %v4299 = vpop.xlane.xlu0 %4298
        %v4300 = vmul.f32 %v4299, %v1053
        %v4301 = vmul.f32 %v4288, %v4288
        %v4302 = vmul.f32 %v4289, %v4289
        %v4303 = vmul.f32 %v4290, %v4290
        %v4304 = vsel %vm1045, %v4301, 0.0
        %v4305 = vsel %vm1045, %v4302, 0.0
        %v4306 = vadd.f32 %v4304, %v4305
        %v4307 = vsel %vm1045, %v4303, 0.0
        %v4308 = vadd.f32 %v4306, %v4307
        %4309 = vadd.xlane.f32.xlu0 %v4308
        %v4310 = vpop.xlane.xlu0 %4309
        %v4311 = vmul.f32 %v4310, %v1053
        %v4312 = vmul.f32 %v4300, %v4300
        %v4313 = vsub.f32 %v4311, %v4312
        %v4314 = vsub.f32 %v4288, %v4300
        %v4315 = vsub.f32 %v4289, %v4300
        %v4316 = vsub.f32 %v4290, %v4300
        %v4317 = vadd.f32 %v4313, 1e-06
        %v4318 = vrsqrt.pop %v4317
        %v4319 = vmul.f32 %v4314, %v4318
        %v4320 = vmul.f32 %v4315, %v4318
        %v4321 = vmul.f32 %v4316, %v4318
        %v4323 = vlaneseq
        %v4324 = vshrl.u32 %v4323, 7
        %v4325 = vsub.s32 0, %v4324
        %v4326 = vrot.slane %v4291, %v4325
        %v4327 = vlaneseq
        %v4328 = vshrl.u32 %v4327, 7
        %v4329 = vsub.s32 1, %v4328
        %v4330 = vrot.slane %v4291, %v4329
        %v4331 = vlaneseq
        %v4332 = vshrl.u32 %v4331, 7
        %v4333 = vsub.s32 2, %v4332
        %v4334 = vrot.slane %v4291, %v4333
        %v4338 = vmul.f32 %v4319, %v4326
        %v4339 = vmul.f32 %v4320, %v4330
        %v4340 = vmul.f32 %v4321, %v4334
        %v4342 = vlaneseq
        %v4343 = vshrl.u32 %v4342, 7
        %v4344 = vsub.s32 0, %v4343
        %v4345 = vrot.slane %v4292, %v4344
        %v4346 = vlaneseq
        %v4347 = vshrl.u32 %v4346, 7
        %v4348 = vsub.s32 1, %v4347
        %v4349 = vrot.slane %v4292, %v4348
        %v4350 = vlaneseq
        %v4351 = vshrl.u32 %v4350, 7
        %v4352 = vsub.s32 2, %v4351
        %v4353 = vrot.slane %v4292, %v4352
        %v4357 = vadd.f32 %v4338, %v4345
        %v4358 = vadd.f32 %v4339, %v4349
        %v4359 = vadd.f32 %v4340, %v4353
        %v4360 = vpack.c.bf16 %v4357, %v4357
        %v4361 = vpack.c.bf16 %v4358, %v4358
        %v4362 = vpack.c.bf16 %v4359, %v4359
        %v4363 = vld [vmem:[%s866] sm:$0xff]
        %v4364 = vld [vmem:[%s866 + $0x8] sm:$0xff]
        %v4365 = vld [vmem:[%s866 + $0x10] sm:$0xff]
        %v4366 = vld [vmem:[%s866 + $0x18] sm:$0xff]
        %v4367 = vld [vmem:[%s866 + $0x20] sm:$0xff]
        %v4368 = vld [vmem:[%s866 + $0x28] sm:$0xff]
        %v4369 = vld [vmem:[%s866 + $0x30] sm:$0xff]
        %v4370 = vld [vmem:[%s866 + $0x38] sm:$0xff]
        %v4371 = vld [vmem:[%s866 + $0x40] sm:$0xff]
        %v4372 = vld [vmem:[%s866 + $0x48] sm:$0xff]
        %v4373 = vld [vmem:[%s866 + $0x50] sm:$0xff]
        %v4374 = vld [vmem:[%s866 + $0x58] sm:$0xff]
        %v4375 = vld [vmem:[%s866 + $0x60] sm:$0xff]
        %v4376 = vld [vmem:[%s866 + $0x68] sm:$0xff]
        %v4377 = vld [vmem:[%s866 + $0x70] sm:$0xff]
        %v4378 = vld [vmem:[%s866 + $0x78] sm:$0xff]
        %v4379 = vld [vmem:[%s866 + $0x80] sm:$0xff]
        %v4380 = vld [vmem:[%s866 + $0x88] sm:$0xff]
        %v4381 = vld [vmem:[%s866 + $0x90] sm:$0xff]
        %v4382 = vld [vmem:[%s866 + $0x98] sm:$0xff]
        %v4383 = vld [vmem:[%s866 + $0xa0] sm:$0xff]
        %v4384 = vld [vmem:[%s866 + $0xa8] sm:$0xff]
        %v4385 = vld [vmem:[%s866 + $0xb0] sm:$0xff]
        %v4386 = vld [vmem:[%s866 + $0xb8] sm:$0xff]
        %v4387 = vld [vmem:[%s866 + $0xc0] sm:$0xff]
        %v4388 = vld [vmem:[%s866 + $0xc8] sm:$0xff]
        %v4389 = vld [vmem:[%s866 + $0xd0] sm:$0xff]
        %v4390 = vld [vmem:[%s866 + $0xd8] sm:$0xff]
        %v4391 = vld [vmem:[%s866 + $0xe0] sm:$0xff]
        %v4392 = vld [vmem:[%s866 + $0xe8] sm:$0xff]
        %v4393 = vld [vmem:[%s866 + $0xf0] sm:$0xff]
        %v4394 = vld [vmem:[%s866 + $0xf8] sm:$0xff]
        %v4395 = vld [vmem:[%s866 + $0x100] sm:$0xff]
        %v4396 = vld [vmem:[%s866 + $0x108] sm:$0xff]
        %v4397 = vld [vmem:[%s866 + $0x110] sm:$0xff]
        %v4398 = vld [vmem:[%s866 + $0x118] sm:$0xff]
        %v4399 = vld [vmem:[%s866 + $0x120] sm:$0xff]
        %v4400 = vld [vmem:[%s866 + $0x128] sm:$0xff]
        %v4401 = vld [vmem:[%s866 + $0x130] sm:$0xff]
        %v4402 = vld [vmem:[%s866 + $0x138] sm:$0xff]
        %v4403 = vld [vmem:[%s866 + $0x140] sm:$0xff]
        %v4404 = vld [vmem:[%s866 + $0x148] sm:$0xff]
        %v4405 = vld [vmem:[%s866 + $0x150] sm:$0xff]
        %v4406 = vld [vmem:[%s866 + $0x158] sm:$0xff]
        %v4407 = vld [vmem:[%s866 + $0x160] sm:$0xff]
        %v4408 = vld [vmem:[%s866 + $0x168] sm:$0xff]
        %v4409 = vld [vmem:[%s866 + $0x170] sm:$0xff]
        %v4410 = vld [vmem:[%s866 + $0x178] sm:$0xff]
        %v4411 = vld [vmem:[%s866 + $0x180] sm:$0xff]
        %v4412 = vld [vmem:[%s866 + $0x188] sm:$0xff]
        %v4413 = vld [vmem:[%s866 + $0x190] sm:$0xff]
        %v4414 = vld [vmem:[%s866 + $0x198] sm:$0xff]
        %v4415 = vld [vmem:[%s866 + $0x1a0] sm:$0xff]
        %v4416 = vld [vmem:[%s866 + $0x1a8] sm:$0xff]
        %v4417 = vld [vmem:[%s866 + $0x1b0] sm:$0xff]
        %v4418 = vld [vmem:[%s866 + $0x1b8] sm:$0xff]
        %v4419 = vld [vmem:[%s866 + $0x1c0] sm:$0xff]
        %v4420 = vld [vmem:[%s866 + $0x1c8] sm:$0xff]
        %v4421 = vld [vmem:[%s866 + $0x1d0] sm:$0xff]
        %v4422 = vld [vmem:[%s866 + $0x1d8] sm:$0xff]
        %v4423 = vld [vmem:[%s866 + $0x1e0] sm:$0xff]
        %v4424 = vld [vmem:[%s866 + $0x1e8] sm:$0xff]
        %v4425 = vld [vmem:[%s866 + $0x1f0] sm:$0xff]
        %v4426 = vld [vmem:[%s866 + $0x1f8] sm:$0xff]
        %v4427 = vld [vmem:[%s866 + $0x200] sm:$0xff]
        %v4428 = vld [vmem:[%s866 + $0x208] sm:$0xff]
        %v4429 = vld [vmem:[%s866 + $0x210] sm:$0xff]
        %v4430 = vld [vmem:[%s866 + $0x218] sm:$0xff]
        %v4431 = vld [vmem:[%s866 + $0x220] sm:$0xff]
        %v4432 = vld [vmem:[%s866 + $0x228] sm:$0xff]
        %v4433 = vld [vmem:[%s866 + $0x230] sm:$0xff]
        %v4434 = vld [vmem:[%s866 + $0x238] sm:$0xff]
        %v4435 = vld [vmem:[%s866 + $0x240] sm:$0xff]
        %v4436 = vld [vmem:[%s866 + $0x248] sm:$0xff]
        %v4437 = vld [vmem:[%s866 + $0x250] sm:$0xff]
        %v4438 = vld [vmem:[%s866 + $0x258] sm:$0xff]
        %v4439 = vld [vmem:[%s866 + $0x260] sm:$0xff]
        %v4440 = vld [vmem:[%s866 + $0x268] sm:$0xff]
        %v4441 = vld [vmem:[%s866 + $0x270] sm:$0xff]
        %v4442 = vld [vmem:[%s866 + $0x278] sm:$0xff]
        %v4443 = vld [vmem:[%s866 + $0x280] sm:$0xff]
        %v4444 = vld [vmem:[%s866 + $0x288] sm:$0xff]
        %v4445 = vld [vmem:[%s866 + $0x290] sm:$0xff]
        %v4446 = vld [vmem:[%s866 + $0x298] sm:$0xff]
        %v4447 = vld [vmem:[%s866 + $0x2a0] sm:$0xff]
        %v4448 = vld [vmem:[%s866 + $0x2a8] sm:$0xff]
        %v4449 = vld [vmem:[%s866 + $0x2b0] sm:$0xff]
        %v4450 = vld [vmem:[%s866 + $0x2b8] sm:$0xff]
        %v4451 = vld [vmem:[%s866 + $0x2c0] sm:$0xff]
        %v4452 = vld [vmem:[%s866 + $0x2c8] sm:$0xff]
        %v4453 = vld [vmem:[%s866 + $0x2d0] sm:$0xff]
        %v4454 = vld [vmem:[%s866 + $0x2d8] sm:$0xff]
        %v4455 = vld [vmem:[%s866 + $0x2e0] sm:$0xff]
        %v4456 = vld [vmem:[%s866 + $0x2e8] sm:$0xff]
        %v4457 = vld [vmem:[%s866 + $0x2f0] sm:$0xff]
        %v4458 = vld [vmem:[%s866 + $0x2f8] sm:$0xff]
        %v4459 = vld [vmem:[%s866 + $0x300] sm:$0xff]
        %v4460 = vld [vmem:[%s866 + $0x308] sm:$0xff]
        %v4461 = vld [vmem:[%s866 + $0x310] sm:$0xff]
        %v4462 = vld [vmem:[%s866 + $0x318] sm:$0xff]
        %v4463 = vld [vmem:[%s866 + $0x320] sm:$0xff]
        %v4464 = vld [vmem:[%s866 + $0x328] sm:$0xff]
        %v4465 = vld [vmem:[%s866 + $0x330] sm:$0xff]
        %v4466 = vld [vmem:[%s866 + $0x338] sm:$0xff]
        %v4467 = vld [vmem:[%s866 + $0x340] sm:$0xff]
        %v4468 = vld [vmem:[%s866 + $0x348] sm:$0xff]
        %v4469 = vld [vmem:[%s866 + $0x350] sm:$0xff]
        %v4470 = vld [vmem:[%s866 + $0x358] sm:$0xff]
        %v4471 = vld [vmem:[%s866 + $0x360] sm:$0xff]
        %v4472 = vld [vmem:[%s866 + $0x368] sm:$0xff]
        %v4473 = vld [vmem:[%s866 + $0x370] sm:$0xff]
        %v4474 = vld [vmem:[%s866 + $0x378] sm:$0xff]
        %v4475 = vld [vmem:[%s866 + $0x380] sm:$0xff]
        %v4476 = vld [vmem:[%s866 + $0x388] sm:$0xff]
        %v4477 = vld [vmem:[%s866 + $0x390] sm:$0xff]
        %v4478 = vld [vmem:[%s866 + $0x398] sm:$0xff]
        %v4479 = vld [vmem:[%s866 + $0x3a0] sm:$0xff]
        %v4480 = vld [vmem:[%s866 + $0x3a8] sm:$0xff]
        %v4481 = vld [vmem:[%s866 + $0x3b0] sm:$0xff]
        %v4482 = vld [vmem:[%s866 + $0x3b8] sm:$0xff]
        %v4483 = vld [vmem:[%s866 + $0x3c0] sm:$0xff]
        %v4484 = vld [vmem:[%s866 + $0x3c8] sm:$0xff]
        %v4485 = vld [vmem:[%s866 + $0x3d0] sm:$0xff]
        %v4486 = vld [vmem:[%s866 + $0x3d8] sm:$0xff]
        %v4487 = vld [vmem:[%s866 + $0x3e0] sm:$0xff]
        %v4488 = vld [vmem:[%s866 + $0x3e8] sm:$0xff]
        %v4489 = vld [vmem:[%s866 + $0x3f0] sm:$0xff]
        %v4490 = vld [vmem:[%s866 + $0x3f8] sm:$0xff]
        %v4491 = vld [vmem:[%s866 + $0x400] sm:$0xff]
        %v4492 = vld [vmem:[%s866 + $0x408] sm:$0xff]
        %v4493 = vld [vmem:[%s866 + $0x410] sm:$0xff]
        %v4494 = vld [vmem:[%s866 + $0x418] sm:$0xff]
        %v4495 = vld [vmem:[%s866 + $0x420] sm:$0xff]
        %v4496 = vld [vmem:[%s866 + $0x428] sm:$0xff]
        %v4497 = vld [vmem:[%s866 + $0x430] sm:$0xff]
        %v4498 = vld [vmem:[%s866 + $0x438] sm:$0xff]
        %v4499 = vld [vmem:[%s866 + $0x440] sm:$0xff]
        %v4500 = vld [vmem:[%s866 + $0x448] sm:$0xff]
        %v4501 = vld [vmem:[%s866 + $0x450] sm:$0xff]
        %v4502 = vld [vmem:[%s866 + $0x458] sm:$0xff]
        %v4503 = vld [vmem:[%s866 + $0x460] sm:$0xff]
        %v4504 = vld [vmem:[%s866 + $0x468] sm:$0xff]
        %v4505 = vld [vmem:[%s866 + $0x470] sm:$0xff]
        %v4506 = vld [vmem:[%s866 + $0x478] sm:$0xff]
        %v4507 = vld [vmem:[%s866 + $0x480] sm:$0xff]
        %v4508 = vld [vmem:[%s866 + $0x488] sm:$0xff]
        %v4509 = vld [vmem:[%s866 + $0x490] sm:$0xff]
        %v4510 = vld [vmem:[%s866 + $0x498] sm:$0xff]
        %v4511 = vld [vmem:[%s866 + $0x4a0] sm:$0xff]
        %v4512 = vld [vmem:[%s866 + $0x4a8] sm:$0xff]
        %v4513 = vld [vmem:[%s866 + $0x4b0] sm:$0xff]
        %v4514 = vld [vmem:[%s866 + $0x4b8] sm:$0xff]
        %v4515 = vld [vmem:[%s866 + $0x4c0] sm:$0xff]
        %v4516 = vld [vmem:[%s866 + $0x4c8] sm:$0xff]
        %v4517 = vld [vmem:[%s866 + $0x4d0] sm:$0xff]
        %v4518 = vld [vmem:[%s866 + $0x4d8] sm:$0xff]
        %v4519 = vld [vmem:[%s866 + $0x4e0] sm:$0xff]
        %v4520 = vld [vmem:[%s866 + $0x4e8] sm:$0xff]
        %v4521 = vld [vmem:[%s866 + $0x4f0] sm:$0xff]
        %v4522 = vld [vmem:[%s866 + $0x4f8] sm:$0xff]
        %v4523 = vld [vmem:[%s866 + $0x500] sm:$0xff]
        %v4524 = vld [vmem:[%s866 + $0x508] sm:$0xff]
        %v4525 = vld [vmem:[%s866 + $0x510] sm:$0xff]
        %v4526 = vld [vmem:[%s866 + $0x518] sm:$0xff]
        %v4527 = vld [vmem:[%s866 + $0x520] sm:$0xff]
        %v4528 = vld [vmem:[%s866 + $0x528] sm:$0xff]
        %v4529 = vld [vmem:[%s866 + $0x530] sm:$0xff]
        %v4530 = vld [vmem:[%s866 + $0x538] sm:$0xff]
        %v4531 = vld [vmem:[%s866 + $0x540] sm:$0xff]
        %v4532 = vld [vmem:[%s866 + $0x548] sm:$0xff]
        %v4533 = vld [vmem:[%s866 + $0x550] sm:$0xff]
        %v4534 = vld [vmem:[%s866 + $0x558] sm:$0xff]
        %v4535 = vld [vmem:[%s866 + $0x560] sm:$0xff]
        %v4536 = vld [vmem:[%s866 + $0x568] sm:$0xff]
        %v4537 = vld [vmem:[%s866 + $0x570] sm:$0xff]
        %v4538 = vld [vmem:[%s866 + $0x578] sm:$0xff]
        %v4539 = vld [vmem:[%s866 + $0x580] sm:$0xff]
        %v4540 = vld [vmem:[%s866 + $0x588] sm:$0xff]
        %v4541 = vld [vmem:[%s866 + $0x590] sm:$0xff]
        %v4542 = vld [vmem:[%s866 + $0x598] sm:$0xff]
        %v4543 = vld [vmem:[%s866 + $0x5a0] sm:$0xff]
        %v4544 = vld [vmem:[%s866 + $0x5a8] sm:$0xff]
        %v4545 = vld [vmem:[%s866 + $0x5b0] sm:$0xff]
        %v4546 = vld [vmem:[%s866 + $0x5b8] sm:$0xff]
        %v4547 = vld [vmem:[%s866 + $0x5c0] sm:$0xff]
        %v4548 = vld [vmem:[%s866 + $0x5c8] sm:$0xff]
        %v4549 = vld [vmem:[%s866 + $0x5d0] sm:$0xff]
        %v4550 = vld [vmem:[%s866 + $0x5d8] sm:$0xff]
        %v4551 = vld [vmem:[%s866 + $0x5e0] sm:$0xff]
        %v4552 = vld [vmem:[%s866 + $0x5e8] sm:$0xff]
        %v4553 = vld [vmem:[%s866 + $0x5f0] sm:$0xff]
        %v4554 = vld [vmem:[%s866 + $0x5f8] sm:$0xff]
        %v4555 = vld [vmem:[%s866 + $0x600] sm:$0xff]
        %v4556 = vld [vmem:[%s866 + $0x608] sm:$0xff]
        %v4557 = vld [vmem:[%s866 + $0x610] sm:$0xff]
        %v4558 = vld [vmem:[%s866 + $0x618] sm:$0xff]
        %v4559 = vld [vmem:[%s866 + $0x620] sm:$0xff]
        %v4560 = vld [vmem:[%s866 + $0x628] sm:$0xff]
        %v4561 = vld [vmem:[%s866 + $0x630] sm:$0xff]
        %v4562 = vld [vmem:[%s866 + $0x638] sm:$0xff]
        %v4563 = vld [vmem:[%s866 + $0x640] sm:$0xff]
        %v4564 = vld [vmem:[%s866 + $0x648] sm:$0xff]
        %v4565 = vld [vmem:[%s866 + $0x650] sm:$0xff]
        %v4566 = vld [vmem:[%s866 + $0x658] sm:$0xff]
        %v4567 = vld [vmem:[%s866 + $0x660] sm:$0xff]
        %v4568 = vld [vmem:[%s866 + $0x668] sm:$0xff]
        %v4569 = vld [vmem:[%s866 + $0x670] sm:$0xff]
        %v4570 = vld [vmem:[%s866 + $0x678] sm:$0xff]
        %v4571 = vld [vmem:[%s866 + $0x680] sm:$0xff]
        %v4572 = vld [vmem:[%s866 + $0x688] sm:$0xff]
        %v4573 = vld [vmem:[%s866 + $0x690] sm:$0xff]
        %v4574 = vld [vmem:[%s866 + $0x698] sm:$0xff]
        %v4575 = vld [vmem:[%s866 + $0x6a0] sm:$0xff]
        %v4576 = vld [vmem:[%s866 + $0x6a8] sm:$0xff]
        %v4577 = vld [vmem:[%s866 + $0x6b0] sm:$0xff]
        %v4578 = vld [vmem:[%s866 + $0x6b8] sm:$0xff]
        %v4579 = vld [vmem:[%s866 + $0x6c0] sm:$0xff]
        %v4580 = vld [vmem:[%s866 + $0x6c8] sm:$0xff]
        %v4581 = vld [vmem:[%s866 + $0x6d0] sm:$0xff]
        %v4582 = vld [vmem:[%s866 + $0x6d8] sm:$0xff]
        %v4583 = vld [vmem:[%s866 + $0x6e0] sm:$0xff]
        %v4584 = vld [vmem:[%s866 + $0x6e8] sm:$0xff]
        %v4585 = vld [vmem:[%s866 + $0x6f0] sm:$0xff]
        %v4586 = vld [vmem:[%s866 + $0x6f8] sm:$0xff]
        %v4587 = vld [vmem:[%s866 + $0x700] sm:$0xff]
        %v4588 = vld [vmem:[%s866 + $0x708] sm:$0xff]
        %v4589 = vld [vmem:[%s866 + $0x710] sm:$0xff]
        %v4590 = vld [vmem:[%s866 + $0x718] sm:$0xff]
        %v4591 = vld [vmem:[%s866 + $0x720] sm:$0xff]
        %v4592 = vld [vmem:[%s866 + $0x728] sm:$0xff]
        %v4593 = vld [vmem:[%s866 + $0x730] sm:$0xff]
        %v4594 = vld [vmem:[%s866 + $0x738] sm:$0xff]
        %v4595 = vld [vmem:[%s866 + $0x740] sm:$0xff]
        %v4596 = vld [vmem:[%s866 + $0x748] sm:$0xff]
        %v4597 = vld [vmem:[%s866 + $0x750] sm:$0xff]
        %v4598 = vld [vmem:[%s866 + $0x758] sm:$0xff]
        %v4599 = vld [vmem:[%s866 + $0x760] sm:$0xff]
        %v4600 = vld [vmem:[%s866 + $0x768] sm:$0xff]
        %v4601 = vld [vmem:[%s866 + $0x770] sm:$0xff]
        %v4602 = vld [vmem:[%s866 + $0x778] sm:$0xff]
        %v4603 = vld [vmem:[%s866 + $0x780] sm:$0xff]
        %v4604 = vld [vmem:[%s866 + $0x788] sm:$0xff]
        %v4605 = vld [vmem:[%s866 + $0x790] sm:$0xff]
        %v4606 = vld [vmem:[%s866 + $0x798] sm:$0xff]
        %v4607 = vld [vmem:[%s866 + $0x7a0] sm:$0xff]
        %v4608 = vld [vmem:[%s866 + $0x7a8] sm:$0xff]
        %v4609 = vld [vmem:[%s866 + $0x7b0] sm:$0xff]
        %v4610 = vld [vmem:[%s866 + $0x7b8] sm:$0xff]
        %v4611 = vld [vmem:[%s866 + $0x7c0] sm:$0xff]
        %v4612 = vld [vmem:[%s866 + $0x7c8] sm:$0xff]
        %v4613 = vld [vmem:[%s866 + $0x7d0] sm:$0xff]
        %v4614 = vld [vmem:[%s866 + $0x7d8] sm:$0xff]
        %v4615 = vld [vmem:[%s866 + $0x7e0] sm:$0xff]
        %v4616 = vld [vmem:[%s866 + $0x7e8] sm:$0xff]
        %v4617 = vld [vmem:[%s866 + $0x7f0] sm:$0xff]
        %v4618 = vld [vmem:[%s866 + $0x7f8] sm:$0xff]
        %v4619 = vld [vmem:[%s866 + $0x800] sm:$0xff]
        %v4620 = vld [vmem:[%s866 + $0x808] sm:$0xff]
        %v4621 = vld [vmem:[%s866 + $0x810] sm:$0xff]
        %v4622 = vld [vmem:[%s866 + $0x818] sm:$0xff]
        %v4623 = vld [vmem:[%s866 + $0x820] sm:$0xff]
        %v4624 = vld [vmem:[%s866 + $0x828] sm:$0xff]
        %v4625 = vld [vmem:[%s866 + $0x830] sm:$0xff]
        %v4626 = vld [vmem:[%s866 + $0x838] sm:$0xff]
        %v4627 = vld [vmem:[%s866 + $0x840] sm:$0xff]
        %v4628 = vld [vmem:[%s866 + $0x848] sm:$0xff]
        %v4629 = vld [vmem:[%s866 + $0x850] sm:$0xff]
        %v4630 = vld [vmem:[%s866 + $0x858] sm:$0xff]
        %v4631 = vld [vmem:[%s866 + $0x860] sm:$0xff]
        %v4632 = vld [vmem:[%s866 + $0x868] sm:$0xff]
        %v4633 = vld [vmem:[%s866 + $0x870] sm:$0xff]
        %v4634 = vld [vmem:[%s866 + $0x878] sm:$0xff]
        %v4635 = vld [vmem:[%s866 + $0x880] sm:$0xff]
        %v4636 = vld [vmem:[%s866 + $0x888] sm:$0xff]
        %v4637 = vld [vmem:[%s866 + $0x890] sm:$0xff]
        %v4638 = vld [vmem:[%s866 + $0x898] sm:$0xff]
        %v4639 = vld [vmem:[%s866 + $0x8a0] sm:$0xff]
        %v4640 = vld [vmem:[%s866 + $0x8a8] sm:$0xff]
        %v4641 = vld [vmem:[%s866 + $0x8b0] sm:$0xff]
        %v4642 = vld [vmem:[%s866 + $0x8b8] sm:$0xff]
        %v4643 = vld [vmem:[%s866 + $0x8c0] sm:$0xff]
        %v4644 = vld [vmem:[%s866 + $0x8c8] sm:$0xff]
        %v4645 = vld [vmem:[%s866 + $0x8d0] sm:$0xff]
        %v4646 = vld [vmem:[%s866 + $0x8d8] sm:$0xff]
        %v4647 = vld [vmem:[%s866 + $0x8e0] sm:$0xff]
        %v4648 = vld [vmem:[%s866 + $0x8e8] sm:$0xff]
        %v4649 = vld [vmem:[%s866 + $0x8f0] sm:$0xff]
        %v4650 = vld [vmem:[%s866 + $0x8f8] sm:$0xff]
        %v4651 = vld [vmem:[%s875] sm:$0xff]
        %v4652 = vld [vmem:[%s875 + $0x8] sm:$0xf]
        %v4655 = vlaneseq
        %v4656 = vshrl.u32 %v4655, 7
        %v4657 = vsub.s32 0, %v4656
        %v4658 = vrot.slane %v4651, %v4657
        %v4659 = vlaneseq
        %v4660 = vshrl.u32 %v4659, 7
        %v4661 = vsub.s32 1, %v4660
        %v4662 = vrot.slane %v4651, %v4661
        %v4663 = vlaneseq
        %v4664 = vshrl.u32 %v4663, 7
        %v4665 = vsub.s32 2, %v4664
        %v4666 = vrot.slane %v4651, %v4665
        %v4667 = vlaneseq
        %v4668 = vshrl.u32 %v4667, 7
        %v4669 = vsub.s32 3, %v4668
        %v4670 = vrot.slane %v4651, %v4669
        %v4671 = vlaneseq
        %v4672 = vshrl.u32 %v4671, 7
        %v4673 = vsub.s32 4, %v4672
        %v4674 = vrot.slane %v4651, %v4673
        %v4675 = vlaneseq
        %v4676 = vshrl.u32 %v4675, 7
        %v4677 = vsub.s32 5, %v4676
        %v4678 = vrot.slane %v4651, %v4677
        %v4679 = vlaneseq
        %v4680 = vshrl.u32 %v4679, 7
        %v4681 = vsub.s32 6, %v4680
        %v4682 = vrot.slane %v4651, %v4681
        %v4683 = vlaneseq
        %v4684 = vshrl.u32 %v4683, 7
        %v4685 = vsub.s32 7, %v4684
        %v4686 = vrot.slane %v4651, %v4685
        %v4687 = vlaneseq
        %v4688 = vshrl.u32 %v4687, 7
        %v4689 = vsub.s32 0, %v4688
        %v4690 = vrot.slane %v4652, %v4689
        %v4691 = vlaneseq
        %v4692 = vshrl.u32 %v4691, 7
        %v4693 = vsub.s32 1, %v4692
        %v4694 = vrot.slane %v4652, %v4693
        %v4695 = vlaneseq
        %v4696 = vshrl.u32 %v4695, 7
        %v4697 = vsub.s32 2, %v4696
        %v4698 = vrot.slane %v4652, %v4697
        %v4699 = vlaneseq
        %v4700 = vshrl.u32 %v4699, 7
        %v4701 = vsub.s32 3, %v4700
        %v4702 = vrot.slane %v4652, %v4701
        %v5003 = vunpack.c.l.b16 %v4363
        %v5004 = vunpack.c.h.b16 %v4363
        %v5005 = vunpack.c.l.b16 %v4364
        %v5006 = vunpack.c.h.b16 %v4364
        %v5007 = vunpack.c.l.b16 %v4365
        %v5008 = vunpack.c.h.b16 %v4365
        %v5009 = vunpack.c.l.b16 %v4366
        %v5010 = vunpack.c.h.b16 %v4366
        %v5011 = vunpack.c.l.b16 %v4367
        %v5012 = vunpack.c.h.b16 %v4367
        %v5013 = vunpack.c.l.b16 %v4368
        %v5014 = vunpack.c.h.b16 %v4368
        %v5015 = vunpack.c.l.b16 %v4369
        %v5016 = vunpack.c.h.b16 %v4369
        %v5017 = vunpack.c.l.b16 %v4370
        %v5018 = vunpack.c.h.b16 %v4370
        %v5019 = vunpack.c.l.b16 %v4371
        %v5020 = vunpack.c.h.b16 %v4371
        %v5021 = vunpack.c.l.b16 %v4372
        %v5022 = vunpack.c.h.b16 %v4372
        %v5023 = vunpack.c.l.b16 %v4373
        %v5024 = vunpack.c.h.b16 %v4373
        %v5025 = vunpack.c.l.b16 %v4374
        %v5026 = vunpack.c.h.b16 %v4374
        %v5027 = vunpack.c.l.b16 %v4375
        %v5028 = vunpack.c.h.b16 %v4375
        %v5029 = vunpack.c.l.b16 %v4376
        %v5030 = vunpack.c.h.b16 %v4376
        %v5031 = vunpack.c.l.b16 %v4377
        %v5032 = vunpack.c.h.b16 %v4377
        %v5033 = vunpack.c.l.b16 %v4378
        %v5034 = vunpack.c.h.b16 %v4378
        %v5035 = vunpack.c.l.b16 %v4379
        %v5036 = vunpack.c.h.b16 %v4379
        %v5037 = vunpack.c.l.b16 %v4380
        %v5038 = vunpack.c.h.b16 %v4380
        %v5039 = vunpack.c.l.b16 %v4381
        %v5040 = vunpack.c.h.b16 %v4381
        %v5041 = vunpack.c.l.b16 %v4382
        %v5042 = vunpack.c.h.b16 %v4382
        %v5043 = vunpack.c.l.b16 %v4383
        %v5044 = vunpack.c.h.b16 %v4383
        %v5045 = vunpack.c.l.b16 %v4384
        %v5046 = vunpack.c.h.b16 %v4384
        %v5047 = vunpack.c.l.b16 %v4385
        %v5048 = vunpack.c.h.b16 %v4385
        %v5049 = vunpack.c.l.b16 %v4386
        %v5050 = vunpack.c.h.b16 %v4386
        %v5051 = vunpack.c.l.b16 %v4387
        %v5052 = vunpack.c.h.b16 %v4387
        %v5053 = vunpack.c.l.b16 %v4388
        %v5054 = vunpack.c.h.b16 %v4388
        %v5055 = vunpack.c.l.b16 %v4389
        %v5056 = vunpack.c.h.b16 %v4389
        %v5057 = vunpack.c.l.b16 %v4390
        %v5058 = vunpack.c.h.b16 %v4390
        %v5059 = vunpack.c.l.b16 %v4391
        %v5060 = vunpack.c.h.b16 %v4391
        %v5061 = vunpack.c.l.b16 %v4392
        %v5062 = vunpack.c.h.b16 %v4392
        %v5063 = vunpack.c.l.b16 %v4393
        %v5064 = vunpack.c.h.b16 %v4393
        %v5065 = vunpack.c.l.b16 %v4394
        %v5066 = vunpack.c.h.b16 %v4394
        %v5067 = vunpack.c.l.b16 %v4395
        %v5068 = vunpack.c.h.b16 %v4395
        %v5069 = vunpack.c.l.b16 %v4396
        %v5070 = vunpack.c.h.b16 %v4396
        %v5071 = vunpack.c.l.b16 %v4397
        %v5072 = vunpack.c.h.b16 %v4397
        %v5073 = vunpack.c.l.b16 %v4398
        %v5074 = vunpack.c.h.b16 %v4398
        %v5075 = vunpack.c.l.b16 %v4399
        %v5076 = vunpack.c.h.b16 %v4399
        %v5077 = vunpack.c.l.b16 %v4400
        %v5078 = vunpack.c.h.b16 %v4400
        %v5079 = vunpack.c.l.b16 %v4401
        %v5080 = vunpack.c.h.b16 %v4401
        %v5081 = vunpack.c.l.b16 %v4402
        %v5082 = vunpack.c.h.b16 %v4402
        %v5083 = vunpack.c.l.b16 %v4403
        %v5084 = vunpack.c.h.b16 %v4403
        %v5085 = vunpack.c.l.b16 %v4404
        %v5086 = vunpack.c.h.b16 %v4404
        %v5087 = vunpack.c.l.b16 %v4405
        %v5088 = vunpack.c.h.b16 %v4405
        %v5089 = vunpack.c.l.b16 %v4406
        %v5090 = vunpack.c.h.b16 %v4406
        %v5091 = vunpack.c.l.b16 %v4407
        %v5092 = vunpack.c.h.b16 %v4407
        %v5093 = vunpack.c.l.b16 %v4408
        %v5094 = vunpack.c.h.b16 %v4408
        %v5095 = vunpack.c.l.b16 %v4409
        %v5096 = vunpack.c.h.b16 %v4409
        %v5097 = vunpack.c.l.b16 %v4410
        %v5098 = vunpack.c.h.b16 %v4410
        %v5099 = vunpack.c.l.b16 %v4411
        %v5100 = vunpack.c.h.b16 %v4411
        %v5101 = vunpack.c.l.b16 %v4412
        %v5102 = vunpack.c.h.b16 %v4412
        %v5103 = vunpack.c.l.b16 %v4413
        %v5104 = vunpack.c.h.b16 %v4413
        %v5105 = vunpack.c.l.b16 %v4414
        %v5106 = vunpack.c.h.b16 %v4414
        %v5107 = vunpack.c.l.b16 %v4415
        %v5108 = vunpack.c.h.b16 %v4415
        %v5109 = vunpack.c.l.b16 %v4416
        %v5110 = vunpack.c.h.b16 %v4416
        %v5111 = vunpack.c.l.b16 %v4417
        %v5112 = vunpack.c.h.b16 %v4417
        %v5113 = vunpack.c.l.b16 %v4418
        %v5114 = vunpack.c.h.b16 %v4418
        %v5115 = vunpack.c.l.b16 %v4419
        %v5116 = vunpack.c.h.b16 %v4419
        %v5117 = vunpack.c.l.b16 %v4420
        %v5118 = vunpack.c.h.b16 %v4420
        %v5119 = vunpack.c.l.b16 %v4421
        %v5120 = vunpack.c.h.b16 %v4421
        %v5121 = vunpack.c.l.b16 %v4422
        %v5122 = vunpack.c.h.b16 %v4422
        %v5123 = vunpack.c.l.b16 %v4423
        %v5124 = vunpack.c.h.b16 %v4423
        %v5125 = vunpack.c.l.b16 %v4424
        %v5126 = vunpack.c.h.b16 %v4424
        %v5127 = vunpack.c.l.b16 %v4425
        %v5128 = vunpack.c.h.b16 %v4425
        %v5129 = vunpack.c.l.b16 %v4426
        %v5130 = vunpack.c.h.b16 %v4426
        %v5131 = vunpack.c.l.b16 %v4427
        %v5132 = vunpack.c.h.b16 %v4427
        %v5133 = vunpack.c.l.b16 %v4428
        %v5134 = vunpack.c.h.b16 %v4428
        %v5135 = vunpack.c.l.b16 %v4429
        %v5136 = vunpack.c.h.b16 %v4429
        %v5137 = vunpack.c.l.b16 %v4430
        %v5138 = vunpack.c.h.b16 %v4430
        %v5139 = vunpack.c.l.b16 %v4431
        %v5140 = vunpack.c.h.b16 %v4431
        %v5141 = vunpack.c.l.b16 %v4432
        %v5142 = vunpack.c.h.b16 %v4432
        %v5143 = vunpack.c.l.b16 %v4433
        %v5144 = vunpack.c.h.b16 %v4433
        %v5145 = vunpack.c.l.b16 %v4434
        %v5146 = vunpack.c.h.b16 %v4434
        %v5147 = vunpack.c.l.b16 %v4435
        %v5148 = vunpack.c.h.b16 %v4435
        %v5149 = vunpack.c.l.b16 %v4436
        %v5150 = vunpack.c.h.b16 %v4436
        %v5151 = vunpack.c.l.b16 %v4437
        %v5152 = vunpack.c.h.b16 %v4437
        %v5153 = vunpack.c.l.b16 %v4438
        %v5154 = vunpack.c.h.b16 %v4438
        %v5155 = vunpack.c.l.b16 %v4439
        %v5156 = vunpack.c.h.b16 %v4439
        %v5157 = vunpack.c.l.b16 %v4440
        %v5158 = vunpack.c.h.b16 %v4440
        %v5159 = vunpack.c.l.b16 %v4441
        %v5160 = vunpack.c.h.b16 %v4441
        %v5161 = vunpack.c.l.b16 %v4442
        %v5162 = vunpack.c.h.b16 %v4442
        %v5163 = vunpack.c.l.b16 %v4443
        %v5164 = vunpack.c.h.b16 %v4443
        %v5165 = vunpack.c.l.b16 %v4444
        %v5166 = vunpack.c.h.b16 %v4444
        %v5167 = vunpack.c.l.b16 %v4445
        %v5168 = vunpack.c.h.b16 %v4445
        %v5169 = vunpack.c.l.b16 %v4446
        %v5170 = vunpack.c.h.b16 %v4446
        %v5171 = vunpack.c.l.b16 %v4447
        %v5172 = vunpack.c.h.b16 %v4447
        %v5173 = vunpack.c.l.b16 %v4448
        %v5174 = vunpack.c.h.b16 %v4448
        %v5175 = vunpack.c.l.b16 %v4449
        %v5176 = vunpack.c.h.b16 %v4449
        %v5177 = vunpack.c.l.b16 %v4450
        %v5178 = vunpack.c.h.b16 %v4450
        %v5179 = vunpack.c.l.b16 %v4451
        %v5180 = vunpack.c.h.b16 %v4451
        %v5181 = vunpack.c.l.b16 %v4452
        %v5182 = vunpack.c.h.b16 %v4452
        %v5183 = vunpack.c.l.b16 %v4453
        %v5184 = vunpack.c.h.b16 %v4453
        %v5185 = vunpack.c.l.b16 %v4454
        %v5186 = vunpack.c.h.b16 %v4454
        %v5187 = vunpack.c.l.b16 %v4455
        %v5188 = vunpack.c.h.b16 %v4455
        %v5189 = vunpack.c.l.b16 %v4456
        %v5190 = vunpack.c.h.b16 %v4456
        %v5191 = vunpack.c.l.b16 %v4457
        %v5192 = vunpack.c.h.b16 %v4457
        %v5193 = vunpack.c.l.b16 %v4458
        %v5194 = vunpack.c.h.b16 %v4458
        %v5195 = vunpack.c.l.b16 %v4459
        %v5196 = vunpack.c.h.b16 %v4459
        %v5197 = vunpack.c.l.b16 %v4460
        %v5198 = vunpack.c.h.b16 %v4460
        %v5199 = vunpack.c.l.b16 %v4461
        %v5200 = vunpack.c.h.b16 %v4461
        %v5201 = vunpack.c.l.b16 %v4462
        %v5202 = vunpack.c.h.b16 %v4462
        %v5203 = vunpack.c.l.b16 %v4463
        %v5204 = vunpack.c.h.b16 %v4463
        %v5205 = vunpack.c.l.b16 %v4464
        %v5206 = vunpack.c.h.b16 %v4464
        %v5207 = vunpack.c.l.b16 %v4465
        %v5208 = vunpack.c.h.b16 %v4465
        %v5209 = vunpack.c.l.b16 %v4466
        %v5210 = vunpack.c.h.b16 %v4466
        %v5211 = vunpack.c.l.b16 %v4467
        %v5212 = vunpack.c.h.b16 %v4467
        %v5213 = vunpack.c.l.b16 %v4468
        %v5214 = vunpack.c.h.b16 %v4468
        %v5215 = vunpack.c.l.b16 %v4469
        %v5216 = vunpack.c.h.b16 %v4469
        %v5217 = vunpack.c.l.b16 %v4470
        %v5218 = vunpack.c.h.b16 %v4470
        %v5219 = vunpack.c.l.b16 %v4471
        %v5220 = vunpack.c.h.b16 %v4471
        %v5221 = vunpack.c.l.b16 %v4472
        %v5222 = vunpack.c.h.b16 %v4472
        %v5223 = vunpack.c.l.b16 %v4473
        %v5224 = vunpack.c.h.b16 %v4473
        %v5225 = vunpack.c.l.b16 %v4474
        %v5226 = vunpack.c.h.b16 %v4474
        %v5227 = vunpack.c.l.b16 %v4475
        %v5228 = vunpack.c.h.b16 %v4475
        %v5229 = vunpack.c.l.b16 %v4476
        %v5230 = vunpack.c.h.b16 %v4476
        %v5231 = vunpack.c.l.b16 %v4477
        %v5232 = vunpack.c.h.b16 %v4477
        %v5233 = vunpack.c.l.b16 %v4478
        %v5234 = vunpack.c.h.b16 %v4478
        %v5235 = vunpack.c.l.b16 %v4479
        %v5236 = vunpack.c.h.b16 %v4479
        %v5237 = vunpack.c.l.b16 %v4480
        %v5238 = vunpack.c.h.b16 %v4480
        %v5239 = vunpack.c.l.b16 %v4481
        %v5240 = vunpack.c.h.b16 %v4481
        %v5241 = vunpack.c.l.b16 %v4482
        %v5242 = vunpack.c.h.b16 %v4482
        %v5243 = vunpack.c.l.b16 %v4483
        %v5244 = vunpack.c.h.b16 %v4483
        %v5245 = vunpack.c.l.b16 %v4484
        %v5246 = vunpack.c.h.b16 %v4484
        %v5247 = vunpack.c.l.b16 %v4485
        %v5248 = vunpack.c.h.b16 %v4485
        %v5249 = vunpack.c.l.b16 %v4486
        %v5250 = vunpack.c.h.b16 %v4486
        %v5251 = vunpack.c.l.b16 %v4487
        %v5252 = vunpack.c.h.b16 %v4487
        %v5253 = vunpack.c.l.b16 %v4488
        %v5254 = vunpack.c.h.b16 %v4488
        %v5255 = vunpack.c.l.b16 %v4489
        %v5256 = vunpack.c.h.b16 %v4489
        %v5257 = vunpack.c.l.b16 %v4490
        %v5258 = vunpack.c.h.b16 %v4490
        %v5259 = vunpack.c.l.b16 %v4491
        %v5260 = vunpack.c.h.b16 %v4491
        %v5261 = vunpack.c.l.b16 %v4492
        %v5262 = vunpack.c.h.b16 %v4492
        %v5263 = vunpack.c.l.b16 %v4493
        %v5264 = vunpack.c.h.b16 %v4493
        %v5265 = vunpack.c.l.b16 %v4494
        %v5266 = vunpack.c.h.b16 %v4494
        %v5267 = vunpack.c.l.b16 %v4495
        %v5268 = vunpack.c.h.b16 %v4495
        %v5269 = vunpack.c.l.b16 %v4496
        %v5270 = vunpack.c.h.b16 %v4496
        %v5271 = vunpack.c.l.b16 %v4497
        %v5272 = vunpack.c.h.b16 %v4497
        %v5273 = vunpack.c.l.b16 %v4498
        %v5274 = vunpack.c.h.b16 %v4498
        %v5275 = vunpack.c.l.b16 %v4499
        %v5276 = vunpack.c.h.b16 %v4499
        %v5277 = vunpack.c.l.b16 %v4500
        %v5278 = vunpack.c.h.b16 %v4500
        %v5279 = vunpack.c.l.b16 %v4501
        %v5280 = vunpack.c.h.b16 %v4501
        %v5281 = vunpack.c.l.b16 %v4502
        %v5282 = vunpack.c.h.b16 %v4502
        %v5283 = vunpack.c.l.b16 %v4503
        %v5284 = vunpack.c.h.b16 %v4503
        %v5285 = vunpack.c.l.b16 %v4504
        %v5286 = vunpack.c.h.b16 %v4504
        %v5287 = vunpack.c.l.b16 %v4505
        %v5288 = vunpack.c.h.b16 %v4505
        %v5289 = vunpack.c.l.b16 %v4506
        %v5290 = vunpack.c.h.b16 %v4506
        %v5291 = vunpack.c.l.b16 %v4507
        %v5292 = vunpack.c.h.b16 %v4507
        %v5293 = vunpack.c.l.b16 %v4508
        %v5294 = vunpack.c.h.b16 %v4508
        %v5295 = vunpack.c.l.b16 %v4509
        %v5296 = vunpack.c.h.b16 %v4509
        %v5297 = vunpack.c.l.b16 %v4510
        %v5298 = vunpack.c.h.b16 %v4510
        %v5299 = vunpack.c.l.b16 %v4511
        %v5300 = vunpack.c.h.b16 %v4511
        %v5301 = vunpack.c.l.b16 %v4512
        %v5302 = vunpack.c.h.b16 %v4512
        %v5303 = vunpack.c.l.b16 %v4513
        %v5304 = vunpack.c.h.b16 %v4513
        %v5305 = vunpack.c.l.b16 %v4514
        %v5306 = vunpack.c.h.b16 %v4514
        %v5307 = vunpack.c.l.b16 %v4515
        %v5308 = vunpack.c.h.b16 %v4515
        %v5309 = vunpack.c.l.b16 %v4516
        %v5310 = vunpack.c.h.b16 %v4516
        %v5311 = vunpack.c.l.b16 %v4517
        %v5312 = vunpack.c.h.b16 %v4517
        %v5313 = vunpack.c.l.b16 %v4518
        %v5314 = vunpack.c.h.b16 %v4518
        %v5315 = vunpack.c.l.b16 %v4519
        %v5316 = vunpack.c.h.b16 %v4519
        %v5317 = vunpack.c.l.b16 %v4520
        %v5318 = vunpack.c.h.b16 %v4520
        %v5319 = vunpack.c.l.b16 %v4521
        %v5320 = vunpack.c.h.b16 %v4521
        %v5321 = vunpack.c.l.b16 %v4522
        %v5322 = vunpack.c.h.b16 %v4522
        %v5323 = vunpack.c.l.b16 %v4523
        %v5324 = vunpack.c.h.b16 %v4523
        %v5325 = vunpack.c.l.b16 %v4524
        %v5326 = vunpack.c.h.b16 %v4524
        %v5327 = vunpack.c.l.b16 %v4525
        %v5328 = vunpack.c.h.b16 %v4525
        %v5329 = vunpack.c.l.b16 %v4526
        %v5330 = vunpack.c.h.b16 %v4526
        %v5331 = vunpack.c.l.b16 %v4527
        %v5332 = vunpack.c.h.b16 %v4527
        %v5333 = vunpack.c.l.b16 %v4528
        %v5334 = vunpack.c.h.b16 %v4528
        %v5335 = vunpack.c.l.b16 %v4529
        %v5336 = vunpack.c.h.b16 %v4529
        %v5337 = vunpack.c.l.b16 %v4530
        %v5338 = vunpack.c.h.b16 %v4530
        %v5339 = vunpack.c.l.b16 %v4531
        %v5340 = vunpack.c.h.b16 %v4531
        %v5341 = vunpack.c.l.b16 %v4532
        %v5342 = vunpack.c.h.b16 %v4532
        %v5343 = vunpack.c.l.b16 %v4533
        %v5344 = vunpack.c.h.b16 %v4533
        %v5345 = vunpack.c.l.b16 %v4534
        %v5346 = vunpack.c.h.b16 %v4534
        %v5347 = vunpack.c.l.b16 %v4535
        %v5348 = vunpack.c.h.b16 %v4535
        %v5349 = vunpack.c.l.b16 %v4536
        %v5350 = vunpack.c.h.b16 %v4536
        %v5351 = vunpack.c.l.b16 %v4537
        %v5352 = vunpack.c.h.b16 %v4537
        %v5353 = vunpack.c.l.b16 %v4538
        %v5354 = vunpack.c.h.b16 %v4538
        %v5355 = vunpack.c.l.b16 %v4539
        %v5356 = vunpack.c.h.b16 %v4539
        %v5357 = vunpack.c.l.b16 %v4540
        %v5358 = vunpack.c.h.b16 %v4540
        %v5359 = vunpack.c.l.b16 %v4541
        %v5360 = vunpack.c.h.b16 %v4541
        %v5361 = vunpack.c.l.b16 %v4542
        %v5362 = vunpack.c.h.b16 %v4542
        %v5363 = vunpack.c.l.b16 %v4543
        %v5364 = vunpack.c.h.b16 %v4543
        %v5365 = vunpack.c.l.b16 %v4544
        %v5366 = vunpack.c.h.b16 %v4544
        %v5367 = vunpack.c.l.b16 %v4545
        %v5368 = vunpack.c.h.b16 %v4545
        %v5369 = vunpack.c.l.b16 %v4546
        %v5370 = vunpack.c.h.b16 %v4546
        %v5371 = vunpack.c.l.b16 %v4547
        %v5372 = vunpack.c.h.b16 %v4547
        %v5373 = vunpack.c.l.b16 %v4548
        %v5374 = vunpack.c.h.b16 %v4548
        %v5375 = vunpack.c.l.b16 %v4549
        %v5376 = vunpack.c.h.b16 %v4549
        %v5377 = vunpack.c.l.b16 %v4550
        %v5378 = vunpack.c.h.b16 %v4550
        %v5379 = vunpack.c.l.b16 %v4551
        %v5380 = vunpack.c.h.b16 %v4551
        %v5381 = vunpack.c.l.b16 %v4552
        %v5382 = vunpack.c.h.b16 %v4552
        %v5383 = vunpack.c.l.b16 %v4553
        %v5384 = vunpack.c.h.b16 %v4553
        %v5385 = vunpack.c.l.b16 %v4554
        %v5386 = vunpack.c.h.b16 %v4554
        %v5387 = vunpack.c.l.b16 %v4555
        %v5388 = vunpack.c.h.b16 %v4555
        %v5389 = vunpack.c.l.b16 %v4556
        %v5390 = vunpack.c.h.b16 %v4556
        %v5391 = vunpack.c.l.b16 %v4557
        %v5392 = vunpack.c.h.b16 %v4557
        %v5393 = vunpack.c.l.b16 %v4558
        %v5394 = vunpack.c.h.b16 %v4558
        %v5395 = vunpack.c.l.b16 %v4559
        %v5396 = vunpack.c.h.b16 %v4559
        %v5397 = vunpack.c.l.b16 %v4560
        %v5398 = vunpack.c.h.b16 %v4560
        %v5399 = vunpack.c.l.b16 %v4561
        %v5400 = vunpack.c.h.b16 %v4561
        %v5401 = vunpack.c.l.b16 %v4562
        %v5402 = vunpack.c.h.b16 %v4562
        %v5403 = vunpack.c.l.b16 %v4563
        %v5404 = vunpack.c.h.b16 %v4563
        %v5405 = vunpack.c.l.b16 %v4564
        %v5406 = vunpack.c.h.b16 %v4564
        %v5407 = vunpack.c.l.b16 %v4565
        %v5408 = vunpack.c.h.b16 %v4565
        %v5409 = vunpack.c.l.b16 %v4566
        %v5410 = vunpack.c.h.b16 %v4566
        %v5411 = vunpack.c.l.b16 %v4567
        %v5412 = vunpack.c.h.b16 %v4567
        %v5413 = vunpack.c.l.b16 %v4568
        %v5414 = vunpack.c.h.b16 %v4568
        %v5415 = vunpack.c.l.b16 %v4569
        %v5416 = vunpack.c.h.b16 %v4569
        %v5417 = vunpack.c.l.b16 %v4570
        %v5418 = vunpack.c.h.b16 %v4570
        %v5419 = vunpack.c.l.b16 %v4571
        %v5420 = vunpack.c.h.b16 %v4571
        %v5421 = vunpack.c.l.b16 %v4572
        %v5422 = vunpack.c.h.b16 %v4572
        %v5423 = vunpack.c.l.b16 %v4573
        %v5424 = vunpack.c.h.b16 %v4573
        %v5425 = vunpack.c.l.b16 %v4574
        %v5426 = vunpack.c.h.b16 %v4574
        %v5427 = vunpack.c.l.b16 %v4575
        %v5428 = vunpack.c.h.b16 %v4575
        %v5429 = vunpack.c.l.b16 %v4576
        %v5430 = vunpack.c.h.b16 %v4576
        %v5431 = vunpack.c.l.b16 %v4577
        %v5432 = vunpack.c.h.b16 %v4577
        %v5433 = vunpack.c.l.b16 %v4578
        %v5434 = vunpack.c.h.b16 %v4578
        %v5435 = vunpack.c.l.b16 %v4579
        %v5436 = vunpack.c.h.b16 %v4579
        %v5437 = vunpack.c.l.b16 %v4580
        %v5438 = vunpack.c.h.b16 %v4580
        %v5439 = vunpack.c.l.b16 %v4581
        %v5440 = vunpack.c.h.b16 %v4581
        %v5441 = vunpack.c.l.b16 %v4582
        %v5442 = vunpack.c.h.b16 %v4582
        %v5443 = vunpack.c.l.b16 %v4583
        %v5444 = vunpack.c.h.b16 %v4583
        %v5445 = vunpack.c.l.b16 %v4584
        %v5446 = vunpack.c.h.b16 %v4584
        %v5447 = vunpack.c.l.b16 %v4585
        %v5448 = vunpack.c.h.b16 %v4585
        %v5449 = vunpack.c.l.b16 %v4586
        %v5450 = vunpack.c.h.b16 %v4586
        %v5451 = vunpack.c.l.b16 %v4587
        %v5452 = vunpack.c.h.b16 %v4587
        %v5453 = vunpack.c.l.b16 %v4588
        %v5454 = vunpack.c.h.b16 %v4588
        %v5455 = vunpack.c.l.b16 %v4589
        %v5456 = vunpack.c.h.b16 %v4589
        %v5457 = vunpack.c.l.b16 %v4590
        %v5458 = vunpack.c.h.b16 %v4590
        %v5459 = vunpack.c.l.b16 %v4591
        %v5460 = vunpack.c.h.b16 %v4591
        %v5461 = vunpack.c.l.b16 %v4592
        %v5462 = vunpack.c.h.b16 %v4592
        %v5463 = vunpack.c.l.b16 %v4593
        %v5464 = vunpack.c.h.b16 %v4593
        %v5465 = vunpack.c.l.b16 %v4594
        %v5466 = vunpack.c.h.b16 %v4594
        %v5467 = vunpack.c.l.b16 %v4595
        %v5468 = vunpack.c.h.b16 %v4595
        %v5469 = vunpack.c.l.b16 %v4596
        %v5470 = vunpack.c.h.b16 %v4596
        %v5471 = vunpack.c.l.b16 %v4597
        %v5472 = vunpack.c.h.b16 %v4597
        %v5473 = vunpack.c.l.b16 %v4598
        %v5474 = vunpack.c.h.b16 %v4598
        %v5475 = vunpack.c.l.b16 %v4599
        %v5476 = vunpack.c.h.b16 %v4599
        %v5477 = vunpack.c.l.b16 %v4600
        %v5478 = vunpack.c.h.b16 %v4600
        %v5479 = vunpack.c.l.b16 %v4601
        %v5480 = vunpack.c.h.b16 %v4601
        %v5481 = vunpack.c.l.b16 %v4602
        %v5482 = vunpack.c.h.b16 %v4602
        %v5483 = vunpack.c.l.b16 %v4603
        %v5484 = vunpack.c.h.b16 %v4603
        %v5485 = vunpack.c.l.b16 %v4604
        %v5486 = vunpack.c.h.b16 %v4604
        %v5487 = vunpack.c.l.b16 %v4605
        %v5488 = vunpack.c.h.b16 %v4605
        %v5489 = vunpack.c.l.b16 %v4606
        %v5490 = vunpack.c.h.b16 %v4606
        %v5491 = vunpack.c.l.b16 %v4607
        %v5492 = vunpack.c.h.b16 %v4607
        %v5493 = vunpack.c.l.b16 %v4608
        %v5494 = vunpack.c.h.b16 %v4608
        %v5495 = vunpack.c.l.b16 %v4609
        %v5496 = vunpack.c.h.b16 %v4609
        %v5497 = vunpack.c.l.b16 %v4610
        %v5498 = vunpack.c.h.b16 %v4610
        %v5499 = vunpack.c.l.b16 %v4611
        %v5500 = vunpack.c.h.b16 %v4611
        %v5501 = vunpack.c.l.b16 %v4612
        %v5502 = vunpack.c.h.b16 %v4612
        %v5503 = vunpack.c.l.b16 %v4613
        %v5504 = vunpack.c.h.b16 %v4613
        %v5505 = vunpack.c.l.b16 %v4614
        %v5506 = vunpack.c.h.b16 %v4614
        %v5507 = vunpack.c.l.b16 %v4615
        %v5508 = vunpack.c.h.b16 %v4615
        %v5509 = vunpack.c.l.b16 %v4616
        %v5510 = vunpack.c.h.b16 %v4616
        %v5511 = vunpack.c.l.b16 %v4617
        %v5512 = vunpack.c.h.b16 %v4617
        %v5513 = vunpack.c.l.b16 %v4618
        %v5514 = vunpack.c.h.b16 %v4618
        %v5515 = vunpack.c.l.b16 %v4619
        %v5516 = vunpack.c.h.b16 %v4619
        %v5517 = vunpack.c.l.b16 %v4620
        %v5518 = vunpack.c.h.b16 %v4620
        %v5519 = vunpack.c.l.b16 %v4621
        %v5520 = vunpack.c.h.b16 %v4621
        %v5521 = vunpack.c.l.b16 %v4622
        %v5522 = vunpack.c.h.b16 %v4622
        %v5523 = vunpack.c.l.b16 %v4623
        %v5524 = vunpack.c.h.b16 %v4623
        %v5525 = vunpack.c.l.b16 %v4624
        %v5526 = vunpack.c.h.b16 %v4624
        %v5527 = vunpack.c.l.b16 %v4625
        %v5528 = vunpack.c.h.b16 %v4625
        %v5529 = vunpack.c.l.b16 %v4626
        %v5530 = vunpack.c.h.b16 %v4626
        %v5531 = vunpack.c.l.b16 %v4627
        %v5532 = vunpack.c.h.b16 %v4627
        %v5533 = vunpack.c.l.b16 %v4628
        %v5534 = vunpack.c.h.b16 %v4628
        %v5535 = vunpack.c.l.b16 %v4629
        %v5536 = vunpack.c.h.b16 %v4629
        %v5537 = vunpack.c.l.b16 %v4630
        %v5538 = vunpack.c.h.b16 %v4630
        %v5539 = vunpack.c.l.b16 %v4631
        %v5540 = vunpack.c.h.b16 %v4631
        %v5541 = vunpack.c.l.b16 %v4632
        %v5542 = vunpack.c.h.b16 %v4632
        %v5543 = vunpack.c.l.b16 %v4633
        %v5544 = vunpack.c.h.b16 %v4633
        %v5545 = vunpack.c.l.b16 %v4634
        %v5546 = vunpack.c.h.b16 %v4634
        %v5547 = vunpack.c.l.b16 %v4635
        %v5548 = vunpack.c.h.b16 %v4635
        %v5549 = vunpack.c.l.b16 %v4636
        %v5550 = vunpack.c.h.b16 %v4636
        %v5551 = vunpack.c.l.b16 %v4637
        %v5552 = vunpack.c.h.b16 %v4637
        %v5553 = vunpack.c.l.b16 %v4638
        %v5554 = vunpack.c.h.b16 %v4638
        %v5555 = vunpack.c.l.b16 %v4639
        %v5556 = vunpack.c.h.b16 %v4639
        %v5557 = vunpack.c.l.b16 %v4640
        %v5558 = vunpack.c.h.b16 %v4640
        %v5559 = vunpack.c.l.b16 %v4641
        %v5560 = vunpack.c.h.b16 %v4641
        %v5561 = vunpack.c.l.b16 %v4642
        %v5562 = vunpack.c.h.b16 %v4642
        %v5563 = vunpack.c.l.b16 %v4643
        %v5564 = vunpack.c.h.b16 %v4643
        %v5565 = vunpack.c.l.b16 %v4644
        %v5566 = vunpack.c.h.b16 %v4644
        %v5567 = vunpack.c.l.b16 %v4645
        %v5568 = vunpack.c.h.b16 %v4645
        %v5569 = vunpack.c.l.b16 %v4646
        %v5570 = vunpack.c.h.b16 %v4646
        %v5571 = vunpack.c.l.b16 %v4647
        %v5572 = vunpack.c.h.b16 %v4647
        %v5573 = vunpack.c.l.b16 %v4648
        %v5574 = vunpack.c.h.b16 %v4648
        %v5575 = vunpack.c.l.b16 %v4649
        %v5576 = vunpack.c.h.b16 %v4649
        %v5577 = vunpack.c.l.b16 %v4650
        %v5578 = vunpack.c.h.b16 %v4650
        %v5579 = vpack.c.b16 %v5015, %v5003
        %v5580 = vpack.c.b16 %v5016, %v5004
        %v5581 = vpack.c.b16 %v5017, %v5005
        %v5582 = vpack.c.b16 %v5018, %v5006
        %v5583 = vpack.c.b16 %v5019, %v5007
        %v5584 = vpack.c.b16 %v5020, %v5008
        %v5585 = vpack.c.b16 %v5021, %v5009
        %v5586 = vpack.c.b16 %v5022, %v5010
        %v5587 = vpack.c.b16 %v5023, %v5011
        %v5588 = vpack.c.b16 %v5024, %v5012
        %v5589 = vpack.c.b16 %v5025, %v5013
        %v5590 = vpack.c.b16 %v5026, %v5014
        %v5591 = vpack.c.b16 %v5039, %v5027
        %v5592 = vpack.c.b16 %v5040, %v5028
        %v5593 = vpack.c.b16 %v5041, %v5029
        %v5594 = vpack.c.b16 %v5042, %v5030
        %v5595 = vpack.c.b16 %v5043, %v5031
        %v5596 = vpack.c.b16 %v5044, %v5032
        %v5597 = vpack.c.b16 %v5045, %v5033
        %v5598 = vpack.c.b16 %v5046, %v5034
        %v5599 = vpack.c.b16 %v5047, %v5035
        %v5600 = vpack.c.b16 %v5048, %v5036
        %v5601 = vpack.c.b16 %v5049, %v5037
        %v5602 = vpack.c.b16 %v5050, %v5038
        %v5603 = vpack.c.b16 %v5063, %v5051
        %v5604 = vpack.c.b16 %v5064, %v5052
        %v5605 = vpack.c.b16 %v5065, %v5053
        %v5606 = vpack.c.b16 %v5066, %v5054
        %v5607 = vpack.c.b16 %v5067, %v5055
        %v5608 = vpack.c.b16 %v5068, %v5056
        %v5609 = vpack.c.b16 %v5069, %v5057
        %v5610 = vpack.c.b16 %v5070, %v5058
        %v5611 = vpack.c.b16 %v5071, %v5059
        %v5612 = vpack.c.b16 %v5072, %v5060
        %v5613 = vpack.c.b16 %v5073, %v5061
        %v5614 = vpack.c.b16 %v5074, %v5062
        %v5615 = vpack.c.b16 %v5087, %v5075
        %v5616 = vpack.c.b16 %v5088, %v5076
        %v5617 = vpack.c.b16 %v5089, %v5077
        %v5618 = vpack.c.b16 %v5090, %v5078
        %v5619 = vpack.c.b16 %v5091, %v5079
        %v5620 = vpack.c.b16 %v5092, %v5080
        %v5621 = vpack.c.b16 %v5093, %v5081
        %v5622 = vpack.c.b16 %v5094, %v5082
        %v5623 = vpack.c.b16 %v5095, %v5083
        %v5624 = vpack.c.b16 %v5096, %v5084
        %v5625 = vpack.c.b16 %v5097, %v5085
        %v5626 = vpack.c.b16 %v5098, %v5086
        %v5627 = vpack.c.b16 %v5111, %v5099
        %v5628 = vpack.c.b16 %v5112, %v5100
        %v5629 = vpack.c.b16 %v5113, %v5101
        %v5630 = vpack.c.b16 %v5114, %v5102
        %v5631 = vpack.c.b16 %v5115, %v5103
        %v5632 = vpack.c.b16 %v5116, %v5104
        %v5633 = vpack.c.b16 %v5117, %v5105
        %v5634 = vpack.c.b16 %v5118, %v5106
        %v5635 = vpack.c.b16 %v5119, %v5107
        %v5636 = vpack.c.b16 %v5120, %v5108
        %v5637 = vpack.c.b16 %v5121, %v5109
        %v5638 = vpack.c.b16 %v5122, %v5110
        %v5639 = vpack.c.b16 %v5135, %v5123
        %v5640 = vpack.c.b16 %v5136, %v5124
        %v5641 = vpack.c.b16 %v5137, %v5125
        %v5642 = vpack.c.b16 %v5138, %v5126
        %v5643 = vpack.c.b16 %v5139, %v5127
        %v5644 = vpack.c.b16 %v5140, %v5128
        %v5645 = vpack.c.b16 %v5141, %v5129
        %v5646 = vpack.c.b16 %v5142, %v5130
        %v5647 = vpack.c.b16 %v5143, %v5131
        %v5648 = vpack.c.b16 %v5144, %v5132
        %v5649 = vpack.c.b16 %v5145, %v5133
        %v5650 = vpack.c.b16 %v5146, %v5134
        %v5651 = vpack.c.b16 %v5159, %v5147
        %v5652 = vpack.c.b16 %v5160, %v5148
        %v5653 = vpack.c.b16 %v5161, %v5149
        %v5654 = vpack.c.b16 %v5162, %v5150
        %v5655 = vpack.c.b16 %v5163, %v5151
        %v5656 = vpack.c.b16 %v5164, %v5152
        %v5657 = vpack.c.b16 %v5165, %v5153
        %v5658 = vpack.c.b16 %v5166, %v5154
        %v5659 = vpack.c.b16 %v5167, %v5155
        %v5660 = vpack.c.b16 %v5168, %v5156
        %v5661 = vpack.c.b16 %v5169, %v5157
        %v5662 = vpack.c.b16 %v5170, %v5158
        %v5663 = vpack.c.b16 %v5183, %v5171
        %v5664 = vpack.c.b16 %v5184, %v5172
        %v5665 = vpack.c.b16 %v5185, %v5173
        %v5666 = vpack.c.b16 %v5186, %v5174
        %v5667 = vpack.c.b16 %v5187, %v5175
        %v5668 = vpack.c.b16 %v5188, %v5176
        %v5669 = vpack.c.b16 %v5189, %v5177
        %v5670 = vpack.c.b16 %v5190, %v5178
        %v5671 = vpack.c.b16 %v5191, %v5179
        %v5672 = vpack.c.b16 %v5192, %v5180
        %v5673 = vpack.c.b16 %v5193, %v5181
        %v5674 = vpack.c.b16 %v5194, %v5182
        %v5675 = vpack.c.b16 %v5207, %v5195
        %v5676 = vpack.c.b16 %v5208, %v5196
        %v5677 = vpack.c.b16 %v5209, %v5197
        %v5678 = vpack.c.b16 %v5210, %v5198
        %v5679 = vpack.c.b16 %v5211, %v5199
        %v5680 = vpack.c.b16 %v5212, %v5200
        %v5681 = vpack.c.b16 %v5213, %v5201
        %v5682 = vpack.c.b16 %v5214, %v5202
        %v5683 = vpack.c.b16 %v5215, %v5203
        %v5684 = vpack.c.b16 %v5216, %v5204
        %v5685 = vpack.c.b16 %v5217, %v5205
        %v5686 = vpack.c.b16 %v5218, %v5206
        %v5687 = vpack.c.b16 %v5231, %v5219
        %v5688 = vpack.c.b16 %v5232, %v5220
        %v5689 = vpack.c.b16 %v5233, %v5221
        %v5690 = vpack.c.b16 %v5234, %v5222
        %v5691 = vpack.c.b16 %v5235, %v5223
        %v5692 = vpack.c.b16 %v5236, %v5224
        %v5693 = vpack.c.b16 %v5237, %v5225
        %v5694 = vpack.c.b16 %v5238, %v5226
        %v5695 = vpack.c.b16 %v5239, %v5227
        %v5696 = vpack.c.b16 %v5240, %v5228
        %v5697 = vpack.c.b16 %v5241, %v5229
        %v5698 = vpack.c.b16 %v5242, %v5230
        %v5699 = vpack.c.b16 %v5255, %v5243
        %v5700 = vpack.c.b16 %v5256, %v5244
        %v5701 = vpack.c.b16 %v5257, %v5245
        %v5702 = vpack.c.b16 %v5258, %v5246
        %v5703 = vpack.c.b16 %v5259, %v5247
        %v5704 = vpack.c.b16 %v5260, %v5248
        %v5705 = vpack.c.b16 %v5261, %v5249
        %v5706 = vpack.c.b16 %v5262, %v5250
        %v5707 = vpack.c.b16 %v5263, %v5251
        %v5708 = vpack.c.b16 %v5264, %v5252
        %v5709 = vpack.c.b16 %v5265, %v5253
        %v5710 = vpack.c.b16 %v5266, %v5254
        %v5711 = vpack.c.b16 %v5279, %v5267
        %v5712 = vpack.c.b16 %v5280, %v5268
        %v5713 = vpack.c.b16 %v5281, %v5269
        %v5714 = vpack.c.b16 %v5282, %v5270
        %v5715 = vpack.c.b16 %v5283, %v5271
        %v5716 = vpack.c.b16 %v5284, %v5272
        %v5717 = vpack.c.b16 %v5285, %v5273
        %v5718 = vpack.c.b16 %v5286, %v5274
        %v5719 = vpack.c.b16 %v5287, %v5275
        %v5720 = vpack.c.b16 %v5288, %v5276
        %v5721 = vpack.c.b16 %v5289, %v5277
        %v5722 = vpack.c.b16 %v5290, %v5278
        %v5723 = vpack.c.b16 %v5303, %v5291
        %v5724 = vpack.c.b16 %v5304, %v5292
        %v5725 = vpack.c.b16 %v5305, %v5293
        %v5726 = vpack.c.b16 %v5306, %v5294
        %v5727 = vpack.c.b16 %v5307, %v5295
        %v5728 = vpack.c.b16 %v5308, %v5296
        %v5729 = vpack.c.b16 %v5309, %v5297
        %v5730 = vpack.c.b16 %v5310, %v5298
        %v5731 = vpack.c.b16 %v5311, %v5299
        %v5732 = vpack.c.b16 %v5312, %v5300
        %v5733 = vpack.c.b16 %v5313, %v5301
        %v5734 = vpack.c.b16 %v5314, %v5302
        %v5735 = vpack.c.b16 %v5327, %v5315
        %v5736 = vpack.c.b16 %v5328, %v5316
        %v5737 = vpack.c.b16 %v5329, %v5317
        %v5738 = vpack.c.b16 %v5330, %v5318
        %v5739 = vpack.c.b16 %v5331, %v5319
        %v5740 = vpack.c.b16 %v5332, %v5320
        %v5741 = vpack.c.b16 %v5333, %v5321
        %v5742 = vpack.c.b16 %v5334, %v5322
        %v5743 = vpack.c.b16 %v5335, %v5323
        %v5744 = vpack.c.b16 %v5336, %v5324
        %v5745 = vpack.c.b16 %v5337, %v5325
        %v5746 = vpack.c.b16 %v5338, %v5326
        %v5747 = vpack.c.b16 %v5351, %v5339
        %v5748 = vpack.c.b16 %v5352, %v5340
        %v5749 = vpack.c.b16 %v5353, %v5341
        %v5750 = vpack.c.b16 %v5354, %v5342
        %v5751 = vpack.c.b16 %v5355, %v5343
        %v5752 = vpack.c.b16 %v5356, %v5344
        %v5753 = vpack.c.b16 %v5357, %v5345
        %v5754 = vpack.c.b16 %v5358, %v5346
        %v5755 = vpack.c.b16 %v5359, %v5347
        %v5756 = vpack.c.b16 %v5360, %v5348
        %v5757 = vpack.c.b16 %v5361, %v5349
        %v5758 = vpack.c.b16 %v5362, %v5350
        %v5759 = vpack.c.b16 %v5375, %v5363
        %v5760 = vpack.c.b16 %v5376, %v5364
        %v5761 = vpack.c.b16 %v5377, %v5365
        %v5762 = vpack.c.b16 %v5378, %v5366
        %v5763 = vpack.c.b16 %v5379, %v5367
        %v5764 = vpack.c.b16 %v5380, %v5368
        %v5765 = vpack.c.b16 %v5381, %v5369
        %v5766 = vpack.c.b16 %v5382, %v5370
        %v5767 = vpack.c.b16 %v5383, %v5371
        %v5768 = vpack.c.b16 %v5384, %v5372
        %v5769 = vpack.c.b16 %v5385, %v5373
        %v5770 = vpack.c.b16 %v5386, %v5374
        %v5771 = vpack.c.b16 %v5399, %v5387
        %v5772 = vpack.c.b16 %v5400, %v5388
        %v5773 = vpack.c.b16 %v5401, %v5389
        %v5774 = vpack.c.b16 %v5402, %v5390
        %v5775 = vpack.c.b16 %v5403, %v5391
        %v5776 = vpack.c.b16 %v5404, %v5392
        %v5777 = vpack.c.b16 %v5405, %v5393
        %v5778 = vpack.c.b16 %v5406, %v5394
        %v5779 = vpack.c.b16 %v5407, %v5395
        %v5780 = vpack.c.b16 %v5408, %v5396
        %v5781 = vpack.c.b16 %v5409, %v5397
        %v5782 = vpack.c.b16 %v5410, %v5398
        %v5783 = vpack.c.b16 %v5423, %v5411
        %v5784 = vpack.c.b16 %v5424, %v5412
        %v5785 = vpack.c.b16 %v5425, %v5413
        %v5786 = vpack.c.b16 %v5426, %v5414
        %v5787 = vpack.c.b16 %v5427, %v5415
        %v5788 = vpack.c.b16 %v5428, %v5416
        %v5789 = vpack.c.b16 %v5429, %v5417
        %v5790 = vpack.c.b16 %v5430, %v5418
        %v5791 = vpack.c.b16 %v5431, %v5419
        %v5792 = vpack.c.b16 %v5432, %v5420
        %v5793 = vpack.c.b16 %v5433, %v5421
        %v5794 = vpack.c.b16 %v5434, %v5422
        %v5795 = vpack.c.b16 %v5447, %v5435
        %v5796 = vpack.c.b16 %v5448, %v5436
        %v5797 = vpack.c.b16 %v5449, %v5437
        %v5798 = vpack.c.b16 %v5450, %v5438
        %v5799 = vpack.c.b16 %v5451, %v5439
        %v5800 = vpack.c.b16 %v5452, %v5440
        %v5801 = vpack.c.b16 %v5453, %v5441
        %v5802 = vpack.c.b16 %v5454, %v5442
        %v5803 = vpack.c.b16 %v5455, %v5443
        %v5804 = vpack.c.b16 %v5456, %v5444
        %v5805 = vpack.c.b16 %v5457, %v5445
        %v5806 = vpack.c.b16 %v5458, %v5446
        %v5807 = vpack.c.b16 %v5471, %v5459
        %v5808 = vpack.c.b16 %v5472, %v5460
        %v5809 = vpack.c.b16 %v5473, %v5461
        %v5810 = vpack.c.b16 %v5474, %v5462
        %v5811 = vpack.c.b16 %v5475, %v5463
        %v5812 = vpack.c.b16 %v5476, %v5464
        %v5813 = vpack.c.b16 %v5477, %v5465
        %v5814 = vpack.c.b16 %v5478, %v5466
        %v5815 = vpack.c.b16 %v5479, %v5467
        %v5816 = vpack.c.b16 %v5480, %v5468
        %v5817 = vpack.c.b16 %v5481, %v5469
        %v5818 = vpack.c.b16 %v5482, %v5470
        %v5819 = vpack.c.b16 %v5495, %v5483
        %v5820 = vpack.c.b16 %v5496, %v5484
        %v5821 = vpack.c.b16 %v5497, %v5485
        %v5822 = vpack.c.b16 %v5498, %v5486
        %v5823 = vpack.c.b16 %v5499, %v5487
        %v5824 = vpack.c.b16 %v5500, %v5488
        %v5825 = vpack.c.b16 %v5501, %v5489
        %v5826 = vpack.c.b16 %v5502, %v5490
        %v5827 = vpack.c.b16 %v5503, %v5491
        %v5828 = vpack.c.b16 %v5504, %v5492
        %v5829 = vpack.c.b16 %v5505, %v5493
        %v5830 = vpack.c.b16 %v5506, %v5494
        %v5831 = vpack.c.b16 %v5519, %v5507
        %v5832 = vpack.c.b16 %v5520, %v5508
        %v5833 = vpack.c.b16 %v5521, %v5509
        %v5834 = vpack.c.b16 %v5522, %v5510
        %v5835 = vpack.c.b16 %v5523, %v5511
        %v5836 = vpack.c.b16 %v5524, %v5512
        %v5837 = vpack.c.b16 %v5525, %v5513
        %v5838 = vpack.c.b16 %v5526, %v5514
        %v5839 = vpack.c.b16 %v5527, %v5515
        %v5840 = vpack.c.b16 %v5528, %v5516
        %v5841 = vpack.c.b16 %v5529, %v5517
        %v5842 = vpack.c.b16 %v5530, %v5518
        %v5843 = vpack.c.b16 %v5543, %v5531
        %v5844 = vpack.c.b16 %v5544, %v5532
        %v5845 = vpack.c.b16 %v5545, %v5533
        %v5846 = vpack.c.b16 %v5546, %v5534
        %v5847 = vpack.c.b16 %v5547, %v5535
        %v5848 = vpack.c.b16 %v5548, %v5536
        %v5849 = vpack.c.b16 %v5549, %v5537
        %v5850 = vpack.c.b16 %v5550, %v5538
        %v5851 = vpack.c.b16 %v5551, %v5539
        %v5852 = vpack.c.b16 %v5552, %v5540
        %v5853 = vpack.c.b16 %v5553, %v5541
        %v5854 = vpack.c.b16 %v5554, %v5542
        %v5855 = vpack.c.b16 %v5567, %v5555
        %v5856 = vpack.c.b16 %v5568, %v5556
        %v5857 = vpack.c.b16 %v5569, %v5557
        %v5858 = vpack.c.b16 %v5570, %v5558
        %v5859 = vpack.c.b16 %v5571, %v5559
        %v5860 = vpack.c.b16 %v5572, %v5560
        %v5861 = vpack.c.b16 %v5573, %v5561
        %v5862 = vpack.c.b16 %v5574, %v5562
        %v5863 = vpack.c.b16 %v5575, %v5563
        %v5864 = vpack.c.b16 %v5576, %v5564
        %v5865 = vpack.c.b16 %v5577, %v5565
        %v5866 = vpack.c.b16 %v5578, %v5566
        %6155 = vmatprep.subr.bf16.mxu0 %v5580
        %6156 = vmatpush1.bf16.msra.mxu0 %v5579
        %6157 = vmatprep.subr.bf16.mxu0 %v5592
        %6158 = vmatpush1.bf16.msra.mxu0 %v5591
        %6159 = vmatprep.subr.bf16.mxu0 %v5604
        %6160 = vmatpush1.bf16.msra.mxu0 %v5603
        %6161 = vmatprep.subr.bf16.mxu0 %v5616
        %6162 = vmatpush1.bf16.msra.mxu0 %v5615
        %6163 = vmatprep.subr.bf16.mxu0 %v5628
        %6164 = vmatpush1.bf16.msra.mxu0 %v5627
        %6165 = vmatprep.subr.bf16.mxu0 %v5640
        %6166 = vmatpush1.bf16.msra.mxu0 %v5639
        %6167 = vmatprep.subr.bf16.mxu0 %v5652
        %6168 = vmatpush1.bf16.msra.mxu0 %v5651
        %6169 = vmatprep.subr.bf16.mxu0 %v5664
        %6170 = vmatpush1.bf16.msra.mxu0 %v5663
        %6171 = vmatprep.subr.bf16.mxu0 %v5676
        %6172 = vmatpush1.bf16.msra.mxu0 %v5675
        %6173 = vmatprep.subr.bf16.mxu0 %v5688
        %6174 = vmatpush1.bf16.msra.mxu0 %v5687
        %6175 = vmatprep.subr.bf16.mxu0 %v5700
        %6176 = vmatpush1.bf16.msra.mxu0 %v5699
        %6177 = vmatprep.subr.bf16.mxu0 %v5712
        %6178 = vmatpush1.bf16.msra.mxu0 %v5711
        %6179 = vmatprep.subr.bf16.mxu0 %v5724
        %6180 = vmatpush1.bf16.msra.mxu0 %v5723
        %6181 = vmatprep.subr.bf16.mxu0 %v5736
        %6182 = vmatpush1.bf16.msra.mxu0 %v5735
        %6183 = vmatprep.subr.bf16.mxu0 %v5748
        %6184 = vmatpush1.bf16.msra.mxu0 %v5747
        %6185 = vmatprep.subr.bf16.mxu0 %v5760
        %6186 = vmatpush1.bf16.msra.mxu0 %v5759
        %6187 = vmatprep.mubr.bf16.mxu0 %v4361
        %6188 = vmatmul.mubr.bf16.gmra.mrb[0].mxu0 %v4360
        %v6189 = vpop.f32.mrb[0].mxu0
        %v6190 = vadd.f32 %v4658, %v6189
        %v6191 = vpop.f32.mrb[0].mxu0
        %v6192 = vadd.f32 %v4662, %v6191
        %v6193 = vpop.f32.mrb[0].mxu0
        %v6194 = vpop.f32.mrb[0].mxu0
        %6195 = vdwg.mxu0
        %6196 = vmatprep.subr.bf16.mxu0 %v5772
        %6197 = vmatpush1.bf16.msra.mxu0 %v5771
        %6198 = vmatprep.subr.bf16.mxu0 %v5784
        %6199 = vmatpush1.bf16.msra.mxu0 %v5783
        %6200 = vmatprep.subr.bf16.mxu0 %v5796
        %6201 = vmatpush1.bf16.msra.mxu0 %v5795
        %6202 = vmatprep.subr.bf16.mxu0 %v5808
        %6203 = vmatpush1.bf16.msra.mxu0 %v5807
        %6204 = vmatprep.subr.bf16.mxu0 %v5820
        %6205 = vmatpush1.bf16.msra.mxu0 %v5819
        %6206 = vmatprep.subr.bf16.mxu0 %v5832
        %6207 = vmatpush1.bf16.msra.mxu0 %v5831
        %6208 = vmatprep.subr.bf16.mxu0 %v5844
        %6209 = vmatpush1.bf16.msra.mxu0 %v5843
        %6210 = vmatprep.subr.bf16.mxu0 %v5856
        %6211 = vmatpush1.bf16.msra.mxu0 %v5855
        %6212 = vmatprep.subr.bf16.mxu0 0
        %6213 = vmatpush1.bf16.msra.mxu0 0
        %6214 = vmatprep.subr.bf16.mxu0 0
        %6215 = vmatpush1.bf16.msra.mxu0 0
        %6216 = vmatprep.subr.bf16.mxu0 0
        %6217 = vmatpush1.bf16.msra.mxu0 0
        %6218 = vmatprep.subr.bf16.mxu0 0
        %6219 = vmatpush1.bf16.msra.mxu0 0
        %6220 = vmatprep.subr.bf16.mxu0 0
        %6221 = vmatpush1.bf16.msra.mxu0 0
        %6222 = vmatprep.subr.bf16.mxu0 0
        %6223 = vmatpush1.bf16.msra.mxu0 0
        %6224 = vmatprep.subr.bf16.mxu0 0
        %6225 = vmatpush1.bf16.msra.mxu0 0
        %6226 = vmatprep.subr.bf16.mxu0 0
        %6227 = vmatpush1.bf16.msra.mxu0 0
        %6228 = vmatprep.mubr.bf16.mxu0 0
        %6229 = vmatmul.mubr.bf16.gmra.mrb[0].mxu0 %v4362
        %v6230 = vpop.f32.mrb[0].mxu0
        %v6231 = vadd.f32 %v6190, %v6230
        %v6232 = vpop.f32.mrb[0].mxu0
        %v6233 = vadd.f32 %v6192, %v6232
        %v6234 = vpop.f32.mrb[0].mxu0
        %v6235 = vpop.f32.mrb[0].mxu0
        %6236 = vdwg.mxu0
        %6237 = vmatprep.subr.bf16.mxu0 %v5582
        %6238 = vmatpush1.bf16.msra.mxu0 %v5581
        %6239 = vmatprep.subr.bf16.mxu0 %v5594
        %6240 = vmatpush1.bf16.msra.mxu0 %v5593
        %6241 = vmatprep.subr.bf16.mxu0 %v5606
        %6242 = vmatpush1.bf16.msra.mxu0 %v5605
        %6243 = vmatprep.subr.bf16.mxu0 %v5618
        %6244 = vmatpush1.bf16.msra.mxu0 %v5617
        %6245 = vmatprep.subr.bf16.mxu0 %v5630
        %6246 = vmatpush1.bf16.msra.mxu0 %v5629
        %6247 = vmatprep.subr.bf16.mxu0 %v5642
        %6248 = vmatpush1.bf16.msra.mxu0 %v5641
        %6249 = vmatprep.subr.bf16.mxu0 %v5654
        %6250 = vmatpush1.bf16.msra.mxu0 %v5653
        %6251 = vmatprep.subr.bf16.mxu0 %v5666
        %6252 = vmatpush1.bf16.msra.mxu0 %v5665
        %6253 = vmatprep.subr.bf16.mxu0 %v5678
        %6254 = vmatpush1.bf16.msra.mxu0 %v5677
        %6255 = vmatprep.subr.bf16.mxu0 %v5690
        %6256 = vmatpush1.bf16.msra.mxu0 %v5689
        %6257 = vmatprep.subr.bf16.mxu0 %v5702
        %6258 = vmatpush1.bf16.msra.mxu0 %v5701
        %6259 = vmatprep.subr.bf16.mxu0 %v5714
        %6260 = vmatpush1.bf16.msra.mxu0 %v5713
        %6261 = vmatprep.subr.bf16.mxu0 %v5726
        %6262 = vmatpush1.bf16.msra.mxu0 %v5725
        %6263 = vmatprep.subr.bf16.mxu0 %v5738
        %6264 = vmatpush1.bf16.msra.mxu0 %v5737
        %6265 = vmatprep.subr.bf16.mxu0 %v5750
        %6266 = vmatpush1.bf16.msra.mxu0 %v5749
        %6267 = vmatprep.subr.bf16.mxu0 %v5762
        %6268 = vmatpush1.bf16.msra.mxu0 %v5761
        %6269 = vmatprep.mubr.bf16.mxu0 %v4361
        %6270 = vmatmul.mubr.bf16.gmra.mrb[0].mxu0 %v4360
        %v6271 = vpop.f32.mrb[0].mxu0
        %v6272 = vadd.f32 %v4666, %v6271
        %v6273 = vpop.f32.mrb[0].mxu0
        %v6274 = vadd.f32 %v4670, %v6273
        %v6275 = vpop.f32.mrb[0].mxu0
        %v6276 = vpop.f32.mrb[0].mxu0
        %6277 = vdwg.mxu0
        %6278 = vmatprep.subr.bf16.mxu0 %v5774
        %6279 = vmatpush1.bf16.msra.mxu0 %v5773
        %6280 = vmatprep.subr.bf16.mxu0 %v5786
        %6281 = vmatpush1.bf16.msra.mxu0 %v5785
        %6282 = vmatprep.subr.bf16.mxu0 %v5798
        %6283 = vmatpush1.bf16.msra.mxu0 %v5797
        %6284 = vmatprep.subr.bf16.mxu0 %v5810
        %6285 = vmatpush1.bf16.msra.mxu0 %v5809
        %6286 = vmatprep.subr.bf16.mxu0 %v5822
        %6287 = vmatpush1.bf16.msra.mxu0 %v5821
        %6288 = vmatprep.subr.bf16.mxu0 %v5834
        %6289 = vmatpush1.bf16.msra.mxu0 %v5833
        %6290 = vmatprep.subr.bf16.mxu0 %v5846
        %6291 = vmatpush1.bf16.msra.mxu0 %v5845
        %6292 = vmatprep.subr.bf16.mxu0 %v5858
        %6293 = vmatpush1.bf16.msra.mxu0 %v5857
        %6294 = vmatprep.subr.bf16.mxu0 0
        %6295 = vmatpush1.bf16.msra.mxu0 0
        %6296 = vmatprep.subr.bf16.mxu0 0
        %6297 = vmatpush1.bf16.msra.mxu0 0
        %6298 = vmatprep.subr.bf16.mxu0 0
        %6299 = vmatpush1.bf16.msra.mxu0 0
        %6300 = vmatprep.subr.bf16.mxu0 0
        %6301 = vmatpush1.bf16.msra.mxu0 0
        %6302 = vmatprep.subr.bf16.mxu0 0
        %6303 = vmatpush1.bf16.msra.mxu0 0
        %6304 = vmatprep.subr.bf16.mxu0 0
        %6305 = vmatpush1.bf16.msra.mxu0 0
        %6306 = vmatprep.subr.bf16.mxu0 0
        %6307 = vmatpush1.bf16.msra.mxu0 0
        %6308 = vmatprep.subr.bf16.mxu0 0
        %6309 = vmatpush1.bf16.msra.mxu0 0
        %6310 = vmatprep.mubr.bf16.mxu0 0
        %6311 = vmatmul.mubr.bf16.gmra.mrb[0].mxu0 %v4362
        %v6312 = vpop.f32.mrb[0].mxu0
        %v6313 = vadd.f32 %v6272, %v6312
        %v6314 = vpop.f32.mrb[0].mxu0
        %v6315 = vadd.f32 %v6274, %v6314
        %v6316 = vpop.f32.mrb[0].mxu0
        %v6317 = vpop.f32.mrb[0].mxu0
        %6318 = vdwg.mxu0
        %6319 = vmatprep.subr.bf16.mxu0 %v5584
        %6320 = vmatpush1.bf16.msra.mxu0 %v5583
        %6321 = vmatprep.subr.bf16.mxu0 %v5596
        %6322 = vmatpush1.bf16.msra.mxu0 %v5595
        %6323 = vmatprep.subr.bf16.mxu0 %v5608
        %6324 = vmatpush1.bf16.msra.mxu0 %v5607
        %6325 = vmatprep.subr.bf16.mxu0 %v5620
        %6326 = vmatpush1.bf16.msra.mxu0 %v5619
        %6327 = vmatprep.subr.bf16.mxu0 %v5632
        %6328 = vmatpush1.bf16.msra.mxu0 %v5631
        %6329 = vmatprep.subr.bf16.mxu0 %v5644
        %6330 = vmatpush1.bf16.msra.mxu0 %v5643
        %6331 = vmatprep.subr.bf16.mxu0 %v5656
        %6332 = vmatpush1.bf16.msra.mxu0 %v5655
        %6333 = vmatprep.subr.bf16.mxu0 %v5668
        %6334 = vmatpush1.bf16.msra.mxu0 %v5667
        %6335 = vmatprep.subr.bf16.mxu0 %v5680
        %6336 = vmatpush1.bf16.msra.mxu0 %v5679
        %6337 = vmatprep.subr.bf16.mxu0 %v5692
        %6338 = vmatpush1.bf16.msra.mxu0 %v5691
        %6339 = vmatprep.subr.bf16.mxu0 %v5704
        %6340 = vmatpush1.bf16.msra.mxu0 %v5703
        %6341 = vmatprep.subr.bf16.mxu0 %v5716
        %6342 = vmatpush1.bf16.msra.mxu0 %v5715
        %6343 = vmatprep.subr.bf16.mxu0 %v5728
        %6344 = vmatpush1.bf16.msra.mxu0 %v5727
        %6345 = vmatprep.subr.bf16.mxu0 %v5740
        %6346 = vmatpush1.bf16.msra.mxu0 %v5739
        %6347 = vmatprep.subr.bf16.mxu0 %v5752
        %6348 = vmatpush1.bf16.msra.mxu0 %v5751
        %6349 = vmatprep.subr.bf16.mxu0 %v5764
        %6350 = vmatpush1.bf16.msra.mxu0 %v5763
        %6351 = vmatprep.mubr.bf16.mxu0 %v4361
        %6352 = vmatmul.mubr.bf16.gmra.mrb[0].mxu0 %v4360
        %v6353 = vpop.f32.mrb[0].mxu0
        %v6354 = vadd.f32 %v4674, %v6353
        %v6355 = vpop.f32.mrb[0].mxu0
        %v6356 = vadd.f32 %v4678, %v6355
        %v6357 = vpop.f32.mrb[0].mxu0
        %v6358 = vpop.f32.mrb[0].mxu0
        %6359 = vdwg.mxu0
        %6360 = vmatprep.subr.bf16.mxu0 %v5776
        %6361 = vmatpush1.bf16.msra.mxu0 %v5775
        %6362 = vmatprep.subr.bf16.mxu0 %v5788
        %6363 = vmatpush1.bf16.msra.mxu0 %v5787
        %6364 = vmatprep.subr.bf16.mxu0 %v5800
        %6365 = vmatpush1.bf16.msra.mxu0 %v5799
        %6366 = vmatprep.subr.bf16.mxu0 %v5812
        %6367 = vmatpush1.bf16.msra.mxu0 %v5811
        %6368 = vmatprep.subr.bf16.mxu0 %v5824
        %6369 = vmatpush1.bf16.msra.mxu0 %v5823
        %6370 = vmatprep.subr.bf16.mxu0 %v5836
        %6371 = vmatpush1.bf16.msra.mxu0 %v5835
        %6372 = vmatprep.subr.bf16.mxu0 %v5848
        %6373 = vmatpush1.bf16.msra.mxu0 %v5847
        %6374 = vmatprep.subr.bf16.mxu0 %v5860
        %6375 = vmatpush1.bf16.msra.mxu0 %v5859
        %6376 = vmatprep.subr.bf16.mxu0 0
        %6377 = vmatpush1.bf16.msra.mxu0 0
        %6378 = vmatprep.subr.bf16.mxu0 0
        %6379 = vmatpush1.bf16.msra.mxu0 0
        %6380 = vmatprep.subr.bf16.mxu0 0
        %6381 = vmatpush1.bf16.msra.mxu0 0
        %6382 = vmatprep.subr.bf16.mxu0 0
        %6383 = vmatpush1.bf16.msra.mxu0 0
        %6384 = vmatprep.subr.bf16.mxu0 0
        %6385 = vmatpush1.bf16.msra.mxu0 0
        %6386 = vmatprep.subr.bf16.mxu0 0
        %6387 = vmatpush1.bf16.msra.mxu0 0
        %6388 = vmatprep.subr.bf16.mxu0 0
        %6389 = vmatpush1.bf16.msra.mxu0 0
        %6390 = vmatprep.subr.bf16.mxu0 0
        %6391 = vmatpush1.bf16.msra.mxu0 0
        %6392 = vmatprep.mubr.bf16.mxu0 0
        %6393 = vmatmul.mubr.bf16.gmra.mrb[0].mxu0 %v4362
        %v6394 = vpop.f32.mrb[0].mxu0
        %v6395 = vadd.f32 %v6354, %v6394
        %v6396 = vpop.f32.mrb[0].mxu0
        %v6397 = vadd.f32 %v6356, %v6396
        %v6398 = vpop.f32.mrb[0].mxu0
        %v6399 = vpop.f32.mrb[0].mxu0
        %6400 = vdwg.mxu0
        %6401 = vmatprep.subr.bf16.mxu0 %v5586
        %6402 = vmatpush1.bf16.msra.mxu0 %v5585
        %6403 = vmatprep.subr.bf16.mxu0 %v5598
        %6404 = vmatpush1.bf16.msra.mxu0 %v5597
        %6405 = vmatprep.subr.bf16.mxu0 %v5610
        %6406 = vmatpush1.bf16.msra.mxu0 %v5609
        %6407 = vmatprep.subr.bf16.mxu0 %v5622
        %6408 = vmatpush1.bf16.msra.mxu0 %v5621
        %6409 = vmatprep.subr.bf16.mxu0 %v5634
        %6410 = vmatpush1.bf16.msra.mxu0 %v5633
        %6411 = vmatprep.subr.bf16.mxu0 %v5646
        %6412 = vmatpush1.bf16.msra.mxu0 %v5645
        %6413 = vmatprep.subr.bf16.mxu0 %v5658
        %6414 = vmatpush1.bf16.msra.mxu0 %v5657
        %6415 = vmatprep.subr.bf16.mxu0 %v5670
        %6416 = vmatpush1.bf16.msra.mxu0 %v5669
        %6417 = vmatprep.subr.bf16.mxu0 %v5682
        %6418 = vmatpush1.bf16.msra.mxu0 %v5681
        %6419 = vmatprep.subr.bf16.mxu0 %v5694
        %6420 = vmatpush1.bf16.msra.mxu0 %v5693
        %6421 = vmatprep.subr.bf16.mxu0 %v5706
        %6422 = vmatpush1.bf16.msra.mxu0 %v5705
        %6423 = vmatprep.subr.bf16.mxu0 %v5718
        %6424 = vmatpush1.bf16.msra.mxu0 %v5717
        %6425 = vmatprep.subr.bf16.mxu0 %v5730
        %6426 = vmatpush1.bf16.msra.mxu0 %v5729
        %6427 = vmatprep.subr.bf16.mxu0 %v5742
        %6428 = vmatpush1.bf16.msra.mxu0 %v5741
        %6429 = vmatprep.subr.bf16.mxu0 %v5754
        %6430 = vmatpush1.bf16.msra.mxu0 %v5753
        %6431 = vmatprep.subr.bf16.mxu0 %v5766
        %6432 = vmatpush1.bf16.msra.mxu0 %v5765
        %6433 = vmatprep.mubr.bf16.mxu0 %v4361
        %6434 = vmatmul.mubr.bf16.gmra.mrb[0].mxu0 %v4360
        %v6435 = vpop.f32.mrb[0].mxu0
        %v6436 = vadd.f32 %v4682, %v6435
        %v6437 = vpop.f32.mrb[0].mxu0
        %v6438 = vadd.f32 %v4686, %v6437
        %v6439 = vpop.f32.mrb[0].mxu0
        %v6440 = vpop.f32.mrb[0].mxu0
        %6441 = vdwg.mxu0
        %6442 = vmatprep.subr.bf16.mxu0 %v5778
        %6443 = vmatpush1.bf16.msra.mxu0 %v5777
        %6444 = vmatprep.subr.bf16.mxu0 %v5790
        %6445 = vmatpush1.bf16.msra.mxu0 %v5789
        %6446 = vmatprep.subr.bf16.mxu0 %v5802
        %6447 = vmatpush1.bf16.msra.mxu0 %v5801
        %6448 = vmatprep.subr.bf16.mxu0 %v5814
        %6449 = vmatpush1.bf16.msra.mxu0 %v5813
        %6450 = vmatprep.subr.bf16.mxu0 %v5826
        %6451 = vmatpush1.bf16.msra.mxu0 %v5825
        %6452 = vmatprep.subr.bf16.mxu0 %v5838
        %6453 = vmatpush1.bf16.msra.mxu0 %v5837
        %6454 = vmatprep.subr.bf16.mxu0 %v5850
        %6455 = vmatpush1.bf16.msra.mxu0 %v5849
        %6456 = vmatprep.subr.bf16.mxu0 %v5862
        %6457 = vmatpush1.bf16.msra.mxu0 %v5861
        %6458 = vmatprep.subr.bf16.mxu0 0
        %6459 = vmatpush1.bf16.msra.mxu0 0
        %6460 = vmatprep.subr.bf16.mxu0 0
        %6461 = vmatpush1.bf16.msra.mxu0 0
        %6462 = vmatprep.subr.bf16.mxu0 0
        %6463 = vmatpush1.bf16.msra.mxu0 0
        %6464 = vmatprep.subr.bf16.mxu0 0
        %6465 = vmatpush1.bf16.msra.mxu0 0
        %6466 = vmatprep.subr.bf16.mxu0 0
        %6467 = vmatpush1.bf16.msra.mxu0 0
        %6468 = vmatprep.subr.bf16.mxu0 0
        %6469 = vmatpush1.bf16.msra.mxu0 0
        %6470 = vmatprep.subr.bf16.mxu0 0
        %6471 = vmatpush1.bf16.msra.mxu0 0
        %6472 = vmatprep.subr.bf16.mxu0 0
        %6473 = vmatpush1.bf16.msra.mxu0 0
        %6474 = vmatprep.mubr.bf16.mxu0 0
        %6475 = vmatmul.mubr.bf16.gmra.mrb[0].mxu0 %v4362
        %v6476 = vpop.f32.mrb[0].mxu0
        %v6477 = vadd.f32 %v6436, %v6476
        %v6478 = vpop.f32.mrb[0].mxu0
        %v6479 = vadd.f32 %v6438, %v6478
        %v6480 = vpop.f32.mrb[0].mxu0
        %v6481 = vpop.f32.mrb[0].mxu0
        %6482 = vdwg.mxu0
        %6483 = vmatprep.subr.bf16.mxu0 %v5588
        %6484 = vmatpush1.bf16.msra.mxu0 %v5587
        %6485 = vmatprep.subr.bf16.mxu0 %v5600
        %6486 = vmatpush1.bf16.msra.mxu0 %v5599
        %6487 = vmatprep.subr.bf16.mxu0 %v5612
        %6488 = vmatpush1.bf16.msra.mxu0 %v5611
        %6489 = vmatprep.subr.bf16.mxu0 %v5624
        %6490 = vmatpush1.bf16.msra.mxu0 %v5623
        %6491 = vmatprep.subr.bf16.mxu0 %v5636
        %6492 = vmatpush1.bf16.msra.mxu0 %v5635
        %6493 = vmatprep.subr.bf16.mxu0 %v5648
        %6494 = vmatpush1.bf16.msra.mxu0 %v5647
        %6495 = vmatprep.subr.bf16.mxu0 %v5660
        %6496 = vmatpush1.bf16.msra.mxu0 %v5659
        %6497 = vmatprep.subr.bf16.mxu0 %v5672
        %6498 = vmatpush1.bf16.msra.mxu0 %v5671
        %6499 = vmatprep.subr.bf16.mxu0 %v5684
        %6500 = vmatpush1.bf16.msra.mxu0 %v5683
        %6501 = vmatprep.subr.bf16.mxu0 %v5696
        %6502 = vmatpush1.bf16.msra.mxu0 %v5695
        %6503 = vmatprep.subr.bf16.mxu0 %v5708
        %6504 = vmatpush1.bf16.msra.mxu0 %v5707
        %6505 = vmatprep.subr.bf16.mxu0 %v5720
        %6506 = vmatpush1.bf16.msra.mxu0 %v5719
        %6507 = vmatprep.subr.bf16.mxu0 %v5732
        %6508 = vmatpush1.bf16.msra.mxu0 %v5731
        %6509 = vmatprep.subr.bf16.mxu0 %v5744
        %6510 = vmatpush1.bf16.msra.mxu0 %v5743
        %6511 = vmatprep.subr.bf16.mxu0 %v5756
        %6512 = vmatpush1.bf16.msra.mxu0 %v5755
        %6513 = vmatprep.subr.bf16.mxu0 %v5768
        %6514 = vmatpush1.bf16.msra.mxu0 %v5767
        %6515 = vmatprep.mubr.bf16.mxu0 %v4361
        %6516 = vmatmul.mubr.bf16.gmra.mrb[0].mxu0 %v4360
        %v6517 = vpop.f32.mrb[0].mxu0
        %v6518 = vadd.f32 %v4690, %v6517
        %v6519 = vpop.f32.mrb[0].mxu0
        %v6520 = vadd.f32 %v4694, %v6519
        %v6521 = vpop.f32.mrb[0].mxu0
        %v6522 = vpop.f32.mrb[0].mxu0
        %6523 = vdwg.mxu0
        %6524 = vmatprep.subr.bf16.mxu0 %v5780
        %6525 = vmatpush1.bf16.msra.mxu0 %v5779
        %6526 = vmatprep.subr.bf16.mxu0 %v5792
        %6527 = vmatpush1.bf16.msra.mxu0 %v5791
        %6528 = vmatprep.subr.bf16.mxu0 %v5804
        %6529 = vmatpush1.bf16.msra.mxu0 %v5803
        %6530 = vmatprep.subr.bf16.mxu0 %v5816
        %6531 = vmatpush1.bf16.msra.mxu0 %v5815
        %6532 = vmatprep.subr.bf16.mxu0 %v5828
        %6533 = vmatpush1.bf16.msra.mxu0 %v5827
        %6534 = vmatprep.subr.bf16.mxu0 %v5840
        %6535 = vmatpush1.bf16.msra.mxu0 %v5839
        %6536 = vmatprep.subr.bf16.mxu0 %v5852
        %6537 = vmatpush1.bf16.msra.mxu0 %v5851
        %6538 = vmatprep.subr.bf16.mxu0 %v5864
        %6539 = vmatpush1.bf16.msra.mxu0 %v5863
        %6540 = vmatprep.subr.bf16.mxu0 0
        %6541 = vmatpush1.bf16.msra.mxu0 0
        %6542 = vmatprep.subr.bf16.mxu0 0
        %6543 = vmatpush1.bf16.msra.mxu0 0
        %6544 = vmatprep.subr.bf16.mxu0 0
        %6545 = vmatpush1.bf16.msra.mxu0 0
        %6546 = vmatprep.subr.bf16.mxu0 0
        %6547 = vmatpush1.bf16.msra.mxu0 0
        %6548 = vmatprep.subr.bf16.mxu0 0
        %6549 = vmatpush1.bf16.msra.mxu0 0
        %6550 = vmatprep.subr.bf16.mxu0 0
        %6551 = vmatpush1.bf16.msra.mxu0 0
        %6552 = vmatprep.subr.bf16.mxu0 0
        %6553 = vmatpush1.bf16.msra.mxu0 0
        %6554 = vmatprep.subr.bf16.mxu0 0
        %6555 = vmatpush1.bf16.msra.mxu0 0
        %6556 = vmatprep.mubr.bf16.mxu0 0
        %6557 = vmatmul.mubr.bf16.gmra.mrb[0].mxu0 %v4362
        %v6558 = vpop.f32.mrb[0].mxu0
        %v6559 = vadd.f32 %v6518, %v6558
        %v6560 = vpop.f32.mrb[0].mxu0
        %v6561 = vadd.f32 %v6520, %v6560
        %v6562 = vpop.f32.mrb[0].mxu0
        %v6563 = vpop.f32.mrb[0].mxu0
        %6564 = vdwg.mxu0
        %6565 = vmatprep.subr.bf16.mxu0 %v5590
        %6566 = vmatpush1.bf16.msra.mxu0 %v5589
        %6567 = vmatprep.subr.bf16.mxu0 %v5602
        %6568 = vmatpush1.bf16.msra.mxu0 %v5601
        %6569 = vmatprep.subr.bf16.mxu0 %v5614
        %6570 = vmatpush1.bf16.msra.mxu0 %v5613
        %6571 = vmatprep.subr.bf16.mxu0 %v5626
        %6572 = vmatpush1.bf16.msra.mxu0 %v5625
        %6573 = vmatprep.subr.bf16.mxu0 %v5638
        %6574 = vmatpush1.bf16.msra.mxu0 %v5637
        %6575 = vmatprep.subr.bf16.mxu0 %v5650
        %6576 = vmatpush1.bf16.msra.mxu0 %v5649
        %6577 = vmatprep.subr.bf16.mxu0 %v5662
        %6578 = vmatpush1.bf16.msra.mxu0 %v5661
        %6579 = vmatprep.subr.bf16.mxu0 %v5674
        %6580 = vmatpush1.bf16.msra.mxu0 %v5673
        %6581 = vmatprep.subr.bf16.mxu0 %v5686
        %6582 = vmatpush1.bf16.msra.mxu0 %v5685
        %6583 = vmatprep.subr.bf16.mxu0 %v5698
        %6584 = vmatpush1.bf16.msra.mxu0 %v5697
        %6585 = vmatprep.subr.bf16.mxu0 %v5710
        %6586 = vmatpush1.bf16.msra.mxu0 %v5709
        %6587 = vmatprep.subr.bf16.mxu0 %v5722
        %6588 = vmatpush1.bf16.msra.mxu0 %v5721
        %6589 = vmatprep.subr.bf16.mxu0 %v5734
        %6590 = vmatpush1.bf16.msra.mxu0 %v5733
        %6591 = vmatprep.subr.bf16.mxu0 %v5746
        %6592 = vmatpush1.bf16.msra.mxu0 %v5745
        %6593 = vmatprep.subr.bf16.mxu0 %v5758
        %6594 = vmatpush1.bf16.msra.mxu0 %v5757
        %6595 = vmatprep.subr.bf16.mxu0 %v5770
        %6596 = vmatpush1.bf16.msra.mxu0 %v5769
        %6597 = vmatprep.mubr.bf16.mxu0 %v4361
        %6598 = vmatmul.mubr.bf16.gmra.mrb[0].mxu0 %v4360
        %v6599 = vpop.f32.mrb[0].mxu0
        %v6600 = vadd.f32 %v4698, %v6599
        %v6601 = vpop.f32.mrb[0].mxu0
        %v6602 = vadd.f32 %v4702, %v6601
        %v6603 = vpop.f32.mrb[0].mxu0
        %v6604 = vpop.f32.mrb[0].mxu0
        %6605 = vdwg.mxu0
        %6606 = vmatprep.subr.bf16.mxu0 %v5782
        %6607 = vmatpush1.bf16.msra.mxu0 %v5781
        %6608 = vmatprep.subr.bf16.mxu0 %v5794
        %6609 = vmatpush1.bf16.msra.mxu0 %v5793
        %6610 = vmatprep.subr.bf16.mxu0 %v5806
        %6611 = vmatpush1.bf16.msra.mxu0 %v5805
        %6612 = vmatprep.subr.bf16.mxu0 %v5818
        %6613 = vmatpush1.bf16.msra.mxu0 %v5817
        %6614 = vmatprep.subr.bf16.mxu0 %v5830
        %6615 = vmatpush1.bf16.msra.mxu0 %v5829
        %6616 = vmatprep.subr.bf16.mxu0 %v5842
        %6617 = vmatpush1.bf16.msra.mxu0 %v5841
        %6618 = vmatprep.subr.bf16.mxu0 %v5854
        %6619 = vmatpush1.bf16.msra.mxu0 %v5853
        %6620 = vmatprep.subr.bf16.mxu0 %v5866
        %6621 = vmatpush1.bf16.msra.mxu0 %v5865
        %6622 = vmatprep.subr.bf16.mxu0 0
        %6623 = vmatpush1.bf16.msra.mxu0 0
        %6624 = vmatprep.subr.bf16.mxu0 0
        %6625 = vmatpush1.bf16.msra.mxu0 0
        %6626 = vmatprep.subr.bf16.mxu0 0
        %6627 = vmatpush1.bf16.msra.mxu0 0
        %6628 = vmatprep.subr.bf16.mxu0 0
        %6629 = vmatpush1.bf16.msra.mxu0 0
        %6630 = vmatprep.subr.bf16.mxu0 0
        %6631 = vmatpush1.bf16.msra.mxu0 0
        %6632 = vmatprep.subr.bf16.mxu0 0
        %6633 = vmatpush1.bf16.msra.mxu0 0
        %6634 = vmatprep.subr.bf16.mxu0 0
        %6635 = vmatpush1.bf16.msra.mxu0 0
        %6636 = vmatprep.subr.bf16.mxu0 0
        %6637 = vmatpush1.bf16.msra.mxu0 0
        %6638 = vmatprep.mubr.bf16.mxu0 0
        %6639 = vmatmul.mubr.bf16.gmra.mrb[0].mxu0 %v4362
        %v6640 = vpop.f32.mrb[0].mxu0
        %v6641 = vadd.f32 %v6600, %v6640
        %v6642 = vpop.f32.mrb[0].mxu0
        %v6643 = vadd.f32 %v6602, %v6642
        %v6644 = vpop.f32.mrb[0].mxu0
        %v6645 = vpop.f32.mrb[0].mxu0
        %6646 = vdwg.mxu0
        %v6647 = vmul.f32 %v6231, %v6231
        %v6648 = vmul.f32 %v6233, %v6233
        %v6649 = vmul.f32 %v6313, %v6313
        %v6650 = vmul.f32 %v6315, %v6315
        %v6651 = vmul.f32 %v6395, %v6395
        %v6652 = vmul.f32 %v6397, %v6397
        %v6653 = vmul.f32 %v6477, %v6477
        %v6654 = vmul.f32 %v6479, %v6479
        %v6655 = vmul.f32 %v6559, %v6559
        %v6656 = vmul.f32 %v6561, %v6561
        %v6657 = vmul.f32 %v6641, %v6641
        %v6658 = vmul.f32 %v6643, %v6643
        %v6659 = vmul.f32 %v6231, %v6647
        %v6660 = vmul.f32 %v6233, %v6648
        %v6661 = vmul.f32 %v6313, %v6649
        %v6662 = vmul.f32 %v6315, %v6650
        %v6663 = vmul.f32 %v6395, %v6651
        %v6664 = vmul.f32 %v6397, %v6652
        %v6665 = vmul.f32 %v6477, %v6653
        %v6666 = vmul.f32 %v6479, %v6654
        %v6667 = vmul.f32 %v6559, %v6655
        %v6668 = vmul.f32 %v6561, %v6656
        %v6669 = vmul.f32 %v6641, %v6657
        %v6670 = vmul.f32 %v6643, %v6658
        %v6671 = vmul.f32 %v6659, 0.044715
        %v6672 = vmul.f32 %v6660, 0.044715
        %v6673 = vmul.f32 %v6661, 0.044715
        %v6674 = vmul.f32 %v6662, 0.044715
        %v6675 = vmul.f32 %v6663, 0.044715
        %v6676 = vmul.f32 %v6664, 0.044715
        %v6677 = vmul.f32 %v6665, 0.044715
        %v6678 = vmul.f32 %v6666, 0.044715
        %v6679 = vmul.f32 %v6667, 0.044715
        %v6680 = vmul.f32 %v6668, 0.044715
        %v6681 = vmul.f32 %v6669, 0.044715
        %v6682 = vmul.f32 %v6670, 0.044715
        %v6683 = vadd.f32 %v6231, %v6671
        %v6684 = vadd.f32 %v6233, %v6672
        %v6685 = vadd.f32 %v6313, %v6673
        %v6686 = vadd.f32 %v6315, %v6674
        %v6687 = vadd.f32 %v6395, %v6675
        %v6688 = vadd.f32 %v6397, %v6676
        %v6689 = vadd.f32 %v6477, %v6677
        %v6690 = vadd.f32 %v6479, %v6678
        %v6691 = vadd.f32 %v6559, %v6679
        %v6692 = vadd.f32 %v6561, %v6680
        %v6693 = vadd.f32 %v6641, %v6681
        %v6694 = vadd.f32 %v6643, %v6682
        %v6695 = vmul.f32 %v6683, 0.7978846
        %v6696 = vmul.f32 %v6684, 0.7978846
        %v6697 = vmul.f32 %v6685, 0.7978846
        %v6698 = vmul.f32 %v6686, 0.7978846
        %v6699 = vmul.f32 %v6687, 0.7978846
        %v6700 = vmul.f32 %v6688, 0.7978846
        %v6701 = vmul.f32 %v6689, 0.7978846
        %v6702 = vmul.f32 %v6690, 0.7978846
        %v6703 = vmul.f32 %v6691, 0.7978846
        %v6704 = vmul.f32 %v6692, 0.7978846
        %v6705 = vmul.f32 %v6693, 0.7978846
        %v6706 = vmul.f32 %v6694, 0.7978846
        %v6707 = vtanh.pop %v6695
        %v6708 = vtanh.pop %v6696
        %v6709 = vtanh.pop %v6697
        %v6710 = vtanh.pop %v6698
        %v6711 = vtanh.pop %v6699
        %v6712 = vtanh.pop %v6700
        %v6713 = vtanh.pop %v6701
        %v6714 = vtanh.pop %v6702
        %v6715 = vtanh.pop %v6703
        %v6716 = vtanh.pop %v6704
        %v6717 = vtanh.pop %v6705
        %v6718 = vtanh.pop %v6706
        %v6719 = vadd.f32 %v6707, 1.0
        %v6720 = vadd.f32 %v6708, 1.0
        %v6721 = vadd.f32 %v6709, 1.0
        %v6722 = vadd.f32 %v6710, 1.0
        %v6723 = vadd.f32 %v6711, 1.0
        %v6724 = vadd.f32 %v6712, 1.0
        %v6725 = vadd.f32 %v6713, 1.0
        %v6726 = vadd.f32 %v6714, 1.0
        %v6727 = vadd.f32 %v6715, 1.0
        %v6728 = vadd.f32 %v6716, 1.0
        %v6729 = vadd.f32 %v6717, 1.0
        %v6730 = vadd.f32 %v6718, 1.0
        %v6731 = vmul.f32 %v6719, 0.5
        %v6732 = vmul.f32 %v6720, 0.5
        %v6733 = vmul.f32 %v6721, 0.5
        %v6734 = vmul.f32 %v6722, 0.5
        %v6735 = vmul.f32 %v6723, 0.5
        %v6736 = vmul.f32 %v6724, 0.5
        %v6737 = vmul.f32 %v6725, 0.5
        %v6738 = vmul.f32 %v6726, 0.5
        %v6739 = vmul.f32 %v6727, 0.5
        %v6740 = vmul.f32 %v6728, 0.5
        %v6741 = vmul.f32 %v6729, 0.5
        %v6742 = vmul.f32 %v6730, 0.5
        %v6743 = vmul.f32 %v6231, %v6731
        %v6744 = vmul.f32 %v6233, %v6732
        %v6745 = vmul.f32 %v6313, %v6733
        %v6746 = vmul.f32 %v6315, %v6734
        %v6747 = vmul.f32 %v6395, %v6735
        %v6748 = vmul.f32 %v6397, %v6736
        %v6749 = vmul.f32 %v6477, %v6737
        %v6750 = vmul.f32 %v6479, %v6738
        %v6751 = vmul.f32 %v6559, %v6739
        %v6752 = vmul.f32 %v6561, %v6740
        %v6753 = vmul.f32 %v6641, %v6741
        %v6754 = vmul.f32 %v6643, %v6742
        %v6755 = vpack.c.bf16 %v6743, %v6743
        %v6756 = vpack.c.bf16 %v6744, %v6744
        %v6757 = vpack.c.bf16 %v6745, %v6745
        %v6758 = vpack.c.bf16 %v6746, %v6746
        %v6759 = vpack.c.bf16 %v6747, %v6747
        %v6760 = vpack.c.bf16 %v6748, %v6748
        %v6761 = vpack.c.bf16 %v6749, %v6749
        %v6762 = vpack.c.bf16 %v6750, %v6750
        %v6763 = vpack.c.bf16 %v6751, %v6751
        %v6764 = vpack.c.bf16 %v6752, %v6752
        %v6765 = vpack.c.bf16 %v6753, %v6753
        %v6766 = vpack.c.bf16 %v6754, %v6754
        %v6767 = vld [vmem:[%s884] sm:$0xff]
        %v6768 = vld [vmem:[%s884 + $0x8] sm:$0xf]
        %v6769 = vld [vmem:[%s884 + $0xc] sm:$0xff]
        %v6770 = vld [vmem:[%s884 + $0x14] sm:$0xf]
        %v6771 = vld [vmem:[%s884 + $0x18] sm:$0xff]
        %v6772 = vld [vmem:[%s884 + $0x20] sm:$0xf]
        %v6773 = vld [vmem:[%s884 + $0x24] sm:$0xff]
        %v6774 = vld [vmem:[%s884 + $0x2c] sm:$0xf]
        %v6775 = vld [vmem:[%s884 + $0x30] sm:$0xff]
        %v6776 = vld [vmem:[%s884 + $0x38] sm:$0xf]
        %v6777 = vld [vmem:[%s884 + $0x3c] sm:$0xff]
        %v6778 = vld [vmem:[%s884 + $0x44] sm:$0xf]
        %v6779 = vld [vmem:[%s884 + $0x48] sm:$0xff]
        %v6780 = vld [vmem:[%s884 + $0x50] sm:$0xf]
        %v6781 = vld [vmem:[%s884 + $0x54] sm:$0xff]
        %v6782 = vld [vmem:[%s884 + $0x5c] sm:$0xf]
        %v6783 = vld [vmem:[%s884 + $0x60] sm:$0xff]
        %v6784 = vld [vmem:[%s884 + $0x68] sm:$0xf]
        %v6785 = vld [vmem:[%s884 + $0x6c] sm:$0xff]
        %v6786 = vld [vmem:[%s884 + $0x74] sm:$0xf]
        %v6787 = vld [vmem:[%s884 + $0x78] sm:$0xff]
        %v6788 = vld [vmem:[%s884 + $0x80] sm:$0xf]
        %v6789 = vld [vmem:[%s884 + $0x84] sm:$0xff]
        %v6790 = vld [vmem:[%s884 + $0x8c] sm:$0xf]
        %v6791 = vld [vmem:[%s884 + $0x90] sm:$0xff]
        %v6792 = vld [vmem:[%s884 + $0x98] sm:$0xf]
        %v6793 = vld [vmem:[%s884 + $0x9c] sm:$0xff]
        %v6794 = vld [vmem:[%s884 + $0xa4] sm:$0xf]
        %v6795 = vld [vmem:[%s884 + $0xa8] sm:$0xff]
        %v6796 = vld [vmem:[%s884 + $0xb0] sm:$0xf]
        %v6797 = vld [vmem:[%s884 + $0xb4] sm:$0xff]
        %v6798 = vld [vmem:[%s884 + $0xbc] sm:$0xf]
        %v6799 = vld [vmem:[%s884 + $0xc0] sm:$0xff]
        %v6800 = vld [vmem:[%s884 + $0xc8] sm:$0xf]
        %v6801 = vld [vmem:[%s884 + $0xcc] sm:$0xff]
        %v6802 = vld [vmem:[%s884 + $0xd4] sm:$0xf]
        %v6803 = vld [vmem:[%s884 + $0xd8] sm:$0xff]
        %v6804 = vld [vmem:[%s884 + $0xe0] sm:$0xf]
        %v6805 = vld [vmem:[%s884 + $0xe4] sm:$0xff]
        %v6806 = vld [vmem:[%s884 + $0xec] sm:$0xf]
        %v6807 = vld [vmem:[%s884 + $0xf0] sm:$0xff]
        %v6808 = vld [vmem:[%s884 + $0xf8] sm:$0xf]
        %v6809 = vld [vmem:[%s884 + $0xfc] sm:$0xff]
        %v6810 = vld [vmem:[%s884 + $0x104] sm:$0xf]
        %v6811 = vld [vmem:[%s884 + $0x108] sm:$0xff]
        %v6812 = vld [vmem:[%s884 + $0x110] sm:$0xf]
        %v6813 = vld [vmem:[%s884 + $0x114] sm:$0xff]
        %v6814 = vld [vmem:[%s884 + $0x11c] sm:$0xf]
        %v6815 = vld [vmem:[%s884 + $0x120] sm:$0xff]
        %v6816 = vld [vmem:[%s884 + $0x128] sm:$0xf]
        %v6817 = vld [vmem:[%s884 + $0x12c] sm:$0xff]
        %v6818 = vld [vmem:[%s884 + $0x134] sm:$0xf]
        %v6819 = vld [vmem:[%s884 + $0x138] sm:$0xff]
        %v6820 = vld [vmem:[%s884 + $0x140] sm:$0xf]
        %v6821 = vld [vmem:[%s884 + $0x144] sm:$0xff]
        %v6822 = vld [vmem:[%s884 + $0x14c] sm:$0xf]
        %v6823 = vld [vmem:[%s884 + $0x150] sm:$0xff]
        %v6824 = vld [vmem:[%s884 + $0x158] sm:$0xf]
        %v6825 = vld [vmem:[%s884 + $0x15c] sm:$0xff]
        %v6826 = vld [vmem:[%s884 + $0x164] sm:$0xf]
        %v6827 = vld [vmem:[%s884 + $0x168] sm:$0xff]
        %v6828 = vld [vmem:[%s884 + $0x170] sm:$0xf]
        %v6829 = vld [vmem:[%s884 + $0x174] sm:$0xff]
        %v6830 = vld [vmem:[%s884 + $0x17c] sm:$0xf]
        %v6831 = vld [vmem:[%s884 + $0x180] sm:$0xff]
        %v6832 = vld [vmem:[%s884 + $0x188] sm:$0xf]
        %v6833 = vld [vmem:[%s884 + $0x18c] sm:$0xff]
        %v6834 = vld [vmem:[%s884 + $0x194] sm:$0xf]
        %v6835 = vld [vmem:[%s884 + $0x198] sm:$0xff]
        %v6836 = vld [vmem:[%s884 + $0x1a0] sm:$0xf]
        %v6837 = vld [vmem:[%s884 + $0x1a4] sm:$0xff]
        %v6838 = vld [vmem:[%s884 + $0x1ac] sm:$0xf]
        %v6839 = vld [vmem:[%s884 + $0x1b0] sm:$0xff]
        %v6840 = vld [vmem:[%s884 + $0x1b8] sm:$0xf]
        %v6841 = vld [vmem:[%s884 + $0x1bc] sm:$0xff]
        %v6842 = vld [vmem:[%s884 + $0x1c4] sm:$0xf]
        %v6843 = vld [vmem:[%s884 + $0x1c8] sm:$0xff]
        %v6844 = vld [vmem:[%s884 + $0x1d0] sm:$0xf]
        %v6845 = vld [vmem:[%s884 + $0x1d4] sm:$0xff]
        %v6846 = vld [vmem:[%s884 + $0x1dc] sm:$0xf]
        %v6847 = vld [vmem:[%s884 + $0x1e0] sm:$0xff]
        %v6848 = vld [vmem:[%s884 + $0x1e8] sm:$0xf]
        %v6849 = vld [vmem:[%s884 + $0x1ec] sm:$0xff]
        %v6850 = vld [vmem:[%s884 + $0x1f4] sm:$0xf]
        %v6851 = vld [vmem:[%s884 + $0x1f8] sm:$0xff]
        %v6852 = vld [vmem:[%s884 + $0x200] sm:$0xf]
        %v6853 = vld [vmem:[%s884 + $0x204] sm:$0xff]
        %v6854 = vld [vmem:[%s884 + $0x20c] sm:$0xf]
        %v6855 = vld [vmem:[%s884 + $0x210] sm:$0xff]
        %v6856 = vld [vmem:[%s884 + $0x218] sm:$0xf]
        %v6857 = vld [vmem:[%s884 + $0x21c] sm:$0xff]
        %v6858 = vld [vmem:[%s884 + $0x224] sm:$0xf]
        %v6859 = vld [vmem:[%s884 + $0x228] sm:$0xff]
        %v6860 = vld [vmem:[%s884 + $0x230] sm:$0xf]
        %v6861 = vld [vmem:[%s884 + $0x234] sm:$0xff]
        %v6862 = vld [vmem:[%s884 + $0x23c] sm:$0xf]
        %v6863 = vld [vmem:[%s884 + $0x240] sm:$0xff]
        %v6864 = vld [vmem:[%s884 + $0x248] sm:$0xf]
        %v6865 = vld [vmem:[%s884 + $0x24c] sm:$0xff]
        %v6866 = vld [vmem:[%s884 + $0x254] sm:$0xf]
        %v6867 = vld [vmem:[%s884 + $0x258] sm:$0xff]
        %v6868 = vld [vmem:[%s884 + $0x260] sm:$0xf]
        %v6869 = vld [vmem:[%s884 + $0x264] sm:$0xff]
        %v6870 = vld [vmem:[%s884 + $0x26c] sm:$0xf]
        %v6871 = vld [vmem:[%s884 + $0x270] sm:$0xff]
        %v6872 = vld [vmem:[%s884 + $0x278] sm:$0xf]
        %v6873 = vld [vmem:[%s884 + $0x27c] sm:$0xff]
        %v6874 = vld [vmem:[%s884 + $0x284] sm:$0xf]
        %v6875 = vld [vmem:[%s884 + $0x288] sm:$0xff]
        %v6876 = vld [vmem:[%s884 + $0x290] sm:$0xf]
        %v6877 = vld [vmem:[%s884 + $0x294] sm:$0xff]
        %v6878 = vld [vmem:[%s884 + $0x29c] sm:$0xf]
        %v6879 = vld [vmem:[%s884 + $0x2a0] sm:$0xff]
        %v6880 = vld [vmem:[%s884 + $0x2a8] sm:$0xf]
        %v6881 = vld [vmem:[%s884 + $0x2ac] sm:$0xff]
        %v6882 = vld [vmem:[%s884 + $0x2b4] sm:$0xf]
        %v6883 = vld [vmem:[%s884 + $0x2b8] sm:$0xff]
        %v6884 = vld [vmem:[%s884 + $0x2c0] sm:$0xf]
        %v6885 = vld [vmem:[%s884 + $0x2c4] sm:$0xff]
        %v6886 = vld [vmem:[%s884 + $0x2cc] sm:$0xf]
        %v6887 = vld [vmem:[%s884 + $0x2d0] sm:$0xff]
        %v6888 = vld [vmem:[%s884 + $0x2d8] sm:$0xf]
        %v6889 = vld [vmem:[%s884 + $0x2dc] sm:$0xff]
        %v6890 = vld [vmem:[%s884 + $0x2e4] sm:$0xf]
        %v6891 = vld [vmem:[%s884 + $0x2e8] sm:$0xff]
        %v6892 = vld [vmem:[%s884 + $0x2f0] sm:$0xf]
        %v6893 = vld [vmem:[%s884 + $0x2f4] sm:$0xff]
        %v6894 = vld [vmem:[%s884 + $0x2fc] sm:$0xf]
        %v6895 = vld [vmem:[%s884 + $0x300] sm:$0xff]
        %v6896 = vld [vmem:[%s884 + $0x308] sm:$0xf]
        %v6897 = vld [vmem:[%s884 + $0x30c] sm:$0xff]
        %v6898 = vld [vmem:[%s884 + $0x314] sm:$0xf]
        %v6899 = vld [vmem:[%s884 + $0x318] sm:$0xff]
        %v6900 = vld [vmem:[%s884 + $0x320] sm:$0xf]
        %v6901 = vld [vmem:[%s884 + $0x324] sm:$0xff]
        %v6902 = vld [vmem:[%s884 + $0x32c] sm:$0xf]
        %v6903 = vld [vmem:[%s884 + $0x330] sm:$0xff]
        %v6904 = vld [vmem:[%s884 + $0x338] sm:$0xf]
        %v6905 = vld [vmem:[%s884 + $0x33c] sm:$0xff]
        %v6906 = vld [vmem:[%s884 + $0x344] sm:$0xf]
        %v6907 = vld [vmem:[%s884 + $0x348] sm:$0xff]
        %v6908 = vld [vmem:[%s884 + $0x350] sm:$0xf]
        %v6909 = vld [vmem:[%s884 + $0x354] sm:$0xff]
        %v6910 = vld [vmem:[%s884 + $0x35c] sm:$0xf]
        %v6911 = vld [vmem:[%s884 + $0x360] sm:$0xff]
        %v6912 = vld [vmem:[%s884 + $0x368] sm:$0xf]
        %v6913 = vld [vmem:[%s884 + $0x36c] sm:$0xff]
        %v6914 = vld [vmem:[%s884 + $0x374] sm:$0xf]
        %v6915 = vld [vmem:[%s884 + $0x378] sm:$0xff]
        %v6916 = vld [vmem:[%s884 + $0x380] sm:$0xf]
        %v6917 = vld [vmem:[%s884 + $0x384] sm:$0xff]
        %v6918 = vld [vmem:[%s884 + $0x38c] sm:$0xf]
        %v6919 = vld [vmem:[%s884 + $0x390] sm:$0xff]
        %v6920 = vld [vmem:[%s884 + $0x398] sm:$0xf]
        %v6921 = vld [vmem:[%s884 + $0x39c] sm:$0xff]
        %v6922 = vld [vmem:[%s884 + $0x3a4] sm:$0xf]
        %v6923 = vld [vmem:[%s884 + $0x3a8] sm:$0xff]
        %v6924 = vld [vmem:[%s884 + $0x3b0] sm:$0xf]
        %v6925 = vld [vmem:[%s884 + $0x3b4] sm:$0xff]
        %v6926 = vld [vmem:[%s884 + $0x3bc] sm:$0xf]
        %v6927 = vld [vmem:[%s884 + $0x3c0] sm:$0xff]
        %v6928 = vld [vmem:[%s884 + $0x3c8] sm:$0xf]
        %v6929 = vld [vmem:[%s884 + $0x3cc] sm:$0xff]
        %v6930 = vld [vmem:[%s884 + $0x3d4] sm:$0xf]
        %v6931 = vld [vmem:[%s884 + $0x3d8] sm:$0xff]
        %v6932 = vld [vmem:[%s884 + $0x3e0] sm:$0xf]
        %v6933 = vld [vmem:[%s884 + $0x3e4] sm:$0xff]
        %v6934 = vld [vmem:[%s884 + $0x3ec] sm:$0xf]
        %v6935 = vld [vmem:[%s884 + $0x3f0] sm:$0xff]
        %v6936 = vld [vmem:[%s884 + $0x3f8] sm:$0xf]
        %v6937 = vld [vmem:[%s884 + $0x3fc] sm:$0xff]
        %v6938 = vld [vmem:[%s884 + $0x404] sm:$0xf]
        %v6939 = vld [vmem:[%s884 + $0x408] sm:$0xff]
        %v6940 = vld [vmem:[%s884 + $0x410] sm:$0xf]
        %v6941 = vld [vmem:[%s884 + $0x414] sm:$0xff]
        %v6942 = vld [vmem:[%s884 + $0x41c] sm:$0xf]
        %v6943 = vld [vmem:[%s884 + $0x420] sm:$0xff]
        %v6944 = vld [vmem:[%s884 + $0x428] sm:$0xf]
        %v6945 = vld [vmem:[%s884 + $0x42c] sm:$0xff]
        %v6946 = vld [vmem:[%s884 + $0x434] sm:$0xf]
        %v6947 = vld [vmem:[%s884 + $0x438] sm:$0xff]
        %v6948 = vld [vmem:[%s884 + $0x440] sm:$0xf]
        %v6949 = vld [vmem:[%s884 + $0x444] sm:$0xff]
        %v6950 = vld [vmem:[%s884 + $0x44c] sm:$0xf]
        %v6951 = vld [vmem:[%s884 + $0x450] sm:$0xff]
        %v6952 = vld [vmem:[%s884 + $0x458] sm:$0xf]
        %v6953 = vld [vmem:[%s884 + $0x45c] sm:$0xff]
        %v6954 = vld [vmem:[%s884 + $0x464] sm:$0xf]
        %v6955 = vld [vmem:[%s884 + $0x468] sm:$0xff]
        %v6956 = vld [vmem:[%s884 + $0x470] sm:$0xf]
        %v6957 = vld [vmem:[%s884 + $0x474] sm:$0xff]
        %v6958 = vld [vmem:[%s884 + $0x47c] sm:$0xf]
        %v6959 = vld [vmem:[%s884 + $0x480] sm:$0xff]
        %v6960 = vld [vmem:[%s884 + $0x488] sm:$0xf]
        %v6961 = vld [vmem:[%s884 + $0x48c] sm:$0xff]
        %v6962 = vld [vmem:[%s884 + $0x494] sm:$0xf]
        %v6963 = vld [vmem:[%s884 + $0x498] sm:$0xff]
        %v6964 = vld [vmem:[%s884 + $0x4a0] sm:$0xf]
        %v6965 = vld [vmem:[%s884 + $0x4a4] sm:$0xff]
        %v6966 = vld [vmem:[%s884 + $0x4ac] sm:$0xf]
        %v6967 = vld [vmem:[%s884 + $0x4b0] sm:$0xff]
        %v6968 = vld [vmem:[%s884 + $0x4b8] sm:$0xf]
        %v6969 = vld [vmem:[%s884 + $0x4bc] sm:$0xff]
        %v6970 = vld [vmem:[%s884 + $0x4c4] sm:$0xf]
        %v6971 = vld [vmem:[%s884 + $0x4c8] sm:$0xff]
        %v6972 = vld [vmem:[%s884 + $0x4d0] sm:$0xf]
        %v6973 = vld [vmem:[%s884 + $0x4d4] sm:$0xff]
        %v6974 = vld [vmem:[%s884 + $0x4dc] sm:$0xf]
        %v6975 = vld [vmem:[%s884 + $0x4e0] sm:$0xff]
        %v6976 = vld [vmem:[%s884 + $0x4e8] sm:$0xf]
        %v6977 = vld [vmem:[%s884 + $0x4ec] sm:$0xff]
        %v6978 = vld [vmem:[%s884 + $0x4f4] sm:$0xf]
        %v6979 = vld [vmem:[%s884 + $0x4f8] sm:$0xff]
        %v6980 = vld [vmem:[%s884 + $0x500] sm:$0xf]
        %v6981 = vld [vmem:[%s884 + $0x504] sm:$0xff]
        %v6982 = vld [vmem:[%s884 + $0x50c] sm:$0xf]
        %v6983 = vld [vmem:[%s884 + $0x510] sm:$0xff]
        %v6984 = vld [vmem:[%s884 + $0x518] sm:$0xf]
        %v6985 = vld [vmem:[%s884 + $0x51c] sm:$0xff]
        %v6986 = vld [vmem:[%s884 + $0x524] sm:$0xf]
        %v6987 = vld [vmem:[%s884 + $0x528] sm:$0xff]
        %v6988 = vld [vmem:[%s884 + $0x530] sm:$0xf]
        %v6989 = vld [vmem:[%s884 + $0x534] sm:$0xff]
        %v6990 = vld [vmem:[%s884 + $0x53c] sm:$0xf]
        %v6991 = vld [vmem:[%s884 + $0x540] sm:$0xff]
        %v6992 = vld [vmem:[%s884 + $0x548] sm:$0xf]
        %v6993 = vld [vmem:[%s884 + $0x54c] sm:$0xff]
        %v6994 = vld [vmem:[%s884 + $0x554] sm:$0xf]
        %v6995 = vld [vmem:[%s884 + $0x558] sm:$0xff]
        %v6996 = vld [vmem:[%s884 + $0x560] sm:$0xf]
        %v6997 = vld [vmem:[%s884 + $0x564] sm:$0xff]
        %v6998 = vld [vmem:[%s884 + $0x56c] sm:$0xf]
        %v6999 = vld [vmem:[%s884 + $0x570] sm:$0xff]
        %v7000 = vld [vmem:[%s884 + $0x578] sm:$0xf]
        %v7001 = vld [vmem:[%s884 + $0x57c] sm:$0xff]
        %v7002 = vld [vmem:[%s884 + $0x584] sm:$0xf]
        %v7003 = vld [vmem:[%s884 + $0x588] sm:$0xff]
        %v7004 = vld [vmem:[%s884 + $0x590] sm:$0xf]
        %v7005 = vld [vmem:[%s884 + $0x594] sm:$0xff]
        %v7006 = vld [vmem:[%s884 + $0x59c] sm:$0xf]
        %v7007 = vld [vmem:[%s884 + $0x5a0] sm:$0xff]
        %v7008 = vld [vmem:[%s884 + $0x5a8] sm:$0xf]
        %v7009 = vld [vmem:[%s884 + $0x5ac] sm:$0xff]
        %v7010 = vld [vmem:[%s884 + $0x5b4] sm:$0xf]
        %v7011 = vld [vmem:[%s884 + $0x5b8] sm:$0xff]
        %v7012 = vld [vmem:[%s884 + $0x5c0] sm:$0xf]
        %v7013 = vld [vmem:[%s884 + $0x5c4] sm:$0xff]
        %v7014 = vld [vmem:[%s884 + $0x5cc] sm:$0xf]
        %v7015 = vld [vmem:[%s884 + $0x5d0] sm:$0xff]
        %v7016 = vld [vmem:[%s884 + $0x5d8] sm:$0xf]
        %v7017 = vld [vmem:[%s884 + $0x5dc] sm:$0xff]
        %v7018 = vld [vmem:[%s884 + $0x5e4] sm:$0xf]
        %v7019 = vld [vmem:[%s884 + $0x5e8] sm:$0xff]
        %v7020 = vld [vmem:[%s884 + $0x5f0] sm:$0xf]
        %v7021 = vld [vmem:[%s884 + $0x5f4] sm:$0xff]
        %v7022 = vld [vmem:[%s884 + $0x5fc] sm:$0xf]
        %v7023 = vld [vmem:[%s884 + $0x600] sm:$0xff]
        %v7024 = vld [vmem:[%s884 + $0x608] sm:$0xf]
        %v7025 = vld [vmem:[%s884 + $0x60c] sm:$0xff]
        %v7026 = vld [vmem:[%s884 + $0x614] sm:$0xf]
        %v7027 = vld [vmem:[%s884 + $0x618] sm:$0xff]
        %v7028 = vld [vmem:[%s884 + $0x620] sm:$0xf]
        %v7029 = vld [vmem:[%s884 + $0x624] sm:$0xff]
        %v7030 = vld [vmem:[%s884 + $0x62c] sm:$0xf]
        %v7031 = vld [vmem:[%s884 + $0x630] sm:$0xff]
        %v7032 = vld [vmem:[%s884 + $0x638] sm:$0xf]
        %v7033 = vld [vmem:[%s884 + $0x63c] sm:$0xff]
        %v7034 = vld [vmem:[%s884 + $0x644] sm:$0xf]
        %v7035 = vld [vmem:[%s884 + $0x648] sm:$0xff]
        %v7036 = vld [vmem:[%s884 + $0x650] sm:$0xf]
        %v7037 = vld [vmem:[%s884 + $0x654] sm:$0xff]
        %v7038 = vld [vmem:[%s884 + $0x65c] sm:$0xf]
        %v7039 = vld [vmem:[%s884 + $0x660] sm:$0xff]
        %v7040 = vld [vmem:[%s884 + $0x668] sm:$0xf]
        %v7041 = vld [vmem:[%s884 + $0x66c] sm:$0xff]
        %v7042 = vld [vmem:[%s884 + $0x674] sm:$0xf]
        %v7043 = vld [vmem:[%s884 + $0x678] sm:$0xff]
        %v7044 = vld [vmem:[%s884 + $0x680] sm:$0xf]
        %v7045 = vld [vmem:[%s884 + $0x684] sm:$0xff]
        %v7046 = vld [vmem:[%s884 + $0x68c] sm:$0xf]
        %v7047 = vld [vmem:[%s884 + $0x690] sm:$0xff]
        %v7048 = vld [vmem:[%s884 + $0x698] sm:$0xf]
        %v7049 = vld [vmem:[%s884 + $0x69c] sm:$0xff]
        %v7050 = vld [vmem:[%s884 + $0x6a4] sm:$0xf]
        %v7051 = vld [vmem:[%s884 + $0x6a8] sm:$0xff]
        %v7052 = vld [vmem:[%s884 + $0x6b0] sm:$0xf]
        %v7053 = vld [vmem:[%s884 + $0x6b4] sm:$0xff]
        %v7054 = vld [vmem:[%s884 + $0x6bc] sm:$0xf]
        %v7055 = vld [vmem:[%s884 + $0x6c0] sm:$0xff]
        %v7056 = vld [vmem:[%s884 + $0x6c8] sm:$0xf]
        %v7057 = vld [vmem:[%s884 + $0x6cc] sm:$0xff]
        %v7058 = vld [vmem:[%s884 + $0x6d4] sm:$0xf]
        %v7059 = vld [vmem:[%s884 + $0x6d8] sm:$0xff]
        %v7060 = vld [vmem:[%s884 + $0x6e0] sm:$0xf]
        %v7061 = vld [vmem:[%s884 + $0x6e4] sm:$0xff]
        %v7062 = vld [vmem:[%s884 + $0x6ec] sm:$0xf]
        %v7063 = vld [vmem:[%s884 + $0x6f0] sm:$0xff]
        %v7064 = vld [vmem:[%s884 + $0x6f8] sm:$0xf]
        %v7065 = vld [vmem:[%s884 + $0x6fc] sm:$0xff]
        %v7066 = vld [vmem:[%s884 + $0x704] sm:$0xf]
        %v7067 = vld [vmem:[%s884 + $0x708] sm:$0xff]
        %v7068 = vld [vmem:[%s884 + $0x710] sm:$0xf]
        %v7069 = vld [vmem:[%s884 + $0x714] sm:$0xff]
        %v7070 = vld [vmem:[%s884 + $0x71c] sm:$0xf]
        %v7071 = vld [vmem:[%s884 + $0x720] sm:$0xff]
        %v7072 = vld [vmem:[%s884 + $0x728] sm:$0xf]
        %v7073 = vld [vmem:[%s884 + $0x72c] sm:$0xff]
        %v7074 = vld [vmem:[%s884 + $0x734] sm:$0xf]
        %v7075 = vld [vmem:[%s884 + $0x738] sm:$0xff]
        %v7076 = vld [vmem:[%s884 + $0x740] sm:$0xf]
        %v7077 = vld [vmem:[%s884 + $0x744] sm:$0xff]
        %v7078 = vld [vmem:[%s884 + $0x74c] sm:$0xf]
        %v7079 = vld [vmem:[%s884 + $0x750] sm:$0xff]
        %v7080 = vld [vmem:[%s884 + $0x758] sm:$0xf]
        %v7081 = vld [vmem:[%s884 + $0x75c] sm:$0xff]
        %v7082 = vld [vmem:[%s884 + $0x764] sm:$0xf]
        %v7083 = vld [vmem:[%s884 + $0x768] sm:$0xff]
        %v7084 = vld [vmem:[%s884 + $0x770] sm:$0xf]
        %v7085 = vld [vmem:[%s884 + $0x774] sm:$0xff]
        %v7086 = vld [vmem:[%s884 + $0x77c] sm:$0xf]
        %v7087 = vld [vmem:[%s884 + $0x780] sm:$0xff]
        %v7088 = vld [vmem:[%s884 + $0x788] sm:$0xf]
        %v7089 = vld [vmem:[%s884 + $0x78c] sm:$0xff]
        %v7090 = vld [vmem:[%s884 + $0x794] sm:$0xf]
        %v7091 = vld [vmem:[%s884 + $0x798] sm:$0xff]
        %v7092 = vld [vmem:[%s884 + $0x7a0] sm:$0xf]
        %v7093 = vld [vmem:[%s884 + $0x7a4] sm:$0xff]
        %v7094 = vld [vmem:[%s884 + $0x7ac] sm:$0xf]
        %v7095 = vld [vmem:[%s884 + $0x7b0] sm:$0xff]
        %v7096 = vld [vmem:[%s884 + $0x7b8] sm:$0xf]
        %v7097 = vld [vmem:[%s884 + $0x7bc] sm:$0xff]
        %v7098 = vld [vmem:[%s884 + $0x7c4] sm:$0xf]
        %v7099 = vld [vmem:[%s884 + $0x7c8] sm:$0xff]
        %v7100 = vld [vmem:[%s884 + $0x7d0] sm:$0xf]
        %v7101 = vld [vmem:[%s884 + $0x7d4] sm:$0xff]
        %v7102 = vld [vmem:[%s884 + $0x7dc] sm:$0xf]
        %v7103 = vld [vmem:[%s884 + $0x7e0] sm:$0xff]
        %v7104 = vld [vmem:[%s884 + $0x7e8] sm:$0xf]
        %v7105 = vld [vmem:[%s884 + $0x7ec] sm:$0xff]
        %v7106 = vld [vmem:[%s884 + $0x7f4] sm:$0xf]
        %v7107 = vld [vmem:[%s884 + $0x7f8] sm:$0xff]
        %v7108 = vld [vmem:[%s884 + $0x800] sm:$0xf]
        %v7109 = vld [vmem:[%s884 + $0x804] sm:$0xff]
        %v7110 = vld [vmem:[%s884 + $0x80c] sm:$0xf]
        %v7111 = vld [vmem:[%s884 + $0x810] sm:$0xff]
        %v7112 = vld [vmem:[%s884 + $0x818] sm:$0xf]
        %v7113 = vld [vmem:[%s884 + $0x81c] sm:$0xff]
        %v7114 = vld [vmem:[%s884 + $0x824] sm:$0xf]
        %v7115 = vld [vmem:[%s884 + $0x828] sm:$0xff]
        %v7116 = vld [vmem:[%s884 + $0x830] sm:$0xf]
        %v7117 = vld [vmem:[%s884 + $0x834] sm:$0xff]
        %v7118 = vld [vmem:[%s884 + $0x83c] sm:$0xf]
        %v7119 = vld [vmem:[%s884 + $0x840] sm:$0xff]
        %v7120 = vld [vmem:[%s884 + $0x848] sm:$0xf]
        %v7121 = vld [vmem:[%s884 + $0x84c] sm:$0xff]
        %v7122 = vld [vmem:[%s884 + $0x854] sm:$0xf]
        %v7123 = vld [vmem:[%s884 + $0x858] sm:$0xff]
        %v7124 = vld [vmem:[%s884 + $0x860] sm:$0xf]
        %v7125 = vld [vmem:[%s884 + $0x864] sm:$0xff]
        %v7126 = vld [vmem:[%s884 + $0x86c] sm:$0xf]
        %v7127 = vld [vmem:[%s884 + $0x870] sm:$0xff]
        %v7128 = vld [vmem:[%s884 + $0x878] sm:$0xf]
        %v7129 = vld [vmem:[%s884 + $0x87c] sm:$0xff]
        %v7130 = vld [vmem:[%s884 + $0x884] sm:$0xf]
        %v7131 = vld [vmem:[%s884 + $0x888] sm:$0xff]
        %v7132 = vld [vmem:[%s884 + $0x890] sm:$0xf]
        %v7133 = vld [vmem:[%s884 + $0x894] sm:$0xff]
        %v7134 = vld [vmem:[%s884 + $0x89c] sm:$0xf]
        %v7135 = vld [vmem:[%s884 + $0x8a0] sm:$0xff]
        %v7136 = vld [vmem:[%s884 + $0x8a8] sm:$0xf]
        %v7137 = vld [vmem:[%s884 + $0x8ac] sm:$0xff]
        %v7138 = vld [vmem:[%s884 + $0x8b4] sm:$0xf]
        %v7139 = vld [vmem:[%s884 + $0x8b8] sm:$0xff]
        %v7140 = vld [vmem:[%s884 + $0x8c0] sm:$0xf]
        %v7141 = vld [vmem:[%s884 + $0x8c4] sm:$0xff]
        %v7142 = vld [vmem:[%s884 + $0x8cc] sm:$0xf]
        %v7143 = vld [vmem:[%s884 + $0x8d0] sm:$0xff]
        %v7144 = vld [vmem:[%s884 + $0x8d8] sm:$0xf]
        %v7145 = vld [vmem:[%s884 + $0x8dc] sm:$0xff]
        %v7146 = vld [vmem:[%s884 + $0x8e4] sm:$0xf]
        %v7147 = vld [vmem:[%s884 + $0x8e8] sm:$0xff]
        %v7148 = vld [vmem:[%s884 + $0x8f0] sm:$0xf]
        %v7149 = vld [vmem:[%s884 + $0x8f4] sm:$0xff]
        %v7150 = vld [vmem:[%s884 + $0x8fc] sm:$0xf]
        %v7151 = vld [vmem:[%s893] sm:$0x7]
        %v7153 = vlaneseq
        %v7154 = vshrl.u32 %v7153, 7
        %v7155 = vsub.s32 0, %v7154
        %v7156 = vrot.slane %v7151, %v7155
        %v7157 = vlaneseq
        %v7158 = vshrl.u32 %v7157, 7
        %v7159 = vsub.s32 1, %v7158
        %v7160 = vrot.slane %v7151, %v7159
        %v7161 = vlaneseq
        %v7162 = vshrl.u32 %v7161, 7
        %v7163 = vsub.s32 2, %v7162
        %v7164 = vrot.slane %v7151, %v7163
        %v7552 = vunpack.c.l.b16 %v6767
        %v7553 = vunpack.c.h.b16 %v6767
        %v7554 = vunpack.c.l.b16 %v6768
        %v7555 = vunpack.c.l.b16 %v6769
        %v7556 = vunpack.c.h.b16 %v6769
        %v7557 = vunpack.c.l.b16 %v6770
        %v7558 = vunpack.c.l.b16 %v6771
        %v7559 = vunpack.c.h.b16 %v6771
        %v7560 = vunpack.c.l.b16 %v6772
        %v7561 = vunpack.c.l.b16 %v6773
        %v7562 = vunpack.c.h.b16 %v6773
        %v7563 = vunpack.c.l.b16 %v6774
        %v7564 = vunpack.c.l.b16 %v6775
        %v7565 = vunpack.c.h.b16 %v6775
        %v7566 = vunpack.c.l.b16 %v6776
        %v7567 = vunpack.c.l.b16 %v6777
        %v7568 = vunpack.c.h.b16 %v6777
        %v7569 = vunpack.c.l.b16 %v6778
        %v7570 = vunpack.c.l.b16 %v6779
        %v7571 = vunpack.c.h.b16 %v6779
        %v7572 = vunpack.c.l.b16 %v6780
        %v7573 = vunpack.c.l.b16 %v6781
        %v7574 = vunpack.c.h.b16 %v6781
        %v7575 = vunpack.c.l.b16 %v6782
        %v7576 = vunpack.c.l.b16 %v6783
        %v7577 = vunpack.c.h.b16 %v6783
        %v7578 = vunpack.c.l.b16 %v6784
        %v7579 = vunpack.c.l.b16 %v6785
        %v7580 = vunpack.c.h.b16 %v6785
        %v7581 = vunpack.c.l.b16 %v6786
        %v7582 = vunpack.c.l.b16 %v6787
        %v7583 = vunpack.c.h.b16 %v6787
        %v7584 = vunpack.c.l.b16 %v6788
        %v7585 = vunpack.c.l.b16 %v6789
        %v7586 = vunpack.c.h.b16 %v6789
        %v7587 = vunpack.c.l.b16 %v6790
        %v7588 = vunpack.c.l.b16 %v6791
        %v7589 = vunpack.c.h.b16 %v6791
        %v7590 = vunpack.c.l.b16 %v6792
        %v7591 = vunpack.c.l.b16 %v6793
        %v7592 = vunpack.c.h.b16 %v6793
        %v7593 = vunpack.c.l.b16 %v6794
        %v7594 = vunpack.c.l.b16 %v6795
        %v7595 = vunpack.c.h.b16 %v6795
        %v7596 = vunpack.c.l.b16 %v6796
        %v7597 = vunpack.c.l.b16 %v6797
        %v7598 = vunpack.c.h.b16 %v6797
        %v7599 = vunpack.c.l.b16 %v6798
        %v7600 = vunpack.c.l.b16 %v6799
        %v7601 = vunpack.c.h.b16 %v6799
        %v7602 = vunpack.c.l.b16 %v6800
        %v7603 = vunpack.c.l.b16 %v6801
        %v7604 = vunpack.c.h.b16 %v6801
        %v7605 = vunpack.c.l.b16 %v6802
        %v7606 = vunpack.c.l.b16 %v6803
        %v7607 = vunpack.c.h.b16 %v6803
        %v7608 = vunpack.c.l.b16 %v6804
        %v7609 = vunpack.c.l.b16 %v6805
        %v7610 = vunpack.c.h.b16 %v6805
        %v7611 = vunpack.c.l.b16 %v6806
        %v7612 = vunpack.c.l.b16 %v6807
        %v7613 = vunpack.c.h.b16 %v6807
        %v7614 = vunpack.c.l.b16 %v6808
        %v7615 = vunpack.c.l.b16 %v6809
        %v7616 = vunpack.c.h.b16 %v6809
        %v7617 = vunpack.c.l.b16 %v6810
        %v7618 = vunpack.c.l.b16 %v6811
        %v7619 = vunpack.c.h.b16 %v6811
        %v7620 = vunpack.c.l.b16 %v6812
        %v7621 = vunpack.c.l.b16 %v6813
        %v7622 = vunpack.c.h.b16 %v6813
        %v7623 = vunpack.c.l.b16 %v6814
        %v7624 = vunpack.c.l.b16 %v6815
        %v7625 = vunpack.c.h.b16 %v6815
        %v7626 = vunpack.c.l.b16 %v6816
        %v7627 = vunpack.c.l.b16 %v6817
        %v7628 = vunpack.c.h.b16 %v6817
        %v7629 = vunpack.c.l.b16 %v6818
        %v7630 = vunpack.c.l.b16 %v6819
        %v7631 = vunpack.c.h.b16 %v6819
        %v7632 = vunpack.c.l.b16 %v6820
        %v7633 = vunpack.c.l.b16 %v6821
        %v7634 = vunpack.c.h.b16 %v6821
        %v7635 = vunpack.c.l.b16 %v6822
        %v7636 = vunpack.c.l.b16 %v6823
        %v7637 = vunpack.c.h.b16 %v6823
        %v7638 = vunpack.c.l.b16 %v6824
        %v7639 = vunpack.c.l.b16 %v6825
        %v7640 = vunpack.c.h.b16 %v6825
        %v7641 = vunpack.c.l.b16 %v6826
        %v7642 = vunpack.c.l.b16 %v6827
        %v7643 = vunpack.c.h.b16 %v6827
        %v7644 = vunpack.c.l.b16 %v6828
        %v7645 = vunpack.c.l.b16 %v6829
        %v7646 = vunpack.c.h.b16 %v6829
        %v7647 = vunpack.c.l.b16 %v6830
        %v7648 = vunpack.c.l.b16 %v6831
        %v7649 = vunpack.c.h.b16 %v6831
        %v7650 = vunpack.c.l.b16 %v6832
        %v7651 = vunpack.c.l.b16 %v6833
        %v7652 = vunpack.c.h.b16 %v6833
        %v7653 = vunpack.c.l.b16 %v6834
        %v7654 = vunpack.c.l.b16 %v6835
        %v7655 = vunpack.c.h.b16 %v6835
        %v7656 = vunpack.c.l.b16 %v6836
        %v7657 = vunpack.c.l.b16 %v6837
        %v7658 = vunpack.c.h.b16 %v6837
        %v7659 = vunpack.c.l.b16 %v6838
        %v7660 = vunpack.c.l.b16 %v6839
        %v7661 = vunpack.c.h.b16 %v6839
        %v7662 = vunpack.c.l.b16 %v6840
        %v7663 = vunpack.c.l.b16 %v6841
        %v7664 = vunpack.c.h.b16 %v6841
        %v7665 = vunpack.c.l.b16 %v6842
        %v7666 = vunpack.c.l.b16 %v6843
        %v7667 = vunpack.c.h.b16 %v6843
        %v7668 = vunpack.c.l.b16 %v6844
        %v7669 = vunpack.c.l.b16 %v6845
        %v7670 = vunpack.c.h.b16 %v6845
        %v7671 = vunpack.c.l.b16 %v6846
        %v7672 = vunpack.c.l.b16 %v6847
        %v7673 = vunpack.c.h.b16 %v6847
        %v7674 = vunpack.c.l.b16 %v6848
        %v7675 = vunpack.c.l.b16 %v6849
        %v7676 = vunpack.c.h.b16 %v6849
        %v7677 = vunpack.c.l.b16 %v6850
        %v7678 = vunpack.c.l.b16 %v6851
        %v7679 = vunpack.c.h.b16 %v6851
        %v7680 = vunpack.c.l.b16 %v6852
        %v7681 = vunpack.c.l.b16 %v6853
        %v7682 = vunpack.c.h.b16 %v6853
        %v7683 = vunpack.c.l.b16 %v6854
        %v7684 = vunpack.c.l.b16 %v6855
        %v7685 = vunpack.c.h.b16 %v6855
        %v7686 = vunpack.c.l.b16 %v6856
        %v7687 = vunpack.c.l.b16 %v6857
        %v7688 = vunpack.c.h.b16 %v6857
        %v7689 = vunpack.c.l.b16 %v6858
        %v7690 = vunpack.c.l.b16 %v6859
        %v7691 = vunpack.c.h.b16 %v6859
        %v7692 = vunpack.c.l.b16 %v6860
        %v7693 = vunpack.c.l.b16 %v6861
        %v7694 = vunpack.c.h.b16 %v6861
        %v7695 = vunpack.c.l.b16 %v6862
        %v7696 = vunpack.c.l.b16 %v6863
        %v7697 = vunpack.c.h.b16 %v6863
        %v7698 = vunpack.c.l.b16 %v6864
        %v7699 = vunpack.c.l.b16 %v6865
        %v7700 = vunpack.c.h.b16 %v6865
        %v7701 = vunpack.c.l.b16 %v6866
        %v7702 = vunpack.c.l.b16 %v6867
        %v7703 = vunpack.c.h.b16 %v6867
        %v7704 = vunpack.c.l.b16 %v6868
        %v7705 = vunpack.c.l.b16 %v6869
        %v7706 = vunpack.c.h.b16 %v6869
        %v7707 = vunpack.c.l.b16 %v6870
        %v7708 = vunpack.c.l.b16 %v6871
        %v7709 = vunpack.c.h.b16 %v6871
        %v7710 = vunpack.c.l.b16 %v6872
        %v7711 = vunpack.c.l.b16 %v6873
        %v7712 = vunpack.c.h.b16 %v6873
        %v7713 = vunpack.c.l.b16 %v6874
        %v7714 = vunpack.c.l.b16 %v6875
        %v7715 = vunpack.c.h.b16 %v6875
        %v7716 = vunpack.c.l.b16 %v6876
        %v7717 = vunpack.c.l.b16 %v6877
        %v7718 = vunpack.c.h.b16 %v6877
        %v7719 = vunpack.c.l.b16 %v6878
        %v7720 = vunpack.c.l.b16 %v6879
        %v7721 = vunpack.c.h.b16 %v6879
        %v7722 = vunpack.c.l.b16 %v6880
        %v7723 = vunpack.c.l.b16 %v6881
        %v7724 = vunpack.c.h.b16 %v6881
        %v7725 = vunpack.c.l.b16 %v6882
        %v7726 = vunpack.c.l.b16 %v6883
        %v7727 = vunpack.c.h.b16 %v6883
        %v7728 = vunpack.c.l.b16 %v6884
        %v7729 = vunpack.c.l.b16 %v6885
        %v7730 = vunpack.c.h.b16 %v6885
        %v7731 = vunpack.c.l.b16 %v6886
        %v7732 = vunpack.c.l.b16 %v6887
        %v7733 = vunpack.c.h.b16 %v6887
        %v7734 = vunpack.c.l.b16 %v6888
        %v7735 = vunpack.c.l.b16 %v6889
        %v7736 = vunpack.c.h.b16 %v6889
        %v7737 = vunpack.c.l.b16 %v6890
        %v7738 = vunpack.c.l.b16 %v6891
        %v7739 = vunpack.c.h.b16 %v6891
        %v7740 = vunpack.c.l.b16 %v6892
        %v7741 = vunpack.c.l.b16 %v6893
        %v7742 = vunpack.c.h.b16 %v6893
        %v7743 = vunpack.c.l.b16 %v6894
        %v7744 = vunpack.c.l.b16 %v6895
        %v7745 = vunpack.c.h.b16 %v6895
        %v7746 = vunpack.c.l.b16 %v6896
        %v7747 = vunpack.c.l.b16 %v6897
        %v7748 = vunpack.c.h.b16 %v6897
        %v7749 = vunpack.c.l.b16 %v6898
        %v7750 = vunpack.c.l.b16 %v6899
        %v7751 = vunpack.c.h.b16 %v6899
        %v7752 = vunpack.c.l.b16 %v6900
        %v7753 = vunpack.c.l.b16 %v6901
        %v7754 = vunpack.c.h.b16 %v6901
        %v7755 = vunpack.c.l.b16 %v6902
        %v7756 = vunpack.c.l.b16 %v6903
        %v7757 = vunpack.c.h.b16 %v6903
        %v7758 = vunpack.c.l.b16 %v6904
        %v7759 = vunpack.c.l.b16 %v6905
        %v7760 = vunpack.c.h.b16 %v6905
        %v7761 = vunpack.c.l.b16 %v6906
        %v7762 = vunpack.c.l.b16 %v6907
        %v7763 = vunpack.c.h.b16 %v6907
        %v7764 = vunpack.c.l.b16 %v6908
        %v7765 = vunpack.c.l.b16 %v6909
        %v7766 = vunpack.c.h.b16 %v6909
        %v7767 = vunpack.c.l.b16 %v6910
        %v7768 = vunpack.c.l.b16 %v6911
        %v7769 = vunpack.c.h.b16 %v6911
        %v7770 = vunpack.c.l.b16 %v6912
        %v7771 = vunpack.c.l.b16 %v6913
        %v7772 = vunpack.c.h.b16 %v6913
        %v7773 = vunpack.c.l.b16 %v6914
        %v7774 = vunpack.c.l.b16 %v6915
        %v7775 = vunpack.c.h.b16 %v6915
        %v7776 = vunpack.c.l.b16 %v6916
        %v7777 = vunpack.c.l.b16 %v6917
        %v7778 = vunpack.c.h.b16 %v6917
        %v7779 = vunpack.c.l.b16 %v6918
        %v7780 = vunpack.c.l.b16 %v6919
        %v7781 = vunpack.c.h.b16 %v6919
        %v7782 = vunpack.c.l.b16 %v6920
        %v7783 = vunpack.c.l.b16 %v6921
        %v7784 = vunpack.c.h.b16 %v6921
        %v7785 = vunpack.c.l.b16 %v6922
        %v7786 = vunpack.c.l.b16 %v6923
        %v7787 = vunpack.c.h.b16 %v6923
        %v7788 = vunpack.c.l.b16 %v6924
        %v7789 = vunpack.c.l.b16 %v6925
        %v7790 = vunpack.c.h.b16 %v6925
        %v7791 = vunpack.c.l.b16 %v6926
        %v7792 = vunpack.c.l.b16 %v6927
        %v7793 = vunpack.c.h.b16 %v6927
        %v7794 = vunpack.c.l.b16 %v6928
        %v7795 = vunpack.c.l.b16 %v6929
        %v7796 = vunpack.c.h.b16 %v6929
        %v7797 = vunpack.c.l.b16 %v6930
        %v7798 = vunpack.c.l.b16 %v6931
        %v7799 = vunpack.c.h.b16 %v6931
        %v7800 = vunpack.c.l.b16 %v6932
        %v7801 = vunpack.c.l.b16 %v6933
        %v7802 = vunpack.c.h.b16 %v6933
        %v7803 = vunpack.c.l.b16 %v6934
        %v7804 = vunpack.c.l.b16 %v6935
        %v7805 = vunpack.c.h.b16 %v6935
        %v7806 = vunpack.c.l.b16 %v6936
        %v7807 = vunpack.c.l.b16 %v6937
        %v7808 = vunpack.c.h.b16 %v6937
        %v7809 = vunpack.c.l.b16 %v6938
        %v7810 = vunpack.c.l.b16 %v6939
        %v7811 = vunpack.c.h.b16 %v6939
        %v7812 = vunpack.c.l.b16 %v6940
        %v7813 = vunpack.c.l.b16 %v6941
        %v7814 = vunpack.c.h.b16 %v6941
        %v7815 = vunpack.c.l.b16 %v6942
        %v7816 = vunpack.c.l.b16 %v6943
        %v7817 = vunpack.c.h.b16 %v6943
        %v7818 = vunpack.c.l.b16 %v6944
        %v7819 = vunpack.c.l.b16 %v6945
        %v7820 = vunpack.c.h.b16 %v6945
        %v7821 = vunpack.c.l.b16 %v6946
        %v7822 = vunpack.c.l.b16 %v6947
        %v7823 = vunpack.c.h.b16 %v6947
        %v7824 = vunpack.c.l.b16 %v6948
        %v7825 = vunpack.c.l.b16 %v6949
        %v7826 = vunpack.c.h.b16 %v6949
        %v7827 = vunpack.c.l.b16 %v6950
        %v7828 = vunpack.c.l.b16 %v6951
        %v7829 = vunpack.c.h.b16 %v6951
        %v7830 = vunpack.c.l.b16 %v6952
        %v7831 = vunpack.c.l.b16 %v6953
        %v7832 = vunpack.c.h.b16 %v6953
        %v7833 = vunpack.c.l.b16 %v6954
        %v7834 = vunpack.c.l.b16 %v6955
        %v7835 = vunpack.c.h.b16 %v6955
        %v7836 = vunpack.c.l.b16 %v6956
        %v7837 = vunpack.c.l.b16 %v6957
        %v7838 = vunpack.c.h.b16 %v6957
        %v7839 = vunpack.c.l.b16 %v6958
        %v7840 = vunpack.c.l.b16 %v6959
        %v7841 = vunpack.c.h.b16 %v6959
        %v7842 = vunpack.c.l.b16 %v6960
        %v7843 = vunpack.c.l.b16 %v6961
        %v7844 = vunpack.c.h.b16 %v6961
        %v7845 = vunpack.c.l.b16 %v6962
        %v7846 = vunpack.c.l.b16 %v6963
        %v7847 = vunpack.c.h.b16 %v6963
        %v7848 = vunpack.c.l.b16 %v6964
        %v7849 = vunpack.c.l.b16 %v6965
        %v7850 = vunpack.c.h.b16 %v6965
        %v7851 = vunpack.c.l.b16 %v6966
        %v7852 = vunpack.c.l.b16 %v6967
        %v7853 = vunpack.c.h.b16 %v6967
        %v7854 = vunpack.c.l.b16 %v6968
        %v7855 = vunpack.c.l.b16 %v6969
        %v7856 = vunpack.c.h.b16 %v6969
        %v7857 = vunpack.c.l.b16 %v6970
        %v7858 = vunpack.c.l.b16 %v6971
        %v7859 = vunpack.c.h.b16 %v6971
        %v7860 = vunpack.c.l.b16 %v6972
        %v7861 = vunpack.c.l.b16 %v6973
        %v7862 = vunpack.c.h.b16 %v6973
        %v7863 = vunpack.c.l.b16 %v6974
        %v7864 = vunpack.c.l.b16 %v6975
        %v7865 = vunpack.c.h.b16 %v6975
        %v7866 = vunpack.c.l.b16 %v6976
        %v7867 = vunpack.c.l.b16 %v6977
        %v7868 = vunpack.c.h.b16 %v6977
        %v7869 = vunpack.c.l.b16 %v6978
        %v7870 = vunpack.c.l.b16 %v6979
        %v7871 = vunpack.c.h.b16 %v6979
        %v7872 = vunpack.c.l.b16 %v6980
        %v7873 = vunpack.c.l.b16 %v6981
        %v7874 = vunpack.c.h.b16 %v6981
        %v7875 = vunpack.c.l.b16 %v6982
        %v7876 = vunpack.c.l.b16 %v6983
        %v7877 = vunpack.c.h.b16 %v6983
        %v7878 = vunpack.c.l.b16 %v6984
        %v7879 = vunpack.c.l.b16 %v6985
        %v7880 = vunpack.c.h.b16 %v6985
        %v7881 = vunpack.c.l.b16 %v6986
        %v7882 = vunpack.c.l.b16 %v6987
        %v7883 = vunpack.c.h.b16 %v6987
        %v7884 = vunpack.c.l.b16 %v6988
        %v7885 = vunpack.c.l.b16 %v6989
        %v7886 = vunpack.c.h.b16 %v6989
        %v7887 = vunpack.c.l.b16 %v6990
        %v7888 = vunpack.c.l.b16 %v6991
        %v7889 = vunpack.c.h.b16 %v6991
        %v7890 = vunpack.c.l.b16 %v6992
        %v7891 = vunpack.c.l.b16 %v6993
        %v7892 = vunpack.c.h.b16 %v6993
        %v7893 = vunpack.c.l.b16 %v6994
        %v7894 = vunpack.c.l.b16 %v6995
        %v7895 = vunpack.c.h.b16 %v6995
        %v7896 = vunpack.c.l.b16 %v6996
        %v7897 = vunpack.c.l.b16 %v6997
        %v7898 = vunpack.c.h.b16 %v6997
        %v7899 = vunpack.c.l.b16 %v6998
        %v7900 = vunpack.c.l.b16 %v6999
        %v7901 = vunpack.c.h.b16 %v6999
        %v7902 = vunpack.c.l.b16 %v7000
        %v7903 = vunpack.c.l.b16 %v7001
        %v7904 = vunpack.c.h.b16 %v7001
        %v7905 = vunpack.c.l.b16 %v7002
        %v7906 = vunpack.c.l.b16 %v7003
        %v7907 = vunpack.c.h.b16 %v7003
        %v7908 = vunpack.c.l.b16 %v7004
        %v7909 = vunpack.c.l.b16 %v7005
        %v7910 = vunpack.c.h.b16 %v7005
        %v7911 = vunpack.c.l.b16 %v7006
        %v7912 = vunpack.c.l.b16 %v7007
        %v7913 = vunpack.c.h.b16 %v7007
        %v7914 = vunpack.c.l.b16 %v7008
        %v7915 = vunpack.c.l.b16 %v7009
        %v7916 = vunpack.c.h.b16 %v7009
        %v7917 = vunpack.c.l.b16 %v7010
        %v7918 = vunpack.c.l.b16 %v7011
        %v7919 = vunpack.c.h.b16 %v7011
        %v7920 = vunpack.c.l.b16 %v7012
        %v7921 = vunpack.c.l.b16 %v7013
        %v7922 = vunpack.c.h.b16 %v7013
        %v7923 = vunpack.c.l.b16 %v7014
        %v7924 = vunpack.c.l.b16 %v7015
        %v7925 = vunpack.c.h.b16 %v7015
        %v7926 = vunpack.c.l.b16 %v7016
        %v7927 = vunpack.c.l.b16 %v7017
        %v7928 = vunpack.c.h.b16 %v7017
        %v7929 = vunpack.c.l.b16 %v7018
        %v7930 = vunpack.c.l.b16 %v7019
        %v7931 = vunpack.c.h.b16 %v7019
        %v7932 = vunpack.c.l.b16 %v7020
        %v7933 = vunpack.c.l.b16 %v7021
        %v7934 = vunpack.c.h.b16 %v7021
        %v7935 = vunpack.c.l.b16 %v7022
        %v7936 = vunpack.c.l.b16 %v7023
        %v7937 = vunpack.c.h.b16 %v7023
        %v7938 = vunpack.c.l.b16 %v7024
        %v7939 = vunpack.c.l.b16 %v7025
        %v7940 = vunpack.c.h.b16 %v7025
        %v7941 = vunpack.c.l.b16 %v7026
        %v7942 = vunpack.c.l.b16 %v7027
        %v7943 = vunpack.c.h.b16 %v7027
        %v7944 = vunpack.c.l.b16 %v7028
        %v7945 = vunpack.c.l.b16 %v7029
        %v7946 = vunpack.c.h.b16 %v7029
        %v7947 = vunpack.c.l.b16 %v7030
        %v7948 = vunpack.c.l.b16 %v7031
        %v7949 = vunpack.c.h.b16 %v7031
        %v7950 = vunpack.c.l.b16 %v7032
        %v7951 = vunpack.c.l.b16 %v7033
        %v7952 = vunpack.c.h.b16 %v7033
        %v7953 = vunpack.c.l.b16 %v7034
        %v7954 = vunpack.c.l.b16 %v7035
        %v7955 = vunpack.c.h.b16 %v7035
        %v7956 = vunpack.c.l.b16 %v7036
        %v7957 = vunpack.c.l.b16 %v7037
        %v7958 = vunpack.c.h.b16 %v7037
        %v7959 = vunpack.c.l.b16 %v7038
        %v7960 = vunpack.c.l.b16 %v7039
        %v7961 = vunpack.c.h.b16 %v7039
        %v7962 = vunpack.c.l.b16 %v7040
        %v7963 = vunpack.c.l.b16 %v7041
        %v7964 = vunpack.c.h.b16 %v7041
        %v7965 = vunpack.c.l.b16 %v7042
        %v7966 = vunpack.c.l.b16 %v7043
        %v7967 = vunpack.c.h.b16 %v7043
        %v7968 = vunpack.c.l.b16 %v7044
        %v7969 = vunpack.c.l.b16 %v7045
        %v7970 = vunpack.c.h.b16 %v7045
        %v7971 = vunpack.c.l.b16 %v7046
        %v7972 = vunpack.c.l.b16 %v7047
        %v7973 = vunpack.c.h.b16 %v7047
        %v7974 = vunpack.c.l.b16 %v7048
        %v7975 = vunpack.c.l.b16 %v7049
        %v7976 = vunpack.c.h.b16 %v7049
        %v7977 = vunpack.c.l.b16 %v7050
        %v7978 = vunpack.c.l.b16 %v7051
        %v7979 = vunpack.c.h.b16 %v7051
        %v7980 = vunpack.c.l.b16 %v7052
        %v7981 = vunpack.c.l.b16 %v7053
        %v7982 = vunpack.c.h.b16 %v7053
        %v7983 = vunpack.c.l.b16 %v7054
        %v7984 = vunpack.c.l.b16 %v7055
        %v7985 = vunpack.c.h.b16 %v7055
        %v7986 = vunpack.c.l.b16 %v7056
        %v7987 = vunpack.c.l.b16 %v7057
        %v7988 = vunpack.c.h.b16 %v7057
        %v7989 = vunpack.c.l.b16 %v7058
        %v7990 = vunpack.c.l.b16 %v7059
        %v7991 = vunpack.c.h.b16 %v7059
        %v7992 = vunpack.c.l.b16 %v7060
        %v7993 = vunpack.c.l.b16 %v7061
        %v7994 = vunpack.c.h.b16 %v7061
        %v7995 = vunpack.c.l.b16 %v7062
        %v7996 = vunpack.c.l.b16 %v7063
        %v7997 = vunpack.c.h.b16 %v7063
        %v7998 = vunpack.c.l.b16 %v7064
        %v7999 = vunpack.c.l.b16 %v7065
        %v8000 = vunpack.c.h.b16 %v7065
        %v8001 = vunpack.c.l.b16 %v7066
        %v8002 = vunpack.c.l.b16 %v7067
        %v8003 = vunpack.c.h.b16 %v7067
        %v8004 = vunpack.c.l.b16 %v7068
        %v8005 = vunpack.c.l.b16 %v7069
        %v8006 = vunpack.c.h.b16 %v7069
        %v8007 = vunpack.c.l.b16 %v7070
        %v8008 = vunpack.c.l.b16 %v7071
        %v8009 = vunpack.c.h.b16 %v7071
        %v8010 = vunpack.c.l.b16 %v7072
        %v8011 = vunpack.c.l.b16 %v7073
        %v8012 = vunpack.c.h.b16 %v7073
        %v8013 = vunpack.c.l.b16 %v7074
        %v8014 = vunpack.c.l.b16 %v7075
        %v8015 = vunpack.c.h.b16 %v7075
        %v8016 = vunpack.c.l.b16 %v7076
        %v8017 = vunpack.c.l.b16 %v7077
        %v8018 = vunpack.c.h.b16 %v7077
        %v8019 = vunpack.c.l.b16 %v7078
        %v8020 = vunpack.c.l.b16 %v7079
        %v8021 = vunpack.c.h.b16 %v7079
        %v8022 = vunpack.c.l.b16 %v7080
        %v8023 = vunpack.c.l.b16 %v7081
        %v8024 = vunpack.c.h.b16 %v7081
        %v8025 = vunpack.c.l.b16 %v7082
        %v8026 = vunpack.c.l.b16 %v7083
        %v8027 = vunpack.c.h.b16 %v7083
        %v8028 = vunpack.c.l.b16 %v7084
        %v8029 = vunpack.c.l.b16 %v7085
        %v8030 = vunpack.c.h.b16 %v7085
        %v8031 = vunpack.c.l.b16 %v7086
        %v8032 = vunpack.c.l.b16 %v7087
        %v8033 = vunpack.c.h.b16 %v7087
        %v8034 = vunpack.c.l.b16 %v7088
        %v8035 = vunpack.c.l.b16 %v7089
        %v8036 = vunpack.c.h.b16 %v7089
        %v8037 = vunpack.c.l.b16 %v7090
        %v8038 = vunpack.c.l.b16 %v7091
        %v8039 = vunpack.c.h.b16 %v7091
        %v8040 = vunpack.c.l.b16 %v7092
        %v8041 = vunpack.c.l.b16 %v7093
        %v8042 = vunpack.c.h.b16 %v7093
        %v8043 = vunpack.c.l.b16 %v7094
        %v8044 = vunpack.c.l.b16 %v7095
        %v8045 = vunpack.c.h.b16 %v7095
        %v8046 = vunpack.c.l.b16 %v7096
        %v8047 = vunpack.c.l.b16 %v7097
        %v8048 = vunpack.c.h.b16 %v7097
        %v8049 = vunpack.c.l.b16 %v7098
        %v8050 = vunpack.c.l.b16 %v7099
        %v8051 = vunpack.c.h.b16 %v7099
        %v8052 = vunpack.c.l.b16 %v7100
        %v8053 = vunpack.c.l.b16 %v7101
        %v8054 = vunpack.c.h.b16 %v7101
        %v8055 = vunpack.c.l.b16 %v7102
        %v8056 = vunpack.c.l.b16 %v7103
        %v8057 = vunpack.c.h.b16 %v7103
        %v8058 = vunpack.c.l.b16 %v7104
        %v8059 = vunpack.c.l.b16 %v7105
        %v8060 = vunpack.c.h.b16 %v7105
        %v8061 = vunpack.c.l.b16 %v7106
        %v8062 = vunpack.c.l.b16 %v7107
        %v8063 = vunpack.c.h.b16 %v7107
        %v8064 = vunpack.c.l.b16 %v7108
        %v8065 = vunpack.c.l.b16 %v7109
        %v8066 = vunpack.c.h.b16 %v7109
        %v8067 = vunpack.c.l.b16 %v7110
        %v8068 = vunpack.c.l.b16 %v7111
        %v8069 = vunpack.c.h.b16 %v7111
        %v8070 = vunpack.c.l.b16 %v7112
        %v8071 = vunpack.c.l.b16 %v7113
        %v8072 = vunpack.c.h.b16 %v7113
        %v8073 = vunpack.c.l.b16 %v7114
        %v8074 = vunpack.c.l.b16 %v7115
        %v8075 = vunpack.c.h.b16 %v7115
        %v8076 = vunpack.c.l.b16 %v7116
        %v8077 = vunpack.c.l.b16 %v7117
        %v8078 = vunpack.c.h.b16 %v7117
        %v8079 = vunpack.c.l.b16 %v7118
        %v8080 = vunpack.c.l.b16 %v7119
        %v8081 = vunpack.c.h.b16 %v7119
        %v8082 = vunpack.c.l.b16 %v7120
        %v8083 = vunpack.c.l.b16 %v7121
        %v8084 = vunpack.c.h.b16 %v7121
        %v8085 = vunpack.c.l.b16 %v7122
        %v8086 = vunpack.c.l.b16 %v7123
        %v8087 = vunpack.c.h.b16 %v7123
        %v8088 = vunpack.c.l.b16 %v7124
        %v8089 = vunpack.c.l.b16 %v7125
        %v8090 = vunpack.c.h.b16 %v7125
        %v8091 = vunpack.c.l.b16 %v7126
        %v8092 = vunpack.c.l.b16 %v7127
        %v8093 = vunpack.c.h.b16 %v7127
        %v8094 = vunpack.c.l.b16 %v7128
        %v8095 = vunpack.c.l.b16 %v7129
        %v8096 = vunpack.c.h.b16 %v7129
        %v8097 = vunpack.c.l.b16 %v7130
        %v8098 = vunpack.c.l.b16 %v7131
        %v8099 = vunpack.c.h.b16 %v7131
        %v8100 = vunpack.c.l.b16 %v7132
        %v8101 = vunpack.c.l.b16 %v7133
        %v8102 = vunpack.c.h.b16 %v7133
        %v8103 = vunpack.c.l.b16 %v7134
        %v8104 = vunpack.c.l.b16 %v7135
        %v8105 = vunpack.c.h.b16 %v7135
        %v8106 = vunpack.c.l.b16 %v7136
        %v8107 = vunpack.c.l.b16 %v7137
        %v8108 = vunpack.c.h.b16 %v7137
        %v8109 = vunpack.c.l.b16 %v7138
        %v8110 = vunpack.c.l.b16 %v7139
        %v8111 = vunpack.c.h.b16 %v7139
        %v8112 = vunpack.c.l.b16 %v7140
        %v8113 = vunpack.c.l.b16 %v7141
        %v8114 = vunpack.c.h.b16 %v7141
        %v8115 = vunpack.c.l.b16 %v7142
        %v8116 = vunpack.c.l.b16 %v7143
        %v8117 = vunpack.c.h.b16 %v7143
        %v8118 = vunpack.c.l.b16 %v7144
        %v8119 = vunpack.c.l.b16 %v7145
        %v8120 = vunpack.c.h.b16 %v7145
        %v8121 = vunpack.c.l.b16 %v7146
        %v8122 = vunpack.c.l.b16 %v7147
        %v8123 = vunpack.c.h.b16 %v7147
        %v8124 = vunpack.c.l.b16 %v7148
        %v8125 = vunpack.c.l.b16 %v7149
        %v8126 = vunpack.c.h.b16 %v7149
        %v8127 = vunpack.c.l.b16 %v7150
        %v8128 = vpack.c.b16 %v7555, %v7552
        %v8129 = vpack.c.b16 %v7556, %v7553
        %v8130 = vpack.c.b16 %v7557, %v7554
        %v8131 = vpack.c.b16 %v7561, %v7558
        %v8132 = vpack.c.b16 %v7562, %v7559
        %v8133 = vpack.c.b16 %v7563, %v7560
        %v8134 = vpack.c.b16 %v7567, %v7564
        %v8135 = vpack.c.b16 %v7568, %v7565
        %v8136 = vpack.c.b16 %v7569, %v7566
        %v8137 = vpack.c.b16 %v7573, %v7570
        %v8138 = vpack.c.b16 %v7574, %v7571
        %v8139 = vpack.c.b16 %v7575, %v7572
        %v8140 = vpack.c.b16 %v7579, %v7576
        %v8141 = vpack.c.b16 %v7580, %v7577
        %v8142 = vpack.c.b16 %v7581, %v7578
        %v8143 = vpack.c.b16 %v7585, %v7582
        %v8144 = vpack.c.b16 %v7586, %v7583
        %v8145 = vpack.c.b16 %v7587, %v7584
        %v8146 = vpack.c.b16 %v7591, %v7588
        %v8147 = vpack.c.b16 %v7592, %v7589
        %v8148 = vpack.c.b16 %v7593, %v7590
        %v8149 = vpack.c.b16 %v7597, %v7594
        %v8150 = vpack.c.b16 %v7598, %v7595
        %v8151 = vpack.c.b16 %v7599, %v7596
        %v8152 = vpack.c.b16 %v7603, %v7600
        %v8153 = vpack.c.b16 %v7604, %v7601
        %v8154 = vpack.c.b16 %v7605, %v7602
        %v8155 = vpack.c.b16 %v7609, %v7606
        %v8156 = vpack.c.b16 %v7610, %v7607
        %v8157 = vpack.c.b16 %v7611, %v7608
        %v8158 = vpack.c.b16 %v7615, %v7612
        %v8159 = vpack.c.b16 %v7616, %v7613
        %v8160 = vpack.c.b16 %v7617, %v7614
        %v8161 = vpack.c.b16 %v7621, %v7618
        %v8162 = vpack.c.b16 %v7622, %v7619
        %v8163 = vpack.c.b16 %v7623, %v7620
        %v8164 = vpack.c.b16 %v7627, %v7624
        %v8165 = vpack.c.b16 %v7628, %v7625
        %v8166 = vpack.c.b16 %v7629, %v7626
        %v8167 = vpack.c.b16 %v7633, %v7630
        %v8168 = vpack.c.b16 %v7634, %v7631
        %v8169 = vpack.c.b16 %v7635, %v7632
        %v8170 = vpack.c.b16 %v7639, %v7636
        %v8171 = vpack.c.b16 %v7640, %v7637
        %v8172 = vpack.c.b16 %v7641, %v7638
        %v8173 = vpack.c.b16 %v7645, %v7642
        %v8174 = vpack.c.b16 %v7646, %v7643
        %v8175 = vpack.c.b16 %v7647, %v7644
        %v8176 = vpack.c.b16 %v7651, %v7648
        %v8177 = vpack.c.b16 %v7652, %v7649
        %v8178 = vpack.c.b16 %v7653, %v7650
        %v8179 = vpack.c.b16 %v7657, %v7654
        %v8180 = vpack.c.b16 %v7658, %v7655
        %v8181 = vpack.c.b16 %v7659, %v7656
        %v8182 = vpack.c.b16 %v7663, %v7660
        %v8183 = vpack.c.b16 %v7664, %v7661
        %v8184 = vpack.c.b16 %v7665, %v7662
        %v8185 = vpack.c.b16 %v7669, %v7666
        %v8186 = vpack.c.b16 %v7670, %v7667
        %v8187 = vpack.c.b16 %v7671, %v7668
        %v8188 = vpack.c.b16 %v7675, %v7672
        %v8189 = vpack.c.b16 %v7676, %v7673
        %v8190 = vpack.c.b16 %v7677, %v7674
        %v8191 = vpack.c.b16 %v7681, %v7678
        %v8192 = vpack.c.b16 %v7682, %v7679
        %v8193 = vpack.c.b16 %v7683, %v7680
        %v8194 = vpack.c.b16 %v7687, %v7684
        %v8195 = vpack.c.b16 %v7688, %v7685
        %v8196 = vpack.c.b16 %v7689, %v7686
        %v8197 = vpack.c.b16 %v7693, %v7690
        %v8198 = vpack.c.b16 %v7694, %v7691
        %v8199 = vpack.c.b16 %v7695, %v7692
        %v8200 = vpack.c.b16 %v7699, %v7696
        %v8201 = vpack.c.b16 %v7700, %v7697
        %v8202 = vpack.c.b16 %v7701, %v7698
        %v8203 = vpack.c.b16 %v7705, %v7702
        %v8204 = vpack.c.b16 %v7706, %v7703
        %v8205 = vpack.c.b16 %v7707, %v7704
        %v8206 = vpack.c.b16 %v7711, %v7708
        %v8207 = vpack.c.b16 %v7712, %v7709
        %v8208 = vpack.c.b16 %v7713, %v7710
        %v8209 = vpack.c.b16 %v7717, %v7714
        %v8210 = vpack.c.b16 %v7718, %v7715
        %v8211 = vpack.c.b16 %v7719, %v7716
        %v8212 = vpack.c.b16 %v7723, %v7720
        %v8213 = vpack.c.b16 %v7724, %v7721
        %v8214 = vpack.c.b16 %v7725, %v7722
        %v8215 = vpack.c.b16 %v7729, %v7726
        %v8216 = vpack.c.b16 %v7730, %v7727
        %v8217 = vpack.c.b16 %v7731, %v7728
        %v8218 = vpack.c.b16 %v7735, %v7732
        %v8219 = vpack.c.b16 %v7736, %v7733
        %v8220 = vpack.c.b16 %v7737, %v7734
        %v8221 = vpack.c.b16 %v7741, %v7738
        %v8222 = vpack.c.b16 %v7742, %v7739
        %v8223 = vpack.c.b16 %v7743, %v7740
        %v8224 = vpack.c.b16 %v7747, %v7744
        %v8225 = vpack.c.b16 %v7748, %v7745
        %v8226 = vpack.c.b16 %v7749, %v7746
        %v8227 = vpack.c.b16 %v7753, %v7750
        %v8228 = vpack.c.b16 %v7754, %v7751
        %v8229 = vpack.c.b16 %v7755, %v7752
        %v8230 = vpack.c.b16 %v7759, %v7756
        %v8231 = vpack.c.b16 %v7760, %v7757
        %v8232 = vpack.c.b16 %v7761, %v7758
        %v8233 = vpack.c.b16 %v7765, %v7762
        %v8234 = vpack.c.b16 %v7766, %v7763
        %v8235 = vpack.c.b16 %v7767, %v7764
        %v8236 = vpack.c.b16 %v7771, %v7768
        %v8237 = vpack.c.b16 %v7772, %v7769
        %v8238 = vpack.c.b16 %v7773, %v7770
        %v8239 = vpack.c.b16 %v7777, %v7774
        %v8240 = vpack.c.b16 %v7778, %v7775
        %v8241 = vpack.c.b16 %v7779, %v7776
        %v8242 = vpack.c.b16 %v7783, %v7780
        %v8243 = vpack.c.b16 %v7784, %v7781
        %v8244 = vpack.c.b16 %v7785, %v7782
        %v8245 = vpack.c.b16 %v7789, %v7786
        %v8246 = vpack.c.b16 %v7790, %v7787
        %v8247 = vpack.c.b16 %v7791, %v7788
        %v8248 = vpack.c.b16 %v7795, %v7792
        %v8249 = vpack.c.b16 %v7796, %v7793
        %v8250 = vpack.c.b16 %v7797, %v7794
        %v8251 = vpack.c.b16 %v7801, %v7798
        %v8252 = vpack.c.b16 %v7802, %v7799
        %v8253 = vpack.c.b16 %v7803, %v7800
        %v8254 = vpack.c.b16 %v7807, %v7804
        %v8255 = vpack.c.b16 %v7808, %v7805
        %v8256 = vpack.c.b16 %v7809, %v7806
        %v8257 = vpack.c.b16 %v7813, %v7810
        %v8258 = vpack.c.b16 %v7814, %v7811
        %v8259 = vpack.c.b16 %v7815, %v7812
        %v8260 = vpack.c.b16 %v7819, %v7816
        %v8261 = vpack.c.b16 %v7820, %v7817
        %v8262 = vpack.c.b16 %v7821, %v7818
        %v8263 = vpack.c.b16 %v7825, %v7822
        %v8264 = vpack.c.b16 %v7826, %v7823
        %v8265 = vpack.c.b16 %v7827, %v7824
        %v8266 = vpack.c.b16 %v7831, %v7828
        %v8267 = vpack.c.b16 %v7832, %v7829
        %v8268 = vpack.c.b16 %v7833, %v7830
        %v8269 = vpack.c.b16 %v7837, %v7834
        %v8270 = vpack.c.b16 %v7838, %v7835
        %v8271 = vpack.c.b16 %v7839, %v7836
        %v8272 = vpack.c.b16 %v7843, %v7840
        %v8273 = vpack.c.b16 %v7844, %v7841
        %v8274 = vpack.c.b16 %v7845, %v7842
        %v8275 = vpack.c.b16 %v7849, %v7846
        %v8276 = vpack.c.b16 %v7850, %v7847
        %v8277 = vpack.c.b16 %v7851, %v7848
        %v8278 = vpack.c.b16 %v7855, %v7852
        %v8279 = vpack.c.b16 %v7856, %v7853
        %v8280 = vpack.c.b16 %v7857, %v7854
        %v8281 = vpack.c.b16 %v7861, %v7858
        %v8282 = vpack.c.b16 %v7862, %v7859
        %v8283 = vpack.c.b16 %v7863, %v7860
        %v8284 = vpack.c.b16 %v7867, %v7864
        %v8285 = vpack.c.b16 %v7868, %v7865
        %v8286 = vpack.c.b16 %v7869, %v7866
        %v8287 = vpack.c.b16 %v7873, %v7870
        %v8288 = vpack.c.b16 %v7874, %v7871
        %v8289 = vpack.c.b16 %v7875, %v7872
        %v8290 = vpack.c.b16 %v7879, %v7876
        %v8291 = vpack.c.b16 %v7880, %v7877
        %v8292 = vpack.c.b16 %v7881, %v7878
        %v8293 = vpack.c.b16 %v7885, %v7882
        %v8294 = vpack.c.b16 %v7886, %v7883
        %v8295 = vpack.c.b16 %v7887, %v7884
        %v8296 = vpack.c.b16 %v7891, %v7888
        %v8297 = vpack.c.b16 %v7892, %v7889
        %v8298 = vpack.c.b16 %v7893, %v7890
        %v8299 = vpack.c.b16 %v7897, %v7894
        %v8300 = vpack.c.b16 %v7898, %v7895
        %v8301 = vpack.c.b16 %v7899, %v7896
        %v8302 = vpack.c.b16 %v7903, %v7900
        %v8303 = vpack.c.b16 %v7904, %v7901
        %v8304 = vpack.c.b16 %v7905, %v7902
        %v8305 = vpack.c.b16 %v7909, %v7906
        %v8306 = vpack.c.b16 %v7910, %v7907
        %v8307 = vpack.c.b16 %v7911, %v7908
        %v8308 = vpack.c.b16 %v7915, %v7912
        %v8309 = vpack.c.b16 %v7916, %v7913
        %v8310 = vpack.c.b16 %v7917, %v7914
        %v8311 = vpack.c.b16 %v7921, %v7918
        %v8312 = vpack.c.b16 %v7922, %v7919
        %v8313 = vpack.c.b16 %v7923, %v7920
        %v8314 = vpack.c.b16 %v7927, %v7924
        %v8315 = vpack.c.b16 %v7928, %v7925
        %v8316 = vpack.c.b16 %v7929, %v7926
        %v8317 = vpack.c.b16 %v7933, %v7930
        %v8318 = vpack.c.b16 %v7934, %v7931
        %v8319 = vpack.c.b16 %v7935, %v7932
        %v8320 = vpack.c.b16 %v7939, %v7936
        %v8321 = vpack.c.b16 %v7940, %v7937
        %v8322 = vpack.c.b16 %v7941, %v7938
        %v8323 = vpack.c.b16 %v7945, %v7942
        %v8324 = vpack.c.b16 %v7946, %v7943
        %v8325 = vpack.c.b16 %v7947, %v7944
        %v8326 = vpack.c.b16 %v7951, %v7948
        %v8327 = vpack.c.b16 %v7952, %v7949
        %v8328 = vpack.c.b16 %v7953, %v7950
        %v8329 = vpack.c.b16 %v7957, %v7954
        %v8330 = vpack.c.b16 %v7958, %v7955
        %v8331 = vpack.c.b16 %v7959, %v7956
        %v8332 = vpack.c.b16 %v7963, %v7960
        %v8333 = vpack.c.b16 %v7964, %v7961
        %v8334 = vpack.c.b16 %v7965, %v7962
        %v8335 = vpack.c.b16 %v7969, %v7966
        %v8336 = vpack.c.b16 %v7970, %v7967
        %v8337 = vpack.c.b16 %v7971, %v7968
        %v8338 = vpack.c.b16 %v7975, %v7972
        %v8339 = vpack.c.b16 %v7976, %v7973
        %v8340 = vpack.c.b16 %v7977, %v7974
        %v8341 = vpack.c.b16 %v7981, %v7978
        %v8342 = vpack.c.b16 %v7982, %v7979
        %v8343 = vpack.c.b16 %v7983, %v7980
        %v8344 = vpack.c.b16 %v7987, %v7984
        %v8345 = vpack.c.b16 %v7988, %v7985
        %v8346 = vpack.c.b16 %v7989, %v7986
        %v8347 = vpack.c.b16 %v7993, %v7990
        %v8348 = vpack.c.b16 %v7994, %v7991
        %v8349 = vpack.c.b16 %v7995, %v7992
        %v8350 = vpack.c.b16 %v7999, %v7996
        %v8351 = vpack.c.b16 %v8000, %v7997
        %v8352 = vpack.c.b16 %v8001, %v7998
        %v8353 = vpack.c.b16 %v8005, %v8002
        %v8354 = vpack.c.b16 %v8006, %v8003
        %v8355 = vpack.c.b16 %v8007, %v8004
        %v8356 = vpack.c.b16 %v8011, %v8008
        %v8357 = vpack.c.b16 %v8012, %v8009
        %v8358 = vpack.c.b16 %v8013, %v8010
        %v8359 = vpack.c.b16 %v8017, %v8014
        %v8360 = vpack.c.b16 %v8018, %v8015
        %v8361 = vpack.c.b16 %v8019, %v8016
        %v8362 = vpack.c.b16 %v8023, %v8020
        %v8363 = vpack.c.b16 %v8024, %v8021
        %v8364 = vpack.c.b16 %v8025, %v8022
        %v8365 = vpack.c.b16 %v8029, %v8026
        %v8366 = vpack.c.b16 %v8030, %v8027
        %v8367 = vpack.c.b16 %v8031, %v8028
        %v8368 = vpack.c.b16 %v8035, %v8032
        %v8369 = vpack.c.b16 %v8036, %v8033
        %v8370 = vpack.c.b16 %v8037, %v8034
        %v8371 = vpack.c.b16 %v8041, %v8038
        %v8372 = vpack.c.b16 %v8042, %v8039
        %v8373 = vpack.c.b16 %v8043, %v8040
        %v8374 = vpack.c.b16 %v8047, %v8044
        %v8375 = vpack.c.b16 %v8048, %v8045
        %v8376 = vpack.c.b16 %v8049, %v8046
        %v8377 = vpack.c.b16 %v8053, %v8050
        %v8378 = vpack.c.b16 %v8054, %v8051
        %v8379 = vpack.c.b16 %v8055, %v8052
        %v8380 = vpack.c.b16 %v8059, %v8056
        %v8381 = vpack.c.b16 %v8060, %v8057
        %v8382 = vpack.c.b16 %v8061, %v8058
        %v8383 = vpack.c.b16 %v8065, %v8062
        %v8384 = vpack.c.b16 %v8066, %v8063
        %v8385 = vpack.c.b16 %v8067, %v8064
        %v8386 = vpack.c.b16 %v8071, %v8068
        %v8387 = vpack.c.b16 %v8072, %v8069
        %v8388 = vpack.c.b16 %v8073, %v8070
        %v8389 = vpack.c.b16 %v8077, %v8074
        %v8390 = vpack.c.b16 %v8078, %v8075
        %v8391 = vpack.c.b16 %v8079, %v8076
        %v8392 = vpack.c.b16 %v8083, %v8080
        %v8393 = vpack.c.b16 %v8084, %v8081
        %v8394 = vpack.c.b16 %v8085, %v8082
        %v8395 = vpack.c.b16 %v8089, %v8086
        %v8396 = vpack.c.b16 %v8090, %v8087
        %v8397 = vpack.c.b16 %v8091, %v8088
        %v8398 = vpack.c.b16 %v8095, %v8092
        %v8399 = vpack.c.b16 %v8096, %v8093
        %v8400 = vpack.c.b16 %v8097, %v8094
        %v8401 = vpack.c.b16 %v8101, %v8098
        %v8402 = vpack.c.b16 %v8102, %v8099
        %v8403 = vpack.c.b16 %v8103, %v8100
        %v8404 = vpack.c.b16 %v8107, %v8104
        %v8405 = vpack.c.b16 %v8108, %v8105
        %v8406 = vpack.c.b16 %v8109, %v8106
        %v8407 = vpack.c.b16 %v8113, %v8110
        %v8408 = vpack.c.b16 %v8114, %v8111
        %v8409 = vpack.c.b16 %v8115, %v8112
        %v8410 = vpack.c.b16 %v8119, %v8116
        %v8411 = vpack.c.b16 %v8120, %v8117
        %v8412 = vpack.c.b16 %v8121, %v8118
        %v8413 = vpack.c.b16 %v8125, %v8122
        %v8414 = vpack.c.b16 %v8126, %v8123
        %v8415 = vpack.c.b16 %v8127, %v8124
        %8704 = vmatprep.subr.bf16.mxu0 %v8129
        %8705 = vmatpush1.bf16.msra.mxu0 %v8128
        %8706 = vmatprep.subr.bf16.mxu0 %v8132
        %8707 = vmatpush1.bf16.msra.mxu0 %v8131
        %8708 = vmatprep.subr.bf16.mxu0 %v8135
        %8709 = vmatpush1.bf16.msra.mxu0 %v8134
        %8710 = vmatprep.subr.bf16.mxu0 %v8138
        %8711 = vmatpush1.bf16.msra.mxu0 %v8137
        %8712 = vmatprep.subr.bf16.mxu0 %v8141
        %8713 = vmatpush1.bf16.msra.mxu0 %v8140
        %8714 = vmatprep.subr.bf16.mxu0 %v8144
        %8715 = vmatpush1.bf16.msra.mxu0 %v8143
        %8716 = vmatprep.subr.bf16.mxu0 %v8147
        %8717 = vmatpush1.bf16.msra.mxu0 %v8146
        %8718 = vmatprep.subr.bf16.mxu0 %v8150
        %8719 = vmatpush1.bf16.msra.mxu0 %v8149
        %8720 = vmatprep.subr.bf16.mxu0 %v8153
        %8721 = vmatpush1.bf16.msra.mxu0 %v8152
        %8722 = vmatprep.subr.bf16.mxu0 %v8156
        %8723 = vmatpush1.bf16.msra.mxu0 %v8155
        %8724 = vmatprep.subr.bf16.mxu0 %v8159
        %8725 = vmatpush1.bf16.msra.mxu0 %v8158
        %8726 = vmatprep.subr.bf16.mxu0 %v8162
        %8727 = vmatpush1.bf16.msra.mxu0 %v8161
        %8728 = vmatprep.subr.bf16.mxu0 %v8165
        %8729 = vmatpush1.bf16.msra.mxu0 %v8164
        %8730 = vmatprep.subr.bf16.mxu0 %v8168
        %8731 = vmatpush1.bf16.msra.mxu0 %v8167
        %8732 = vmatprep.subr.bf16.mxu0 %v8171
        %8733 = vmatpush1.bf16.msra.mxu0 %v8170
        %8734 = vmatprep.subr.bf16.mxu0 %v8174
        %8735 = vmatpush1.bf16.msra.mxu0 %v8173
        %8736 = vmatprep.mubr.bf16.mxu0 %v6756
        %8737 = vmatmul.mubr.bf16.gmra.mrb[0].mxu0 %v6755
        %v8738 = vpop.f32.mrb[0].mxu0
        %v8739 = vadd.f32 %v7156, %v8738
        %v8740 = vpop.f32.mrb[0].mxu0
        %v8741 = vadd.f32 %v7160, %v8740
        %v8742 = vpop.f32.mrb[0].mxu0
        %v8743 = vpop.f32.mrb[0].mxu0
        %8744 = vdwg.mxu0
        %8745 = vmatprep.subr.bf16.mxu0 %v8177
        %8746 = vmatpush1.bf16.msra.mxu0 %v8176
        %8747 = vmatprep.subr.bf16.mxu0 %v8180
        %8748 = vmatpush1.bf16.msra.mxu0 %v8179
        %8749 = vmatprep.subr.bf16.mxu0 %v8183
        %8750 = vmatpush1.bf16.msra.mxu0 %v8182
        %8751 = vmatprep.subr.bf16.mxu0 %v8186
        %8752 = vmatpush1.bf16.msra.mxu0 %v8185
        %8753 = vmatprep.subr.bf16.mxu0 %v8189
        %8754 = vmatpush1.bf16.msra.mxu0 %v8188
        %8755 = vmatprep.subr.bf16.mxu0 %v8192
        %8756 = vmatpush1.bf16.msra.mxu0 %v8191
        %8757 = vmatprep.subr.bf16.mxu0 %v8195
        %8758 = vmatpush1.bf16.msra.mxu0 %v8194
        %8759 = vmatprep.subr.bf16.mxu0 %v8198
        %8760 = vmatpush1.bf16.msra.mxu0 %v8197
        %8761 = vmatprep.subr.bf16.mxu0 %v8201
        %8762 = vmatpush1.bf16.msra.mxu0 %v8200
        %8763 = vmatprep.subr.bf16.mxu0 %v8204
        %8764 = vmatpush1.bf16.msra.mxu0 %v8203
        %8765 = vmatprep.subr.bf16.mxu0 %v8207
        %8766 = vmatpush1.bf16.msra.mxu0 %v8206
        %8767 = vmatprep.subr.bf16.mxu0 %v8210
        %8768 = vmatpush1.bf16.msra.mxu0 %v8209
        %8769 = vmatprep.subr.bf16.mxu0 %v8213
        %8770 = vmatpush1.bf16.msra.mxu0 %v8212
        %8771 = vmatprep.subr.bf16.mxu0 %v8216
        %8772 = vmatpush1.bf16.msra.mxu0 %v8215
        %8773 = vmatprep.subr.bf16.mxu0 %v8219
        %8774 = vmatpush1.bf16.msra.mxu0 %v8218
        %8775 = vmatprep.subr.bf16.mxu0 %v8222
        %8776 = vmatpush1.bf16.msra.mxu0 %v8221
        %8777 = vmatprep.mubr.bf16.mxu0 %v6758
        %8778 = vmatmul.mubr.bf16.gmra.mrb[0].mxu0 %v6757
        %v8779 = vpop.f32.mrb[0].mxu0
        %v8780 = vadd.f32 %v8739, %v8779
        %v8781 = vpop.f32.mrb[0].mxu0
        %v8782 = vadd.f32 %v8741, %v8781
        %v8783 = vpop.f32.mrb[0].mxu0
        %v8784 = vpop.f32.mrb[0].mxu0
        %8785 = vdwg.mxu0
        %8786 = vmatprep.subr.bf16.mxu0 %v8225
        %8787 = vmatpush1.bf16.msra.mxu0 %v8224
        %8788 = vmatprep.subr.bf16.mxu0 %v8228
        %8789 = vmatpush1.bf16.msra.mxu0 %v8227
        %8790 = vmatprep.subr.bf16.mxu0 %v8231
        %8791 = vmatpush1.bf16.msra.mxu0 %v8230
        %8792 = vmatprep.subr.bf16.mxu0 %v8234
        %8793 = vmatpush1.bf16.msra.mxu0 %v8233
        %8794 = vmatprep.subr.bf16.mxu0 %v8237
        %8795 = vmatpush1.bf16.msra.mxu0 %v8236
        %8796 = vmatprep.subr.bf16.mxu0 %v8240
        %8797 = vmatpush1.bf16.msra.mxu0 %v8239
        %8798 = vmatprep.subr.bf16.mxu0 %v8243
        %8799 = vmatpush1.bf16.msra.mxu0 %v8242
        %8800 = vmatprep.subr.bf16.mxu0 %v8246
        %8801 = vmatpush1.bf16.msra.mxu0 %v8245
        %8802 = vmatprep.subr.bf16.mxu0 %v8249
        %8803 = vmatpush1.bf16.msra.mxu0 %v8248
        %8804 = vmatprep.subr.bf16.mxu0 %v8252
        %8805 = vmatpush1.bf16.msra.mxu0 %v8251
        %8806 = vmatprep.subr.bf16.mxu0 %v8255
        %8807 = vmatpush1.bf16.msra.mxu0 %v8254
        %8808 = vmatprep.subr.bf16.mxu0 %v8258
        %8809 = vmatpush1.bf16.msra.mxu0 %v8257
        %8810 = vmatprep.subr.bf16.mxu0 %v8261
        %8811 = vmatpush1.bf16.msra.mxu0 %v8260
        %8812 = vmatprep.subr.bf16.mxu0 %v8264
        %8813 = vmatpush1.bf16.msra.mxu0 %v8263
        %8814 = vmatprep.subr.bf16.mxu0 %v8267
        %8815 = vmatpush1.bf16.msra.mxu0 %v8266
        %8816 = vmatprep.subr.bf16.mxu0 %v8270
        %8817 = vmatpush1.bf16.msra.mxu0 %v8269
        %8818 = vmatprep.mubr.bf16.mxu0 %v6760
        %8819 = vmatmul.mubr.bf16.gmra.mrb[0].mxu0 %v6759
        %v8820 = vpop.f32.mrb[0].mxu0
        %v8821 = vadd.f32 %v8780, %v8820
        %v8822 = vpop.f32.mrb[0].mxu0
        %v8823 = vadd.f32 %v8782, %v8822
        %v8824 = vpop.f32.mrb[0].mxu0
        %v8825 = vpop.f32.mrb[0].mxu0
        %8826 = vdwg.mxu0
        %8827 = vmatprep.subr.bf16.mxu0 %v8273
        %8828 = vmatpush1.bf16.msra.mxu0 %v8272
        %8829 = vmatprep.subr.bf16.mxu0 %v8276
        %8830 = vmatpush1.bf16.msra.mxu0 %v8275
        %8831 = vmatprep.subr.bf16.mxu0 %v8279
        %8832 = vmatpush1.bf16.msra.mxu0 %v8278
        %8833 = vmatprep.subr.bf16.mxu0 %v8282
        %8834 = vmatpush1.bf16.msra.mxu0 %v8281
        %8835 = vmatprep.subr.bf16.mxu0 %v8285
        %8836 = vmatpush1.bf16.msra.mxu0 %v8284
        %8837 = vmatprep.subr.bf16.mxu0 %v8288
        %8838 = vmatpush1.bf16.msra.mxu0 %v8287
        %8839 = vmatprep.subr.bf16.mxu0 %v8291
        %8840 = vmatpush1.bf16.msra.mxu0 %v8290
        %8841 = vmatprep.subr.bf16.mxu0 %v8294
        %8842 = vmatpush1.bf16.msra.mxu0 %v8293
        %8843 = vmatprep.subr.bf16.mxu0 %v8297
        %8844 = vmatpush1.bf16.msra.mxu0 %v8296
        %8845 = vmatprep.subr.bf16.mxu0 %v8300
        %8846 = vmatpush1.bf16.msra.mxu0 %v8299
        %8847 = vmatprep.subr.bf16.mxu0 %v8303
        %8848 = vmatpush1.bf16.msra.mxu0 %v8302
        %8849 = vmatprep.subr.bf16.mxu0 %v8306
        %8850 = vmatpush1.bf16.msra.mxu0 %v8305
        %8851 = vmatprep.subr.bf16.mxu0 %v8309
        %8852 = vmatpush1.bf16.msra.mxu0 %v8308
        %8853 = vmatprep.subr.bf16.mxu0 %v8312
        %8854 = vmatpush1.bf16.msra.mxu0 %v8311
        %8855 = vmatprep.subr.bf16.mxu0 %v8315
        %8856 = vmatpush1.bf16.msra.mxu0 %v8314
        %8857 = vmatprep.subr.bf16.mxu0 %v8318
        %8858 = vmatpush1.bf16.msra.mxu0 %v8317
        %8859 = vmatprep.mubr.bf16.mxu0 %v6762
        %8860 = vmatmul.mubr.bf16.gmra.mrb[0].mxu0 %v6761
        %v8861 = vpop.f32.mrb[0].mxu0
        %v8862 = vadd.f32 %v8821, %v8861
        %v8863 = vpop.f32.mrb[0].mxu0
        %v8864 = vadd.f32 %v8823, %v8863
        %v8865 = vpop.f32.mrb[0].mxu0
        %v8866 = vpop.f32.mrb[0].mxu0
        %8867 = vdwg.mxu0
        %8868 = vmatprep.subr.bf16.mxu0 %v8321
        %8869 = vmatpush1.bf16.msra.mxu0 %v8320
        %8870 = vmatprep.subr.bf16.mxu0 %v8324
        %8871 = vmatpush1.bf16.msra.mxu0 %v8323
        %8872 = vmatprep.subr.bf16.mxu0 %v8327
        %8873 = vmatpush1.bf16.msra.mxu0 %v8326
        %8874 = vmatprep.subr.bf16.mxu0 %v8330
        %8875 = vmatpush1.bf16.msra.mxu0 %v8329
        %8876 = vmatprep.subr.bf16.mxu0 %v8333
        %8877 = vmatpush1.bf16.msra.mxu0 %v8332
        %8878 = vmatprep.subr.bf16.mxu0 %v8336
        %8879 = vmatpush1.bf16.msra.mxu0 %v8335
        %8880 = vmatprep.subr.bf16.mxu0 %v8339
        %8881 = vmatpush1.bf16.msra.mxu0 %v8338
        %8882 = vmatprep.subr.bf16.mxu0 %v8342
        %8883 = vmatpush1.bf16.msra.mxu0 %v8341
        %8884 = vmatprep.subr.bf16.mxu0 %v8345
        %8885 = vmatpush1.bf16.msra.mxu0 %v8344
        %8886 = vmatprep.subr.bf16.mxu0 %v8348
        %8887 = vmatpush1.bf16.msra.mxu0 %v8347
        %8888 = vmatprep.subr.bf16.mxu0 %v8351
        %8889 = vmatpush1.bf16.msra.mxu0 %v8350
        %8890 = vmatprep.subr.bf16.mxu0 %v8354
        %8891 = vmatpush1.bf16.msra.mxu0 %v8353
        %8892 = vmatprep.subr.bf16.mxu0 %v8357
        %8893 = vmatpush1.bf16.msra.mxu0 %v8356
        %8894 = vmatprep.subr.bf16.mxu0 %v8360
        %8895 = vmatpush1.bf16.msra.mxu0 %v8359
        %8896 = vmatprep.subr.bf16.mxu0 %v8363
        %8897 = vmatpush1.bf16.msra.mxu0 %v8362
        %8898 = vmatprep.subr.bf16.mxu0 %v8366
        %8899 = vmatpush1.bf16.msra.mxu0 %v8365
        %8900 = vmatprep.mubr.bf16.mxu0 %v6764
        %8901 = vmatmul.mubr.bf16.gmra.mrb[0].mxu0 %v6763
        %v8902 = vpop.f32.mrb[0].mxu0
        %v8903 = vadd.f32 %v8862, %v8902
        %v8904 = vpop.f32.mrb[0].mxu0
        %v8905 = vadd.f32 %v8864, %v8904
        %v8906 = vpop.f32.mrb[0].mxu0
        %v8907 = vpop.f32.mrb[0].mxu0
        %8908 = vdwg.mxu0
        %8909 = vmatprep.subr.bf16.mxu0 %v8369
        %8910 = vmatpush1.bf16.msra.mxu0 %v8368
        %8911 = vmatprep.subr.bf16.mxu0 %v8372
        %8912 = vmatpush1.bf16.msra.mxu0 %v8371
        %8913 = vmatprep.subr.bf16.mxu0 %v8375
        %8914 = vmatpush1.bf16.msra.mxu0 %v8374
        %8915 = vmatprep.subr.bf16.mxu0 %v8378
        %8916 = vmatpush1.bf16.msra.mxu0 %v8377
        %8917 = vmatprep.subr.bf16.mxu0 %v8381
        %8918 = vmatpush1.bf16.msra.mxu0 %v8380
        %8919 = vmatprep.subr.bf16.mxu0 %v8384
        %8920 = vmatpush1.bf16.msra.mxu0 %v8383
        %8921 = vmatprep.subr.bf16.mxu0 %v8387
        %8922 = vmatpush1.bf16.msra.mxu0 %v8386
        %8923 = vmatprep.subr.bf16.mxu0 %v8390
        %8924 = vmatpush1.bf16.msra.mxu0 %v8389
        %8925 = vmatprep.subr.bf16.mxu0 %v8393
        %8926 = vmatpush1.bf16.msra.mxu0 %v8392
        %8927 = vmatprep.subr.bf16.mxu0 %v8396
        %8928 = vmatpush1.bf16.msra.mxu0 %v8395
        %8929 = vmatprep.subr.bf16.mxu0 %v8399
        %8930 = vmatpush1.bf16.msra.mxu0 %v8398
        %8931 = vmatprep.subr.bf16.mxu0 %v8402
        %8932 = vmatpush1.bf16.msra.mxu0 %v8401
        %8933 = vmatprep.subr.bf16.mxu0 %v8405
        %8934 = vmatpush1.bf16.msra.mxu0 %v8404
        %8935 = vmatprep.subr.bf16.mxu0 %v8408
        %8936 = vmatpush1.bf16.msra.mxu0 %v8407
        %8937 = vmatprep.subr.bf16.mxu0 %v8411
        %8938 = vmatpush1.bf16.msra.mxu0 %v8410
        %8939 = vmatprep.subr.bf16.mxu0 %v8414
        %8940 = vmatpush1.bf16.msra.mxu0 %v8413
        %8941 = vmatprep.mubr.bf16.mxu0 %v6766
        %8942 = vmatmul.mubr.bf16.gmra.mrb[0].mxu0 %v6765
        %v8943 = vpop.f32.mrb[0].mxu0
        %v8944 = vadd.f32 %v8903, %v8943
        %v8945 = vpop.f32.mrb[0].mxu0
        %v8946 = vadd.f32 %v8905, %v8945
        %v8947 = vpop.f32.mrb[0].mxu0
        %v8948 = vpop.f32.mrb[0].mxu0
        %8949 = vdwg.mxu0
        %8950 = vmatprep.subr.bf16.mxu0 0
        %8951 = vmatpush1.bf16.msra.mxu0 %v8130
        %8952 = vmatprep.subr.bf16.mxu0 0
        %8953 = vmatpush1.bf16.msra.mxu0 %v8133
        %8954 = vmatprep.subr.bf16.mxu0 0
        %8955 = vmatpush1.bf16.msra.mxu0 %v8136
        %8956 = vmatprep.subr.bf16.mxu0 0
        %8957 = vmatpush1.bf16.msra.mxu0 %v8139
        %8958 = vmatprep.subr.bf16.mxu0 0
        %8959 = vmatpush1.bf16.msra.mxu0 %v8142
        %8960 = vmatprep.subr.bf16.mxu0 0
        %8961 = vmatpush1.bf16.msra.mxu0 %v8145
        %8962 = vmatprep.subr.bf16.mxu0 0
        %8963 = vmatpush1.bf16.msra.mxu0 %v8148
        %8964 = vmatprep.subr.bf16.mxu0 0
        %8965 = vmatpush1.bf16.msra.mxu0 %v8151
        %8966 = vmatprep.subr.bf16.mxu0 0
        %8967 = vmatpush1.bf16.msra.mxu0 %v8154
        %8968 = vmatprep.subr.bf16.mxu0 0
        %8969 = vmatpush1.bf16.msra.mxu0 %v8157
        %8970 = vmatprep.subr.bf16.mxu0 0
        %8971 = vmatpush1.bf16.msra.mxu0 %v8160
        %8972 = vmatprep.subr.bf16.mxu0 0
        %8973 = vmatpush1.bf16.msra.mxu0 %v8163
        %8974 = vmatprep.subr.bf16.mxu0 0
        %8975 = vmatpush1.bf16.msra.mxu0 %v8166
        %8976 = vmatprep.subr.bf16.mxu0 0
        %8977 = vmatpush1.bf16.msra.mxu0 %v8169
        %8978 = vmatprep.subr.bf16.mxu0 0
        %8979 = vmatpush1.bf16.msra.mxu0 %v8172
        %8980 = vmatprep.subr.bf16.mxu0 0
        %8981 = vmatpush1.bf16.msra.mxu0 %v8175
        %8982 = vmatprep.mubr.bf16.mxu0 %v6756
        %8983 = vmatmul.mubr.bf16.gmra.mrb[0].mxu0 %v6755
        %v8984 = vpop.f32.mrb[0].mxu0
        %v8985 = vadd.f32 %v7164, %v8984
        %v8986 = vpop.f32.mrb[0].mxu0
        %v8987 = vpop.f32.mrb[0].mxu0
        %v8988 = vpop.f32.mrb[0].mxu0
        %8989 = vdwg.mxu0
        %8990 = vmatprep.subr.bf16.mxu0 0
        %8991 = vmatpush1.bf16.msra.mxu0 %v8178
        %8992 = vmatprep.subr.bf16.mxu0 0
        %8993 = vmatpush1.bf16.msra.mxu0 %v8181
        %8994 = vmatprep.subr.bf16.mxu0 0
        %8995 = vmatpush1.bf16.msra.mxu0 %v8184
        %8996 = vmatprep.subr.bf16.mxu0 0
        %8997 = vmatpush1.bf16.msra.mxu0 %v8187
        %8998 = vmatprep.subr.bf16.mxu0 0
        %8999 = vmatpush1.bf16.msra.mxu0 %v8190
        %9000 = vmatprep.subr.bf16.mxu0 0
        %9001 = vmatpush1.bf16.msra.mxu0 %v8193
        %9002 = vmatprep.subr.bf16.mxu0 0
        %9003 = vmatpush1.bf16.msra.mxu0 %v8196
        %9004 = vmatprep.subr.bf16.mxu0 0
        %9005 = vmatpush1.bf16.msra.mxu0 %v8199
        %9006 = vmatprep.subr.bf16.mxu0 0
        %9007 = vmatpush1.bf16.msra.mxu0 %v8202
        %9008 = vmatprep.subr.bf16.mxu0 0
        %9009 = vmatpush1.bf16.msra.mxu0 %v8205
        %9010 = vmatprep.subr.bf16.mxu0 0
        %9011 = vmatpush1.bf16.msra.mxu0 %v8208
        %9012 = vmatprep.subr.bf16.mxu0 0
        %9013 = vmatpush1.bf16.msra.mxu0 %v8211
        %9014 = vmatprep.subr.bf16.mxu0 0
        %9015 = vmatpush1.bf16.msra.mxu0 %v8214
        %9016 = vmatprep.subr.bf16.mxu0 0
        %9017 = vmatpush1.bf16.msra.mxu0 %v8217
        %9018 = vmatprep.subr.bf16.mxu0 0
        %9019 = vmatpush1.bf16.msra.mxu0 %v8220
        %9020 = vmatprep.subr.bf16.mxu0 0
        %9021 = vmatpush1.bf16.msra.mxu0 %v8223
        %9022 = vmatprep.mubr.bf16.mxu0 %v6758
        %9023 = vmatmul.mubr.bf16.gmra.mrb[0].mxu0 %v6757
        %v9024 = vpop.f32.mrb[0].mxu0
        %v9025 = vadd.f32 %v8985, %v9024
        %v9026 = vpop.f32.mrb[0].mxu0
        %v9027 = vpop.f32.mrb[0].mxu0
        %v9028 = vpop.f32.mrb[0].mxu0
        %9029 = vdwg.mxu0
        %9030 = vmatprep.subr.bf16.mxu0 0
        %9031 = vmatpush1.bf16.msra.mxu0 %v8226
        %9032 = vmatprep.subr.bf16.mxu0 0
        %9033 = vmatpush1.bf16.msra.mxu0 %v8229
        %9034 = vmatprep.subr.bf16.mxu0 0
        %9035 = vmatpush1.bf16.msra.mxu0 %v8232
        %9036 = vmatprep.subr.bf16.mxu0 0
        %9037 = vmatpush1.bf16.msra.mxu0 %v8235
        %9038 = vmatprep.subr.bf16.mxu0 0
        %9039 = vmatpush1.bf16.msra.mxu0 %v8238
        %9040 = vmatprep.subr.bf16.mxu0 0
        %9041 = vmatpush1.bf16.msra.mxu0 %v8241
        %9042 = vmatprep.subr.bf16.mxu0 0
        %9043 = vmatpush1.bf16.msra.mxu0 %v8244
        %9044 = vmatprep.subr.bf16.mxu0 0
        %9045 = vmatpush1.bf16.msra.mxu0 %v8247
        %9046 = vmatprep.subr.bf16.mxu0 0
        %9047 = vmatpush1.bf16.msra.mxu0 %v8250
        %9048 = vmatprep.subr.bf16.mxu0 0
        %9049 = vmatpush1.bf16.msra.mxu0 %v8253
        %9050 = vmatprep.subr.bf16.mxu0 0
        %9051 = vmatpush1.bf16.msra.mxu0 %v8256
        %9052 = vmatprep.subr.bf16.mxu0 0
        %9053 = vmatpush1.bf16.msra.mxu0 %v8259
        %9054 = vmatprep.subr.bf16.mxu0 0
        %9055 = vmatpush1.bf16.msra.mxu0 %v8262
        %9056 = vmatprep.subr.bf16.mxu0 0
        %9057 = vmatpush1.bf16.msra.mxu0 %v8265
        %9058 = vmatprep.subr.bf16.mxu0 0
        %9059 = vmatpush1.bf16.msra.mxu0 %v8268
        %9060 = vmatprep.subr.bf16.mxu0 0
        %9061 = vmatpush1.bf16.msra.mxu0 %v8271
        %9062 = vmatprep.mubr.bf16.mxu0 %v6760
        %9063 = vmatmul.mubr.bf16.gmra.mrb[0].mxu0 %v6759
        %v9064 = vpop.f32.mrb[0].mxu0
        %v9065 = vadd.f32 %v9025, %v9064
        %v9066 = vpop.f32.mrb[0].mxu0
        %v9067 = vpop.f32.mrb[0].mxu0
        %v9068 = vpop.f32.mrb[0].mxu0
        %9069 = vdwg.mxu0
        %9070 = vmatprep.subr.bf16.mxu0 0
        %9071 = vmatpush1.bf16.msra.mxu0 %v8274
        %9072 = vmatprep.subr.bf16.mxu0 0
        %9073 = vmatpush1.bf16.msra.mxu0 %v8277
        %9074 = vmatprep.subr.bf16.mxu0 0
        %9075 = vmatpush1.bf16.msra.mxu0 %v8280
        %9076 = vmatprep.subr.bf16.mxu0 0
        %9077 = vmatpush1.bf16.msra.mxu0 %v8283
        %9078 = vmatprep.subr.bf16.mxu0 0
        %9079 = vmatpush1.bf16.msra.mxu0 %v8286
        %9080 = vmatprep.subr.bf16.mxu0 0
        %9081 = vmatpush1.bf16.msra.mxu0 %v8289
        %9082 = vmatprep.subr.bf16.mxu0 0
        %9083 = vmatpush1.bf16.msra.mxu0 %v8292
        %9084 = vmatprep.subr.bf16.mxu0 0
        %9085 = vmatpush1.bf16.msra.mxu0 %v8295
        %9086 = vmatprep.subr.bf16.mxu0 0
        %9087 = vmatpush1.bf16.msra.mxu0 %v8298
        %9088 = vmatprep.subr.bf16.mxu0 0
        %9089 = vmatpush1.bf16.msra.mxu0 %v8301
        %9090 = vmatprep.subr.bf16.mxu0 0
        %9091 = vmatpush1.bf16.msra.mxu0 %v8304
        %9092 = vmatprep.subr.bf16.mxu0 0
        %9093 = vmatpush1.bf16.msra.mxu0 %v8307
        %9094 = vmatprep.subr.bf16.mxu0 0
        %9095 = vmatpush1.bf16.msra.mxu0 %v8310
        %9096 = vmatprep.subr.bf16.mxu0 0
        %9097 = vmatpush1.bf16.msra.mxu0 %v8313
        %9098 = vmatprep.subr.bf16.mxu0 0
        %9099 = vmatpush1.bf16.msra.mxu0 %v8316
        %9100 = vmatprep.subr.bf16.mxu0 0
        %9101 = vmatpush1.bf16.msra.mxu0 %v8319
        %9102 = vmatprep.mubr.bf16.mxu0 %v6762
        %9103 = vmatmul.mubr.bf16.gmra.mrb[0].mxu0 %v6761
        %v9104 = vpop.f32.mrb[0].mxu0
        %v9105 = vadd.f32 %v9065, %v9104
        %v9106 = vpop.f32.mrb[0].mxu0
        %v9107 = vpop.f32.mrb[0].mxu0
        %v9108 = vpop.f32.mrb[0].mxu0
        %9109 = vdwg.mxu0
        %9110 = vmatprep.subr.bf16.mxu0 0
        %9111 = vmatpush1.bf16.msra.mxu0 %v8322
        %9112 = vmatprep.subr.bf16.mxu0 0
        %9113 = vmatpush1.bf16.msra.mxu0 %v8325
        %9114 = vmatprep.subr.bf16.mxu0 0
        %9115 = vmatpush1.bf16.msra.mxu0 %v8328
        %9116 = vmatprep.subr.bf16.mxu0 0
        %9117 = vmatpush1.bf16.msra.mxu0 %v8331
        %9118 = vmatprep.subr.bf16.mxu0 0
        %9119 = vmatpush1.bf16.msra.mxu0 %v8334
        %9120 = vmatprep.subr.bf16.mxu0 0
        %9121 = vmatpush1.bf16.msra.mxu0 %v8337
        %9122 = vmatprep.subr.bf16.mxu0 0
        %9123 = vmatpush1.bf16.msra.mxu0 %v8340
        %9124 = vmatprep.subr.bf16.mxu0 0
        %9125 = vmatpush1.bf16.msra.mxu0 %v8343
        %9126 = vmatprep.subr.bf16.mxu0 0
        %9127 = vmatpush1.bf16.msra.mxu0 %v8346
        %9128 = vmatprep.subr.bf16.mxu0 0
        %9129 = vmatpush1.bf16.msra.mxu0 %v8349
        %9130 = vmatprep.subr.bf16.mxu0 0
        %9131 = vmatpush1.bf16.msra.mxu0 %v8352
        %9132 = vmatprep.subr.bf16.mxu0 0
        %9133 = vmatpush1.bf16.msra.mxu0 %v8355
        %9134 = vmatprep.subr.bf16.mxu0 0
        %9135 = vmatpush1.bf16.msra.mxu0 %v8358
        %9136 = vmatprep.subr.bf16.mxu0 0
        %9137 = vmatpush1.bf16.msra.mxu0 %v8361
        %9138 = vmatprep.subr.bf16.mxu0 0
        %9139 = vmatpush1.bf16.msra.mxu0 %v8364
        %9140 = vmatprep.subr.bf16.mxu0 0
        %9141 = vmatpush1.bf16.msra.mxu0 %v8367
        %9142 = vmatprep.mubr.bf16.mxu0 %v6764
        %9143 = vmatmul.mubr.bf16.gmra.mrb[0].mxu0 %v6763
        %v9144 = vpop.f32.mrb[0].mxu0
        %v9145 = vadd.f32 %v9105, %v9144
        %v9146 = vpop.f32.mrb[0].mxu0
        %v9147 = vpop.f32.mrb[0].mxu0
        %v9148 = vpop.f32.mrb[0].mxu0
        %9149 = vdwg.mxu0
        %9150 = vmatprep.subr.bf16.mxu0 0
        %9151 = vmatpush1.bf16.msra.mxu0 %v8370
        %9152 = vmatprep.subr.bf16.mxu0 0
        %9153 = vmatpush1.bf16.msra.mxu0 %v8373
        %9154 = vmatprep.subr.bf16.mxu0 0
        %9155 = vmatpush1.bf16.msra.mxu0 %v8376
        %9156 = vmatprep.subr.bf16.mxu0 0
        %9157 = vmatpush1.bf16.msra.mxu0 %v8379
        %9158 = vmatprep.subr.bf16.mxu0 0
        %9159 = vmatpush1.bf16.msra.mxu0 %v8382
        %9160 = vmatprep.subr.bf16.mxu0 0
        %9161 = vmatpush1.bf16.msra.mxu0 %v8385
        %9162 = vmatprep.subr.bf16.mxu0 0
        %9163 = vmatpush1.bf16.msra.mxu0 %v8388
        %9164 = vmatprep.subr.bf16.mxu0 0
        %9165 = vmatpush1.bf16.msra.mxu0 %v8391
        %9166 = vmatprep.subr.bf16.mxu0 0
        %9167 = vmatpush1.bf16.msra.mxu0 %v8394
        %9168 = vmatprep.subr.bf16.mxu0 0
        %9169 = vmatpush1.bf16.msra.mxu0 %v8397
        %9170 = vmatprep.subr.bf16.mxu0 0
        %9171 = vmatpush1.bf16.msra.mxu0 %v8400
        %9172 = vmatprep.subr.bf16.mxu0 0
        %9173 = vmatpush1.bf16.msra.mxu0 %v8403
        %9174 = vmatprep.subr.bf16.mxu0 0
        %9175 = vmatpush1.bf16.msra.mxu0 %v8406
        %9176 = vmatprep.subr.bf16.mxu0 0
        %9177 = vmatpush1.bf16.msra.mxu0 %v8409
        %9178 = vmatprep.subr.bf16.mxu0 0
        %9179 = vmatpush1.bf16.msra.mxu0 %v8412
        %9180 = vmatprep.subr.bf16.mxu0 0
        %9181 = vmatpush1.bf16.msra.mxu0 %v8415
        %9182 = vmatprep.mubr.bf16.mxu0 %v6766
        %9183 = vmatmul.mubr.bf16.gmra.mrb[0].mxu0 %v6765
        %v9184 = vpop.f32.mrb[0].mxu0
        %v9185 = vadd.f32 %v9145, %v9184
        %v9186 = vpop.f32.mrb[0].mxu0
        %v9187 = vpop.f32.mrb[0].mxu0
        %v9188 = vpop.f32.mrb[0].mxu0
        %9189 = vdwg.mxu0
        %v9190 = vld [vmem:[%s902] sm:$0x7]
        %v9192 = vlaneseq
        %v9193 = vshrl.u32 %v9192, 7
        %v9194 = vsub.s32 0, %v9193
        %v9195 = vrot.slane %v9190, %v9194
        %v9196 = vlaneseq
        %v9197 = vshrl.u32 %v9196, 7
        %v9198 = vsub.s32 1, %v9197
        %v9199 = vrot.slane %v9190, %v9198
        %v9200 = vlaneseq
        %v9201 = vshrl.u32 %v9200, 7
        %v9202 = vsub.s32 2, %v9201
        %v9203 = vrot.slane %v9190, %v9202
        %v9207 = vmul.f32 %v8944, %v9195
        %v9208 = vmul.f32 %v8946, %v9199
        %v9209 = vmul.f32 %v9185, %v9203
        %v9210 = vadd.f32 %v4288, %v9207
        %v9211 = vadd.f32 %v4289, %v9208
        %v9212 = vadd.f32 %v4290, %v9209
        %9213 = vst [vmem:[#allocation2] sm:$0x1f] %v9210
        %9214 = vst [vmem:[#allocation2 + $0x8] sm:$0x1f] %v9211
        %9215 = vst [vmem:[#allocation2 + $0x10] sm:$0x1f] %v9212
        %p9216 = scmp.eq.s32.totalorder %s55, 1
        // Predicated region
        $region141: #{dino_embedder_forward.4} parent=79 // pred_check
          %p9217 = pneg %p9216
        $region142: #{dino_embedder_forward.4} parent=79 // pred_check_branch
          %9219 = sbr.rel (%p9217) target = $region144
        $region143: #{dino_embedder_forward.4} parent=79 // pred_region
          %9220 = vst [vmem:[%s1028] sm:$0x1f] %v9210
          %9221 = vst [vmem:[%s1028 + $0x8] sm:$0x1f] %v9211
          %9222 = vst [vmem:[%s1028 + $0x10] sm:$0x1f] %v9212
        $region144: #{dino_embedder_forward.4} parent=79 // pred_fallthru
          _
        %p9223 = scmp.lt.s32.totalorder %s54, 1
        %s9224 = scalar_select %p9223, %s54, 1
        %s9225 = smul.addr %s9224, 3
        %s9226 = smul.addr %s9225, 8
        %s9227 = scalar_lea.vmem %s15, %s9226
        // Predicated region
        $region145: #{dino_embedder_forward.4} parent=79 // pred_check
          %p9228 = pneg %p470
        $region146: #{dino_embedder_forward.4} parent=79 // pred_check_branch
          %9230 = sbr.rel (%p9228) target = $region148
        $region147: #{dino_embedder_forward.4} parent=79 // pred_region
          _
        $region148: #{dino_embedder_forward.4} parent=79 // pred_fallthru
          _
      $region80: #{dino_embedder_forward.4} parent=5 // pred_fallthru
        _
      %p9231 = scmp.le.s32.totalorder 2, %s45
      // Predicated region
      $region149: #{dino_embedder_forward.4} parent=5 // pred_check
        %p9232 = pneg %p9231
      $region150: #{dino_embedder_forward.4} parent=5 // pred_check_branch
        %9234 = sbr.rel (%p9232) target = $region152
      $region151: #{dino_embedder_forward.4} parent=5 // pred_region
        %s9235 = ssub.s32 %s45, 2
        // Predicated region
        $region153: #{dino_embedder_forward.4} parent=151 // pred_check
          %p9236 = pneg %p476
        $region154: #{dino_embedder_forward.4} parent=151 // pred_check_branch
          %9238 = sbr.rel (%p9236) target = $region156
        $region155: #{dino_embedder_forward.4} parent=151 // pred_region
          %p9239 = scmp.lt.s32.totalorder %s56, 1
          %s9240 = scalar_select %p9239, %s56, 1
          %s9241 = smul.addr %s9240, 3
          %s9242 = smul.addr %s9241, 8
          %s9243 = scalar_lea.vmem %s15, %s9242
        $region156: #{dino_embedder_forward.4} parent=151 // pred_fallthru
          _
      $region152: #{dino_embedder_forward.4} parent=5 // pred_fallthru
        _
    $region6: #{dino_embedder_forward.4} parent=1 // loop_footer
      %s49 = sadd.s32 1, %s45
    $region7: #{dino_embedder_forward.4} parent=1 // loop_footer_branch
      %44 = sbr.rel target = $region3
    $region8: #{dino_embedder_forward.4} parent=1 // loop_exit
      _
    %9244 = vsyncpa [#allocation4], 1
    %s9245 = scalar_lea.sflag [#allocation4], 1
    %9246 = vsyncpa %s9245, 1
    %9247 = vsyncpa [#allocation6], 1
    %s9248 = scalar_lea.sflag [#allocation6], 1
    %9249 = vsyncpa %s9248, 1
    %9250 = vsyncpa [#allocation9], 1
    %s9251 = scalar_lea.sflag [#allocation9], 1
    %9252 = vsyncpa %s9251, 1
    %9253 = vsyncpa [#allocation12], 1
    %s9254 = scalar_lea.sflag [#allocation12], 1
    %9255 = vsyncpa %s9254, 1
    %9256 = vsyncpa [#allocation15], 1
    %s9257 = scalar_lea.sflag [#allocation15], 1
    %9258 = vsyncpa %s9257, 1
    %9259 = vsyncpa [#allocation18], 1
    %s9260 = scalar_lea.sflag [#allocation18], 1
    %9261 = vsyncpa %s9260, 1
    %9262 = vsyncpa [#allocation21], 1
    %s9263 = scalar_lea.sflag [#allocation21], 1
    %9264 = vsyncpa %s9263, 1
    %9265 = vsyncpa [#allocation24], 1
    %s9266 = scalar_lea.sflag [#allocation24], 1
    %9267 = vsyncpa %s9266, 1

</llo_original>
